<compile_context>
chip_gen: v6e
topology: v6e:2x2x1
jax: 0.10.0
libtpu: 0.0.40
codegen_flags: <defaults>
</compile_context>

<pallas_src>
import jax
import jax.numpy as jnp
from jax import lax
from jax.experimental import pallas as pl
from jax.experimental.pallas import tpu as pltpu

FEATURE_DIM = 256
NUM_CLASSES = 10
BATCH_BLOCK = 16      # images folded into one conv grid step (M = BATCH_BLOCK * Q rows)
FC_SPLIT = 2          # fc head parallel column split (2 TCs on v7x)
CLS_PAD = 128         # lane-dense logits (zero-padded cols sliced off outside)
KP1 = 16              # conv1 contraction: 9 -> 16 (sublane-friendly, no 9->128 blowup)


def _round_up(n, m):
    return ((n + m - 1) // m) * m


# ----------------------------------------------------------------------------
# Pallas kernels
# ----------------------------------------------------------------------------
def _conv_pool_kernel(a_ref, w_ref, b_ref, o_ref):
    """Fused 3x3 conv (im2col matmul) + 2x2 maxpool + bias + ReLU.

    a_ref: (1, 4, M, K)  bf16  patches grouped by pool tap g = hi*2 + wi,
                              row m = b_local*Q + ho*Wo + wo.
    w_ref: (K, Cout)     bf16
    b_ref: (1, Cout)     f32
    o_ref: (1, M, Cout)  bf16
    """
    w = w_ref[...]

    def tap(g):
        return jnp.dot(a_ref[0, g], w, preferred_element_type=jnp.float32)

    # max of raw matmuls, then bias + ReLU once (bias is tap-invariant, ReLU monotone)
    y = jnp.maximum(jnp.maximum(tap(0), tap(1)), jnp.maximum(tap(2), tap(3)))
    o_ref[0] = jnp.maximum(y + b_ref[...], 0.0).astype(o_ref.dtype)


def _fc_head_kernel(x_ref, w1_ref, b1_ref, w2_ref, feat_ref, plog_ref):
    """Fused fc1 + fc2 over one column-half of fc1 (grid axis j is parallel).

    x_ref:  (Mp, 3136) bf16    w1_ref: (3136, 128) bf16   b1_ref: (1, 128) f32
    w2_ref: (128, CLS_PAD) bf16
    feat_ref: (Mp, 128) f32    plog_ref: (1, Mp, CLS_PAD) f32 (partial logits, no bias)
    """
    f = jnp.dot(x_ref[...], w1_ref[...], preferred_element_type=jnp.float32) + b1_ref[...]
    feat_ref[...] = f
    plog_ref[0] = jnp.dot(f.astype(w2_ref.dtype), w2_ref[...],
                          preferred_element_type=jnp.float32)


# ----------------------------------------------------------------------------
# pallas_call wrappers
# ----------------------------------------------------------------------------
def conv_pool(a, wmat, bias):
    nb, g, m, k = a.shape
    n = wmat.shape[1]
    return pl.pallas_call(
        _conv_pool_kernel,
        out_shape=jax.ShapeDtypeStruct((nb, m, n), jnp.bfloat16),
        grid=(nb,),
        in_specs=[
            pl.BlockSpec((1, g, m, k), lambda b: (b, 0, 0, 0)),
            pl.BlockSpec((k, n), lambda b: (0, 0)),
            pl.BlockSpec((1, n), lambda b: (0, 0)),
        ],
        out_specs=pl.BlockSpec((1, m, n), lambda b: (b, 0, 0)),
        compiler_params=pltpu.CompilerParams(dimension_semantics=("parallel",)),
    )(a, wmat, bias)


def fc_head(x, w1, b1, w2):
    m, k = x.shape
    f = w1.shape[1]
    cpad = w2.shape[1]
    fb = f // FC_SPLIT
    return pl.pallas_call(
        _fc_head_kernel,
        out_shape=(jax.ShapeDtypeStruct((m, f), jnp.float32),
                   jax.ShapeDtypeStruct((FC_SPLIT, m, cpad), jnp.float32)),
        grid=(FC_SPLIT,),
        in_specs=[
            pl.BlockSpec((m, k), lambda j: (0, 0)),
            pl.BlockSpec((k, fb), lambda j: (0, j)),
            pl.BlockSpec((1, fb), lambda j: (0, j)),
            pl.BlockSpec((fb, cpad), lambda j: (j, 0)),
        ],
        out_specs=(pl.BlockSpec((m, fb), lambda j: (0, j)),
                   pl.BlockSpec((1, m, cpad), lambda j: (j, 0, 0))),
        compiler_params=pltpu.CompilerParams(dimension_semantics=("parallel",)),
    )(x, w1, b1, w2)


# ----------------------------------------------------------------------------
# XLA glue: pool-grouped, batch-blocked im2col (small slabs, no zero blowup)
# ----------------------------------------------------------------------------
def _pool_im2col(x_nhwc, block_b, k_pad=0):
    """3x3 / pad-1 im2col grouped by 2x2-maxpool tap and blocked over batch.

    Returns (B/block_b, 4, block_b*Ho*Wo, K) bf16 where group g = hi*2 + wi and
    row m = b_local*Ho*Wo + ho*Wo + wo hold the patch for conv-output position
    (2*ho + hi, 2*wo + wi). Patch feature index = (kh*3 + kw)*Cin + cin.
    """
    bsz, h, w, c = x_nhwc.shape
    ho, wo = h // 2, w // 2
    k = 9 * c
    nb = bsz // block_b
    xp = jnp.pad(x_nhwc, ((0, 0), (1, 1), (1, 1), (0, 0))).astype(jnp.bfloat16)
    taps = [xp[:, i:i + h, j:j + w, :] for i in range(3) for j in range(3)]
    p = jnp.stack(taps, axis=3)                       # (B, H, W, 9, C)
    p = p.reshape(bsz, ho, 2, wo, 2, k)               # h = 2*ho + hi ; w = 2*wo + wi
    p = jnp.transpose(p, (0, 2, 4, 1, 3, 5))          # (B, hi, wi, Ho, Wo, 9C)
    p = p.reshape(nb, block_b, 4, ho * wo, k)         # g = hi*2 + wi ; q = ho*Wo + wo
    p = jnp.transpose(p, (0, 2, 1, 3, 4))             # (nb, 4, Bb, Q, 9C)
    a = p.reshape(nb, 4, block_b * ho * wo, k)
    if k_pad > k:
        a = jnp.pad(a, ((0, 0), (0, 0), (0, 0), (0, k_pad - k)))
    return a


# ----------------------------------------------------------------------------
# One-time parameter repack (outside the jitted forward)
# ----------------------------------------------------------------------------
def prepare_params(params):
    """Fold weight transposes, the torch NCHW-flatten permutation, minimal zero
    padding, and bf16 casts into a one-time repack."""

    def conv_wmat(w_oihw, k_pad=0):
        o, i, kh, kw = w_oihw.shape
        wm = jnp.transpose(w_oihw, (2, 3, 1, 0)).reshape(kh * kw * i, o)
        if k_pad > kh * kw * i:
            wm = jnp.pad(wm, ((0, k_pad - kh * kw * i), (0, 0)))
        return wm.astype(jnp.bfloat16)

    fdim = params["fc1_w"].shape[0]
    assert fdim % (FC_SPLIT * 128) == 0, "feature_dim must split into 128-wide halves"

    # fc1: torch flattens NCHW (c, h, w) over a (64, 7, 7) map; our conv2 rows are
    # q = h*7 + w with channels minor -> column index q*64 + c.
    w1 = params["fc1_w"].reshape(fdim, 64, 49)                 # [o, c, q]
    w1 = jnp.transpose(w1, (2, 1, 0)).reshape(49 * 64, fdim)   # [(q,c), o]
    w2 = jnp.pad(params["fc2_w"].T,
                 ((0, 0), (0, CLS_PAD - NUM_CLASSES)))         # (fdim, 128), zero pads

    return {
        "c1_w": conv_wmat(params["conv1_w"], KP1),                       # (16, 32) bf16
        "c1_b": params["conv1_b"].reshape(1, -1).astype(jnp.float32),
        "c2_w": conv_wmat(params["conv2_w"]),                            # (288, 64) bf16
        "c2_b": params["conv2_b"].reshape(1, -1).astype(jnp.float32),
        "fc1_w": w1.astype(jnp.bfloat16),                                # (3136, 256)
        "fc1_b": params["fc1_b"].reshape(1, fdim).astype(jnp.float32),
        "fc2_w": w2.astype(jnp.bfloat16),                                # (256, 128)
        "fc2_b": params["fc2_b"].astype(jnp.float32),                    # (10,)
    }


# ----------------------------------------------------------------------------
# Full MNISTCNN forward (Pallas) and pure-JAX reference
# ----------------------------------------------------------------------------
def mnist_cnn_forward(x_nchw, prep):
    bsz = x_nchw.shape[0]
    bb = min(bsz, BATCH_BLOCK)
    bpad = _round_up(bsz, bb)

    x = jnp.transpose(x_nchw, (0, 2, 3, 1))                    # NCHW -> NHWC (B,28,28,1)
    if bpad > bsz:
        x = jnp.pad(x, ((0, bpad - bsz), (0, 0), (0, 0), (0, 0)))

    # stage 1: conv1 + ReLU + pool  (fused kernel, batch folded into M)
    a1 = _pool_im2col(x, bb, KP1)                              # (nb, 4, bb*196, 16) bf16
    y1 = conv_pool(a1, prep["c1_w"], prep["c1_b"])             # (nb, bb*196, 32) bf16
    x2 = y1.reshape(bpad, 14, 14, 32)

    # stage 2: conv2 + ReLU + pool
    a2 = _pool_im2col(x2, bb)                                  # (nb, 4, bb*49, 288) bf16
    y2 = conv_pool(a2, prep["c2_w"], prep["c2_b"])             # (nb, bb*49, 64) bf16

    # fc head: fc1 + fc2 fused, split over 2 parallel column halves
    flat = y2.reshape(bpad, 49 * 64)                           # column index = q*64 + c
    mp = _round_up(bpad, 16)                                   # bf16 sublane packing
    xfc = flat if mp == bpad else jnp.pad(flat, ((0, mp - bpad), (0, 0)))
    feats, plog = fc_head(xfc, prep["fc1_w"], prep["fc1_b"], prep["fc2_w"])
    logits = plog.sum(axis=0)[:bsz, :NUM_CLASSES] + prep["fc2_b"]
    return logits, feats[:bsz, :]


def reference_forward(x_nchw, params):
    hi = lax.Precision.HIGHEST

    def conv(x, w, b):
        dn = lax.conv_dimension_numbers(x.shape, w.shape, ("NCHW", "OIHW", "NCHW"))
        y = lax.conv_general_dilated(
            x, w, (1, 1), ((1, 1), (1, 1)), dimension_numbers=dn, precision=hi)
        return jnp.maximum(y + b[None, :, None, None], 0.0)

    def pool(x):
        return lax.reduce_window(
            x, -jnp.inf, lax.max, (1, 1, 2, 2), (1, 1, 2, 2), "VALID")

    x = pool(conv(x_nchw, params["conv1_w"], params["conv1_b"]))
    x = pool(conv(x, params["conv2_w"], params["conv2_b"]))
    flat = x.reshape(x.shape[0], -1)
    features = jnp.dot(flat, params["fc1_w"].T, precision=hi) + params["fc1_b"]
    logits = jnp.dot(features, params["fc2_w"].T, precision=hi) + params["fc2_b"]
    return logits, features


def init_params(key, feature_dim=FEATURE_DIM, num_classes=NUM_CLASSES):
    """Deterministic synthetic init with PyTorch-convention parameter shapes."""
    ks = jax.random.split(key, 8)

    def u(k, shape, fan_in):
        bound = 1.0 / jnp.sqrt(jnp.float32(fan_in))
        return jax.random.uniform(k, shape, jnp.float32, -bound, bound)

    return {
        "conv1_w": u(ks[0], (32, 1, 3, 3), 9),
        "conv1_b": u(ks[1], (32,), 9),
        "conv2_w": u(ks[2], (64, 32, 3, 3), 32 * 9),
        "conv2_b": u(ks[3], (64,), 32 * 9),
        "fc1_w": u(ks[4], (feature_dim, 64 * 7 * 7), 64 * 7 * 7),
        "fc1_b": u(ks[5], (feature_dim,), 64 * 7 * 7),
        "fc2_w": u(ks[6], (num_classes, feature_dim), feature_dim),
        "fc2_b": u(ks[7], (num_classes,), feature_dim),
    }


if __name__ == "__main__":
    key = jax.random.PRNGKey(0)
    k_param, k_x = jax.random.split(key)
    params = init_params(k_param)
    prep = prepare_params(params)                      # one-time repack, outside jit
    # MNIST-shaped input (fc1 requires 28x28 spatial); small batch.
    x = jax.random.normal(k_x, (2, 1, 28, 28), dtype=jnp.float32)

    logits, features = jax.jit(mnist_cnn_forward)(x, prep)
    jax.block_until_ready((logits, features))

    ref_logits, ref_features = jax.jit(reference_forward)(x, params)
    jax.block_until_ready((ref_logits, ref_features))

    assert logits.shape == (2, NUM_CLASSES) and features.shape == (2, FEATURE_DIM)
    # Tolerance accounts for bf16 MXU operands and bf16 inter-stage tensors (f32 accum).
    assert jnp.allclose(logits, ref_logits, atol=2e-2, rtol=2e-2)
    assert jnp.allclose(features, ref_features, atol=2e-2, rtol=2e-2)
    print("KERNEL_OK")
</pallas_src>

<mosaic_0001>
module attributes {stable_mosaic.version = 11 : i64} {
  func.func @_conv_pool_kernel(%arg0: i32, %arg1: memref<1x4x392x16xbf16, #tpu.memory_space<vmem>>, %arg2: memref<16x32xbf16, #tpu.memory_space<vmem>>, %arg3: memref<1x32xf32, #tpu.memory_space<vmem>>, %arg4: memref<1x392x32xbf16, #tpu.memory_space<vmem>>) attributes {dimension_semantics = [#tpu.dimension_semantics<parallel>], iteration_bounds = array<i64: 1>, scalar_prefetch = 0 : i64, scratch_operands = 0 : i64, tpu.core_type = #tpu.core_type<tc>, window_params = [{transform_indices = @transform_0, window_bounds = array<i64: 1, 4, 392, 16>}, {pipeline_mode = #tpu.pipeline_mode<synchronous>, transform_indices = @transform_1, window_bounds = array<i64: 16, 32>}, {pipeline_mode = #tpu.pipeline_mode<synchronous>, transform_indices = @transform_2, window_bounds = array<i64: 1, 32>}, {transform_indices = @transform_3, window_bounds = array<i64: 1, 392, 32>}]} {
    %c0 = arith.constant 0 : index
    %c0_0 = arith.constant 0 : index
    %0 = vector.load %arg2[%c0, %c0_0] : memref<16x32xbf16, #tpu.memory_space<vmem>>, vector<16x32xbf16>
    %c0_1 = arith.constant 0 : index
    %c0_2 = arith.constant 0 : index
    %c0_3 = arith.constant 0 : index
    %c0_4 = arith.constant 0 : index
    %1 = vector.load %arg1[%c0_1, %c0_2, %c0_3, %c0_4] : memref<1x4x392x16xbf16, #tpu.memory_space<vmem>>, vector<1x1x392x16xbf16>
    %2 = vector.shape_cast %1 : vector<1x1x392x16xbf16> to vector<392x16xbf16>
    %cst = arith.constant dense<0.000000e+00> : vector<392x32xf32>
    %3 = tpu.matmul %2, %0, %cst {dimension_numbers = #tpu.dot_dimension_numbers<[1], [0], [0], [1], [0, 0, 1, 1], [], []>} : vector<392x16xbf16>, vector<16x32xbf16>, vector<392x32xf32> -> vector<392x32xf32>
    %c0_5 = arith.constant 0 : index
    %c1 = arith.constant 1 : index
    %c0_6 = arith.constant 0 : index
    %c0_7 = arith.constant 0 : index
    %4 = vector.load %arg1[%c0_5, %c1, %c0_6, %c0_7] : memref<1x4x392x16xbf16, #tpu.memory_space<vmem>>, vector<1x1x392x16xbf16>
    %5 = vector.shape_cast %4 : vector<1x1x392x16xbf16> to vector<392x16xbf16>
    %cst_8 = arith.constant dense<0.000000e+00> : vector<392x32xf32>
    %6 = tpu.matmul %5, %0, %cst_8 {dimension_numbers = #tpu.dot_dimension_numbers<[1], [0], [0], [1], [0, 0, 1, 1], [], []>} : vector<392x16xbf16>, vector<16x32xbf16>, vector<392x32xf32> -> vector<392x32xf32>
    %7 = arith.maximumf %3, %6 : vector<392x32xf32>
    %c0_9 = arith.constant 0 : index
    %c2 = arith.constant 2 : index
    %c0_10 = arith.constant 0 : index
    %c0_11 = arith.constant 0 : index
    %8 = vector.load %arg1[%c0_9, %c2, %c0_10, %c0_11] : memref<1x4x392x16xbf16, #tpu.memory_space<vmem>>, vector<1x1x392x16xbf16>
    %9 = vector.shape_cast %8 : vector<1x1x392x16xbf16> to vector<392x16xbf16>
    %cst_12 = arith.constant dense<0.000000e+00> : vector<392x32xf32>
    %10 = tpu.matmul %9, %0, %cst_12 {dimension_numbers = #tpu.dot_dimension_numbers<[1], [0], [0], [1], [0, 0, 1, 1], [], []>} : vector<392x16xbf16>, vector<16x32xbf16>, vector<392x32xf32> -> vector<392x32xf32>
    %c0_13 = arith.constant 0 : index
    %c3 = arith.constant 3 : index
    %c0_14 = arith.constant 0 : index
    %c0_15 = arith.constant 0 : index
    %11 = vector.load %arg1[%c0_13, %c3, %c0_14, %c0_15] : memref<1x4x392x16xbf16, #tpu.memory_space<vmem>>, vector<1x1x392x16xbf16>
    %12 = vector.shape_cast %11 : vector<1x1x392x16xbf16> to vector<392x16xbf16>
    %cst_16 = arith.constant dense<0.000000e+00> : vector<392x32xf32>
    %13 = tpu.matmul %12, %0, %cst_16 {dimension_numbers = #tpu.dot_dimension_numbers<[1], [0], [0], [1], [0, 0, 1, 1], [], []>} : vector<392x16xbf16>, vector<16x32xbf16>, vector<392x32xf32> -> vector<392x32xf32>
    %14 = arith.maximumf %10, %13 : vector<392x32xf32>
    %15 = arith.maximumf %7, %14 : vector<392x32xf32>
    %c0_17 = arith.constant 0 : index
    %c0_18 = arith.constant 0 : index
    %16 = vector.load %arg3[%c0_17, %c0_18] : memref<1x32xf32, #tpu.memory_space<vmem>>, vector<1x32xf32>
    %17 = vector.broadcast %16 : vector<1x32xf32> to vector<392x32xf32>
    %18 = arith.addf %15, %17 : vector<392x32xf32>
    %cst_19 = arith.constant 0.000000e+00 : f32
    %19 = vector.broadcast %cst_19 : f32 to vector<392x32xf32>
    %20 = arith.maximumf %18, %19 : vector<392x32xf32>
    %21 = arith.truncf %20 : vector<392x32xf32> to vector<392x32xbf16>
    %c0_20 = arith.constant 0 : index
    %c0_21 = arith.constant 0 : index
    %c0_22 = arith.constant 0 : index
    %22 = vector.load %arg4[%c0_20, %c0_21, %c0_22] : memref<1x392x32xbf16, #tpu.memory_space<vmem>>, vector<1x392x32xbf16>
    %23 = vector.shape_cast %22 : vector<1x392x32xbf16> to vector<392x32xbf16>
    %24 = vector.shape_cast %21 : vector<392x32xbf16> to vector<1x392x32xbf16>
    tpu.vector_store %arg4[%c0_20, %c0_21, %c0_22], %24 {strides = array<i32>} : memref<1x392x32xbf16, #tpu.memory_space<vmem>>, vector<1x392x32xbf16>,
    return
  }
  func.func @transform_0(%arg0: i32) -> (i32, i32, i32, i32) {
    %c0_i32 = arith.constant 0 : i32
    %c0_i32_0 = arith.constant 0 : i32
    %c0_i32_1 = arith.constant 0 : i32
    %c0_i32_2 = arith.constant 0 : i32
    return %arg0, %c0_i32, %c0_i32_0, %c0_i32_1 : i32, i32, i32, i32
  }
  func.func @transform_1(%arg0: i32) -> (i32, i32) {
    %c0_i32 = arith.constant 0 : i32
    %c0_i32_0 = arith.constant 0 : i32
    %c0_i32_1 = arith.constant 0 : i32
    return %c0_i32, %c0_i32_0 : i32, i32
  }
  func.func @transform_2(%arg0: i32) -> (i32, i32) {
    %c0_i32 = arith.constant 0 : i32
    %c0_i32_0 = arith.constant 0 : i32
    %c0_i32_1 = arith.constant 0 : i32
    return %c0_i32, %c0_i32_0 : i32, i32
  }
  func.func @transform_3(%arg0: i32) -> (i32, i32, i32) {
    %c0_i32 = arith.constant 0 : i32
    %c0_i32_0 = arith.constant 0 : i32
    %c0_i32_1 = arith.constant 0 : i32
    return %arg0, %c0_i32, %c0_i32_0 : i32, i32, i32
  }
}

module attributes {stable_mosaic.version = 11 : i64} {
  func.func @_conv_pool_kernel(%arg0: i32, %arg1: memref<1x4x98x288xbf16, #tpu.memory_space<vmem>>, %arg2: memref<288x64xbf16, #tpu.memory_space<vmem>>, %arg3: memref<1x64xf32, #tpu.memory_space<vmem>>, %arg4: memref<1x98x64xbf16, #tpu.memory_space<vmem>>) attributes {dimension_semantics = [#tpu.dimension_semantics<parallel>], iteration_bounds = array<i64: 1>, scalar_prefetch = 0 : i64, scratch_operands = 0 : i64, tpu.core_type = #tpu.core_type<tc>, window_params = [{transform_indices = @transform_0, window_bounds = array<i64: 1, 4, 98, 288>}, {pipeline_mode = #tpu.pipeline_mode<synchronous>, transform_indices = @transform_1, window_bounds = array<i64: 288, 64>}, {pipeline_mode = #tpu.pipeline_mode<synchronous>, transform_indices = @transform_2, window_bounds = array<i64: 1, 64>}, {transform_indices = @transform_3, window_bounds = array<i64: 1, 98, 64>}]} {
    %c0 = arith.constant 0 : index
    %c0_0 = arith.constant 0 : index
    %0 = vector.load %arg2[%c0, %c0_0] : memref<288x64xbf16, #tpu.memory_space<vmem>>, vector<288x64xbf16>
    %c0_1 = arith.constant 0 : index
    %c0_2 = arith.constant 0 : index
    %c0_3 = arith.constant 0 : index
    %c0_4 = arith.constant 0 : index
    %1 = vector.load %arg1[%c0_1, %c0_2, %c0_3, %c0_4] : memref<1x4x98x288xbf16, #tpu.memory_space<vmem>>, vector<1x1x98x288xbf16>
    %2 = vector.shape_cast %1 : vector<1x1x98x288xbf16> to vector<98x288xbf16>
    %cst = arith.constant dense<0.000000e+00> : vector<98x64xf32>
    %3 = tpu.matmul %2, %0, %cst {dimension_numbers = #tpu.dot_dimension_numbers<[1], [0], [0], [1], [0, 0, 1, 1], [], []>} : vector<98x288xbf16>, vector<288x64xbf16>, vector<98x64xf32> -> vector<98x64xf32>
    %c0_5 = arith.constant 0 : index
    %c1 = arith.constant 1 : index
    %c0_6 = arith.constant 0 : index
    %c0_7 = arith.constant 0 : index
    %4 = vector.load %arg1[%c0_5, %c1, %c0_6, %c0_7] : memref<1x4x98x288xbf16, #tpu.memory_space<vmem>>, vector<1x1x98x288xbf16>
    %5 = vector.shape_cast %4 : vector<1x1x98x288xbf16> to vector<98x288xbf16>
    %cst_8 = arith.constant dense<0.000000e+00> : vector<98x64xf32>
    %6 = tpu.matmul %5, %0, %cst_8 {dimension_numbers = #tpu.dot_dimension_numbers<[1], [0], [0], [1], [0, 0, 1, 1], [], []>} : vector<98x288xbf16>, vector<288x64xbf16>, vector<98x64xf32> -> vector<98x64xf32>
    %7 = arith.maximumf %3, %6 : vector<98x64xf32>
    %c0_9 = arith.constant 0 : index
    %c2 = arith.constant 2 : index
    %c0_10 = arith.constant 0 : index
    %c0_11 = arith.constant 0 : index
    %8 = vector.load %arg1[%c0_9, %c2, %c0_10, %c0_11] : memref<1x4x98x288xbf16, #tpu.memory_space<vmem>>, vector<1x1x98x288xbf16>
    %9 = vector.shape_cast %8 : vector<1x1x98x288xbf16> to vector<98x288xbf16>
    %cst_12 = arith.constant dense<0.000000e+00> : vector<98x64xf32>
    %10 = tpu.matmul %9, %0, %cst_12 {dimension_numbers = #tpu.dot_dimension_numbers<[1], [0], [0], [1], [0, 0, 1, 1], [], []>} : vector<98x288xbf16>, vector<288x64xbf16>, vector<98x64xf32> -> vector<98x64xf32>
    %c0_13 = arith.constant 0 : index
    %c3 = arith.constant 3 : index
    %c0_14 = arith.constant 0 : index
    %c0_15 = arith.constant 0 : index
    %11 = vector.load %arg1[%c0_13, %c3, %c0_14, %c0_15] : memref<1x4x98x288xbf16, #tpu.memory_space<vmem>>, vector<1x1x98x288xbf16>
    %12 = vector.shape_cast %11 : vector<1x1x98x288xbf16> to vector<98x288xbf16>
    %cst_16 = arith.constant dense<0.000000e+00> : vector<98x64xf32>
    %13 = tpu.matmul %12, %0, %cst_16 {dimension_numbers = #tpu.dot_dimension_numbers<[1], [0], [0], [1], [0, 0, 1, 1], [], []>} : vector<98x288xbf16>, vector<288x64xbf16>, vector<98x64xf32> -> vector<98x64xf32>
    %14 = arith.maximumf %10, %13 : vector<98x64xf32>
    %15 = arith.maximumf %7, %14 : vector<98x64xf32>
    %c0_17 = arith.constant 0 : index
    %c0_18 = arith.constant 0 : index
    %16 = vector.load %arg3[%c0_17, %c0_18] : memref<1x64xf32, #tpu.memory_space<vmem>>, vector<1x64xf32>
    %17 = vector.broadcast %16 : vector<1x64xf32> to vector<98x64xf32>
    %18 = arith.addf %15, %17 : vector<98x64xf32>
    %cst_19 = arith.constant 0.000000e+00 : f32
    %19 = vector.broadcast %cst_19 : f32 to vector<98x64xf32>
    %20 = arith.maximumf %18, %19 : vector<98x64xf32>
    %21 = arith.truncf %20 : vector<98x64xf32> to vector<98x64xbf16>
    %c0_20 = arith.constant 0 : index
    %c0_21 = arith.constant 0 : index
    %c0_22 = arith.constant 0 : index
    %22 = vector.load %arg4[%c0_20, %c0_21, %c0_22] : memref<1x98x64xbf16, #tpu.memory_space<vmem>>, vector<1x98x64xbf16>
    %23 = vector.shape_cast %22 : vector<1x98x64xbf16> to vector<98x64xbf16>
    %24 = vector.shape_cast %21 : vector<98x64xbf16> to vector<1x98x64xbf16>
    tpu.vector_store %arg4[%c0_20, %c0_21, %c0_22], %24 {strides = array<i32>} : memref<1x98x64xbf16, #tpu.memory_space<vmem>>, vector<1x98x64xbf16>,
    return
  }
  func.func @transform_0(%arg0: i32) -> (i32, i32, i32, i32) {
    %c0_i32 = arith.constant 0 : i32
    %c0_i32_0 = arith.constant 0 : i32
    %c0_i32_1 = arith.constant 0 : i32
    %c0_i32_2 = arith.constant 0 : i32
    return %arg0, %c0_i32, %c0_i32_0, %c0_i32_1 : i32, i32, i32, i32
  }
  func.func @transform_1(%arg0: i32) -> (i32, i32) {
    %c0_i32 = arith.constant 0 : i32
    %c0_i32_0 = arith.constant 0 : i32
    %c0_i32_1 = arith.constant 0 : i32
    return %c0_i32, %c0_i32_0 : i32, i32
  }
  func.func @transform_2(%arg0: i32) -> (i32, i32) {
    %c0_i32 = arith.constant 0 : i32
    %c0_i32_0 = arith.constant 0 : i32
    %c0_i32_1 = arith.constant 0 : i32
    return %c0_i32, %c0_i32_0 : i32, i32
  }
  func.func @transform_3(%arg0: i32) -> (i32, i32, i32) {
    %c0_i32 = arith.constant 0 : i32
    %c0_i32_0 = arith.constant 0 : i32
    %c0_i32_1 = arith.constant 0 : i32
    return %arg0, %c0_i32, %c0_i32_0 : i32, i32, i32
  }
}

module attributes {stable_mosaic.version = 11 : i64} {
  func.func @_fc_head_kernel(%arg0: i32, %arg1: memref<16x3136xbf16, #tpu.memory_space<vmem>>, %arg2: memref<3136x128xbf16, #tpu.memory_space<vmem>>, %arg3: memref<1x128xf32, #tpu.memory_space<vmem>>, %arg4: memref<128x128xbf16, #tpu.memory_space<vmem>>, %arg5: memref<16x128xf32, #tpu.memory_space<vmem>>, %arg6: memref<1x16x128xf32, #tpu.memory_space<vmem>>) attributes {dimension_semantics = [#tpu.dimension_semantics<parallel>], iteration_bounds = array<i64: 2>, scalar_prefetch = 0 : i64, scratch_operands = 0 : i64, tpu.core_type = #tpu.core_type<tc>, window_params = [{pipeline_mode = #tpu.pipeline_mode<synchronous>, transform_indices = @transform_0, window_bounds = array<i64: 16, 3136>}, {transform_indices = @transform_1, window_bounds = array<i64: 3136, 128>}, {transform_indices = @transform_2, window_bounds = array<i64: 1, 128>}, {transform_indices = @transform_3, window_bounds = array<i64: 128, 128>}, {transform_indices = @transform_4, window_bounds = array<i64: 16, 128>}, {transform_indices = @transform_5, window_bounds = array<i64: 1, 16, 128>}]} {
    %c0 = arith.constant 0 : index
    %c0_0 = arith.constant 0 : index
    %0 = vector.load %arg1[%c0, %c0_0] : memref<16x3136xbf16, #tpu.memory_space<vmem>>, vector<16x3136xbf16>
    %c0_1 = arith.constant 0 : index
    %c0_2 = arith.constant 0 : index
    %1 = vector.load %arg2[%c0_1, %c0_2] : memref<3136x128xbf16, #tpu.memory_space<vmem>>, vector<3136x128xbf16>
    %cst = arith.constant dense<0.000000e+00> : vector<16x128xf32>
    %2 = tpu.matmul %0, %1, %cst {dimension_numbers = #tpu.dot_dimension_numbers<[1], [0], [0], [1], [0, 0, 1, 1], [], []>} : vector<16x3136xbf16>, vector<3136x128xbf16>, vector<16x128xf32> -> vector<16x128xf32>
    %c0_3 = arith.constant 0 : index
    %c0_4 = arith.constant 0 : index
    %3 = vector.load %arg3[%c0_3, %c0_4] : memref<1x128xf32, #tpu.memory_space<vmem>>, vector<1x128xf32>
    %4 = vector.broadcast %3 : vector<1x128xf32> to vector<16x128xf32>
    %5 = arith.addf %2, %4 : vector<16x128xf32>
    %c0_5 = arith.constant 0 : index
    %c0_6 = arith.constant 0 : index
    %6 = vector.load %arg5[%c0_5, %c0_6] : memref<16x128xf32, #tpu.memory_space<vmem>>, vector<16x128xf32>
    tpu.vector_store %arg5[%c0_5, %c0_6], %5 {strides = array<i32>} : memref<16x128xf32, #tpu.memory_space<vmem>>, vector<16x128xf32>,
    %7 = arith.truncf %5 : vector<16x128xf32> to vector<16x128xbf16>
    %c0_7 = arith.constant 0 : index
    %c0_8 = arith.constant 0 : index
    %8 = vector.load %arg4[%c0_7, %c0_8] : memref<128x128xbf16, #tpu.memory_space<vmem>>, vector<128x128xbf16>
    %cst_9 = arith.constant dense<0.000000e+00> : vector<16x128xf32>
    %9 = tpu.matmul %7, %8, %cst_9 {dimension_numbers = #tpu.dot_dimension_numbers<[1], [0], [0], [1], [0, 0, 1, 1], [], []>} : vector<16x128xbf16>, vector<128x128xbf16>, vector<16x128xf32> -> vector<16x128xf32>
    %c0_10 = arith.constant 0 : index
    %c0_11 = arith.constant 0 : index
    %c0_12 = arith.constant 0 : index
    %10 = vector.load %arg6[%c0_10, %c0_11, %c0_12] : memref<1x16x128xf32, #tpu.memory_space<vmem>>, vector<1x16x128xf32>
    %11 = vector.shape_cast %10 : vector<1x16x128xf32> to vector<16x128xf32>
    %12 = vector.shape_cast %9 : vector<16x128xf32> to vector<1x16x128xf32>
    tpu.vector_store %arg6[%c0_10, %c0_11, %c0_12], %12 {strides = array<i32>} : memref<1x16x128xf32, #tpu.memory_space<vmem>>, vector<1x16x128xf32>,
    return
  }
  func.func @transform_0(%arg0: i32) -> (i32, i32) {
    %c0_i32 = arith.constant 0 : i32
    %c0_i32_0 = arith.constant 0 : i32
    %c0_i32_1 = arith.constant 0 : i32
    return %c0_i32, %c0_i32_0 : i32, i32
  }
  func.func @transform_1(%arg0: i32) -> (i32, i32) {
    %c0_i32 = arith.constant 0 : i32
    %c0_i32_0 = arith.constant 0 : i32
    return %c0_i32, %arg0 : i32, i32
  }
  func.func @transform_2(%arg0: i32) -> (i32, i32) {
    %c0_i32 = arith.constant 0 : i32
    %c0_i32_0 = arith.constant 0 : i32
    return %c0_i32, %arg0 : i32, i32
  }
  func.func @transform_3(%arg0: i32) -> (i32, i32) {
    %c0_i32 = arith.constant 0 : i32
    %c0_i32_0 = arith.constant 0 : i32
    return %arg0, %c0_i32 : i32, i32
  }
  func.func @transform_4(%arg0: i32) -> (i32, i32) {
    %c0_i32 = arith.constant 0 : i32
    %c0_i32_0 = arith.constant 0 : i32
    return %c0_i32, %arg0 : i32, i32
  }
  func.func @transform_5(%arg0: i32) -> (i32, i32, i32) {
    %c0_i32 = arith.constant 0 : i32
    %c0_i32_0 = arith.constant 0 : i32
    %c0_i32_1 = arith.constant 0 : i32
    return %arg0, %c0_i32, %c0_i32_0 : i32, i32, i32
  }
}

</mosaic_0001>

<llo_original>
// kernel: mnist_cnn_forward.3
$region0: #{mnist_cnn_forward.3}
  #allocation0 [shape = 'u32[]', space=smem, size = 0x4, offset = 0x4, fixed_abs, tag = 'smem constant byte address 0x4 - core index']
  #allocation1 [shape = 'u32[144,128]{1,0:T(1,128)}', space=vmem, size = 0x12000, scoped, tag = 'internal scratch']
  %s0 = inlined_call_operand.vmem [shape: bf16[1,4,392,16], index: 0, kind: input, shape index: {}]
  %s1 = inlined_call_operand.vmem [shape: bf16[16,32], index: 1, kind: input, shape index: {}]
  %s2 = inlined_call_operand.vmem [shape: f32[1,32], index: 2, kind: input, shape index: {}]
  %s3 = inlined_call_operand.vmem [shape: bf16[1,392,32], index: 3, kind: output, shape index: {}]
  %s4 = sld [smem:[#allocation0]]
  $region22: #{mnist_cnn_forward.3} parent=0
    _
  %s6 = ssub.s32 1, %s4
  %s7 = scalar_select 0, %s6, %s4
  // Predicated region
  $region2: #{mnist_cnn_forward.3} parent=0 // pred_check
    _
  $region3: #{mnist_cnn_forward.3} parent=0 // pred_check_branch
    %9 = sbr.rel (0) target = $region5
  $region4: #{mnist_cnn_forward.3} parent=0 // pred_region
    _
  $region5: #{mnist_cnn_forward.3} parent=0 // pred_fallthru
    _
  // Predicated region
  $region6: #{mnist_cnn_forward.3} parent=0 // pred_check
    _
  $region7: #{mnist_cnn_forward.3} parent=0 // pred_check_branch
    %11 = sbr.rel (0) target = $region9
  $region8: #{mnist_cnn_forward.3} parent=0 // pred_region
    _
  $region9: #{mnist_cnn_forward.3} parent=0 // pred_fallthru
    _
  // Predicated region
  $region10: #{mnist_cnn_forward.3} parent=0 // pred_check
    _
  $region11: #{mnist_cnn_forward.3} parent=0 // pred_check_branch
    %13 = sbr.rel (0) target = $region13
  $region12: #{mnist_cnn_forward.3} parent=0 // pred_region
    _
  $region13: #{mnist_cnn_forward.3} parent=0 // pred_fallthru
    _
  %v15 = vld [vmem:[%s1] sm:$0xf]
  %v16 = vld [vmem:[%s1 + $0x4] sm:$0xf]
  %v17 = vld [vmem:[%s0] sm:$0xf]
  %v18 = vld [vmem:[%s0 + $0x4] sm:$0xf]
  %v19 = vld [vmem:[%s0 + $0x8] sm:$0xf]
  %v20 = vld [vmem:[%s0 + $0xc] sm:$0xf]
  %v21 = vld [vmem:[%s0 + $0x10] sm:$0xf]
  %v22 = vld [vmem:[%s0 + $0x14] sm:$0xf]
  %v23 = vld [vmem:[%s0 + $0x18] sm:$0xf]
  %v24 = vld [vmem:[%s0 + $0x1c] sm:$0xf]
  %v25 = vld [vmem:[%s0 + $0x20] sm:$0xf]
  %v26 = vld [vmem:[%s0 + $0x24] sm:$0xf]
  %v27 = vld [vmem:[%s0 + $0x28] sm:$0xf]
  %v28 = vld [vmem:[%s0 + $0x2c] sm:$0xf]
  %v29 = vld [vmem:[%s0 + $0x30] sm:$0xf]
  %v30 = vld [vmem:[%s0 + $0x34] sm:$0xf]
  %v31 = vld [vmem:[%s0 + $0x38] sm:$0xf]
  %v32 = vld [vmem:[%s0 + $0x3c] sm:$0xf]
  %v33 = vld [vmem:[%s0 + $0x40] sm:$0xf]
  %v34 = vld [vmem:[%s0 + $0x44] sm:$0xf]
  %v35 = vld [vmem:[%s0 + $0x48] sm:$0xf]
  %v36 = vld [vmem:[%s0 + $0x4c] sm:$0xf]
  %v37 = vld [vmem:[%s0 + $0x50] sm:$0xf]
  %v38 = vld [vmem:[%s0 + $0x54] sm:$0xf]
  %v39 = vld [vmem:[%s0 + $0x58] sm:$0xf]
  %v40 = vld [vmem:[%s0 + $0x5c] sm:$0xf]
  %v41 = vld [vmem:[%s0 + $0x60] sm:$0xf]
  %v42 = vld [vmem:[%s0 + $0x64] sm:$0xf]
  %v43 = vld [vmem:[%s0 + $0x68] sm:$0xf]
  %v44 = vld [vmem:[%s0 + $0x6c] sm:$0xf]
  %v45 = vld [vmem:[%s0 + $0x70] sm:$0xf]
  %v46 = vld [vmem:[%s0 + $0x74] sm:$0xf]
  %v47 = vld [vmem:[%s0 + $0x78] sm:$0xf]
  %v48 = vld [vmem:[%s0 + $0x7c] sm:$0xf]
  %v49 = vld [vmem:[%s0 + $0x80] sm:$0xf]
  %v50 = vld [vmem:[%s0 + $0x84] sm:$0xf]
  %v51 = vld [vmem:[%s0 + $0x88] sm:$0xf]
  %v52 = vld [vmem:[%s0 + $0x8c] sm:$0xf]
  %v53 = vld [vmem:[%s0 + $0x90] sm:$0xf]
  %v54 = vld [vmem:[%s0 + $0x94] sm:$0xf]
  %v55 = vld [vmem:[%s0 + $0x98] sm:$0xf]
  %v56 = vld [vmem:[%s0 + $0x9c] sm:$0xf]
  %v57 = vld [vmem:[%s0 + $0xa0] sm:$0xf]
  %v58 = vld [vmem:[%s0 + $0xa4] sm:$0xf]
  %v59 = vld [vmem:[%s0 + $0xa8] sm:$0xf]
  %v60 = vld [vmem:[%s0 + $0xac] sm:$0xf]
  %v61 = vld [vmem:[%s0 + $0xb0] sm:$0xf]
  %v62 = vld [vmem:[%s0 + $0xb4] sm:$0xf]
  %v63 = vld [vmem:[%s0 + $0xb8] sm:$0xf]
  %v64 = vld [vmem:[%s0 + $0xbc] sm:$0xf]
  %v65 = vld [vmem:[%s0 + $0xc0] sm:$0xf]
  %v115 = vunpack.c.l.b16 %v17
  %v116 = vunpack.c.l.b16 %v18
  %v117 = vunpack.c.l.b16 %v19
  %v118 = vunpack.c.l.b16 %v20
  %v119 = vunpack.c.l.b16 %v21
  %v120 = vunpack.c.l.b16 %v22
  %v121 = vunpack.c.l.b16 %v23
  %v122 = vunpack.c.l.b16 %v24
  %v123 = vunpack.c.l.b16 %v25
  %v124 = vunpack.c.l.b16 %v26
  %v125 = vunpack.c.l.b16 %v27
  %v126 = vunpack.c.l.b16 %v28
  %v127 = vunpack.c.l.b16 %v29
  %v128 = vunpack.c.l.b16 %v30
  %v129 = vunpack.c.l.b16 %v31
  %v130 = vunpack.c.l.b16 %v32
  %v131 = vunpack.c.l.b16 %v33
  %v132 = vunpack.c.l.b16 %v34
  %v133 = vunpack.c.l.b16 %v35
  %v134 = vunpack.c.l.b16 %v36
  %v135 = vunpack.c.l.b16 %v37
  %v136 = vunpack.c.l.b16 %v38
  %v137 = vunpack.c.l.b16 %v39
  %v138 = vunpack.c.l.b16 %v40
  %v139 = vunpack.c.l.b16 %v41
  %v140 = vunpack.c.l.b16 %v42
  %v141 = vunpack.c.l.b16 %v43
  %v142 = vunpack.c.l.b16 %v44
  %v143 = vunpack.c.l.b16 %v45
  %v144 = vunpack.c.l.b16 %v46
  %v145 = vunpack.c.l.b16 %v47
  %v146 = vunpack.c.l.b16 %v48
  %v147 = vunpack.c.l.b16 %v49
  %v148 = vunpack.c.l.b16 %v50
  %v149 = vunpack.c.l.b16 %v51
  %v150 = vunpack.c.l.b16 %v52
  %v151 = vunpack.c.l.b16 %v53
  %v152 = vunpack.c.l.b16 %v54
  %v153 = vunpack.c.l.b16 %v55
  %v154 = vunpack.c.l.b16 %v56
  %v155 = vunpack.c.l.b16 %v57
  %v156 = vunpack.c.l.b16 %v58
  %v157 = vunpack.c.l.b16 %v59
  %v158 = vunpack.c.l.b16 %v60
  %v159 = vunpack.c.l.b16 %v61
  %v160 = vunpack.c.l.b16 %v62
  %v161 = vunpack.c.l.b16 %v63
  %v162 = vunpack.c.l.b16 %v64
  %v163 = vunpack.c.l.b16 %v65
  %v164 = vpack.c.b16 %v116, %v115
  %v165 = vpack.c.b16 %v118, %v117
  %v166 = vpack.c.b16 %v120, %v119
  %v167 = vpack.c.b16 %v122, %v121
  %v168 = vpack.c.b16 %v124, %v123
  %v169 = vpack.c.b16 %v126, %v125
  %v170 = vpack.c.b16 %v128, %v127
  %v171 = vpack.c.b16 %v130, %v129
  %v172 = vpack.c.b16 %v132, %v131
  %v173 = vpack.c.b16 %v134, %v133
  %v174 = vpack.c.b16 %v136, %v135
  %v175 = vpack.c.b16 %v138, %v137
  %v176 = vpack.c.b16 %v140, %v139
  %v177 = vpack.c.b16 %v142, %v141
  %v178 = vpack.c.b16 %v144, %v143
  %v179 = vpack.c.b16 %v146, %v145
  %v180 = vpack.c.b16 %v148, %v147
  %v181 = vpack.c.b16 %v150, %v149
  %v182 = vpack.c.b16 %v152, %v151
  %v183 = vpack.c.b16 %v154, %v153
  %v184 = vpack.c.b16 %v156, %v155
  %v185 = vpack.c.b16 %v158, %v157
  %v186 = vpack.c.b16 %v160, %v159
  %v187 = vpack.c.b16 %v162, %v161
  %v188 = vpack.c.b16 %v163, %v163
  %v191 = vunpack.c.l.b16 %v15
  %v192 = vunpack.c.l.b16 %v16
  %v193 = vpack.c.b16 %v192, %v191
  %vm195 = vcmask 130048
  %v197 = vsel %vm195, %v164, 0
  %v200 = vsel %vm195, %v165, 0
  %v203 = vsel %vm195, %v166, 0
  %v206 = vsel %vm195, %v167, 0
  %v209 = vsel %vm195, %v168, 0
  %v212 = vsel %vm195, %v169, 0
  %v215 = vsel %vm195, %v170, 0
  %v218 = vsel %vm195, %v171, 0
  %v221 = vsel %vm195, %v172, 0
  %v224 = vsel %vm195, %v173, 0
  %v227 = vsel %vm195, %v174, 0
  %v230 = vsel %vm195, %v175, 0
  %v233 = vsel %vm195, %v176, 0
  %v236 = vsel %vm195, %v177, 0
  %v239 = vsel %vm195, %v178, 0
  %v242 = vsel %vm195, %v179, 0
  %v245 = vsel %vm195, %v180, 0
  %v248 = vsel %vm195, %v181, 0
  %v251 = vsel %vm195, %v182, 0
  %v254 = vsel %vm195, %v183, 0
  %v257 = vsel %vm195, %v184, 0
  %v260 = vsel %vm195, %v185, 0
  %v263 = vsel %vm195, %v186, 0
  %v266 = vsel %vm195, %v187, 0
  %v269 = vsel %vm195, %v188, 0
  %271 = vmatprep.subr.bf16.mxu0 0
  %272 = vmatpush1.bf16.msra.mxu0 0
  %273 = vmatprep.subr.bf16.mxu0 0
  %274 = vmatpush1.bf16.msra.mxu0 0
  %275 = vmatprep.subr.bf16.mxu0 0
  %276 = vmatpush1.bf16.msra.mxu0 0
  %277 = vmatprep.subr.bf16.mxu0 0
  %278 = vmatpush1.bf16.msra.mxu0 0
  %279 = vmatprep.subr.bf16.mxu0 0
  %280 = vmatpush1.bf16.msra.mxu0 0
  %281 = vmatprep.subr.bf16.mxu0 0
  %282 = vmatpush1.bf16.msra.mxu0 0
  %283 = vmatprep.subr.bf16.mxu0 0
  %284 = vmatpush1.bf16.msra.mxu0 0
  %285 = vmatprep.subr.bf16.mxu0 0
  %286 = vmatpush1.bf16.msra.mxu0 %v193
  %287 = vmatprep.subr.bf16.mxu0 0
  %288 = vmatpush2.bf16.msra.mxu0 0
  %289 = vmatprep.subr.bf16.mxu0 0
  %290 = vmatpush2.bf16.msra.mxu0 0
  %291 = vmatprep.subr.bf16.mxu0 0
  %292 = vmatpush2.bf16.msra.mxu0 0
  %293 = vmatprep.subr.bf16.mxu0 0
  %294 = vmatpush2.bf16.msra.mxu0 0
  %295 = vmatprep.subr.bf16.mxu0 0
  %296 = vmatpush2.bf16.msra.mxu0 0
  %297 = vmatprep.subr.bf16.mxu0 0
  %298 = vmatpush2.bf16.msra.mxu0 0
  %299 = vmatprep.subr.bf16.mxu0 0
  %300 = vmatpush2.bf16.msra.mxu0 0
  %301 = vmatprep.subr.bf16.mxu0 0
  %302 = vmatpush2.bf16.msra.mxu0 0
  %303 = vmatprep.mubr.bf16.mxu0 0
  %304 = vmatmul.mubr.bf16.gmra.mxu0 %v197
  %v305 = vpop.f32.mrf.mxu0
  %v306 = vadd.f32 0.0, %v305
  %v307 = vpop.f32.mrf.mxu0
  %v308 = vpop.f32.mrf.mxu0
  %v309 = vadd.f32 0.0, %v308
  %v310 = vpop.f32.mrf.mxu0
  %311 = vmatprep.mubr.bf16.mxu0 0
  %312 = vmatmul.mubr.bf16.gmra.mxu0 %v200
  %v313 = vpop.f32.mrf.mxu0
  %v314 = vadd.f32 0.0, %v313
  %v315 = vpop.f32.mrf.mxu0
  %v316 = vpop.f32.mrf.mxu0
  %v317 = vadd.f32 0.0, %v316
  %v318 = vpop.f32.mrf.mxu0
  %319 = vmatprep.mubr.bf16.mxu0 0
  %320 = vmatmul.mubr.bf16.gmra.mxu0 %v203
  %v321 = vpop.f32.mrf.mxu0
  %v322 = vadd.f32 0.0, %v321
  %v323 = vpop.f32.mrf.mxu0
  %v324 = vpop.f32.mrf.mxu0
  %v325 = vadd.f32 0.0, %v324
  %v326 = vpop.f32.mrf.mxu0
  %327 = vmatprep.mubr.bf16.mxu0 0
  %328 = vmatmul.mubr.bf16.gmra.mxu0 %v206
  %v329 = vpop.f32.mrf.mxu0
  %v330 = vadd.f32 0.0, %v329
  %v331 = vpop.f32.mrf.mxu0
  %v332 = vpop.f32.mrf.mxu0
  %v333 = vadd.f32 0.0, %v332
  %v334 = vpop.f32.mrf.mxu0
  %335 = vmatprep.mubr.bf16.mxu0 0
  %336 = vmatmul.mubr.bf16.gmra.mxu0 %v209
  %v337 = vpop.f32.mrf.mxu0
  %v338 = vadd.f32 0.0, %v337
  %v339 = vpop.f32.mrf.mxu0
  %v340 = vpop.f32.mrf.mxu0
  %v341 = vadd.f32 0.0, %v340
  %v342 = vpop.f32.mrf.mxu0
  %343 = vmatprep.mubr.bf16.mxu0 0
  %344 = vmatmul.mubr.bf16.gmra.mxu0 %v212
  %v345 = vpop.f32.mrf.mxu0
  %v346 = vadd.f32 0.0, %v345
  %v347 = vpop.f32.mrf.mxu0
  %v348 = vpop.f32.mrf.mxu0
  %v349 = vadd.f32 0.0, %v348
  %v350 = vpop.f32.mrf.mxu0
  %351 = vmatprep.mubr.bf16.mxu0 0
  %352 = vmatmul.mubr.bf16.gmra.mxu0 %v215
  %v353 = vpop.f32.mrf.mxu0
  %v354 = vadd.f32 0.0, %v353
  %v355 = vpop.f32.mrf.mxu0
  %v356 = vpop.f32.mrf.mxu0
  %v357 = vadd.f32 0.0, %v356
  %v358 = vpop.f32.mrf.mxu0
  %359 = vmatprep.mubr.bf16.mxu0 0
  %360 = vmatmul.mubr.bf16.gmra.mxu0 %v218
  %v361 = vpop.f32.mrf.mxu0
  %v362 = vadd.f32 0.0, %v361
  %v363 = vpop.f32.mrf.mxu0
  %v364 = vpop.f32.mrf.mxu0
  %v365 = vadd.f32 0.0, %v364
  %v366 = vpop.f32.mrf.mxu0
  %367 = vmatprep.mubr.bf16.mxu0 0
  %368 = vmatmul.mubr.bf16.gmra.mxu0 %v221
  %v369 = vpop.f32.mrf.mxu0
  %v370 = vadd.f32 0.0, %v369
  %v371 = vpop.f32.mrf.mxu0
  %v372 = vpop.f32.mrf.mxu0
  %v373 = vadd.f32 0.0, %v372
  %v374 = vpop.f32.mrf.mxu0
  %375 = vmatprep.mubr.bf16.mxu0 0
  %376 = vmatmul.mubr.bf16.gmra.mxu0 %v224
  %v377 = vpop.f32.mrf.mxu0
  %v378 = vadd.f32 0.0, %v377
  %v379 = vpop.f32.mrf.mxu0
  %v380 = vpop.f32.mrf.mxu0
  %v381 = vadd.f32 0.0, %v380
  %v382 = vpop.f32.mrf.mxu0
  %383 = vmatprep.mubr.bf16.mxu0 0
  %384 = vmatmul.mubr.bf16.gmra.mxu0 %v227
  %v385 = vpop.f32.mrf.mxu0
  %v386 = vadd.f32 0.0, %v385
  %v387 = vpop.f32.mrf.mxu0
  %v388 = vpop.f32.mrf.mxu0
  %v389 = vadd.f32 0.0, %v388
  %v390 = vpop.f32.mrf.mxu0
  %391 = vmatprep.mubr.bf16.mxu0 0
  %392 = vmatmul.mubr.bf16.gmra.mxu0 %v230
  %v393 = vpop.f32.mrf.mxu0
  %v394 = vadd.f32 0.0, %v393
  %v395 = vpop.f32.mrf.mxu0
  %v396 = vpop.f32.mrf.mxu0
  %v397 = vadd.f32 0.0, %v396
  %v398 = vpop.f32.mrf.mxu0
  %399 = vmatprep.mubr.bf16.mxu0 0
  %400 = vmatmul.mubr.bf16.gmra.mxu0 %v233
  %v401 = vpop.f32.mrf.mxu0
  %v402 = vadd.f32 0.0, %v401
  %v403 = vpop.f32.mrf.mxu0
  %v404 = vpop.f32.mrf.mxu0
  %v405 = vadd.f32 0.0, %v404
  %v406 = vpop.f32.mrf.mxu0
  %407 = vmatprep.mubr.bf16.mxu0 0
  %408 = vmatmul.mubr.bf16.gmra.mxu0 %v236
  %v409 = vpop.f32.mrf.mxu0
  %v410 = vadd.f32 0.0, %v409
  %v411 = vpop.f32.mrf.mxu0
  %v412 = vpop.f32.mrf.mxu0
  %v413 = vadd.f32 0.0, %v412
  %v414 = vpop.f32.mrf.mxu0
  %415 = vmatprep.mubr.bf16.mxu0 0
  %416 = vmatmul.mubr.bf16.gmra.mxu0 %v239
  %v417 = vpop.f32.mrf.mxu0
  %v418 = vadd.f32 0.0, %v417
  %v419 = vpop.f32.mrf.mxu0
  %v420 = vpop.f32.mrf.mxu0
  %v421 = vadd.f32 0.0, %v420
  %v422 = vpop.f32.mrf.mxu0
  %423 = vmatprep.mubr.bf16.mxu0 0
  %424 = vmatmul.mubr.bf16.gmra.mxu0 %v242
  %v425 = vpop.f32.mrf.mxu0
  %v426 = vadd.f32 0.0, %v425
  %v427 = vpop.f32.mrf.mxu0
  %v428 = vpop.f32.mrf.mxu0
  %v429 = vadd.f32 0.0, %v428
  %v430 = vpop.f32.mrf.mxu0
  %431 = vmatprep.mubr.bf16.mxu0 0
  %432 = vmatmul.mubr.bf16.gmra.mxu0 %v245
  %v433 = vpop.f32.mrf.mxu0
  %v434 = vadd.f32 0.0, %v433
  %v435 = vpop.f32.mrf.mxu0
  %v436 = vpop.f32.mrf.mxu0
  %v437 = vadd.f32 0.0, %v436
  %v438 = vpop.f32.mrf.mxu0
  %439 = vmatprep.mubr.bf16.mxu0 0
  %440 = vmatmul.mubr.bf16.gmra.mxu0 %v248
  %v441 = vpop.f32.mrf.mxu0
  %v442 = vadd.f32 0.0, %v441
  %v443 = vpop.f32.mrf.mxu0
  %v444 = vpop.f32.mrf.mxu0
  %v445 = vadd.f32 0.0, %v444
  %v446 = vpop.f32.mrf.mxu0
  %447 = vmatprep.mubr.bf16.mxu0 0
  %448 = vmatmul.mubr.bf16.gmra.mxu0 %v251
  %v449 = vpop.f32.mrf.mxu0
  %v450 = vadd.f32 0.0, %v449
  %v451 = vpop.f32.mrf.mxu0
  %v452 = vpop.f32.mrf.mxu0
  %v453 = vadd.f32 0.0, %v452
  %v454 = vpop.f32.mrf.mxu0
  %455 = vmatprep.mubr.bf16.mxu0 0
  %456 = vmatmul.mubr.bf16.gmra.mxu0 %v254
  %v457 = vpop.f32.mrf.mxu0
  %v458 = vadd.f32 0.0, %v457
  %v459 = vpop.f32.mrf.mxu0
  %v460 = vpop.f32.mrf.mxu0
  %v461 = vadd.f32 0.0, %v460
  %v462 = vpop.f32.mrf.mxu0
  %463 = vmatprep.mubr.bf16.mxu0 0
  %464 = vmatmul.mubr.bf16.gmra.mxu0 %v257
  %v465 = vpop.f32.mrf.mxu0
  %v466 = vadd.f32 0.0, %v465
  %v467 = vpop.f32.mrf.mxu0
  %v468 = vpop.f32.mrf.mxu0
  %v469 = vadd.f32 0.0, %v468
  %v470 = vpop.f32.mrf.mxu0
  %471 = vmatprep.mubr.bf16.mxu0 0
  %472 = vmatmul.mubr.bf16.gmra.mxu0 %v260
  %v473 = vpop.f32.mrf.mxu0
  %v474 = vadd.f32 0.0, %v473
  %v475 = vpop.f32.mrf.mxu0
  %v476 = vpop.f32.mrf.mxu0
  %v477 = vadd.f32 0.0, %v476
  %v478 = vpop.f32.mrf.mxu0
  %479 = vmatprep.mubr.bf16.mxu0 0
  %480 = vmatmul.mubr.bf16.gmra.mxu0 %v263
  %v481 = vpop.f32.mrf.mxu0
  %v482 = vadd.f32 0.0, %v481
  %v483 = vpop.f32.mrf.mxu0
  %v484 = vpop.f32.mrf.mxu0
  %v485 = vadd.f32 0.0, %v484
  %v486 = vpop.f32.mrf.mxu0
  %487 = vmatprep.mubr.bf16.mxu0 0
  %488 = vmatmul.mubr.bf16.gmra.mxu0 %v266
  %v489 = vpop.f32.mrf.mxu0
  %v490 = vadd.f32 0.0, %v489
  %v491 = vpop.f32.mrf.mxu0
  %v492 = vpop.f32.mrf.mxu0
  %v493 = vadd.f32 0.0, %v492
  %v494 = vpop.f32.mrf.mxu0
  %495 = vmatprep.mubr.bf16.mxu0 0
  %496 = vmatmul.mubr.bf16.gmra.mxu0 %v269
  %v497 = vpop.f32.mrf.mxu0
  %v498 = vadd.f32 0.0, %v497
  %v499 = vpop.f32.mrf.mxu0
  %v500 = vpop.f32.mrf.mxu0
  %v501 = vpop.f32.mrf.mxu0
  %502 = vdwg.mxu0
  %s503 = scalar_lea.vmem %s0, 196
  %v504 = vld [vmem:[%s503] sm:$0xf]
  %v505 = vld [vmem:[%s503 + $0x4] sm:$0xf]
  %v506 = vld [vmem:[%s503 + $0x8] sm:$0xf]
  %v507 = vld [vmem:[%s503 + $0xc] sm:$0xf]
  %v508 = vld [vmem:[%s503 + $0x10] sm:$0xf]
  %v509 = vld [vmem:[%s503 + $0x14] sm:$0xf]
  %v510 = vld [vmem:[%s503 + $0x18] sm:$0xf]
  %v511 = vld [vmem:[%s503 + $0x1c] sm:$0xf]
  %v512 = vld [vmem:[%s503 + $0x20] sm:$0xf]
  %v513 = vld [vmem:[%s503 + $0x24] sm:$0xf]
  %v514 = vld [vmem:[%s503 + $0x28] sm:$0xf]
  %v515 = vld [vmem:[%s503 + $0x2c] sm:$0xf]
  %v516 = vld [vmem:[%s503 + $0x30] sm:$0xf]
  %v517 = vld [vmem:[%s503 + $0x34] sm:$0xf]
  %v518 = vld [vmem:[%s503 + $0x38] sm:$0xf]
  %v519 = vld [vmem:[%s503 + $0x3c] sm:$0xf]
  %v520 = vld [vmem:[%s503 + $0x40] sm:$0xf]
  %v521 = vld [vmem:[%s503 + $0x44] sm:$0xf]
  %v522 = vld [vmem:[%s503 + $0x48] sm:$0xf]
  %v523 = vld [vmem:[%s503 + $0x4c] sm:$0xf]
  %v524 = vld [vmem:[%s503 + $0x50] sm:$0xf]
  %v525 = vld [vmem:[%s503 + $0x54] sm:$0xf]
  %v526 = vld [vmem:[%s503 + $0x58] sm:$0xf]
  %v527 = vld [vmem:[%s503 + $0x5c] sm:$0xf]
  %v528 = vld [vmem:[%s503 + $0x60] sm:$0xf]
  %v529 = vld [vmem:[%s503 + $0x64] sm:$0xf]
  %v530 = vld [vmem:[%s503 + $0x68] sm:$0xf]
  %v531 = vld [vmem:[%s503 + $0x6c] sm:$0xf]
  %v532 = vld [vmem:[%s503 + $0x70] sm:$0xf]
  %v533 = vld [vmem:[%s503 + $0x74] sm:$0xf]
  %v534 = vld [vmem:[%s503 + $0x78] sm:$0xf]
  %v535 = vld [vmem:[%s503 + $0x7c] sm:$0xf]
  %v536 = vld [vmem:[%s503 + $0x80] sm:$0xf]
  %v537 = vld [vmem:[%s503 + $0x84] sm:$0xf]
  %v538 = vld [vmem:[%s503 + $0x88] sm:$0xf]
  %v539 = vld [vmem:[%s503 + $0x8c] sm:$0xf]
  %v540 = vld [vmem:[%s503 + $0x90] sm:$0xf]
  %v541 = vld [vmem:[%s503 + $0x94] sm:$0xf]
  %v542 = vld [vmem:[%s503 + $0x98] sm:$0xf]
  %v543 = vld [vmem:[%s503 + $0x9c] sm:$0xf]
  %v544 = vld [vmem:[%s503 + $0xa0] sm:$0xf]
  %v545 = vld [vmem:[%s503 + $0xa4] sm:$0xf]
  %v546 = vld [vmem:[%s503 + $0xa8] sm:$0xf]
  %v547 = vld [vmem:[%s503 + $0xac] sm:$0xf]
  %v548 = vld [vmem:[%s503 + $0xb0] sm:$0xf]
  %v549 = vld [vmem:[%s503 + $0xb4] sm:$0xf]
  %v550 = vld [vmem:[%s503 + $0xb8] sm:$0xf]
  %v551 = vld [vmem:[%s503 + $0xbc] sm:$0xf]
  %v552 = vld [vmem:[%s503 + $0xc0] sm:$0xf]
  %v602 = vunpack.c.l.b16 %v504
  %v603 = vunpack.c.l.b16 %v505
  %v604 = vunpack.c.l.b16 %v506
  %v605 = vunpack.c.l.b16 %v507
  %v606 = vunpack.c.l.b16 %v508
  %v607 = vunpack.c.l.b16 %v509
  %v608 = vunpack.c.l.b16 %v510
  %v609 = vunpack.c.l.b16 %v511
  %v610 = vunpack.c.l.b16 %v512
  %v611 = vunpack.c.l.b16 %v513
  %v612 = vunpack.c.l.b16 %v514
  %v613 = vunpack.c.l.b16 %v515
  %v614 = vunpack.c.l.b16 %v516
  %v615 = vunpack.c.l.b16 %v517
  %v616 = vunpack.c.l.b16 %v518
  %v617 = vunpack.c.l.b16 %v519
  %v618 = vunpack.c.l.b16 %v520
  %v619 = vunpack.c.l.b16 %v521
  %v620 = vunpack.c.l.b16 %v522
  %v621 = vunpack.c.l.b16 %v523
  %v622 = vunpack.c.l.b16 %v524
  %v623 = vunpack.c.l.b16 %v525
  %v624 = vunpack.c.l.b16 %v526
  %v625 = vunpack.c.l.b16 %v527
  %v626 = vunpack.c.l.b16 %v528
  %v627 = vunpack.c.l.b16 %v529
  %v628 = vunpack.c.l.b16 %v530
  %v629 = vunpack.c.l.b16 %v531
  %v630 = vunpack.c.l.b16 %v532
  %v631 = vunpack.c.l.b16 %v533
  %v632 = vunpack.c.l.b16 %v534
  %v633 = vunpack.c.l.b16 %v535
  %v634 = vunpack.c.l.b16 %v536
  %v635 = vunpack.c.l.b16 %v537
  %v636 = vunpack.c.l.b16 %v538
  %v637 = vunpack.c.l.b16 %v539
  %v638 = vunpack.c.l.b16 %v540
  %v639 = vunpack.c.l.b16 %v541
  %v640 = vunpack.c.l.b16 %v542
  %v641 = vunpack.c.l.b16 %v543
  %v642 = vunpack.c.l.b16 %v544
  %v643 = vunpack.c.l.b16 %v545
  %v644 = vunpack.c.l.b16 %v546
  %v645 = vunpack.c.l.b16 %v547
  %v646 = vunpack.c.l.b16 %v548
  %v647 = vunpack.c.l.b16 %v549
  %v648 = vunpack.c.l.b16 %v550
  %v649 = vunpack.c.l.b16 %v551
  %v650 = vunpack.c.l.b16 %v552
  %v651 = vpack.c.b16 %v603, %v602
  %v652 = vpack.c.b16 %v605, %v604
  %v653 = vpack.c.b16 %v607, %v606
  %v654 = vpack.c.b16 %v609, %v608
  %v655 = vpack.c.b16 %v611, %v610
  %v656 = vpack.c.b16 %v613, %v612
  %v657 = vpack.c.b16 %v615, %v614
  %v658 = vpack.c.b16 %v617, %v616
  %v659 = vpack.c.b16 %v619, %v618
  %v660 = vpack.c.b16 %v621, %v620
  %v661 = vpack.c.b16 %v623, %v622
  %v662 = vpack.c.b16 %v625, %v624
  %v663 = vpack.c.b16 %v627, %v626
  %v664 = vpack.c.b16 %v629, %v628
  %v665 = vpack.c.b16 %v631, %v630
  %v666 = vpack.c.b16 %v633, %v632
  %v667 = vpack.c.b16 %v635, %v634
  %v668 = vpack.c.b16 %v637, %v636
  %v669 = vpack.c.b16 %v639, %v638
  %v670 = vpack.c.b16 %v641, %v640
  %v671 = vpack.c.b16 %v643, %v642
  %v672 = vpack.c.b16 %v645, %v644
  %v673 = vpack.c.b16 %v647, %v646
  %v674 = vpack.c.b16 %v649, %v648
  %v675 = vpack.c.b16 %v650, %v650
  %v677 = vsel %vm195, %v651, 0
  %v680 = vsel %vm195, %v652, 0
  %v683 = vsel %vm195, %v653, 0
  %v686 = vsel %vm195, %v654, 0
  %v689 = vsel %vm195, %v655, 0
  %v692 = vsel %vm195, %v656, 0
  %v695 = vsel %vm195, %v657, 0
  %v698 = vsel %vm195, %v658, 0
  %v701 = vsel %vm195, %v659, 0
  %v704 = vsel %vm195, %v660, 0
  %v707 = vsel %vm195, %v661, 0
  %v710 = vsel %vm195, %v662, 0
  %v713 = vsel %vm195, %v663, 0
  %v716 = vsel %vm195, %v664, 0
  %v719 = vsel %vm195, %v665, 0
  %v722 = vsel %vm195, %v666, 0
  %v725 = vsel %vm195, %v667, 0
  %v728 = vsel %vm195, %v668, 0
  %v731 = vsel %vm195, %v669, 0
  %v734 = vsel %vm195, %v670, 0
  %v737 = vsel %vm195, %v671, 0
  %v740 = vsel %vm195, %v672, 0
  %v743 = vsel %vm195, %v673, 0
  %v746 = vsel %vm195, %v674, 0
  %v749 = vsel %vm195, %v675, 0
  %751 = vmatprep.subr.bf16.mxu0 0
  %752 = vmatpush1.bf16.msra.mxu0 0
  %753 = vmatprep.subr.bf16.mxu0 0
  %754 = vmatpush1.bf16.msra.mxu0 0
  %755 = vmatprep.subr.bf16.mxu0 0
  %756 = vmatpush1.bf16.msra.mxu0 0
  %757 = vmatprep.subr.bf16.mxu0 0
  %758 = vmatpush1.bf16.msra.mxu0 0
  %759 = vmatprep.subr.bf16.mxu0 0
  %760 = vmatpush1.bf16.msra.mxu0 0
  %761 = vmatprep.subr.bf16.mxu0 0
  %762 = vmatpush1.bf16.msra.mxu0 0
  %763 = vmatprep.subr.bf16.mxu0 0
  %764 = vmatpush1.bf16.msra.mxu0 0
  %765 = vmatprep.subr.bf16.mxu0 0
  %766 = vmatpush1.bf16.msra.mxu0 %v193
  %767 = vmatprep.subr.bf16.mxu0 0
  %768 = vmatpush2.bf16.msra.mxu0 0
  %769 = vmatprep.subr.bf16.mxu0 0
  %770 = vmatpush2.bf16.msra.mxu0 0
  %771 = vmatprep.subr.bf16.mxu0 0
  %772 = vmatpush2.bf16.msra.mxu0 0
  %773 = vmatprep.subr.bf16.mxu0 0
  %774 = vmatpush2.bf16.msra.mxu0 0
  %775 = vmatprep.subr.bf16.mxu0 0
  %776 = vmatpush2.bf16.msra.mxu0 0
  %777 = vmatprep.subr.bf16.mxu0 0
  %778 = vmatpush2.bf16.msra.mxu0 0
  %779 = vmatprep.subr.bf16.mxu0 0
  %780 = vmatpush2.bf16.msra.mxu0 0
  %781 = vmatprep.subr.bf16.mxu0 0
  %782 = vmatpush2.bf16.msra.mxu0 0
  %783 = vmatprep.mubr.bf16.mxu0 0
  %784 = vmatmul.mubr.bf16.gmra.mxu0 %v677
  %v785 = vpop.f32.mrf.mxu0
  %v786 = vadd.f32 0.0, %v785
  %v787 = vpop.f32.mrf.mxu0
  %v788 = vpop.f32.mrf.mxu0
  %v789 = vadd.f32 0.0, %v788
  %v790 = vpop.f32.mrf.mxu0
  %791 = vmatprep.mubr.bf16.mxu0 0
  %792 = vmatmul.mubr.bf16.gmra.mxu0 %v680
  %v793 = vpop.f32.mrf.mxu0
  %v794 = vadd.f32 0.0, %v793
  %v795 = vpop.f32.mrf.mxu0
  %v796 = vpop.f32.mrf.mxu0
  %v797 = vadd.f32 0.0, %v796
  %v798 = vpop.f32.mrf.mxu0
  %799 = vmatprep.mubr.bf16.mxu0 0
  %800 = vmatmul.mubr.bf16.gmra.mxu0 %v683
  %v801 = vpop.f32.mrf.mxu0
  %v802 = vadd.f32 0.0, %v801
  %v803 = vpop.f32.mrf.mxu0
  %v804 = vpop.f32.mrf.mxu0
  %v805 = vadd.f32 0.0, %v804
  %v806 = vpop.f32.mrf.mxu0
  %807 = vmatprep.mubr.bf16.mxu0 0
  %808 = vmatmul.mubr.bf16.gmra.mxu0 %v686
  %v809 = vpop.f32.mrf.mxu0
  %v810 = vadd.f32 0.0, %v809
  %v811 = vpop.f32.mrf.mxu0
  %v812 = vpop.f32.mrf.mxu0
  %v813 = vadd.f32 0.0, %v812
  %v814 = vpop.f32.mrf.mxu0
  %815 = vmatprep.mubr.bf16.mxu0 0
  %816 = vmatmul.mubr.bf16.gmra.mxu0 %v689
  %v817 = vpop.f32.mrf.mxu0
  %v818 = vadd.f32 0.0, %v817
  %v819 = vpop.f32.mrf.mxu0
  %v820 = vpop.f32.mrf.mxu0
  %v821 = vadd.f32 0.0, %v820
  %v822 = vpop.f32.mrf.mxu0
  %823 = vmatprep.mubr.bf16.mxu0 0
  %824 = vmatmul.mubr.bf16.gmra.mxu0 %v692
  %v825 = vpop.f32.mrf.mxu0
  %v826 = vadd.f32 0.0, %v825
  %v827 = vpop.f32.mrf.mxu0
  %v828 = vpop.f32.mrf.mxu0
  %v829 = vadd.f32 0.0, %v828
  %v830 = vpop.f32.mrf.mxu0
  %831 = vmatprep.mubr.bf16.mxu0 0
  %832 = vmatmul.mubr.bf16.gmra.mxu0 %v695
  %v833 = vpop.f32.mrf.mxu0
  %v834 = vadd.f32 0.0, %v833
  %v835 = vpop.f32.mrf.mxu0
  %v836 = vpop.f32.mrf.mxu0
  %v837 = vadd.f32 0.0, %v836
  %v838 = vpop.f32.mrf.mxu0
  %839 = vmatprep.mubr.bf16.mxu0 0
  %840 = vmatmul.mubr.bf16.gmra.mxu0 %v698
  %v841 = vpop.f32.mrf.mxu0
  %v842 = vadd.f32 0.0, %v841
  %v843 = vpop.f32.mrf.mxu0
  %v844 = vpop.f32.mrf.mxu0
  %v845 = vadd.f32 0.0, %v844
  %v846 = vpop.f32.mrf.mxu0
  %847 = vmatprep.mubr.bf16.mxu0 0
  %848 = vmatmul.mubr.bf16.gmra.mxu0 %v701
  %v849 = vpop.f32.mrf.mxu0
  %v850 = vadd.f32 0.0, %v849
  %v851 = vpop.f32.mrf.mxu0
  %v852 = vpop.f32.mrf.mxu0
  %v853 = vadd.f32 0.0, %v852
  %v854 = vpop.f32.mrf.mxu0
  %855 = vmatprep.mubr.bf16.mxu0 0
  %856 = vmatmul.mubr.bf16.gmra.mxu0 %v704
  %v857 = vpop.f32.mrf.mxu0
  %v858 = vadd.f32 0.0, %v857
  %v859 = vpop.f32.mrf.mxu0
  %v860 = vpop.f32.mrf.mxu0
  %v861 = vadd.f32 0.0, %v860
  %v862 = vpop.f32.mrf.mxu0
  %863 = vmatprep.mubr.bf16.mxu0 0
  %864 = vmatmul.mubr.bf16.gmra.mxu0 %v707
  %v865 = vpop.f32.mrf.mxu0
  %v866 = vadd.f32 0.0, %v865
  %v867 = vpop.f32.mrf.mxu0
  %v868 = vpop.f32.mrf.mxu0
  %v869 = vadd.f32 0.0, %v868
  %v870 = vpop.f32.mrf.mxu0
  %871 = vmatprep.mubr.bf16.mxu0 0
  %872 = vmatmul.mubr.bf16.gmra.mxu0 %v710
  %v873 = vpop.f32.mrf.mxu0
  %v874 = vadd.f32 0.0, %v873
  %v875 = vpop.f32.mrf.mxu0
  %v876 = vpop.f32.mrf.mxu0
  %v877 = vadd.f32 0.0, %v876
  %v878 = vpop.f32.mrf.mxu0
  %879 = vmatprep.mubr.bf16.mxu0 0
  %880 = vmatmul.mubr.bf16.gmra.mxu0 %v713
  %v881 = vpop.f32.mrf.mxu0
  %v882 = vadd.f32 0.0, %v881
  %v883 = vpop.f32.mrf.mxu0
  %v884 = vpop.f32.mrf.mxu0
  %v885 = vadd.f32 0.0, %v884
  %v886 = vpop.f32.mrf.mxu0
  %887 = vmatprep.mubr.bf16.mxu0 0
  %888 = vmatmul.mubr.bf16.gmra.mxu0 %v716
  %v889 = vpop.f32.mrf.mxu0
  %v890 = vadd.f32 0.0, %v889
  %v891 = vpop.f32.mrf.mxu0
  %v892 = vpop.f32.mrf.mxu0
  %v893 = vadd.f32 0.0, %v892
  %v894 = vpop.f32.mrf.mxu0
  %895 = vmatprep.mubr.bf16.mxu0 0
  %896 = vmatmul.mubr.bf16.gmra.mxu0 %v719
  %v897 = vpop.f32.mrf.mxu0
  %v898 = vadd.f32 0.0, %v897
  %v899 = vpop.f32.mrf.mxu0
  %v900 = vpop.f32.mrf.mxu0
  %v901 = vadd.f32 0.0, %v900
  %v902 = vpop.f32.mrf.mxu0
  %903 = vmatprep.mubr.bf16.mxu0 0
  %904 = vmatmul.mubr.bf16.gmra.mxu0 %v722
  %v905 = vpop.f32.mrf.mxu0
  %v906 = vadd.f32 0.0, %v905
  %v907 = vpop.f32.mrf.mxu0
  %v908 = vpop.f32.mrf.mxu0
  %v909 = vadd.f32 0.0, %v908
  %v910 = vpop.f32.mrf.mxu0
  %911 = vmatprep.mubr.bf16.mxu0 0
  %912 = vmatmul.mubr.bf16.gmra.mxu0 %v725
  %v913 = vpop.f32.mrf.mxu0
  %v914 = vadd.f32 0.0, %v913
  %v915 = vpop.f32.mrf.mxu0
  %v916 = vpop.f32.mrf.mxu0
  %v917 = vadd.f32 0.0, %v916
  %v918 = vpop.f32.mrf.mxu0
  %919 = vmatprep.mubr.bf16.mxu0 0
  %920 = vmatmul.mubr.bf16.gmra.mxu0 %v728
  %v921 = vpop.f32.mrf.mxu0
  %v922 = vadd.f32 0.0, %v921
  %v923 = vpop.f32.mrf.mxu0
  %v924 = vpop.f32.mrf.mxu0
  %v925 = vadd.f32 0.0, %v924
  %v926 = vpop.f32.mrf.mxu0
  %927 = vmatprep.mubr.bf16.mxu0 0
  %928 = vmatmul.mubr.bf16.gmra.mxu0 %v731
  %v929 = vpop.f32.mrf.mxu0
  %v930 = vadd.f32 0.0, %v929
  %v931 = vpop.f32.mrf.mxu0
  %v932 = vpop.f32.mrf.mxu0
  %v933 = vadd.f32 0.0, %v932
  %v934 = vpop.f32.mrf.mxu0
  %935 = vmatprep.mubr.bf16.mxu0 0
  %936 = vmatmul.mubr.bf16.gmra.mxu0 %v734
  %v937 = vpop.f32.mrf.mxu0
  %v938 = vadd.f32 0.0, %v937
  %v939 = vpop.f32.mrf.mxu0
  %v940 = vpop.f32.mrf.mxu0
  %v941 = vadd.f32 0.0, %v940
  %v942 = vpop.f32.mrf.mxu0
  %943 = vmatprep.mubr.bf16.mxu0 0
  %944 = vmatmul.mubr.bf16.gmra.mxu0 %v737
  %v945 = vpop.f32.mrf.mxu0
  %v946 = vadd.f32 0.0, %v945
  %v947 = vpop.f32.mrf.mxu0
  %v948 = vpop.f32.mrf.mxu0
  %v949 = vadd.f32 0.0, %v948
  %v950 = vpop.f32.mrf.mxu0
  %951 = vmatprep.mubr.bf16.mxu0 0
  %952 = vmatmul.mubr.bf16.gmra.mxu0 %v740
  %v953 = vpop.f32.mrf.mxu0
  %v954 = vadd.f32 0.0, %v953
  %v955 = vpop.f32.mrf.mxu0
  %v956 = vpop.f32.mrf.mxu0
  %v957 = vadd.f32 0.0, %v956
  %v958 = vpop.f32.mrf.mxu0
  %959 = vmatprep.mubr.bf16.mxu0 0
  %960 = vmatmul.mubr.bf16.gmra.mxu0 %v743
  %v961 = vpop.f32.mrf.mxu0
  %v962 = vadd.f32 0.0, %v961
  %v963 = vpop.f32.mrf.mxu0
  %v964 = vpop.f32.mrf.mxu0
  %v965 = vadd.f32 0.0, %v964
  %v966 = vpop.f32.mrf.mxu0
  %967 = vmatprep.mubr.bf16.mxu0 0
  %968 = vmatmul.mubr.bf16.gmra.mxu0 %v746
  %v969 = vpop.f32.mrf.mxu0
  %v970 = vadd.f32 0.0, %v969
  %v971 = vpop.f32.mrf.mxu0
  %v972 = vpop.f32.mrf.mxu0
  %v973 = vadd.f32 0.0, %v972
  %v974 = vpop.f32.mrf.mxu0
  %975 = vmatprep.mubr.bf16.mxu0 0
  %976 = vmatmul.mubr.bf16.gmra.mxu0 %v749
  %v977 = vpop.f32.mrf.mxu0
  %v978 = vadd.f32 0.0, %v977
  %v979 = vpop.f32.mrf.mxu0
  %v980 = vpop.f32.mrf.mxu0
  %v981 = vpop.f32.mrf.mxu0
  %982 = vdwg.mxu0
  %v983 = vmax.f32 %v306, %v786
  %v984 = vmax.f32 %v309, %v789
  %v985 = vmax.f32 %v314, %v794
  %v986 = vmax.f32 %v317, %v797
  %v987 = vmax.f32 %v322, %v802
  %v988 = vmax.f32 %v325, %v805
  %v989 = vmax.f32 %v330, %v810
  %v990 = vmax.f32 %v333, %v813
  %v991 = vmax.f32 %v338, %v818
  %v992 = vmax.f32 %v341, %v821
  %v993 = vmax.f32 %v346, %v826
  %v994 = vmax.f32 %v349, %v829
  %v995 = vmax.f32 %v354, %v834
  %v996 = vmax.f32 %v357, %v837
  %v997 = vmax.f32 %v362, %v842
  %v998 = vmax.f32 %v365, %v845
  %v999 = vmax.f32 %v370, %v850
  %v1000 = vmax.f32 %v373, %v853
  %v1001 = vmax.f32 %v378, %v858
  %v1002 = vmax.f32 %v381, %v861
  %v1003 = vmax.f32 %v386, %v866
  %v1004 = vmax.f32 %v389, %v869
  %v1005 = vmax.f32 %v394, %v874
  %v1006 = vmax.f32 %v397, %v877
  %v1007 = vmax.f32 %v402, %v882
  %v1008 = vmax.f32 %v405, %v885
  %v1009 = vmax.f32 %v410, %v890
  %v1010 = vmax.f32 %v413, %v893
  %v1011 = vmax.f32 %v418, %v898
  %v1012 = vmax.f32 %v421, %v901
  %v1013 = vmax.f32 %v426, %v906
  %v1014 = vmax.f32 %v429, %v909
  %v1015 = vmax.f32 %v434, %v914
  %v1016 = vmax.f32 %v437, %v917
  %v1017 = vmax.f32 %v442, %v922
  %v1018 = vmax.f32 %v445, %v925
  %v1019 = vmax.f32 %v450, %v930
  %v1020 = vmax.f32 %v453, %v933
  %v1021 = vmax.f32 %v458, %v938
  %v1022 = vmax.f32 %v461, %v941
  %v1023 = vmax.f32 %v466, %v946
  %v1024 = vmax.f32 %v469, %v949
  %v1025 = vmax.f32 %v474, %v954
  %v1026 = vmax.f32 %v477, %v957
  %v1027 = vmax.f32 %v482, %v962
  %v1028 = vmax.f32 %v485, %v965
  %v1029 = vmax.f32 %v490, %v970
  %v1030 = vmax.f32 %v493, %v973
  %v1031 = vmax.f32 %v498, %v978
  %s1032 = scalar_lea.vmem %s0, 392
  %v1033 = vld [vmem:[%s1032] sm:$0xf]
  %v1034 = vld [vmem:[%s1032 + $0x4] sm:$0xf]
  %v1035 = vld [vmem:[%s1032 + $0x8] sm:$0xf]
  %v1036 = vld [vmem:[%s1032 + $0xc] sm:$0xf]
  %v1037 = vld [vmem:[%s1032 + $0x10] sm:$0xf]
  %v1038 = vld [vmem:[%s1032 + $0x14] sm:$0xf]
  %v1039 = vld [vmem:[%s1032 + $0x18] sm:$0xf]
  %v1040 = vld [vmem:[%s1032 + $0x1c] sm:$0xf]
  %v1041 = vld [vmem:[%s1032 + $0x20] sm:$0xf]
  %v1042 = vld [vmem:[%s1032 + $0x24] sm:$0xf]
  %v1043 = vld [vmem:[%s1032 + $0x28] sm:$0xf]
  %v1044 = vld [vmem:[%s1032 + $0x2c] sm:$0xf]
  %v1045 = vld [vmem:[%s1032 + $0x30] sm:$0xf]
  %v1046 = vld [vmem:[%s1032 + $0x34] sm:$0xf]
  %v1047 = vld [vmem:[%s1032 + $0x38] sm:$0xf]
  %v1048 = vld [vmem:[%s1032 + $0x3c] sm:$0xf]
  %v1049 = vld [vmem:[%s1032 + $0x40] sm:$0xf]
  %v1050 = vld [vmem:[%s1032 + $0x44] sm:$0xf]
  %v1051 = vld [vmem:[%s1032 + $0x48] sm:$0xf]
  %v1052 = vld [vmem:[%s1032 + $0x4c] sm:$0xf]
  %v1053 = vld [vmem:[%s1032 + $0x50] sm:$0xf]
  %v1054 = vld [vmem:[%s1032 + $0x54] sm:$0xf]
  %v1055 = vld [vmem:[%s1032 + $0x58] sm:$0xf]
  %v1056 = vld [vmem:[%s1032 + $0x5c] sm:$0xf]
  %v1057 = vld [vmem:[%s1032 + $0x60] sm:$0xf]
  %v1058 = vld [vmem:[%s1032 + $0x64] sm:$0xf]
  %v1059 = vld [vmem:[%s1032 + $0x68] sm:$0xf]
  %v1060 = vld [vmem:[%s1032 + $0x6c] sm:$0xf]
  %v1061 = vld [vmem:[%s1032 + $0x70] sm:$0xf]
  %v1062 = vld [vmem:[%s1032 + $0x74] sm:$0xf]
  %v1063 = vld [vmem:[%s1032 + $0x78] sm:$0xf]
  %v1064 = vld [vmem:[%s1032 + $0x7c] sm:$0xf]
  %v1065 = vld [vmem:[%s1032 + $0x80] sm:$0xf]
  %v1066 = vld [vmem:[%s1032 + $0x84] sm:$0xf]
  %v1067 = vld [vmem:[%s1032 + $0x88] sm:$0xf]
  %v1068 = vld [vmem:[%s1032 + $0x8c] sm:$0xf]
  %v1069 = vld [vmem:[%s1032 + $0x90] sm:$0xf]
  %v1070 = vld [vmem:[%s1032 + $0x94] sm:$0xf]
  %v1071 = vld [vmem:[%s1032 + $0x98] sm:$0xf]
  %v1072 = vld [vmem:[%s1032 + $0x9c] sm:$0xf]
  %v1073 = vld [vmem:[%s1032 + $0xa0] sm:$0xf]
  %v1074 = vld [vmem:[%s1032 + $0xa4] sm:$0xf]
  %v1075 = vld [vmem:[%s1032 + $0xa8] sm:$0xf]
  %v1076 = vld [vmem:[%s1032 + $0xac] sm:$0xf]
  %v1077 = vld [vmem:[%s1032 + $0xb0] sm:$0xf]
  %v1078 = vld [vmem:[%s1032 + $0xb4] sm:$0xf]
  %v1079 = vld [vmem:[%s1032 + $0xb8] sm:$0xf]
  %v1080 = vld [vmem:[%s1032 + $0xbc] sm:$0xf]
  %v1081 = vld [vmem:[%s1032 + $0xc0] sm:$0xf]
  %v1131 = vunpack.c.l.b16 %v1033
  %v1132 = vunpack.c.l.b16 %v1034
  %v1133 = vunpack.c.l.b16 %v1035
  %v1134 = vunpack.c.l.b16 %v1036
  %v1135 = vunpack.c.l.b16 %v1037
  %v1136 = vunpack.c.l.b16 %v1038
  %v1137 = vunpack.c.l.b16 %v1039
  %v1138 = vunpack.c.l.b16 %v1040
  %v1139 = vunpack.c.l.b16 %v1041
  %v1140 = vunpack.c.l.b16 %v1042
  %v1141 = vunpack.c.l.b16 %v1043
  %v1142 = vunpack.c.l.b16 %v1044
  %v1143 = vunpack.c.l.b16 %v1045
  %v1144 = vunpack.c.l.b16 %v1046
  %v1145 = vunpack.c.l.b16 %v1047
  %v1146 = vunpack.c.l.b16 %v1048
  %v1147 = vunpack.c.l.b16 %v1049
  %v1148 = vunpack.c.l.b16 %v1050
  %v1149 = vunpack.c.l.b16 %v1051
  %v1150 = vunpack.c.l.b16 %v1052
  %v1151 = vunpack.c.l.b16 %v1053
  %v1152 = vunpack.c.l.b16 %v1054
  %v1153 = vunpack.c.l.b16 %v1055
  %v1154 = vunpack.c.l.b16 %v1056
  %v1155 = vunpack.c.l.b16 %v1057
  %v1156 = vunpack.c.l.b16 %v1058
  %v1157 = vunpack.c.l.b16 %v1059
  %v1158 = vunpack.c.l.b16 %v1060
  %v1159 = vunpack.c.l.b16 %v1061
  %v1160 = vunpack.c.l.b16 %v1062
  %v1161 = vunpack.c.l.b16 %v1063
  %v1162 = vunpack.c.l.b16 %v1064
  %v1163 = vunpack.c.l.b16 %v1065
  %v1164 = vunpack.c.l.b16 %v1066
  %v1165 = vunpack.c.l.b16 %v1067
  %v1166 = vunpack.c.l.b16 %v1068
  %v1167 = vunpack.c.l.b16 %v1069
  %v1168 = vunpack.c.l.b16 %v1070
  %v1169 = vunpack.c.l.b16 %v1071
  %v1170 = vunpack.c.l.b16 %v1072
  %v1171 = vunpack.c.l.b16 %v1073
  %v1172 = vunpack.c.l.b16 %v1074
  %v1173 = vunpack.c.l.b16 %v1075
  %v1174 = vunpack.c.l.b16 %v1076
  %v1175 = vunpack.c.l.b16 %v1077
  %v1176 = vunpack.c.l.b16 %v1078
  %v1177 = vunpack.c.l.b16 %v1079
  %v1178 = vunpack.c.l.b16 %v1080
  %v1179 = vunpack.c.l.b16 %v1081
  %v1180 = vpack.c.b16 %v1132, %v1131
  %v1181 = vpack.c.b16 %v1134, %v1133
  %v1182 = vpack.c.b16 %v1136, %v1135
  %v1183 = vpack.c.b16 %v1138, %v1137
  %v1184 = vpack.c.b16 %v1140, %v1139
  %v1185 = vpack.c.b16 %v1142, %v1141
  %v1186 = vpack.c.b16 %v1144, %v1143
  %v1187 = vpack.c.b16 %v1146, %v1145
  %v1188 = vpack.c.b16 %v1148, %v1147
  %v1189 = vpack.c.b16 %v1150, %v1149
  %v1190 = vpack.c.b16 %v1152, %v1151
  %v1191 = vpack.c.b16 %v1154, %v1153
  %v1192 = vpack.c.b16 %v1156, %v1155
  %v1193 = vpack.c.b16 %v1158, %v1157
  %v1194 = vpack.c.b16 %v1160, %v1159
  %v1195 = vpack.c.b16 %v1162, %v1161
  %v1196 = vpack.c.b16 %v1164, %v1163
  %v1197 = vpack.c.b16 %v1166, %v1165
  %v1198 = vpack.c.b16 %v1168, %v1167
  %v1199 = vpack.c.b16 %v1170, %v1169
  %v1200 = vpack.c.b16 %v1172, %v1171
  %v1201 = vpack.c.b16 %v1174, %v1173
  %v1202 = vpack.c.b16 %v1176, %v1175
  %v1203 = vpack.c.b16 %v1178, %v1177
  %v1204 = vpack.c.b16 %v1179, %v1179
  %v1206 = vsel %vm195, %v1180, 0
  %v1209 = vsel %vm195, %v1181, 0
  %v1212 = vsel %vm195, %v1182, 0
  %v1215 = vsel %vm195, %v1183, 0
  %v1218 = vsel %vm195, %v1184, 0
  %v1221 = vsel %vm195, %v1185, 0
  %v1224 = vsel %vm195, %v1186, 0
  %v1227 = vsel %vm195, %v1187, 0
  %v1230 = vsel %vm195, %v1188, 0
  %v1233 = vsel %vm195, %v1189, 0
  %v1236 = vsel %vm195, %v1190, 0
  %v1239 = vsel %vm195, %v1191, 0
  %v1242 = vsel %vm195, %v1192, 0
  %v1245 = vsel %vm195, %v1193, 0
  %v1248 = vsel %vm195, %v1194, 0
  %v1251 = vsel %vm195, %v1195, 0
  %v1254 = vsel %vm195, %v1196, 0
  %v1257 = vsel %vm195, %v1197, 0
  %v1260 = vsel %vm195, %v1198, 0
  %v1263 = vsel %vm195, %v1199, 0
  %v1266 = vsel %vm195, %v1200, 0
  %v1269 = vsel %vm195, %v1201, 0
  %v1272 = vsel %vm195, %v1202, 0
  %v1275 = vsel %vm195, %v1203, 0
  %v1278 = vsel %vm195, %v1204, 0
  %1280 = vmatprep.subr.bf16.mxu0 0
  %1281 = vmatpush1.bf16.msra.mxu0 0
  %1282 = vmatprep.subr.bf16.mxu0 0
  %1283 = vmatpush1.bf16.msra.mxu0 0
  %1284 = vmatprep.subr.bf16.mxu0 0
  %1285 = vmatpush1.bf16.msra.mxu0 0
  %1286 = vmatprep.subr.bf16.mxu0 0
  %1287 = vmatpush1.bf16.msra.mxu0 0
  %1288 = vmatprep.subr.bf16.mxu0 0
  %1289 = vmatpush1.bf16.msra.mxu0 0
  %1290 = vmatprep.subr.bf16.mxu0 0
  %1291 = vmatpush1.bf16.msra.mxu0 0
  %1292 = vmatprep.subr.bf16.mxu0 0
  %1293 = vmatpush1.bf16.msra.mxu0 0
  %1294 = vmatprep.subr.bf16.mxu0 0
  %1295 = vmatpush1.bf16.msra.mxu0 %v193
  %1296 = vmatprep.subr.bf16.mxu0 0
  %1297 = vmatpush2.bf16.msra.mxu0 0
  %1298 = vmatprep.subr.bf16.mxu0 0
  %1299 = vmatpush2.bf16.msra.mxu0 0
  %1300 = vmatprep.subr.bf16.mxu0 0
  %1301 = vmatpush2.bf16.msra.mxu0 0
  %1302 = vmatprep.subr.bf16.mxu0 0
  %1303 = vmatpush2.bf16.msra.mxu0 0
  %1304 = vmatprep.subr.bf16.mxu0 0
  %1305 = vmatpush2.bf16.msra.mxu0 0
  %1306 = vmatprep.subr.bf16.mxu0 0
  %1307 = vmatpush2.bf16.msra.mxu0 0
  %1308 = vmatprep.subr.bf16.mxu0 0
  %1309 = vmatpush2.bf16.msra.mxu0 0
  %1310 = vmatprep.subr.bf16.mxu0 0
  %1311 = vmatpush2.bf16.msra.mxu0 0
  %1312 = vmatprep.mubr.bf16.mxu0 0
  %1313 = vmatmul.mubr.bf16.gmra.mxu0 %v1206
  %v1314 = vpop.f32.mrf.mxu0
  %v1315 = vadd.f32 0.0, %v1314
  %v1316 = vpop.f32.mrf.mxu0
  %v1317 = vpop.f32.mrf.mxu0
  %v1318 = vadd.f32 0.0, %v1317
  %v1319 = vpop.f32.mrf.mxu0
  %1320 = vmatprep.mubr.bf16.mxu0 0
  %1321 = vmatmul.mubr.bf16.gmra.mxu0 %v1209
  %v1322 = vpop.f32.mrf.mxu0
  %v1323 = vadd.f32 0.0, %v1322
  %v1324 = vpop.f32.mrf.mxu0
  %v1325 = vpop.f32.mrf.mxu0
  %v1326 = vadd.f32 0.0, %v1325
  %v1327 = vpop.f32.mrf.mxu0
  %1328 = vmatprep.mubr.bf16.mxu0 0
  %1329 = vmatmul.mubr.bf16.gmra.mxu0 %v1212
  %v1330 = vpop.f32.mrf.mxu0
  %v1331 = vadd.f32 0.0, %v1330
  %v1332 = vpop.f32.mrf.mxu0
  %v1333 = vpop.f32.mrf.mxu0
  %v1334 = vadd.f32 0.0, %v1333
  %v1335 = vpop.f32.mrf.mxu0
  %1336 = vmatprep.mubr.bf16.mxu0 0
  %1337 = vmatmul.mubr.bf16.gmra.mxu0 %v1215
  %v1338 = vpop.f32.mrf.mxu0
  %v1339 = vadd.f32 0.0, %v1338
  %v1340 = vpop.f32.mrf.mxu0
  %v1341 = vpop.f32.mrf.mxu0
  %v1342 = vadd.f32 0.0, %v1341
  %v1343 = vpop.f32.mrf.mxu0
  %1344 = vmatprep.mubr.bf16.mxu0 0
  %1345 = vmatmul.mubr.bf16.gmra.mxu0 %v1218
  %v1346 = vpop.f32.mrf.mxu0
  %v1347 = vadd.f32 0.0, %v1346
  %v1348 = vpop.f32.mrf.mxu0
  %v1349 = vpop.f32.mrf.mxu0
  %v1350 = vadd.f32 0.0, %v1349
  %v1351 = vpop.f32.mrf.mxu0
  %1352 = vmatprep.mubr.bf16.mxu0 0
  %1353 = vmatmul.mubr.bf16.gmra.mxu0 %v1221
  %v1354 = vpop.f32.mrf.mxu0
  %v1355 = vadd.f32 0.0, %v1354
  %v1356 = vpop.f32.mrf.mxu0
  %v1357 = vpop.f32.mrf.mxu0
  %v1358 = vadd.f32 0.0, %v1357
  %v1359 = vpop.f32.mrf.mxu0
  %1360 = vmatprep.mubr.bf16.mxu0 0
  %1361 = vmatmul.mubr.bf16.gmra.mxu0 %v1224
  %v1362 = vpop.f32.mrf.mxu0
  %v1363 = vadd.f32 0.0, %v1362
  %v1364 = vpop.f32.mrf.mxu0
  %v1365 = vpop.f32.mrf.mxu0
  %v1366 = vadd.f32 0.0, %v1365
  %v1367 = vpop.f32.mrf.mxu0
  %1368 = vmatprep.mubr.bf16.mxu0 0
  %1369 = vmatmul.mubr.bf16.gmra.mxu0 %v1227
  %v1370 = vpop.f32.mrf.mxu0
  %v1371 = vadd.f32 0.0, %v1370
  %v1372 = vpop.f32.mrf.mxu0
  %v1373 = vpop.f32.mrf.mxu0
  %v1374 = vadd.f32 0.0, %v1373
  %v1375 = vpop.f32.mrf.mxu0
  %1376 = vmatprep.mubr.bf16.mxu0 0
  %1377 = vmatmul.mubr.bf16.gmra.mxu0 %v1230
  %v1378 = vpop.f32.mrf.mxu0
  %v1379 = vadd.f32 0.0, %v1378
  %v1380 = vpop.f32.mrf.mxu0
  %v1381 = vpop.f32.mrf.mxu0
  %v1382 = vadd.f32 0.0, %v1381
  %v1383 = vpop.f32.mrf.mxu0
  %1384 = vmatprep.mubr.bf16.mxu0 0
  %1385 = vmatmul.mubr.bf16.gmra.mxu0 %v1233
  %v1386 = vpop.f32.mrf.mxu0
  %v1387 = vadd.f32 0.0, %v1386
  %v1388 = vpop.f32.mrf.mxu0
  %v1389 = vpop.f32.mrf.mxu0
  %v1390 = vadd.f32 0.0, %v1389
  %v1391 = vpop.f32.mrf.mxu0
  %1392 = vmatprep.mubr.bf16.mxu0 0
  %1393 = vmatmul.mubr.bf16.gmra.mxu0 %v1236
  %v1394 = vpop.f32.mrf.mxu0
  %v1395 = vadd.f32 0.0, %v1394
  %v1396 = vpop.f32.mrf.mxu0
  %v1397 = vpop.f32.mrf.mxu0
  %v1398 = vadd.f32 0.0, %v1397
  %v1399 = vpop.f32.mrf.mxu0
  %1400 = vmatprep.mubr.bf16.mxu0 0
  %1401 = vmatmul.mubr.bf16.gmra.mxu0 %v1239
  %v1402 = vpop.f32.mrf.mxu0
  %v1403 = vadd.f32 0.0, %v1402
  %v1404 = vpop.f32.mrf.mxu0
  %v1405 = vpop.f32.mrf.mxu0
  %v1406 = vadd.f32 0.0, %v1405
  %v1407 = vpop.f32.mrf.mxu0
  %1408 = vmatprep.mubr.bf16.mxu0 0
  %1409 = vmatmul.mubr.bf16.gmra.mxu0 %v1242
  %v1410 = vpop.f32.mrf.mxu0
  %v1411 = vadd.f32 0.0, %v1410
  %v1412 = vpop.f32.mrf.mxu0
  %v1413 = vpop.f32.mrf.mxu0
  %v1414 = vadd.f32 0.0, %v1413
  %v1415 = vpop.f32.mrf.mxu0
  %1416 = vmatprep.mubr.bf16.mxu0 0
  %1417 = vmatmul.mubr.bf16.gmra.mxu0 %v1245
  %v1418 = vpop.f32.mrf.mxu0
  %v1419 = vadd.f32 0.0, %v1418
  %v1420 = vpop.f32.mrf.mxu0
  %v1421 = vpop.f32.mrf.mxu0
  %v1422 = vadd.f32 0.0, %v1421
  %v1423 = vpop.f32.mrf.mxu0
  %1424 = vmatprep.mubr.bf16.mxu0 0
  %1425 = vmatmul.mubr.bf16.gmra.mxu0 %v1248
  %v1426 = vpop.f32.mrf.mxu0
  %v1427 = vadd.f32 0.0, %v1426
  %v1428 = vpop.f32.mrf.mxu0
  %v1429 = vpop.f32.mrf.mxu0
  %v1430 = vadd.f32 0.0, %v1429
  %v1431 = vpop.f32.mrf.mxu0
  %1432 = vmatprep.mubr.bf16.mxu0 0
  %1433 = vmatmul.mubr.bf16.gmra.mxu0 %v1251
  %v1434 = vpop.f32.mrf.mxu0
  %v1435 = vadd.f32 0.0, %v1434
  %v1436 = vpop.f32.mrf.mxu0
  %v1437 = vpop.f32.mrf.mxu0
  %v1438 = vadd.f32 0.0, %v1437
  %v1439 = vpop.f32.mrf.mxu0
  %1440 = vmatprep.mubr.bf16.mxu0 0
  %1441 = vmatmul.mubr.bf16.gmra.mxu0 %v1254
  %v1442 = vpop.f32.mrf.mxu0
  %v1443 = vadd.f32 0.0, %v1442
  %v1444 = vpop.f32.mrf.mxu0
  %v1445 = vpop.f32.mrf.mxu0
  %v1446 = vadd.f32 0.0, %v1445
  %v1447 = vpop.f32.mrf.mxu0
  %1448 = vmatprep.mubr.bf16.mxu0 0
  %1449 = vmatmul.mubr.bf16.gmra.mxu0 %v1257
  %v1450 = vpop.f32.mrf.mxu0
  %v1451 = vadd.f32 0.0, %v1450
  %v1452 = vpop.f32.mrf.mxu0
  %v1453 = vpop.f32.mrf.mxu0
  %v1454 = vadd.f32 0.0, %v1453
  %v1455 = vpop.f32.mrf.mxu0
  %1456 = vmatprep.mubr.bf16.mxu0 0
  %1457 = vmatmul.mubr.bf16.gmra.mxu0 %v1260
  %v1458 = vpop.f32.mrf.mxu0
  %v1459 = vadd.f32 0.0, %v1458
  %v1460 = vpop.f32.mrf.mxu0
  %v1461 = vpop.f32.mrf.mxu0
  %v1462 = vadd.f32 0.0, %v1461
  %v1463 = vpop.f32.mrf.mxu0
  %1464 = vmatprep.mubr.bf16.mxu0 0
  %1465 = vmatmul.mubr.bf16.gmra.mxu0 %v1263
  %v1466 = vpop.f32.mrf.mxu0
  %v1467 = vadd.f32 0.0, %v1466
  %v1468 = vpop.f32.mrf.mxu0
  %v1469 = vpop.f32.mrf.mxu0
  %v1470 = vadd.f32 0.0, %v1469
  %v1471 = vpop.f32.mrf.mxu0
  %1472 = vmatprep.mubr.bf16.mxu0 0
  %1473 = vmatmul.mubr.bf16.gmra.mxu0 %v1266
  %v1474 = vpop.f32.mrf.mxu0
  %v1475 = vadd.f32 0.0, %v1474
  %v1476 = vpop.f32.mrf.mxu0
  %v1477 = vpop.f32.mrf.mxu0
  %v1478 = vadd.f32 0.0, %v1477
  %v1479 = vpop.f32.mrf.mxu0
  %1480 = vmatprep.mubr.bf16.mxu0 0
  %1481 = vmatmul.mubr.bf16.gmra.mxu0 %v1269
  %v1482 = vpop.f32.mrf.mxu0
  %v1483 = vadd.f32 0.0, %v1482
  %v1484 = vpop.f32.mrf.mxu0
  %v1485 = vpop.f32.mrf.mxu0
  %v1486 = vadd.f32 0.0, %v1485
  %v1487 = vpop.f32.mrf.mxu0
  %1488 = vmatprep.mubr.bf16.mxu0 0
  %1489 = vmatmul.mubr.bf16.gmra.mxu0 %v1272
  %v1490 = vpop.f32.mrf.mxu0
  %v1491 = vadd.f32 0.0, %v1490
  %v1492 = vpop.f32.mrf.mxu0
  %v1493 = vpop.f32.mrf.mxu0
  %v1494 = vadd.f32 0.0, %v1493
  %v1495 = vpop.f32.mrf.mxu0
  %1496 = vmatprep.mubr.bf16.mxu0 0
  %1497 = vmatmul.mubr.bf16.gmra.mxu0 %v1275
  %v1498 = vpop.f32.mrf.mxu0
  %v1499 = vadd.f32 0.0, %v1498
  %v1500 = vpop.f32.mrf.mxu0
  %v1501 = vpop.f32.mrf.mxu0
  %v1502 = vadd.f32 0.0, %v1501
  %v1503 = vpop.f32.mrf.mxu0
  %1504 = vmatprep.mubr.bf16.mxu0 0
  %1505 = vmatmul.mubr.bf16.gmra.mxu0 %v1278
  %v1506 = vpop.f32.mrf.mxu0
  %v1507 = vadd.f32 0.0, %v1506
  %v1508 = vpop.f32.mrf.mxu0
  %v1509 = vpop.f32.mrf.mxu0
  %v1510 = vpop.f32.mrf.mxu0
  %1511 = vdwg.mxu0
  %s1512 = scalar_lea.vmem %s0, 588
  %v1513 = vld [vmem:[%s1512] sm:$0xf]
  %v1514 = vld [vmem:[%s1512 + $0x4] sm:$0xf]
  %v1515 = vld [vmem:[%s1512 + $0x8] sm:$0xf]
  %v1516 = vld [vmem:[%s1512 + $0xc] sm:$0xf]
  %v1517 = vld [vmem:[%s1512 + $0x10] sm:$0xf]
  %v1518 = vld [vmem:[%s1512 + $0x14] sm:$0xf]
  %v1519 = vld [vmem:[%s1512 + $0x18] sm:$0xf]
  %v1520 = vld [vmem:[%s1512 + $0x1c] sm:$0xf]
  %v1521 = vld [vmem:[%s1512 + $0x20] sm:$0xf]
  %v1522 = vld [vmem:[%s1512 + $0x24] sm:$0xf]
  %v1523 = vld [vmem:[%s1512 + $0x28] sm:$0xf]
  %v1524 = vld [vmem:[%s1512 + $0x2c] sm:$0xf]
  %v1525 = vld [vmem:[%s1512 + $0x30] sm:$0xf]
  %v1526 = vld [vmem:[%s1512 + $0x34] sm:$0xf]
  %v1527 = vld [vmem:[%s1512 + $0x38] sm:$0xf]
  %v1528 = vld [vmem:[%s1512 + $0x3c] sm:$0xf]
  %v1529 = vld [vmem:[%s1512 + $0x40] sm:$0xf]
  %v1530 = vld [vmem:[%s1512 + $0x44] sm:$0xf]
  %v1531 = vld [vmem:[%s1512 + $0x48] sm:$0xf]
  %v1532 = vld [vmem:[%s1512 + $0x4c] sm:$0xf]
  %v1533 = vld [vmem:[%s1512 + $0x50] sm:$0xf]
  %v1534 = vld [vmem:[%s1512 + $0x54] sm:$0xf]
  %v1535 = vld [vmem:[%s1512 + $0x58] sm:$0xf]
  %v1536 = vld [vmem:[%s1512 + $0x5c] sm:$0xf]
  %v1537 = vld [vmem:[%s1512 + $0x60] sm:$0xf]
  %v1538 = vld [vmem:[%s1512 + $0x64] sm:$0xf]
  %v1539 = vld [vmem:[%s1512 + $0x68] sm:$0xf]
  %v1540 = vld [vmem:[%s1512 + $0x6c] sm:$0xf]
  %v1541 = vld [vmem:[%s1512 + $0x70] sm:$0xf]
  %v1542 = vld [vmem:[%s1512 + $0x74] sm:$0xf]
  %v1543 = vld [vmem:[%s1512 + $0x78] sm:$0xf]
  %v1544 = vld [vmem:[%s1512 + $0x7c] sm:$0xf]
  %v1545 = vld [vmem:[%s1512 + $0x80] sm:$0xf]
  %v1546 = vld [vmem:[%s1512 + $0x84] sm:$0xf]
  %v1547 = vld [vmem:[%s1512 + $0x88] sm:$0xf]
  %v1548 = vld [vmem:[%s1512 + $0x8c] sm:$0xf]
  %v1549 = vld [vmem:[%s1512 + $0x90] sm:$0xf]
  %v1550 = vld [vmem:[%s1512 + $0x94] sm:$0xf]
  %v1551 = vld [vmem:[%s1512 + $0x98] sm:$0xf]
  %v1552 = vld [vmem:[%s1512 + $0x9c] sm:$0xf]
  %v1553 = vld [vmem:[%s1512 + $0xa0] sm:$0xf]
  %v1554 = vld [vmem:[%s1512 + $0xa4] sm:$0xf]
  %v1555 = vld [vmem:[%s1512 + $0xa8] sm:$0xf]
  %v1556 = vld [vmem:[%s1512 + $0xac] sm:$0xf]
  %v1557 = vld [vmem:[%s1512 + $0xb0] sm:$0xf]
  %v1558 = vld [vmem:[%s1512 + $0xb4] sm:$0xf]
  %v1559 = vld [vmem:[%s1512 + $0xb8] sm:$0xf]
  %v1560 = vld [vmem:[%s1512 + $0xbc] sm:$0xf]
  %v1561 = vld [vmem:[%s1512 + $0xc0] sm:$0xf]
  %v1611 = vunpack.c.l.b16 %v1513
  %v1612 = vunpack.c.l.b16 %v1514
  %v1613 = vunpack.c.l.b16 %v1515
  %v1614 = vunpack.c.l.b16 %v1516
  %v1615 = vunpack.c.l.b16 %v1517
  %v1616 = vunpack.c.l.b16 %v1518
  %v1617 = vunpack.c.l.b16 %v1519
  %v1618 = vunpack.c.l.b16 %v1520
  %v1619 = vunpack.c.l.b16 %v1521
  %v1620 = vunpack.c.l.b16 %v1522
  %v1621 = vunpack.c.l.b16 %v1523
  %v1622 = vunpack.c.l.b16 %v1524
  %v1623 = vunpack.c.l.b16 %v1525
  %v1624 = vunpack.c.l.b16 %v1526
  %v1625 = vunpack.c.l.b16 %v1527
  %v1626 = vunpack.c.l.b16 %v1528
  %v1627 = vunpack.c.l.b16 %v1529
  %v1628 = vunpack.c.l.b16 %v1530
  %v1629 = vunpack.c.l.b16 %v1531
  %v1630 = vunpack.c.l.b16 %v1532
  %v1631 = vunpack.c.l.b16 %v1533
  %v1632 = vunpack.c.l.b16 %v1534
  %v1633 = vunpack.c.l.b16 %v1535
  %v1634 = vunpack.c.l.b16 %v1536
  %v1635 = vunpack.c.l.b16 %v1537
  %v1636 = vunpack.c.l.b16 %v1538
  %v1637 = vunpack.c.l.b16 %v1539
  %v1638 = vunpack.c.l.b16 %v1540
  %v1639 = vunpack.c.l.b16 %v1541
  %v1640 = vunpack.c.l.b16 %v1542
  %v1641 = vunpack.c.l.b16 %v1543
  %v1642 = vunpack.c.l.b16 %v1544
  %v1643 = vunpack.c.l.b16 %v1545
  %v1644 = vunpack.c.l.b16 %v1546
  %v1645 = vunpack.c.l.b16 %v1547
  %v1646 = vunpack.c.l.b16 %v1548
  %v1647 = vunpack.c.l.b16 %v1549
  %v1648 = vunpack.c.l.b16 %v1550
  %v1649 = vunpack.c.l.b16 %v1551
  %v1650 = vunpack.c.l.b16 %v1552
  %v1651 = vunpack.c.l.b16 %v1553
  %v1652 = vunpack.c.l.b16 %v1554
  %v1653 = vunpack.c.l.b16 %v1555
  %v1654 = vunpack.c.l.b16 %v1556
  %v1655 = vunpack.c.l.b16 %v1557
  %v1656 = vunpack.c.l.b16 %v1558
  %v1657 = vunpack.c.l.b16 %v1559
  %v1658 = vunpack.c.l.b16 %v1560
  %v1659 = vunpack.c.l.b16 %v1561
  %v1660 = vpack.c.b16 %v1612, %v1611
  %v1661 = vpack.c.b16 %v1614, %v1613
  %v1662 = vpack.c.b16 %v1616, %v1615
  %v1663 = vpack.c.b16 %v1618, %v1617
  %v1664 = vpack.c.b16 %v1620, %v1619
  %v1665 = vpack.c.b16 %v1622, %v1621
  %v1666 = vpack.c.b16 %v1624, %v1623
  %v1667 = vpack.c.b16 %v1626, %v1625
  %v1668 = vpack.c.b16 %v1628, %v1627
  %v1669 = vpack.c.b16 %v1630, %v1629
  %v1670 = vpack.c.b16 %v1632, %v1631
  %v1671 = vpack.c.b16 %v1634, %v1633
  %v1672 = vpack.c.b16 %v1636, %v1635
  %v1673 = vpack.c.b16 %v1638, %v1637
  %v1674 = vpack.c.b16 %v1640, %v1639
  %v1675 = vpack.c.b16 %v1642, %v1641
  %v1676 = vpack.c.b16 %v1644, %v1643
  %v1677 = vpack.c.b16 %v1646, %v1645
  %v1678 = vpack.c.b16 %v1648, %v1647
  %v1679 = vpack.c.b16 %v1650, %v1649
  %v1680 = vpack.c.b16 %v1652, %v1651
  %v1681 = vpack.c.b16 %v1654, %v1653
  %v1682 = vpack.c.b16 %v1656, %v1655
  %v1683 = vpack.c.b16 %v1658, %v1657
  %v1684 = vpack.c.b16 %v1659, %v1659
  %v1686 = vsel %vm195, %v1660, 0
  %v1689 = vsel %vm195, %v1661, 0
  %v1692 = vsel %vm195, %v1662, 0
  %v1695 = vsel %vm195, %v1663, 0
  %v1698 = vsel %vm195, %v1664, 0
  %v1701 = vsel %vm195, %v1665, 0
  %v1704 = vsel %vm195, %v1666, 0
  %v1707 = vsel %vm195, %v1667, 0
  %v1710 = vsel %vm195, %v1668, 0
  %v1713 = vsel %vm195, %v1669, 0
  %v1716 = vsel %vm195, %v1670, 0
  %v1719 = vsel %vm195, %v1671, 0
  %v1722 = vsel %vm195, %v1672, 0
  %v1725 = vsel %vm195, %v1673, 0
  %v1728 = vsel %vm195, %v1674, 0
  %v1731 = vsel %vm195, %v1675, 0
  %v1734 = vsel %vm195, %v1676, 0
  %v1737 = vsel %vm195, %v1677, 0
  %v1740 = vsel %vm195, %v1678, 0
  %v1743 = vsel %vm195, %v1679, 0
  %v1746 = vsel %vm195, %v1680, 0
  %v1749 = vsel %vm195, %v1681, 0
  %v1752 = vsel %vm195, %v1682, 0
  %v1755 = vsel %vm195, %v1683, 0
  %v1758 = vsel %vm195, %v1684, 0
  %1760 = vmatprep.subr.bf16.mxu0 0
  %1761 = vmatpush1.bf16.msra.mxu0 0
  %1762 = vmatprep.subr.bf16.mxu0 0
  %1763 = vmatpush1.bf16.msra.mxu0 0
  %1764 = vmatprep.subr.bf16.mxu0 0
  %1765 = vmatpush1.bf16.msra.mxu0 0
  %1766 = vmatprep.subr.bf16.mxu0 0
  %1767 = vmatpush1.bf16.msra.mxu0 0
  %1768 = vmatprep.subr.bf16.mxu0 0
  %1769 = vmatpush1.bf16.msra.mxu0 0
  %1770 = vmatprep.subr.bf16.mxu0 0
  %1771 = vmatpush1.bf16.msra.mxu0 0
  %1772 = vmatprep.subr.bf16.mxu0 0
  %1773 = vmatpush1.bf16.msra.mxu0 0
  %1774 = vmatprep.subr.bf16.mxu0 0
  %1775 = vmatpush1.bf16.msra.mxu0 %v193
  %1776 = vmatprep.subr.bf16.mxu0 0
  %1777 = vmatpush2.bf16.msra.mxu0 0
  %1778 = vmatprep.subr.bf16.mxu0 0
  %1779 = vmatpush2.bf16.msra.mxu0 0
  %1780 = vmatprep.subr.bf16.mxu0 0
  %1781 = vmatpush2.bf16.msra.mxu0 0
  %1782 = vmatprep.subr.bf16.mxu0 0
  %1783 = vmatpush2.bf16.msra.mxu0 0
  %1784 = vmatprep.subr.bf16.mxu0 0
  %1785 = vmatpush2.bf16.msra.mxu0 0
  %1786 = vmatprep.subr.bf16.mxu0 0
  %1787 = vmatpush2.bf16.msra.mxu0 0
  %1788 = vmatprep.subr.bf16.mxu0 0
  %1789 = vmatpush2.bf16.msra.mxu0 0
  %1790 = vmatprep.subr.bf16.mxu0 0
  %1791 = vmatpush2.bf16.msra.mxu0 0
  %1792 = vmatprep.mubr.bf16.mxu0 0
  %1793 = vmatmul.mubr.bf16.gmra.mxu0 %v1686
  %v1794 = vpop.f32.mrf.mxu0
  %v1795 = vadd.f32 0.0, %v1794
  %v1796 = vpop.f32.mrf.mxu0
  %v1797 = vpop.f32.mrf.mxu0
  %v1798 = vadd.f32 0.0, %v1797
  %v1799 = vpop.f32.mrf.mxu0
  %1800 = vmatprep.mubr.bf16.mxu0 0
  %1801 = vmatmul.mubr.bf16.gmra.mxu0 %v1689
  %v1802 = vpop.f32.mrf.mxu0
  %v1803 = vadd.f32 0.0, %v1802
  %v1804 = vpop.f32.mrf.mxu0
  %v1805 = vpop.f32.mrf.mxu0
  %v1806 = vadd.f32 0.0, %v1805
  %v1807 = vpop.f32.mrf.mxu0
  %1808 = vmatprep.mubr.bf16.mxu0 0
  %1809 = vmatmul.mubr.bf16.gmra.mxu0 %v1692
  %v1810 = vpop.f32.mrf.mxu0
  %v1811 = vadd.f32 0.0, %v1810
  %v1812 = vpop.f32.mrf.mxu0
  %v1813 = vpop.f32.mrf.mxu0
  %v1814 = vadd.f32 0.0, %v1813
  %v1815 = vpop.f32.mrf.mxu0
  %1816 = vmatprep.mubr.bf16.mxu0 0
  %1817 = vmatmul.mubr.bf16.gmra.mxu0 %v1695
  %v1818 = vpop.f32.mrf.mxu0
  %v1819 = vadd.f32 0.0, %v1818
  %v1820 = vpop.f32.mrf.mxu0
  %v1821 = vpop.f32.mrf.mxu0
  %v1822 = vadd.f32 0.0, %v1821
  %v1823 = vpop.f32.mrf.mxu0
  %1824 = vmatprep.mubr.bf16.mxu0 0
  %1825 = vmatmul.mubr.bf16.gmra.mxu0 %v1698
  %v1826 = vpop.f32.mrf.mxu0
  %v1827 = vadd.f32 0.0, %v1826
  %v1828 = vpop.f32.mrf.mxu0
  %v1829 = vpop.f32.mrf.mxu0
  %v1830 = vadd.f32 0.0, %v1829
  %v1831 = vpop.f32.mrf.mxu0
  %1832 = vmatprep.mubr.bf16.mxu0 0
  %1833 = vmatmul.mubr.bf16.gmra.mxu0 %v1701
  %v1834 = vpop.f32.mrf.mxu0
  %v1835 = vadd.f32 0.0, %v1834
  %v1836 = vpop.f32.mrf.mxu0
  %v1837 = vpop.f32.mrf.mxu0
  %v1838 = vadd.f32 0.0, %v1837
  %v1839 = vpop.f32.mrf.mxu0
  %1840 = vmatprep.mubr.bf16.mxu0 0
  %1841 = vmatmul.mubr.bf16.gmra.mxu0 %v1704
  %v1842 = vpop.f32.mrf.mxu0
  %v1843 = vadd.f32 0.0, %v1842
  %v1844 = vpop.f32.mrf.mxu0
  %v1845 = vpop.f32.mrf.mxu0
  %v1846 = vadd.f32 0.0, %v1845
  %v1847 = vpop.f32.mrf.mxu0
  %1848 = vmatprep.mubr.bf16.mxu0 0
  %1849 = vmatmul.mubr.bf16.gmra.mxu0 %v1707
  %v1850 = vpop.f32.mrf.mxu0
  %v1851 = vadd.f32 0.0, %v1850
  %v1852 = vpop.f32.mrf.mxu0
  %v1853 = vpop.f32.mrf.mxu0
  %v1854 = vadd.f32 0.0, %v1853
  %v1855 = vpop.f32.mrf.mxu0
  %1856 = vmatprep.mubr.bf16.mxu0 0
  %1857 = vmatmul.mubr.bf16.gmra.mxu0 %v1710
  %v1858 = vpop.f32.mrf.mxu0
  %v1859 = vadd.f32 0.0, %v1858
  %v1860 = vpop.f32.mrf.mxu0
  %v1861 = vpop.f32.mrf.mxu0
  %v1862 = vadd.f32 0.0, %v1861
  %v1863 = vpop.f32.mrf.mxu0
  %1864 = vmatprep.mubr.bf16.mxu0 0
  %1865 = vmatmul.mubr.bf16.gmra.mxu0 %v1713
  %v1866 = vpop.f32.mrf.mxu0
  %v1867 = vadd.f32 0.0, %v1866
  %v1868 = vpop.f32.mrf.mxu0
  %v1869 = vpop.f32.mrf.mxu0
  %v1870 = vadd.f32 0.0, %v1869
  %v1871 = vpop.f32.mrf.mxu0
  %1872 = vmatprep.mubr.bf16.mxu0 0
  %1873 = vmatmul.mubr.bf16.gmra.mxu0 %v1716
  %v1874 = vpop.f32.mrf.mxu0
  %v1875 = vadd.f32 0.0, %v1874
  %v1876 = vpop.f32.mrf.mxu0
  %v1877 = vpop.f32.mrf.mxu0
  %v1878 = vadd.f32 0.0, %v1877
  %v1879 = vpop.f32.mrf.mxu0
  %1880 = vmatprep.mubr.bf16.mxu0 0
  %1881 = vmatmul.mubr.bf16.gmra.mxu0 %v1719
  %v1882 = vpop.f32.mrf.mxu0
  %v1883 = vadd.f32 0.0, %v1882
  %v1884 = vpop.f32.mrf.mxu0
  %v1885 = vpop.f32.mrf.mxu0
  %v1886 = vadd.f32 0.0, %v1885
  %v1887 = vpop.f32.mrf.mxu0
  %1888 = vmatprep.mubr.bf16.mxu0 0
  %1889 = vmatmul.mubr.bf16.gmra.mxu0 %v1722
  %v1890 = vpop.f32.mrf.mxu0
  %v1891 = vadd.f32 0.0, %v1890
  %v1892 = vpop.f32.mrf.mxu0
  %v1893 = vpop.f32.mrf.mxu0
  %v1894 = vadd.f32 0.0, %v1893
  %v1895 = vpop.f32.mrf.mxu0
  %1896 = vmatprep.mubr.bf16.mxu0 0
  %1897 = vmatmul.mubr.bf16.gmra.mxu0 %v1725
  %v1898 = vpop.f32.mrf.mxu0
  %v1899 = vadd.f32 0.0, %v1898
  %v1900 = vpop.f32.mrf.mxu0
  %v1901 = vpop.f32.mrf.mxu0
  %v1902 = vadd.f32 0.0, %v1901
  %v1903 = vpop.f32.mrf.mxu0
  %1904 = vmatprep.mubr.bf16.mxu0 0
  %1905 = vmatmul.mubr.bf16.gmra.mxu0 %v1728
  %v1906 = vpop.f32.mrf.mxu0
  %v1907 = vadd.f32 0.0, %v1906
  %v1908 = vpop.f32.mrf.mxu0
  %v1909 = vpop.f32.mrf.mxu0
  %v1910 = vadd.f32 0.0, %v1909
  %v1911 = vpop.f32.mrf.mxu0
  %1912 = vmatprep.mubr.bf16.mxu0 0
  %1913 = vmatmul.mubr.bf16.gmra.mxu0 %v1731
  %v1914 = vpop.f32.mrf.mxu0
  %v1915 = vadd.f32 0.0, %v1914
  %v1916 = vpop.f32.mrf.mxu0
  %v1917 = vpop.f32.mrf.mxu0
  %v1918 = vadd.f32 0.0, %v1917
  %v1919 = vpop.f32.mrf.mxu0
  %1920 = vmatprep.mubr.bf16.mxu0 0
  %1921 = vmatmul.mubr.bf16.gmra.mxu0 %v1734
  %v1922 = vpop.f32.mrf.mxu0
  %v1923 = vadd.f32 0.0, %v1922
  %v1924 = vpop.f32.mrf.mxu0
  %v1925 = vpop.f32.mrf.mxu0
  %v1926 = vadd.f32 0.0, %v1925
  %v1927 = vpop.f32.mrf.mxu0
  %1928 = vmatprep.mubr.bf16.mxu0 0
  %1929 = vmatmul.mubr.bf16.gmra.mxu0 %v1737
  %v1930 = vpop.f32.mrf.mxu0
  %v1931 = vadd.f32 0.0, %v1930
  %v1932 = vpop.f32.mrf.mxu0
  %v1933 = vpop.f32.mrf.mxu0
  %v1934 = vadd.f32 0.0, %v1933
  %v1935 = vpop.f32.mrf.mxu0
  %1936 = vmatprep.mubr.bf16.mxu0 0
  %1937 = vmatmul.mubr.bf16.gmra.mxu0 %v1740
  %v1938 = vpop.f32.mrf.mxu0
  %v1939 = vadd.f32 0.0, %v1938
  %v1940 = vpop.f32.mrf.mxu0
  %v1941 = vpop.f32.mrf.mxu0
  %v1942 = vadd.f32 0.0, %v1941
  %v1943 = vpop.f32.mrf.mxu0
  %1944 = vmatprep.mubr.bf16.mxu0 0
  %1945 = vmatmul.mubr.bf16.gmra.mxu0 %v1743
  %v1946 = vpop.f32.mrf.mxu0
  %v1947 = vadd.f32 0.0, %v1946
  %v1948 = vpop.f32.mrf.mxu0
  %v1949 = vpop.f32.mrf.mxu0
  %v1950 = vadd.f32 0.0, %v1949
  %v1951 = vpop.f32.mrf.mxu0
  %1952 = vmatprep.mubr.bf16.mxu0 0
  %1953 = vmatmul.mubr.bf16.gmra.mxu0 %v1746
  %v1954 = vpop.f32.mrf.mxu0
  %v1955 = vadd.f32 0.0, %v1954
  %v1956 = vpop.f32.mrf.mxu0
  %v1957 = vpop.f32.mrf.mxu0
  %v1958 = vadd.f32 0.0, %v1957
  %v1959 = vpop.f32.mrf.mxu0
  %1960 = vmatprep.mubr.bf16.mxu0 0
  %1961 = vmatmul.mubr.bf16.gmra.mxu0 %v1749
  %v1962 = vpop.f32.mrf.mxu0
  %v1963 = vadd.f32 0.0, %v1962
  %v1964 = vpop.f32.mrf.mxu0
  %v1965 = vpop.f32.mrf.mxu0
  %v1966 = vadd.f32 0.0, %v1965
  %v1967 = vpop.f32.mrf.mxu0
  %1968 = vmatprep.mubr.bf16.mxu0 0
  %1969 = vmatmul.mubr.bf16.gmra.mxu0 %v1752
  %v1970 = vpop.f32.mrf.mxu0
  %v1971 = vadd.f32 0.0, %v1970
  %v1972 = vpop.f32.mrf.mxu0
  %v1973 = vpop.f32.mrf.mxu0
  %v1974 = vadd.f32 0.0, %v1973
  %v1975 = vpop.f32.mrf.mxu0
  %1976 = vmatprep.mubr.bf16.mxu0 0
  %1977 = vmatmul.mubr.bf16.gmra.mxu0 %v1755
  %v1978 = vpop.f32.mrf.mxu0
  %v1979 = vadd.f32 0.0, %v1978
  %v1980 = vpop.f32.mrf.mxu0
  %v1981 = vpop.f32.mrf.mxu0
  %v1982 = vadd.f32 0.0, %v1981
  %v1983 = vpop.f32.mrf.mxu0
  %1984 = vmatprep.mubr.bf16.mxu0 0
  %1985 = vmatmul.mubr.bf16.gmra.mxu0 %v1758
  %v1986 = vpop.f32.mrf.mxu0
  %v1987 = vadd.f32 0.0, %v1986
  %v1988 = vpop.f32.mrf.mxu0
  %v1989 = vpop.f32.mrf.mxu0
  %v1990 = vpop.f32.mrf.mxu0
  %1991 = vdwg.mxu0
  %v1992 = vmax.f32 %v1315, %v1795
  %v1993 = vmax.f32 %v1318, %v1798
  %v1994 = vmax.f32 %v1323, %v1803
  %v1995 = vmax.f32 %v1326, %v1806
  %v1996 = vmax.f32 %v1331, %v1811
  %v1997 = vmax.f32 %v1334, %v1814
  %v1998 = vmax.f32 %v1339, %v1819
  %v1999 = vmax.f32 %v1342, %v1822
  %v2000 = vmax.f32 %v1347, %v1827
  %v2001 = vmax.f32 %v1350, %v1830
  %v2002 = vmax.f32 %v1355, %v1835
  %v2003 = vmax.f32 %v1358, %v1838
  %v2004 = vmax.f32 %v1363, %v1843
  %v2005 = vmax.f32 %v1366, %v1846
  %v2006 = vmax.f32 %v1371, %v1851
  %v2007 = vmax.f32 %v1374, %v1854
  %v2008 = vmax.f32 %v1379, %v1859
  %v2009 = vmax.f32 %v1382, %v1862
  %v2010 = vmax.f32 %v1387, %v1867
  %v2011 = vmax.f32 %v1390, %v1870
  %v2012 = vmax.f32 %v1395, %v1875
  %v2013 = vmax.f32 %v1398, %v1878
  %v2014 = vmax.f32 %v1403, %v1883
  %v2015 = vmax.f32 %v1406, %v1886
  %v2016 = vmax.f32 %v1411, %v1891
  %v2017 = vmax.f32 %v1414, %v1894
  %v2018 = vmax.f32 %v1419, %v1899
  %v2019 = vmax.f32 %v1422, %v1902
  %v2020 = vmax.f32 %v1427, %v1907
  %v2021 = vmax.f32 %v1430, %v1910
  %v2022 = vmax.f32 %v1435, %v1915
  %v2023 = vmax.f32 %v1438, %v1918
  %v2024 = vmax.f32 %v1443, %v1923
  %v2025 = vmax.f32 %v1446, %v1926
  %v2026 = vmax.f32 %v1451, %v1931
  %v2027 = vmax.f32 %v1454, %v1934
  %v2028 = vmax.f32 %v1459, %v1939
  %v2029 = vmax.f32 %v1462, %v1942
  %v2030 = vmax.f32 %v1467, %v1947
  %v2031 = vmax.f32 %v1470, %v1950
  %v2032 = vmax.f32 %v1475, %v1955
  %v2033 = vmax.f32 %v1478, %v1958
  %v2034 = vmax.f32 %v1483, %v1963
  %v2035 = vmax.f32 %v1486, %v1966
  %v2036 = vmax.f32 %v1491, %v1971
  %v2037 = vmax.f32 %v1494, %v1974
  %v2038 = vmax.f32 %v1499, %v1979
  %v2039 = vmax.f32 %v1502, %v1982
  %v2040 = vmax.f32 %v1507, %v1987
  %v2041 = vmax.f32 %v983, %v1992
  %v2042 = vmax.f32 %v984, %v1993
  %v2043 = vmax.f32 %v985, %v1994
  %v2044 = vmax.f32 %v986, %v1995
  %v2045 = vmax.f32 %v987, %v1996
  %v2046 = vmax.f32 %v988, %v1997
  %v2047 = vmax.f32 %v989, %v1998
  %v2048 = vmax.f32 %v990, %v1999
  %v2049 = vmax.f32 %v991, %v2000
  %v2050 = vmax.f32 %v992, %v2001
  %v2051 = vmax.f32 %v993, %v2002
  %v2052 = vmax.f32 %v994, %v2003
  %v2053 = vmax.f32 %v995, %v2004
  %v2054 = vmax.f32 %v996, %v2005
  %v2055 = vmax.f32 %v997, %v2006
  %v2056 = vmax.f32 %v998, %v2007
  %v2057 = vmax.f32 %v999, %v2008
  %v2058 = vmax.f32 %v1000, %v2009
  %v2059 = vmax.f32 %v1001, %v2010
  %v2060 = vmax.f32 %v1002, %v2011
  %v2061 = vmax.f32 %v1003, %v2012
  %v2062 = vmax.f32 %v1004, %v2013
  %v2063 = vmax.f32 %v1005, %v2014
  %v2064 = vmax.f32 %v1006, %v2015
  %v2065 = vmax.f32 %v1007, %v2016
  %v2066 = vmax.f32 %v1008, %v2017
  %v2067 = vmax.f32 %v1009, %v2018
  %v2068 = vmax.f32 %v1010, %v2019
  %v2069 = vmax.f32 %v1011, %v2020
  %v2070 = vmax.f32 %v1012, %v2021
  %v2071 = vmax.f32 %v1013, %v2022
  %v2072 = vmax.f32 %v1014, %v2023
  %v2073 = vmax.f32 %v1015, %v2024
  %v2074 = vmax.f32 %v1016, %v2025
  %v2075 = vmax.f32 %v1017, %v2026
  %v2076 = vmax.f32 %v1018, %v2027
  %v2077 = vmax.f32 %v1019, %v2028
  %v2078 = vmax.f32 %v1020, %v2029
  %v2079 = vmax.f32 %v1021, %v2030
  %v2080 = vmax.f32 %v1022, %v2031
  %v2081 = vmax.f32 %v1023, %v2032
  %v2082 = vmax.f32 %v1024, %v2033
  %v2083 = vmax.f32 %v1025, %v2034
  %v2084 = vmax.f32 %v1026, %v2035
  %v2085 = vmax.f32 %v1027, %v2036
  %v2086 = vmax.f32 %v1028, %v2037
  %v2087 = vmax.f32 %v1029, %v2038
  %v2088 = vmax.f32 %v1030, %v2039
  %v2089 = vmax.f32 %v1031, %v2040
  %v2090 = vld [vmem:[%s2] sm:$0x1]
  %v2092 = vlaneseq
  %v2093 = vshrl.u32 %v2092, 7
  %v2094 = vsub.s32 0, %v2093
  %v2095 = vrot.slane %v2090, %v2094
  %v2097 = vadd.f32 %v2041, %v2095
  %v2098 = vadd.f32 %v2042, %v2095
  %v2099 = vadd.f32 %v2043, %v2095
  %v2100 = vadd.f32 %v2044, %v2095
  %v2101 = vadd.f32 %v2045, %v2095
  %v2102 = vadd.f32 %v2046, %v2095
  %v2103 = vadd.f32 %v2047, %v2095
  %v2104 = vadd.f32 %v2048, %v2095
  %v2105 = vadd.f32 %v2049, %v2095
  %v2106 = vadd.f32 %v2050, %v2095
  %v2107 = vadd.f32 %v2051, %v2095
  %v2108 = vadd.f32 %v2052, %v2095
  %v2109 = vadd.f32 %v2053, %v2095
  %v2110 = vadd.f32 %v2054, %v2095
  %v2111 = vadd.f32 %v2055, %v2095
  %v2112 = vadd.f32 %v2056, %v2095
  %v2113 = vadd.f32 %v2057, %v2095
  %v2114 = vadd.f32 %v2058, %v2095
  %v2115 = vadd.f32 %v2059, %v2095
  %v2116 = vadd.f32 %v2060, %v2095
  %v2117 = vadd.f32 %v2061, %v2095
  %v2118 = vadd.f32 %v2062, %v2095
  %v2119 = vadd.f32 %v2063, %v2095
  %v2120 = vadd.f32 %v2064, %v2095
  %v2121 = vadd.f32 %v2065, %v2095
  %v2122 = vadd.f32 %v2066, %v2095
  %v2123 = vadd.f32 %v2067, %v2095
  %v2124 = vadd.f32 %v2068, %v2095
  %v2125 = vadd.f32 %v2069, %v2095
  %v2126 = vadd.f32 %v2070, %v2095
  %v2127 = vadd.f32 %v2071, %v2095
  %v2128 = vadd.f32 %v2072, %v2095
  %v2129 = vadd.f32 %v2073, %v2095
  %v2130 = vadd.f32 %v2074, %v2095
  %v2131 = vadd.f32 %v2075, %v2095
  %v2132 = vadd.f32 %v2076, %v2095
  %v2133 = vadd.f32 %v2077, %v2095
  %v2134 = vadd.f32 %v2078, %v2095
  %v2135 = vadd.f32 %v2079, %v2095
  %v2136 = vadd.f32 %v2080, %v2095
  %v2137 = vadd.f32 %v2081, %v2095
  %v2138 = vadd.f32 %v2082, %v2095
  %v2139 = vadd.f32 %v2083, %v2095
  %v2140 = vadd.f32 %v2084, %v2095
  %v2141 = vadd.f32 %v2085, %v2095
  %v2142 = vadd.f32 %v2086, %v2095
  %v2143 = vadd.f32 %v2087, %v2095
  %v2144 = vadd.f32 %v2088, %v2095
  %v2145 = vadd.f32 %v2089, %v2095
  %v2146 = vmax.f32 %v2097, 0.0
  %v2147 = vmax.f32 %v2098, 0.0
  %v2148 = vmax.f32 %v2099, 0.0
  %v2149 = vmax.f32 %v2100, 0.0
  %v2150 = vmax.f32 %v2101, 0.0
  %v2151 = vmax.f32 %v2102, 0.0
  %v2152 = vmax.f32 %v2103, 0.0
  %v2153 = vmax.f32 %v2104, 0.0
  %v2154 = vmax.f32 %v2105, 0.0
  %v2155 = vmax.f32 %v2106, 0.0
  %v2156 = vmax.f32 %v2107, 0.0
  %v2157 = vmax.f32 %v2108, 0.0
  %v2158 = vmax.f32 %v2109, 0.0
  %v2159 = vmax.f32 %v2110, 0.0
  %v2160 = vmax.f32 %v2111, 0.0
  %v2161 = vmax.f32 %v2112, 0.0
  %v2162 = vmax.f32 %v2113, 0.0
  %v2163 = vmax.f32 %v2114, 0.0
  %v2164 = vmax.f32 %v2115, 0.0
  %v2165 = vmax.f32 %v2116, 0.0
  %v2166 = vmax.f32 %v2117, 0.0
  %v2167 = vmax.f32 %v2118, 0.0
  %v2168 = vmax.f32 %v2119, 0.0
  %v2169 = vmax.f32 %v2120, 0.0
  %v2170 = vmax.f32 %v2121, 0.0
  %v2171 = vmax.f32 %v2122, 0.0
  %v2172 = vmax.f32 %v2123, 0.0
  %v2173 = vmax.f32 %v2124, 0.0
  %v2174 = vmax.f32 %v2125, 0.0
  %v2175 = vmax.f32 %v2126, 0.0
  %v2176 = vmax.f32 %v2127, 0.0
  %v2177 = vmax.f32 %v2128, 0.0
  %v2178 = vmax.f32 %v2129, 0.0
  %v2179 = vmax.f32 %v2130, 0.0
  %v2180 = vmax.f32 %v2131, 0.0
  %v2181 = vmax.f32 %v2132, 0.0
  %v2182 = vmax.f32 %v2133, 0.0
  %v2183 = vmax.f32 %v2134, 0.0
  %v2184 = vmax.f32 %v2135, 0.0
  %v2185 = vmax.f32 %v2136, 0.0
  %v2186 = vmax.f32 %v2137, 0.0
  %v2187 = vmax.f32 %v2138, 0.0
  %v2188 = vmax.f32 %v2139, 0.0
  %v2189 = vmax.f32 %v2140, 0.0
  %v2190 = vmax.f32 %v2141, 0.0
  %v2191 = vmax.f32 %v2142, 0.0
  %v2192 = vmax.f32 %v2143, 0.0
  %v2193 = vmax.f32 %v2144, 0.0
  %v2194 = vmax.f32 %v2145, 0.0
  %v2195 = vpack.c.bf16 %v2147, %v2146
  %v2196 = vpack.c.bf16 %v2149, %v2148
  %v2197 = vpack.c.bf16 %v2151, %v2150
  %v2198 = vpack.c.bf16 %v2153, %v2152
  %v2199 = vpack.c.bf16 %v2155, %v2154
  %v2200 = vpack.c.bf16 %v2157, %v2156
  %v2201 = vpack.c.bf16 %v2159, %v2158
  %v2202 = vpack.c.bf16 %v2161, %v2160
  %v2203 = vpack.c.bf16 %v2163, %v2162
  %v2204 = vpack.c.bf16 %v2165, %v2164
  %v2205 = vpack.c.bf16 %v2167, %v2166
  %v2206 = vpack.c.bf16 %v2169, %v2168
  %v2207 = vpack.c.bf16 %v2171, %v2170
  %v2208 = vpack.c.bf16 %v2173, %v2172
  %v2209 = vpack.c.bf16 %v2175, %v2174
  %v2210 = vpack.c.bf16 %v2177, %v2176
  %v2211 = vpack.c.bf16 %v2179, %v2178
  %v2212 = vpack.c.bf16 %v2181, %v2180
  %v2213 = vpack.c.bf16 %v2183, %v2182
  %v2214 = vpack.c.bf16 %v2185, %v2184
  %v2215 = vpack.c.bf16 %v2187, %v2186
  %v2216 = vpack.c.bf16 %v2189, %v2188
  %v2217 = vpack.c.bf16 %v2191, %v2190
  %v2218 = vpack.c.bf16 %v2193, %v2192
  %v2219 = vpack.c.bf16 %v2194, %v2194
  %v2245 = vunpack.c.l.b16 %v2195
  %v2246 = vunpack.c.h.b16 %v2195
  %v2247 = vunpack.c.l.b16 %v2196
  %v2248 = vunpack.c.h.b16 %v2196
  %v2249 = vunpack.c.l.b16 %v2197
  %v2250 = vunpack.c.h.b16 %v2197
  %v2251 = vunpack.c.l.b16 %v2198
  %v2252 = vunpack.c.h.b16 %v2198
  %v2253 = vunpack.c.l.b16 %v2199
  %v2254 = vunpack.c.h.b16 %v2199
  %v2255 = vunpack.c.l.b16 %v2200
  %v2256 = vunpack.c.h.b16 %v2200
  %v2257 = vunpack.c.l.b16 %v2201
  %v2258 = vunpack.c.h.b16 %v2201
  %v2259 = vunpack.c.l.b16 %v2202
  %v2260 = vunpack.c.h.b16 %v2202
  %v2261 = vunpack.c.l.b16 %v2203
  %v2262 = vunpack.c.h.b16 %v2203
  %v2263 = vunpack.c.l.b16 %v2204
  %v2264 = vunpack.c.h.b16 %v2204
  %v2265 = vunpack.c.l.b16 %v2205
  %v2266 = vunpack.c.h.b16 %v2205
  %v2267 = vunpack.c.l.b16 %v2206
  %v2268 = vunpack.c.h.b16 %v2206
  %v2269 = vunpack.c.l.b16 %v2207
  %v2270 = vunpack.c.h.b16 %v2207
  %v2271 = vunpack.c.l.b16 %v2208
  %v2272 = vunpack.c.h.b16 %v2208
  %v2273 = vunpack.c.l.b16 %v2209
  %v2274 = vunpack.c.h.b16 %v2209
  %v2275 = vunpack.c.l.b16 %v2210
  %v2276 = vunpack.c.h.b16 %v2210
  %v2277 = vunpack.c.l.b16 %v2211
  %v2278 = vunpack.c.h.b16 %v2211
  %v2279 = vunpack.c.l.b16 %v2212
  %v2280 = vunpack.c.h.b16 %v2212
  %v2281 = vunpack.c.l.b16 %v2213
  %v2282 = vunpack.c.h.b16 %v2213
  %v2283 = vunpack.c.l.b16 %v2214
  %v2284 = vunpack.c.h.b16 %v2214
  %v2285 = vunpack.c.l.b16 %v2215
  %v2286 = vunpack.c.h.b16 %v2215
  %v2287 = vunpack.c.l.b16 %v2216
  %v2288 = vunpack.c.h.b16 %v2216
  %v2289 = vunpack.c.l.b16 %v2217
  %v2290 = vunpack.c.h.b16 %v2217
  %v2291 = vunpack.c.l.b16 %v2218
  %v2292 = vunpack.c.h.b16 %v2218
  %v2293 = vunpack.c.l.b16 %v2219
  %v2294 = vpack.c.b16 %v2245, %v2245
  %v2295 = vpack.c.b16 %v2246, %v2246
  %v2296 = vpack.c.b16 %v2247, %v2247
  %v2297 = vpack.c.b16 %v2248, %v2248
  %v2298 = vpack.c.b16 %v2249, %v2249
  %v2299 = vpack.c.b16 %v2250, %v2250
  %v2300 = vpack.c.b16 %v2251, %v2251
  %v2301 = vpack.c.b16 %v2252, %v2252
  %v2302 = vpack.c.b16 %v2253, %v2253
  %v2303 = vpack.c.b16 %v2254, %v2254
  %v2304 = vpack.c.b16 %v2255, %v2255
  %v2305 = vpack.c.b16 %v2256, %v2256
  %v2306 = vpack.c.b16 %v2257, %v2257
  %v2307 = vpack.c.b16 %v2258, %v2258
  %v2308 = vpack.c.b16 %v2259, %v2259
  %v2309 = vpack.c.b16 %v2260, %v2260
  %v2310 = vpack.c.b16 %v2261, %v2261
  %v2311 = vpack.c.b16 %v2262, %v2262
  %v2312 = vpack.c.b16 %v2263, %v2263
  %v2313 = vpack.c.b16 %v2264, %v2264
  %v2314 = vpack.c.b16 %v2265, %v2265
  %v2315 = vpack.c.b16 %v2266, %v2266
  %v2316 = vpack.c.b16 %v2267, %v2267
  %v2317 = vpack.c.b16 %v2268, %v2268
  %v2318 = vpack.c.b16 %v2269, %v2269
  %v2319 = vpack.c.b16 %v2270, %v2270
  %v2320 = vpack.c.b16 %v2271, %v2271
  %v2321 = vpack.c.b16 %v2272, %v2272
  %v2322 = vpack.c.b16 %v2273, %v2273
  %v2323 = vpack.c.b16 %v2274, %v2274
  %v2324 = vpack.c.b16 %v2275, %v2275
  %v2325 = vpack.c.b16 %v2276, %v2276
  %v2326 = vpack.c.b16 %v2277, %v2277
  %v2327 = vpack.c.b16 %v2278, %v2278
  %v2328 = vpack.c.b16 %v2279, %v2279
  %v2329 = vpack.c.b16 %v2280, %v2280
  %v2330 = vpack.c.b16 %v2281, %v2281
  %v2331 = vpack.c.b16 %v2282, %v2282
  %v2332 = vpack.c.b16 %v2283, %v2283
  %v2333 = vpack.c.b16 %v2284, %v2284
  %v2334 = vpack.c.b16 %v2285, %v2285
  %v2335 = vpack.c.b16 %v2286, %v2286
  %v2336 = vpack.c.b16 %v2287, %v2287
  %v2337 = vpack.c.b16 %v2288, %v2288
  %v2338 = vpack.c.b16 %v2289, %v2289
  %v2339 = vpack.c.b16 %v2290, %v2290
  %v2340 = vpack.c.b16 %v2291, %v2291
  %v2341 = vpack.c.b16 %v2292, %v2292
  %v2342 = vpack.c.b16 %v2293, %v2293
  %vm2392 = vcmask 257024
  %2393 = vst.msk [vmem:[%s3] sm:$0xf] %vm2392, %v2294
  %2394 = vst.msk [vmem:[%s3 + $0x4] sm:$0xf] %vm2392, %v2295
  %2395 = vst.msk [vmem:[%s3 + $0x8] sm:$0xf] %vm2392, %v2296
  %2396 = vst.msk [vmem:[%s3 + $0xc] sm:$0xf] %vm2392, %v2297
  %2397 = vst.msk [vmem:[%s3 + $0x10] sm:$0xf] %vm2392, %v2298
  %2398 = vst.msk [vmem:[%s3 + $0x14] sm:$0xf] %vm2392, %v2299
  %2399 = vst.msk [vmem:[%s3 + $0x18] sm:$0xf] %vm2392, %v2300
  %2400 = vst.msk [vmem:[%s3 + $0x1c] sm:$0xf] %vm2392, %v2301
  %2401 = vst.msk [vmem:[%s3 + $0x20] sm:$0xf] %vm2392, %v2302
  %2402 = vst.msk [vmem:[%s3 + $0x24] sm:$0xf] %vm2392, %v2303
  %2403 = vst.msk [vmem:[%s3 + $0x28] sm:$0xf] %vm2392, %v2304
  %2404 = vst.msk [vmem:[%s3 + $0x2c] sm:$0xf] %vm2392, %v2305
  %2405 = vst.msk [vmem:[%s3 + $0x30] sm:$0xf] %vm2392, %v2306
  %2406 = vst.msk [vmem:[%s3 + $0x34] sm:$0xf] %vm2392, %v2307
  %2407 = vst.msk [vmem:[%s3 + $0x38] sm:$0xf] %vm2392, %v2308
  %2408 = vst.msk [vmem:[%s3 + $0x3c] sm:$0xf] %vm2392, %v2309
  %2409 = vst.msk [vmem:[%s3 + $0x40] sm:$0xf] %vm2392, %v2310
  %2410 = vst.msk [vmem:[%s3 + $0x44] sm:$0xf] %vm2392, %v2311
  %2411 = vst.msk [vmem:[%s3 + $0x48] sm:$0xf] %vm2392, %v2312
  %2412 = vst.msk [vmem:[%s3 + $0x4c] sm:$0xf] %vm2392, %v2313
  %2413 = vst.msk [vmem:[%s3 + $0x50] sm:$0xf] %vm2392, %v2314
  %2414 = vst.msk [vmem:[%s3 + $0x54] sm:$0xf] %vm2392, %v2315
  %2415 = vst.msk [vmem:[%s3 + $0x58] sm:$0xf] %vm2392, %v2316
  %2416 = vst.msk [vmem:[%s3 + $0x5c] sm:$0xf] %vm2392, %v2317
  %2417 = vst.msk [vmem:[%s3 + $0x60] sm:$0xf] %vm2392, %v2318
  %2418 = vst.msk [vmem:[%s3 + $0x64] sm:$0xf] %vm2392, %v2319
  %2419 = vst.msk [vmem:[%s3 + $0x68] sm:$0xf] %vm2392, %v2320
  %2420 = vst.msk [vmem:[%s3 + $0x6c] sm:$0xf] %vm2392, %v2321
  %2421 = vst.msk [vmem:[%s3 + $0x70] sm:$0xf] %vm2392, %v2322
  %2422 = vst.msk [vmem:[%s3 + $0x74] sm:$0xf] %vm2392, %v2323
  %2423 = vst.msk [vmem:[%s3 + $0x78] sm:$0xf] %vm2392, %v2324
  %2424 = vst.msk [vmem:[%s3 + $0x7c] sm:$0xf] %vm2392, %v2325
  %2425 = vst.msk [vmem:[%s3 + $0x80] sm:$0xf] %vm2392, %v2326
  %2426 = vst.msk [vmem:[%s3 + $0x84] sm:$0xf] %vm2392, %v2327
  %2427 = vst.msk [vmem:[%s3 + $0x88] sm:$0xf] %vm2392, %v2328
  %2428 = vst.msk [vmem:[%s3 + $0x8c] sm:$0xf] %vm2392, %v2329
  %2429 = vst.msk [vmem:[%s3 + $0x90] sm:$0xf] %vm2392, %v2330
  %2430 = vst.msk [vmem:[%s3 + $0x94] sm:$0xf] %vm2392, %v2331
  %2431 = vst.msk [vmem:[%s3 + $0x98] sm:$0xf] %vm2392, %v2332
  %2432 = vst.msk [vmem:[%s3 + $0x9c] sm:$0xf] %vm2392, %v2333
  %2433 = vst.msk [vmem:[%s3 + $0xa0] sm:$0xf] %vm2392, %v2334
  %2434 = vst.msk [vmem:[%s3 + $0xa4] sm:$0xf] %vm2392, %v2335
  %2435 = vst.msk [vmem:[%s3 + $0xa8] sm:$0xf] %vm2392, %v2336
  %2436 = vst.msk [vmem:[%s3 + $0xac] sm:$0xf] %vm2392, %v2337
  %2437 = vst.msk [vmem:[%s3 + $0xb0] sm:$0xf] %vm2392, %v2338
  %2438 = vst.msk [vmem:[%s3 + $0xb4] sm:$0xf] %vm2392, %v2339
  %2439 = vst.msk [vmem:[%s3 + $0xb8] sm:$0xf] %vm2392, %v2340
  %2440 = vst.msk [vmem:[%s3 + $0xbc] sm:$0xf] %vm2392, %v2341
  %2441 = vst.msk [vmem:[%s3 + $0xc0] sm:$0xf] %vm2392, %v2342
  // Predicated region
  $region14: #{mnist_cnn_forward.3} parent=0 // pred_check
    _
  $region15: #{mnist_cnn_forward.3} parent=0 // pred_check_branch
    %2443 = sbr.rel (0) target = $region17
  $region16: #{mnist_cnn_forward.3} parent=0 // pred_region
    _
  $region17: #{mnist_cnn_forward.3} parent=0 // pred_fallthru
    _
  // Predicated region
  $region18: #{mnist_cnn_forward.3} parent=0 // pred_check
    _
  $region19: #{mnist_cnn_forward.3} parent=0 // pred_check_branch
    %2445 = sbr.rel (0) target = $region21
  $region20: #{mnist_cnn_forward.3} parent=0 // pred_region
    _
  $region21: #{mnist_cnn_forward.3} parent=0 // pred_fallthru
    _

// kernel: mnist_cnn_forward.4
$region0: #{mnist_cnn_forward.4}
  #allocation0 [shape = 'u32[]', space=smem, size = 0x4, offset = 0x4, fixed_abs, tag = 'smem constant byte address 0x4 - core index']
  #allocation1 [shape = 'u32[144,128]{1,0:T(1,128)}', space=vmem, size = 0x12000, scoped, tag = 'internal scratch']
  %s0 = inlined_call_operand.vmem [shape: bf16[1,4,98,288], index: 0, kind: input, shape index: {}]
  %s1 = inlined_call_operand.vmem [shape: bf16[288,64], index: 1, kind: input, shape index: {}]
  %s2 = inlined_call_operand.vmem [shape: f32[1,64], index: 2, kind: input, shape index: {}]
  %s3 = inlined_call_operand.vmem [shape: bf16[1,98,64], index: 3, kind: output, shape index: {}]
  %s4 = sld [smem:[#allocation0]]
  $region22: #{mnist_cnn_forward.4} parent=0
    _
  %s6 = ssub.s32 1, %s4
  %s7 = scalar_select 0, %s6, %s4
  // Predicated region
  $region2: #{mnist_cnn_forward.4} parent=0 // pred_check
    _
  $region3: #{mnist_cnn_forward.4} parent=0 // pred_check_branch
    %9 = sbr.rel (0) target = $region5
  $region4: #{mnist_cnn_forward.4} parent=0 // pred_region
    _
  $region5: #{mnist_cnn_forward.4} parent=0 // pred_fallthru
    _
  // Predicated region
  $region6: #{mnist_cnn_forward.4} parent=0 // pred_check
    _
  $region7: #{mnist_cnn_forward.4} parent=0 // pred_check_branch
    %11 = sbr.rel (0) target = $region9
  $region8: #{mnist_cnn_forward.4} parent=0 // pred_region
    _
  $region9: #{mnist_cnn_forward.4} parent=0 // pred_fallthru
    _
  // Predicated region
  $region10: #{mnist_cnn_forward.4} parent=0 // pred_check
    _
  $region11: #{mnist_cnn_forward.4} parent=0 // pred_check_branch
    %13 = sbr.rel (0) target = $region13
  $region12: #{mnist_cnn_forward.4} parent=0 // pred_region
    _
  $region13: #{mnist_cnn_forward.4} parent=0 // pred_fallthru
    _
  %v15 = vld [vmem:[%s1] sm:$0xf]
  %v16 = vld [vmem:[%s1 + $0x4] sm:$0xf]
  %v17 = vld [vmem:[%s1 + $0x8] sm:$0xf]
  %v18 = vld [vmem:[%s1 + $0xc] sm:$0xf]
  %v19 = vld [vmem:[%s1 + $0x10] sm:$0xf]
  %v20 = vld [vmem:[%s1 + $0x14] sm:$0xf]
  %v21 = vld [vmem:[%s1 + $0x18] sm:$0xf]
  %v22 = vld [vmem:[%s1 + $0x1c] sm:$0xf]
  %v23 = vld [vmem:[%s1 + $0x20] sm:$0xf]
  %v24 = vld [vmem:[%s1 + $0x24] sm:$0xf]
  %v25 = vld [vmem:[%s1 + $0x28] sm:$0xf]
  %v26 = vld [vmem:[%s1 + $0x2c] sm:$0xf]
  %v27 = vld [vmem:[%s1 + $0x30] sm:$0xf]
  %v28 = vld [vmem:[%s1 + $0x34] sm:$0xf]
  %v29 = vld [vmem:[%s1 + $0x38] sm:$0xf]
  %v30 = vld [vmem:[%s1 + $0x3c] sm:$0xf]
  %v31 = vld [vmem:[%s1 + $0x40] sm:$0xf]
  %v32 = vld [vmem:[%s1 + $0x44] sm:$0xf]
  %v33 = vld [vmem:[%s1 + $0x48] sm:$0xf]
  %v34 = vld [vmem:[%s1 + $0x4c] sm:$0xf]
  %v35 = vld [vmem:[%s1 + $0x50] sm:$0xf]
  %v36 = vld [vmem:[%s1 + $0x54] sm:$0xf]
  %v37 = vld [vmem:[%s1 + $0x58] sm:$0xf]
  %v38 = vld [vmem:[%s1 + $0x5c] sm:$0xf]
  %v39 = vld [vmem:[%s1 + $0x60] sm:$0xf]
  %v40 = vld [vmem:[%s1 + $0x64] sm:$0xf]
  %v41 = vld [vmem:[%s1 + $0x68] sm:$0xf]
  %v42 = vld [vmem:[%s1 + $0x6c] sm:$0xf]
  %v43 = vld [vmem:[%s1 + $0x70] sm:$0xf]
  %v44 = vld [vmem:[%s1 + $0x74] sm:$0xf]
  %v45 = vld [vmem:[%s1 + $0x78] sm:$0xf]
  %v46 = vld [vmem:[%s1 + $0x7c] sm:$0xf]
  %v47 = vld [vmem:[%s1 + $0x80] sm:$0xf]
  %v48 = vld [vmem:[%s1 + $0x84] sm:$0xf]
  %v49 = vld [vmem:[%s1 + $0x88] sm:$0xf]
  %v50 = vld [vmem:[%s1 + $0x8c] sm:$0xf]
  %v51 = vld [vmem:[%s0] sm:$0xff]
  %v52 = vld [vmem:[%s0 + $0x8] sm:$0xf]
  %v53 = vld [vmem:[%s0 + $0xc] sm:$0xff]
  %v54 = vld [vmem:[%s0 + $0x14] sm:$0xf]
  %v55 = vld [vmem:[%s0 + $0x18] sm:$0xff]
  %v56 = vld [vmem:[%s0 + $0x20] sm:$0xf]
  %v57 = vld [vmem:[%s0 + $0x24] sm:$0xff]
  %v58 = vld [vmem:[%s0 + $0x2c] sm:$0xf]
  %v59 = vld [vmem:[%s0 + $0x30] sm:$0xff]
  %v60 = vld [vmem:[%s0 + $0x38] sm:$0xf]
  %v61 = vld [vmem:[%s0 + $0x3c] sm:$0xff]
  %v62 = vld [vmem:[%s0 + $0x44] sm:$0xf]
  %v63 = vld [vmem:[%s0 + $0x48] sm:$0xff]
  %v64 = vld [vmem:[%s0 + $0x50] sm:$0xf]
  %v65 = vld [vmem:[%s0 + $0x54] sm:$0xff]
  %v66 = vld [vmem:[%s0 + $0x5c] sm:$0xf]
  %v67 = vld [vmem:[%s0 + $0x60] sm:$0xff]
  %v68 = vld [vmem:[%s0 + $0x68] sm:$0xf]
  %v69 = vld [vmem:[%s0 + $0x6c] sm:$0xff]
  %v70 = vld [vmem:[%s0 + $0x74] sm:$0xf]
  %v71 = vld [vmem:[%s0 + $0x78] sm:$0xff]
  %v72 = vld [vmem:[%s0 + $0x80] sm:$0xf]
  %v73 = vld [vmem:[%s0 + $0x84] sm:$0xff]
  %v74 = vld [vmem:[%s0 + $0x8c] sm:$0xf]
  %v75 = vld [vmem:[%s0 + $0x90] sm:$0x11]
  %v76 = vld [vmem:[%s0 + $0x98] sm:$0x1]
  %v103 = vunpack.c.l.b16 %v51
  %v104 = vunpack.c.h.b16 %v51
  %v105 = vunpack.c.l.b16 %v52
  %v106 = vunpack.c.l.b16 %v53
  %v107 = vunpack.c.h.b16 %v53
  %v108 = vunpack.c.l.b16 %v54
  %v109 = vunpack.c.l.b16 %v55
  %v110 = vunpack.c.h.b16 %v55
  %v111 = vunpack.c.l.b16 %v56
  %v112 = vunpack.c.l.b16 %v57
  %v113 = vunpack.c.h.b16 %v57
  %v114 = vunpack.c.l.b16 %v58
  %v115 = vunpack.c.l.b16 %v59
  %v116 = vunpack.c.h.b16 %v59
  %v117 = vunpack.c.l.b16 %v60
  %v118 = vunpack.c.l.b16 %v61
  %v119 = vunpack.c.h.b16 %v61
  %v120 = vunpack.c.l.b16 %v62
  %v121 = vunpack.c.l.b16 %v63
  %v122 = vunpack.c.h.b16 %v63
  %v123 = vunpack.c.l.b16 %v64
  %v124 = vunpack.c.l.b16 %v65
  %v125 = vunpack.c.h.b16 %v65
  %v126 = vunpack.c.l.b16 %v66
  %v127 = vunpack.c.l.b16 %v67
  %v128 = vunpack.c.h.b16 %v67
  %v129 = vunpack.c.l.b16 %v68
  %v130 = vunpack.c.l.b16 %v69
  %v131 = vunpack.c.h.b16 %v69
  %v132 = vunpack.c.l.b16 %v70
  %v133 = vunpack.c.l.b16 %v71
  %v134 = vunpack.c.h.b16 %v71
  %v135 = vunpack.c.l.b16 %v72
  %v136 = vunpack.c.l.b16 %v73
  %v137 = vunpack.c.h.b16 %v73
  %v138 = vunpack.c.l.b16 %v74
  %v139 = vunpack.c.l.b16 %v75
  %v140 = vunpack.c.h.b16 %v75
  %v141 = vunpack.c.l.b16 %v76
  %v142 = vpack.c.b16 %v106, %v103
  %v143 = vpack.c.b16 %v107, %v104
  %v144 = vpack.c.b16 %v108, %v105
  %v145 = vpack.c.b16 %v112, %v109
  %v146 = vpack.c.b16 %v113, %v110
  %v147 = vpack.c.b16 %v114, %v111
  %v148 = vpack.c.b16 %v118, %v115
  %v149 = vpack.c.b16 %v119, %v116
  %v150 = vpack.c.b16 %v120, %v117
  %v151 = vpack.c.b16 %v124, %v121
  %v152 = vpack.c.b16 %v125, %v122
  %v153 = vpack.c.b16 %v126, %v123
  %v154 = vpack.c.b16 %v130, %v127
  %v155 = vpack.c.b16 %v131, %v128
  %v156 = vpack.c.b16 %v132, %v129
  %v157 = vpack.c.b16 %v136, %v133
  %v158 = vpack.c.b16 %v137, %v134
  %v159 = vpack.c.b16 %v138, %v135
  %v160 = vpack.c.b16 %v139, %v139
  %v161 = vpack.c.b16 %v140, %v140
  %v162 = vpack.c.b16 %v141, %v141
  %v213 = vunpack.c.l.b16 %v15
  %v214 = vunpack.c.l.b16 %v16
  %v215 = vunpack.c.l.b16 %v17
  %v216 = vunpack.c.l.b16 %v18
  %v217 = vunpack.c.l.b16 %v19
  %v218 = vunpack.c.l.b16 %v20
  %v219 = vunpack.c.l.b16 %v21
  %v220 = vunpack.c.l.b16 %v22
  %v221 = vunpack.c.l.b16 %v23
  %v222 = vunpack.c.l.b16 %v24
  %v223 = vunpack.c.l.b16 %v25
  %v224 = vunpack.c.l.b16 %v26
  %v225 = vunpack.c.l.b16 %v27
  %v226 = vunpack.c.l.b16 %v28
  %v227 = vunpack.c.l.b16 %v29
  %v228 = vunpack.c.l.b16 %v30
  %v229 = vunpack.c.l.b16 %v31
  %v230 = vunpack.c.l.b16 %v32
  %v231 = vunpack.c.l.b16 %v33
  %v232 = vunpack.c.l.b16 %v34
  %v233 = vunpack.c.l.b16 %v35
  %v234 = vunpack.c.l.b16 %v36
  %v235 = vunpack.c.l.b16 %v37
  %v236 = vunpack.c.l.b16 %v38
  %v237 = vunpack.c.l.b16 %v39
  %v238 = vunpack.c.l.b16 %v40
  %v239 = vunpack.c.l.b16 %v41
  %v240 = vunpack.c.l.b16 %v42
  %v241 = vunpack.c.l.b16 %v43
  %v242 = vunpack.c.l.b16 %v44
  %v243 = vunpack.c.l.b16 %v45
  %v244 = vunpack.c.l.b16 %v46
  %v245 = vunpack.c.l.b16 %v47
  %v246 = vunpack.c.l.b16 %v48
  %v247 = vunpack.c.l.b16 %v49
  %v248 = vunpack.c.l.b16 %v50
  %v249 = vpack.c.b16 %v214, %v213
  %v250 = vpack.c.b16 %v216, %v215
  %v251 = vpack.c.b16 %v218, %v217
  %v252 = vpack.c.b16 %v220, %v219
  %v253 = vpack.c.b16 %v222, %v221
  %v254 = vpack.c.b16 %v224, %v223
  %v255 = vpack.c.b16 %v226, %v225
  %v256 = vpack.c.b16 %v228, %v227
  %v257 = vpack.c.b16 %v230, %v229
  %v258 = vpack.c.b16 %v232, %v231
  %v259 = vpack.c.b16 %v234, %v233
  %v260 = vpack.c.b16 %v236, %v235
  %v261 = vpack.c.b16 %v238, %v237
  %v262 = vpack.c.b16 %v240, %v239
  %v263 = vpack.c.b16 %v242, %v241
  %v264 = vpack.c.b16 %v244, %v243
  %v265 = vpack.c.b16 %v246, %v245
  %v266 = vpack.c.b16 %v248, %v247
  %vm285 = vcmask 261120
  %v287 = vsel %vm285, %v144, 0
  %v290 = vsel %vm285, %v147, 0
  %v293 = vsel %vm285, %v150, 0
  %v296 = vsel %vm285, %v153, 0
  %v299 = vsel %vm285, %v156, 0
  %v302 = vsel %vm285, %v159, 0
  %v305 = vsel %vm285, %v162, 0
  %307 = vmatprep.subr.bf16.mxu0 0
  %308 = vmatpush1.bf16.msra.mxu0 %v256
  %309 = vmatprep.subr.bf16.mxu0 0
  %310 = vmatpush1.bf16.msra.mxu0 %v255
  %311 = vmatprep.subr.bf16.mxu0 0
  %312 = vmatpush1.bf16.msra.mxu0 %v254
  %313 = vmatprep.subr.bf16.mxu0 0
  %314 = vmatpush1.bf16.msra.mxu0 %v253
  %315 = vmatprep.subr.bf16.mxu0 0
  %316 = vmatpush1.bf16.msra.mxu0 %v252
  %317 = vmatprep.subr.bf16.mxu0 0
  %318 = vmatpush1.bf16.msra.mxu0 %v251
  %319 = vmatprep.subr.bf16.mxu0 0
  %320 = vmatpush1.bf16.msra.mxu0 %v250
  %321 = vmatprep.subr.bf16.mxu0 0
  %322 = vmatpush1.bf16.msra.mxu0 %v249
  %323 = vmatprep.subr.bf16.mxu0 0
  %324 = vmatpush2.bf16.msra.mxu0 %v264
  %325 = vmatprep.subr.bf16.mxu0 0
  %326 = vmatpush2.bf16.msra.mxu0 %v263
  %327 = vmatprep.subr.bf16.mxu0 0
  %328 = vmatpush2.bf16.msra.mxu0 %v262
  %329 = vmatprep.subr.bf16.mxu0 0
  %330 = vmatpush2.bf16.msra.mxu0 %v261
  %331 = vmatprep.subr.bf16.mxu0 0
  %332 = vmatpush2.bf16.msra.mxu0 %v260
  %333 = vmatprep.subr.bf16.mxu0 0
  %334 = vmatpush2.bf16.msra.mxu0 %v259
  %335 = vmatprep.subr.bf16.mxu0 0
  %336 = vmatpush2.bf16.msra.mxu0 %v258
  %337 = vmatprep.subr.bf16.mxu0 0
  %338 = vmatpush2.bf16.msra.mxu0 %v257
  %339 = vmatprep.mubr.bf16.mxu0 %v143
  %340 = vmatmul.mubr.bf16.gmra.mxu0 %v142
  %v341 = vpop.f32.mrf.mxu0
  %v342 = vadd.f32 0.0, %v341
  %v343 = vpop.f32.mrf.mxu0
  %v344 = vpop.f32.mrf.mxu0
  %v345 = vadd.f32 0.0, %v344
  %v346 = vpop.f32.mrf.mxu0
  %347 = vmatprep.mubr.bf16.mxu0 %v146
  %348 = vmatmul.mubr.bf16.gmra.mxu0 %v145
  %v349 = vpop.f32.mrf.mxu0
  %v350 = vadd.f32 0.0, %v349
  %v351 = vpop.f32.mrf.mxu0
  %v352 = vpop.f32.mrf.mxu0
  %v353 = vadd.f32 0.0, %v352
  %v354 = vpop.f32.mrf.mxu0
  %355 = vmatprep.mubr.bf16.mxu0 %v149
  %356 = vmatmul.mubr.bf16.gmra.mxu0 %v148
  %v357 = vpop.f32.mrf.mxu0
  %v358 = vadd.f32 0.0, %v357
  %v359 = vpop.f32.mrf.mxu0
  %v360 = vpop.f32.mrf.mxu0
  %v361 = vadd.f32 0.0, %v360
  %v362 = vpop.f32.mrf.mxu0
  %363 = vmatprep.mubr.bf16.mxu0 %v152
  %364 = vmatmul.mubr.bf16.gmra.mxu0 %v151
  %v365 = vpop.f32.mrf.mxu0
  %v366 = vadd.f32 0.0, %v365
  %v367 = vpop.f32.mrf.mxu0
  %v368 = vpop.f32.mrf.mxu0
  %v369 = vadd.f32 0.0, %v368
  %v370 = vpop.f32.mrf.mxu0
  %371 = vmatprep.mubr.bf16.mxu0 %v155
  %372 = vmatmul.mubr.bf16.gmra.mxu0 %v154
  %v373 = vpop.f32.mrf.mxu0
  %v374 = vadd.f32 0.0, %v373
  %v375 = vpop.f32.mrf.mxu0
  %v376 = vpop.f32.mrf.mxu0
  %v377 = vadd.f32 0.0, %v376
  %v378 = vpop.f32.mrf.mxu0
  %379 = vmatprep.mubr.bf16.mxu0 %v158
  %380 = vmatmul.mubr.bf16.gmra.mxu0 %v157
  %v381 = vpop.f32.mrf.mxu0
  %v382 = vadd.f32 0.0, %v381
  %v383 = vpop.f32.mrf.mxu0
  %v384 = vpop.f32.mrf.mxu0
  %v385 = vadd.f32 0.0, %v384
  %v386 = vpop.f32.mrf.mxu0
  %387 = vmatprep.mubr.bf16.mxu0 %v161
  %388 = vmatmul.mubr.bf16.gmra.mxu0 %v160
  %v389 = vpop.f32.mrf.mxu0
  %v390 = vadd.f32 0.0, %v389
  %v391 = vpop.f32.mrf.mxu0
  %v392 = vpop.f32.mrf.mxu0
  %v393 = vpop.f32.mrf.mxu0
  %394 = vdwg.mxu0
  %395 = vmatprep.subr.bf16.mxu0 0
  %396 = vmatpush1.bf16.msra.mxu0 0
  %397 = vmatprep.subr.bf16.mxu0 0
  %398 = vmatpush1.bf16.msra.mxu0 0
  %399 = vmatprep.subr.bf16.mxu0 0
  %400 = vmatpush1.bf16.msra.mxu0 0
  %401 = vmatprep.subr.bf16.mxu0 0
  %402 = vmatpush1.bf16.msra.mxu0 0
  %403 = vmatprep.subr.bf16.mxu0 0
  %404 = vmatpush1.bf16.msra.mxu0 0
  %405 = vmatprep.subr.bf16.mxu0 0
  %406 = vmatpush1.bf16.msra.mxu0 0
  %407 = vmatprep.subr.bf16.mxu0 0
  %408 = vmatpush1.bf16.msra.mxu0 %v266
  %409 = vmatprep.subr.bf16.mxu0 0
  %410 = vmatpush1.bf16.msra.mxu0 %v265
  %411 = vmatprep.subr.bf16.mxu0 0
  %412 = vmatpush2.bf16.msra.mxu0 0
  %413 = vmatprep.subr.bf16.mxu0 0
  %414 = vmatpush2.bf16.msra.mxu0 0
  %415 = vmatprep.subr.bf16.mxu0 0
  %416 = vmatpush2.bf16.msra.mxu0 0
  %417 = vmatprep.subr.bf16.mxu0 0
  %418 = vmatpush2.bf16.msra.mxu0 0
  %419 = vmatprep.subr.bf16.mxu0 0
  %420 = vmatpush2.bf16.msra.mxu0 0
  %421 = vmatprep.subr.bf16.mxu0 0
  %422 = vmatpush2.bf16.msra.mxu0 0
  %423 = vmatprep.subr.bf16.mxu0 0
  %424 = vmatpush2.bf16.msra.mxu0 0
  %425 = vmatprep.subr.bf16.mxu0 0
  %426 = vmatpush2.bf16.msra.mxu0 0
  %427 = vmatprep.mubr.bf16.mxu0 0
  %428 = vmatmul.mubr.bf16.gmra.mxu0 %v287
  %v429 = vpop.f32.mrf.mxu0
  %v430 = vadd.f32 %v342, %v429
  %v431 = vpop.f32.mrf.mxu0
  %v432 = vpop.f32.mrf.mxu0
  %v433 = vadd.f32 %v345, %v432
  %v434 = vpop.f32.mrf.mxu0
  %435 = vmatprep.mubr.bf16.mxu0 0
  %436 = vmatmul.mubr.bf16.gmra.mxu0 %v290
  %v437 = vpop.f32.mrf.mxu0
  %v438 = vadd.f32 %v350, %v437
  %v439 = vpop.f32.mrf.mxu0
  %v440 = vpop.f32.mrf.mxu0
  %v441 = vadd.f32 %v353, %v440
  %v442 = vpop.f32.mrf.mxu0
  %443 = vmatprep.mubr.bf16.mxu0 0
  %444 = vmatmul.mubr.bf16.gmra.mxu0 %v293
  %v445 = vpop.f32.mrf.mxu0
  %v446 = vadd.f32 %v358, %v445
  %v447 = vpop.f32.mrf.mxu0
  %v448 = vpop.f32.mrf.mxu0
  %v449 = vadd.f32 %v361, %v448
  %v450 = vpop.f32.mrf.mxu0
  %451 = vmatprep.mubr.bf16.mxu0 0
  %452 = vmatmul.mubr.bf16.gmra.mxu0 %v296
  %v453 = vpop.f32.mrf.mxu0
  %v454 = vadd.f32 %v366, %v453
  %v455 = vpop.f32.mrf.mxu0
  %v456 = vpop.f32.mrf.mxu0
  %v457 = vadd.f32 %v369, %v456
  %v458 = vpop.f32.mrf.mxu0
  %459 = vmatprep.mubr.bf16.mxu0 0
  %460 = vmatmul.mubr.bf16.gmra.mxu0 %v299
  %v461 = vpop.f32.mrf.mxu0
  %v462 = vadd.f32 %v374, %v461
  %v463 = vpop.f32.mrf.mxu0
  %v464 = vpop.f32.mrf.mxu0
  %v465 = vadd.f32 %v377, %v464
  %v466 = vpop.f32.mrf.mxu0
  %467 = vmatprep.mubr.bf16.mxu0 0
  %468 = vmatmul.mubr.bf16.gmra.mxu0 %v302
  %v469 = vpop.f32.mrf.mxu0
  %v470 = vadd.f32 %v382, %v469
  %v471 = vpop.f32.mrf.mxu0
  %v472 = vpop.f32.mrf.mxu0
  %v473 = vadd.f32 %v385, %v472
  %v474 = vpop.f32.mrf.mxu0
  %475 = vmatprep.mubr.bf16.mxu0 0
  %476 = vmatmul.mubr.bf16.gmra.mxu0 %v305
  %v477 = vpop.f32.mrf.mxu0
  %v478 = vadd.f32 %v390, %v477
  %v479 = vpop.f32.mrf.mxu0
  %v480 = vpop.f32.mrf.mxu0
  %v481 = vpop.f32.mrf.mxu0
  %482 = vdwg.mxu0
  %s483 = scalar_lea.vmem %s0, 156
  %v484 = vld [vmem:[%s483] sm:$0xff]
  %v485 = vld [vmem:[%s483 + $0x8] sm:$0xf]
  %v486 = vld [vmem:[%s483 + $0xc] sm:$0xff]
  %v487 = vld [vmem:[%s483 + $0x14] sm:$0xf]
  %v488 = vld [vmem:[%s483 + $0x18] sm:$0xff]
  %v489 = vld [vmem:[%s483 + $0x20] sm:$0xf]
  %v490 = vld [vmem:[%s483 + $0x24] sm:$0xff]
  %v491 = vld [vmem:[%s483 + $0x2c] sm:$0xf]
  %v492 = vld [vmem:[%s483 + $0x30] sm:$0xff]
  %v493 = vld [vmem:[%s483 + $0x38] sm:$0xf]
  %v494 = vld [vmem:[%s483 + $0x3c] sm:$0xff]
  %v495 = vld [vmem:[%s483 + $0x44] sm:$0xf]
  %v496 = vld [vmem:[%s483 + $0x48] sm:$0xff]
  %v497 = vld [vmem:[%s483 + $0x50] sm:$0xf]
  %v498 = vld [vmem:[%s483 + $0x54] sm:$0xff]
  %v499 = vld [vmem:[%s483 + $0x5c] sm:$0xf]
  %v500 = vld [vmem:[%s483 + $0x60] sm:$0xff]
  %v501 = vld [vmem:[%s483 + $0x68] sm:$0xf]
  %v502 = vld [vmem:[%s483 + $0x6c] sm:$0xff]
  %v503 = vld [vmem:[%s483 + $0x74] sm:$0xf]
  %v504 = vld [vmem:[%s483 + $0x78] sm:$0xff]
  %v505 = vld [vmem:[%s483 + $0x80] sm:$0xf]
  %v506 = vld [vmem:[%s483 + $0x84] sm:$0xff]
  %v507 = vld [vmem:[%s483 + $0x8c] sm:$0xf]
  %v508 = vld [vmem:[%s483 + $0x90] sm:$0x11]
  %v509 = vld [vmem:[%s483 + $0x98] sm:$0x1]
  %v536 = vunpack.c.l.b16 %v484
  %v537 = vunpack.c.h.b16 %v484
  %v538 = vunpack.c.l.b16 %v485
  %v539 = vunpack.c.l.b16 %v486
  %v540 = vunpack.c.h.b16 %v486
  %v541 = vunpack.c.l.b16 %v487
  %v542 = vunpack.c.l.b16 %v488
  %v543 = vunpack.c.h.b16 %v488
  %v544 = vunpack.c.l.b16 %v489
  %v545 = vunpack.c.l.b16 %v490
  %v546 = vunpack.c.h.b16 %v490
  %v547 = vunpack.c.l.b16 %v491
  %v548 = vunpack.c.l.b16 %v492
  %v549 = vunpack.c.h.b16 %v492
  %v550 = vunpack.c.l.b16 %v493
  %v551 = vunpack.c.l.b16 %v494
  %v552 = vunpack.c.h.b16 %v494
  %v553 = vunpack.c.l.b16 %v495
  %v554 = vunpack.c.l.b16 %v496
  %v555 = vunpack.c.h.b16 %v496
  %v556 = vunpack.c.l.b16 %v497
  %v557 = vunpack.c.l.b16 %v498
  %v558 = vunpack.c.h.b16 %v498
  %v559 = vunpack.c.l.b16 %v499
  %v560 = vunpack.c.l.b16 %v500
  %v561 = vunpack.c.h.b16 %v500
  %v562 = vunpack.c.l.b16 %v501
  %v563 = vunpack.c.l.b16 %v502
  %v564 = vunpack.c.h.b16 %v502
  %v565 = vunpack.c.l.b16 %v503
  %v566 = vunpack.c.l.b16 %v504
  %v567 = vunpack.c.h.b16 %v504
  %v568 = vunpack.c.l.b16 %v505
  %v569 = vunpack.c.l.b16 %v506
  %v570 = vunpack.c.h.b16 %v506
  %v571 = vunpack.c.l.b16 %v507
  %v572 = vunpack.c.l.b16 %v508
  %v573 = vunpack.c.h.b16 %v508
  %v574 = vunpack.c.l.b16 %v509
  %v575 = vpack.c.b16 %v539, %v536
  %v576 = vpack.c.b16 %v540, %v537
  %v577 = vpack.c.b16 %v541, %v538
  %v578 = vpack.c.b16 %v545, %v542
  %v579 = vpack.c.b16 %v546, %v543
  %v580 = vpack.c.b16 %v547, %v544
  %v581 = vpack.c.b16 %v551, %v548
  %v582 = vpack.c.b16 %v552, %v549
  %v583 = vpack.c.b16 %v553, %v550
  %v584 = vpack.c.b16 %v557, %v554
  %v585 = vpack.c.b16 %v558, %v555
  %v586 = vpack.c.b16 %v559, %v556
  %v587 = vpack.c.b16 %v563, %v560
  %v588 = vpack.c.b16 %v564, %v561
  %v589 = vpack.c.b16 %v565, %v562
  %v590 = vpack.c.b16 %v569, %v566
  %v591 = vpack.c.b16 %v570, %v567
  %v592 = vpack.c.b16 %v571, %v568
  %v593 = vpack.c.b16 %v572, %v572
  %v594 = vpack.c.b16 %v573, %v573
  %v595 = vpack.c.b16 %v574, %v574
  %v611 = vsel %vm285, %v577, 0
  %v614 = vsel %vm285, %v580, 0
  %v617 = vsel %vm285, %v583, 0
  %v620 = vsel %vm285, %v586, 0
  %v623 = vsel %vm285, %v589, 0
  %v626 = vsel %vm285, %v592, 0
  %v629 = vsel %vm285, %v595, 0
  %631 = vmatprep.subr.bf16.mxu0 0
  %632 = vmatpush1.bf16.msra.mxu0 %v256
  %633 = vmatprep.subr.bf16.mxu0 0
  %634 = vmatpush1.bf16.msra.mxu0 %v255
  %635 = vmatprep.subr.bf16.mxu0 0
  %636 = vmatpush1.bf16.msra.mxu0 %v254
  %637 = vmatprep.subr.bf16.mxu0 0
  %638 = vmatpush1.bf16.msra.mxu0 %v253
  %639 = vmatprep.subr.bf16.mxu0 0
  %640 = vmatpush1.bf16.msra.mxu0 %v252
  %641 = vmatprep.subr.bf16.mxu0 0
  %642 = vmatpush1.bf16.msra.mxu0 %v251
  %643 = vmatprep.subr.bf16.mxu0 0
  %644 = vmatpush1.bf16.msra.mxu0 %v250
  %645 = vmatprep.subr.bf16.mxu0 0
  %646 = vmatpush1.bf16.msra.mxu0 %v249
  %647 = vmatprep.subr.bf16.mxu0 0
  %648 = vmatpush2.bf16.msra.mxu0 %v264
  %649 = vmatprep.subr.bf16.mxu0 0
  %650 = vmatpush2.bf16.msra.mxu0 %v263
  %651 = vmatprep.subr.bf16.mxu0 0
  %652 = vmatpush2.bf16.msra.mxu0 %v262
  %653 = vmatprep.subr.bf16.mxu0 0
  %654 = vmatpush2.bf16.msra.mxu0 %v261
  %655 = vmatprep.subr.bf16.mxu0 0
  %656 = vmatpush2.bf16.msra.mxu0 %v260
  %657 = vmatprep.subr.bf16.mxu0 0
  %658 = vmatpush2.bf16.msra.mxu0 %v259
  %659 = vmatprep.subr.bf16.mxu0 0
  %660 = vmatpush2.bf16.msra.mxu0 %v258
  %661 = vmatprep.subr.bf16.mxu0 0
  %662 = vmatpush2.bf16.msra.mxu0 %v257
  %663 = vmatprep.mubr.bf16.mxu0 %v576
  %664 = vmatmul.mubr.bf16.gmra.mxu0 %v575
  %v665 = vpop.f32.mrf.mxu0
  %v666 = vadd.f32 0.0, %v665
  %v667 = vpop.f32.mrf.mxu0
  %v668 = vpop.f32.mrf.mxu0
  %v669 = vadd.f32 0.0, %v668
  %v670 = vpop.f32.mrf.mxu0
  %671 = vmatprep.mubr.bf16.mxu0 %v579
  %672 = vmatmul.mubr.bf16.gmra.mxu0 %v578
  %v673 = vpop.f32.mrf.mxu0
  %v674 = vadd.f32 0.0, %v673
  %v675 = vpop.f32.mrf.mxu0
  %v676 = vpop.f32.mrf.mxu0
  %v677 = vadd.f32 0.0, %v676
  %v678 = vpop.f32.mrf.mxu0
  %679 = vmatprep.mubr.bf16.mxu0 %v582
  %680 = vmatmul.mubr.bf16.gmra.mxu0 %v581
  %v681 = vpop.f32.mrf.mxu0
  %v682 = vadd.f32 0.0, %v681
  %v683 = vpop.f32.mrf.mxu0
  %v684 = vpop.f32.mrf.mxu0
  %v685 = vadd.f32 0.0, %v684
  %v686 = vpop.f32.mrf.mxu0
  %687 = vmatprep.mubr.bf16.mxu0 %v585
  %688 = vmatmul.mubr.bf16.gmra.mxu0 %v584
  %v689 = vpop.f32.mrf.mxu0
  %v690 = vadd.f32 0.0, %v689
  %v691 = vpop.f32.mrf.mxu0
  %v692 = vpop.f32.mrf.mxu0
  %v693 = vadd.f32 0.0, %v692
  %v694 = vpop.f32.mrf.mxu0
  %695 = vmatprep.mubr.bf16.mxu0 %v588
  %696 = vmatmul.mubr.bf16.gmra.mxu0 %v587
  %v697 = vpop.f32.mrf.mxu0
  %v698 = vadd.f32 0.0, %v697
  %v699 = vpop.f32.mrf.mxu0
  %v700 = vpop.f32.mrf.mxu0
  %v701 = vadd.f32 0.0, %v700
  %v702 = vpop.f32.mrf.mxu0
  %703 = vmatprep.mubr.bf16.mxu0 %v591
  %704 = vmatmul.mubr.bf16.gmra.mxu0 %v590
  %v705 = vpop.f32.mrf.mxu0
  %v706 = vadd.f32 0.0, %v705
  %v707 = vpop.f32.mrf.mxu0
  %v708 = vpop.f32.mrf.mxu0
  %v709 = vadd.f32 0.0, %v708
  %v710 = vpop.f32.mrf.mxu0
  %711 = vmatprep.mubr.bf16.mxu0 %v594
  %712 = vmatmul.mubr.bf16.gmra.mxu0 %v593
  %v713 = vpop.f32.mrf.mxu0
  %v714 = vadd.f32 0.0, %v713
  %v715 = vpop.f32.mrf.mxu0
  %v716 = vpop.f32.mrf.mxu0
  %v717 = vpop.f32.mrf.mxu0
  %718 = vdwg.mxu0
  %719 = vmatprep.subr.bf16.mxu0 0
  %720 = vmatpush1.bf16.msra.mxu0 0
  %721 = vmatprep.subr.bf16.mxu0 0
  %722 = vmatpush1.bf16.msra.mxu0 0
  %723 = vmatprep.subr.bf16.mxu0 0
  %724 = vmatpush1.bf16.msra.mxu0 0
  %725 = vmatprep.subr.bf16.mxu0 0
  %726 = vmatpush1.bf16.msra.mxu0 0
  %727 = vmatprep.subr.bf16.mxu0 0
  %728 = vmatpush1.bf16.msra.mxu0 0
  %729 = vmatprep.subr.bf16.mxu0 0
  %730 = vmatpush1.bf16.msra.mxu0 0
  %731 = vmatprep.subr.bf16.mxu0 0
  %732 = vmatpush1.bf16.msra.mxu0 %v266
  %733 = vmatprep.subr.bf16.mxu0 0
  %734 = vmatpush1.bf16.msra.mxu0 %v265
  %735 = vmatprep.subr.bf16.mxu0 0
  %736 = vmatpush2.bf16.msra.mxu0 0
  %737 = vmatprep.subr.bf16.mxu0 0
  %738 = vmatpush2.bf16.msra.mxu0 0
  %739 = vmatprep.subr.bf16.mxu0 0
  %740 = vmatpush2.bf16.msra.mxu0 0
  %741 = vmatprep.subr.bf16.mxu0 0
  %742 = vmatpush2.bf16.msra.mxu0 0
  %743 = vmatprep.subr.bf16.mxu0 0
  %744 = vmatpush2.bf16.msra.mxu0 0
  %745 = vmatprep.subr.bf16.mxu0 0
  %746 = vmatpush2.bf16.msra.mxu0 0
  %747 = vmatprep.subr.bf16.mxu0 0
  %748 = vmatpush2.bf16.msra.mxu0 0
  %749 = vmatprep.subr.bf16.mxu0 0
  %750 = vmatpush2.bf16.msra.mxu0 0
  %751 = vmatprep.mubr.bf16.mxu0 0
  %752 = vmatmul.mubr.bf16.gmra.mxu0 %v611
  %v753 = vpop.f32.mrf.mxu0
  %v754 = vadd.f32 %v666, %v753
  %v755 = vpop.f32.mrf.mxu0
  %v756 = vpop.f32.mrf.mxu0
  %v757 = vadd.f32 %v669, %v756
  %v758 = vpop.f32.mrf.mxu0
  %759 = vmatprep.mubr.bf16.mxu0 0
  %760 = vmatmul.mubr.bf16.gmra.mxu0 %v614
  %v761 = vpop.f32.mrf.mxu0
  %v762 = vadd.f32 %v674, %v761
  %v763 = vpop.f32.mrf.mxu0
  %v764 = vpop.f32.mrf.mxu0
  %v765 = vadd.f32 %v677, %v764
  %v766 = vpop.f32.mrf.mxu0
  %767 = vmatprep.mubr.bf16.mxu0 0
  %768 = vmatmul.mubr.bf16.gmra.mxu0 %v617
  %v769 = vpop.f32.mrf.mxu0
  %v770 = vadd.f32 %v682, %v769
  %v771 = vpop.f32.mrf.mxu0
  %v772 = vpop.f32.mrf.mxu0
  %v773 = vadd.f32 %v685, %v772
  %v774 = vpop.f32.mrf.mxu0
  %775 = vmatprep.mubr.bf16.mxu0 0
  %776 = vmatmul.mubr.bf16.gmra.mxu0 %v620
  %v777 = vpop.f32.mrf.mxu0
  %v778 = vadd.f32 %v690, %v777
  %v779 = vpop.f32.mrf.mxu0
  %v780 = vpop.f32.mrf.mxu0
  %v781 = vadd.f32 %v693, %v780
  %v782 = vpop.f32.mrf.mxu0
  %783 = vmatprep.mubr.bf16.mxu0 0
  %784 = vmatmul.mubr.bf16.gmra.mxu0 %v623
  %v785 = vpop.f32.mrf.mxu0
  %v786 = vadd.f32 %v698, %v785
  %v787 = vpop.f32.mrf.mxu0
  %v788 = vpop.f32.mrf.mxu0
  %v789 = vadd.f32 %v701, %v788
  %v790 = vpop.f32.mrf.mxu0
  %791 = vmatprep.mubr.bf16.mxu0 0
  %792 = vmatmul.mubr.bf16.gmra.mxu0 %v626
  %v793 = vpop.f32.mrf.mxu0
  %v794 = vadd.f32 %v706, %v793
  %v795 = vpop.f32.mrf.mxu0
  %v796 = vpop.f32.mrf.mxu0
  %v797 = vadd.f32 %v709, %v796
  %v798 = vpop.f32.mrf.mxu0
  %799 = vmatprep.mubr.bf16.mxu0 0
  %800 = vmatmul.mubr.bf16.gmra.mxu0 %v629
  %v801 = vpop.f32.mrf.mxu0
  %v802 = vadd.f32 %v714, %v801
  %v803 = vpop.f32.mrf.mxu0
  %v804 = vpop.f32.mrf.mxu0
  %v805 = vpop.f32.mrf.mxu0
  %806 = vdwg.mxu0
  %v807 = vmax.f32 %v430, %v754
  %v808 = vmax.f32 %v433, %v757
  %v809 = vmax.f32 %v438, %v762
  %v810 = vmax.f32 %v441, %v765
  %v811 = vmax.f32 %v446, %v770
  %v812 = vmax.f32 %v449, %v773
  %v813 = vmax.f32 %v454, %v778
  %v814 = vmax.f32 %v457, %v781
  %v815 = vmax.f32 %v462, %v786
  %v816 = vmax.f32 %v465, %v789
  %v817 = vmax.f32 %v470, %v794
  %v818 = vmax.f32 %v473, %v797
  %v819 = vmax.f32 %v478, %v802
  %s820 = scalar_lea.vmem %s0, 312
  %v821 = vld [vmem:[%s820] sm:$0xff]
  %v822 = vld [vmem:[%s820 + $0x8] sm:$0xf]
  %v823 = vld [vmem:[%s820 + $0xc] sm:$0xff]
  %v824 = vld [vmem:[%s820 + $0x14] sm:$0xf]
  %v825 = vld [vmem:[%s820 + $0x18] sm:$0xff]
  %v826 = vld [vmem:[%s820 + $0x20] sm:$0xf]
  %v827 = vld [vmem:[%s820 + $0x24] sm:$0xff]
  %v828 = vld [vmem:[%s820 + $0x2c] sm:$0xf]
  %v829 = vld [vmem:[%s820 + $0x30] sm:$0xff]
  %v830 = vld [vmem:[%s820 + $0x38] sm:$0xf]
  %v831 = vld [vmem:[%s820 + $0x3c] sm:$0xff]
  %v832 = vld [vmem:[%s820 + $0x44] sm:$0xf]
  %v833 = vld [vmem:[%s820 + $0x48] sm:$0xff]
  %v834 = vld [vmem:[%s820 + $0x50] sm:$0xf]
  %v835 = vld [vmem:[%s820 + $0x54] sm:$0xff]
  %v836 = vld [vmem:[%s820 + $0x5c] sm:$0xf]
  %v837 = vld [vmem:[%s820 + $0x60] sm:$0xff]
  %v838 = vld [vmem:[%s820 + $0x68] sm:$0xf]
  %v839 = vld [vmem:[%s820 + $0x6c] sm:$0xff]
  %v840 = vld [vmem:[%s820 + $0x74] sm:$0xf]
  %v841 = vld [vmem:[%s820 + $0x78] sm:$0xff]
  %v842 = vld [vmem:[%s820 + $0x80] sm:$0xf]
  %v843 = vld [vmem:[%s820 + $0x84] sm:$0xff]
  %v844 = vld [vmem:[%s820 + $0x8c] sm:$0xf]
  %v845 = vld [vmem:[%s820 + $0x90] sm:$0x11]
  %v846 = vld [vmem:[%s820 + $0x98] sm:$0x1]
  %v873 = vunpack.c.l.b16 %v821
  %v874 = vunpack.c.h.b16 %v821
  %v875 = vunpack.c.l.b16 %v822
  %v876 = vunpack.c.l.b16 %v823
  %v877 = vunpack.c.h.b16 %v823
  %v878 = vunpack.c.l.b16 %v824
  %v879 = vunpack.c.l.b16 %v825
  %v880 = vunpack.c.h.b16 %v825
  %v881 = vunpack.c.l.b16 %v826
  %v882 = vunpack.c.l.b16 %v827
  %v883 = vunpack.c.h.b16 %v827
  %v884 = vunpack.c.l.b16 %v828
  %v885 = vunpack.c.l.b16 %v829
  %v886 = vunpack.c.h.b16 %v829
  %v887 = vunpack.c.l.b16 %v830
  %v888 = vunpack.c.l.b16 %v831
  %v889 = vunpack.c.h.b16 %v831
  %v890 = vunpack.c.l.b16 %v832
  %v891 = vunpack.c.l.b16 %v833
  %v892 = vunpack.c.h.b16 %v833
  %v893 = vunpack.c.l.b16 %v834
  %v894 = vunpack.c.l.b16 %v835
  %v895 = vunpack.c.h.b16 %v835
  %v896 = vunpack.c.l.b16 %v836
  %v897 = vunpack.c.l.b16 %v837
  %v898 = vunpack.c.h.b16 %v837
  %v899 = vunpack.c.l.b16 %v838
  %v900 = vunpack.c.l.b16 %v839
  %v901 = vunpack.c.h.b16 %v839
  %v902 = vunpack.c.l.b16 %v840
  %v903 = vunpack.c.l.b16 %v841
  %v904 = vunpack.c.h.b16 %v841
  %v905 = vunpack.c.l.b16 %v842
  %v906 = vunpack.c.l.b16 %v843
  %v907 = vunpack.c.h.b16 %v843
  %v908 = vunpack.c.l.b16 %v844
  %v909 = vunpack.c.l.b16 %v845
  %v910 = vunpack.c.h.b16 %v845
  %v911 = vunpack.c.l.b16 %v846
  %v912 = vpack.c.b16 %v876, %v873
  %v913 = vpack.c.b16 %v877, %v874
  %v914 = vpack.c.b16 %v878, %v875
  %v915 = vpack.c.b16 %v882, %v879
  %v916 = vpack.c.b16 %v883, %v880
  %v917 = vpack.c.b16 %v884, %v881
  %v918 = vpack.c.b16 %v888, %v885
  %v919 = vpack.c.b16 %v889, %v886
  %v920 = vpack.c.b16 %v890, %v887
  %v921 = vpack.c.b16 %v894, %v891
  %v922 = vpack.c.b16 %v895, %v892
  %v923 = vpack.c.b16 %v896, %v893
  %v924 = vpack.c.b16 %v900, %v897
  %v925 = vpack.c.b16 %v901, %v898
  %v926 = vpack.c.b16 %v902, %v899
  %v927 = vpack.c.b16 %v906, %v903
  %v928 = vpack.c.b16 %v907, %v904
  %v929 = vpack.c.b16 %v908, %v905
  %v930 = vpack.c.b16 %v909, %v909
  %v931 = vpack.c.b16 %v910, %v910
  %v932 = vpack.c.b16 %v911, %v911
  %v948 = vsel %vm285, %v914, 0
  %v951 = vsel %vm285, %v917, 0
  %v954 = vsel %vm285, %v920, 0
  %v957 = vsel %vm285, %v923, 0
  %v960 = vsel %vm285, %v926, 0
  %v963 = vsel %vm285, %v929, 0
  %v966 = vsel %vm285, %v932, 0
  %968 = vmatprep.subr.bf16.mxu0 0
  %969 = vmatpush1.bf16.msra.mxu0 %v256
  %970 = vmatprep.subr.bf16.mxu0 0
  %971 = vmatpush1.bf16.msra.mxu0 %v255
  %972 = vmatprep.subr.bf16.mxu0 0
  %973 = vmatpush1.bf16.msra.mxu0 %v254
  %974 = vmatprep.subr.bf16.mxu0 0
  %975 = vmatpush1.bf16.msra.mxu0 %v253
  %976 = vmatprep.subr.bf16.mxu0 0
  %977 = vmatpush1.bf16.msra.mxu0 %v252
  %978 = vmatprep.subr.bf16.mxu0 0
  %979 = vmatpush1.bf16.msra.mxu0 %v251
  %980 = vmatprep.subr.bf16.mxu0 0
  %981 = vmatpush1.bf16.msra.mxu0 %v250
  %982 = vmatprep.subr.bf16.mxu0 0
  %983 = vmatpush1.bf16.msra.mxu0 %v249
  %984 = vmatprep.subr.bf16.mxu0 0
  %985 = vmatpush2.bf16.msra.mxu0 %v264
  %986 = vmatprep.subr.bf16.mxu0 0
  %987 = vmatpush2.bf16.msra.mxu0 %v263
  %988 = vmatprep.subr.bf16.mxu0 0
  %989 = vmatpush2.bf16.msra.mxu0 %v262
  %990 = vmatprep.subr.bf16.mxu0 0
  %991 = vmatpush2.bf16.msra.mxu0 %v261
  %992 = vmatprep.subr.bf16.mxu0 0
  %993 = vmatpush2.bf16.msra.mxu0 %v260
  %994 = vmatprep.subr.bf16.mxu0 0
  %995 = vmatpush2.bf16.msra.mxu0 %v259
  %996 = vmatprep.subr.bf16.mxu0 0
  %997 = vmatpush2.bf16.msra.mxu0 %v258
  %998 = vmatprep.subr.bf16.mxu0 0
  %999 = vmatpush2.bf16.msra.mxu0 %v257
  %1000 = vmatprep.mubr.bf16.mxu0 %v913
  %1001 = vmatmul.mubr.bf16.gmra.mxu0 %v912
  %v1002 = vpop.f32.mrf.mxu0
  %v1003 = vadd.f32 0.0, %v1002
  %v1004 = vpop.f32.mrf.mxu0
  %v1005 = vpop.f32.mrf.mxu0
  %v1006 = vadd.f32 0.0, %v1005
  %v1007 = vpop.f32.mrf.mxu0
  %1008 = vmatprep.mubr.bf16.mxu0 %v916
  %1009 = vmatmul.mubr.bf16.gmra.mxu0 %v915
  %v1010 = vpop.f32.mrf.mxu0
  %v1011 = vadd.f32 0.0, %v1010
  %v1012 = vpop.f32.mrf.mxu0
  %v1013 = vpop.f32.mrf.mxu0
  %v1014 = vadd.f32 0.0, %v1013
  %v1015 = vpop.f32.mrf.mxu0
  %1016 = vmatprep.mubr.bf16.mxu0 %v919
  %1017 = vmatmul.mubr.bf16.gmra.mxu0 %v918
  %v1018 = vpop.f32.mrf.mxu0
  %v1019 = vadd.f32 0.0, %v1018
  %v1020 = vpop.f32.mrf.mxu0
  %v1021 = vpop.f32.mrf.mxu0
  %v1022 = vadd.f32 0.0, %v1021
  %v1023 = vpop.f32.mrf.mxu0
  %1024 = vmatprep.mubr.bf16.mxu0 %v922
  %1025 = vmatmul.mubr.bf16.gmra.mxu0 %v921
  %v1026 = vpop.f32.mrf.mxu0
  %v1027 = vadd.f32 0.0, %v1026
  %v1028 = vpop.f32.mrf.mxu0
  %v1029 = vpop.f32.mrf.mxu0
  %v1030 = vadd.f32 0.0, %v1029
  %v1031 = vpop.f32.mrf.mxu0
  %1032 = vmatprep.mubr.bf16.mxu0 %v925
  %1033 = vmatmul.mubr.bf16.gmra.mxu0 %v924
  %v1034 = vpop.f32.mrf.mxu0
  %v1035 = vadd.f32 0.0, %v1034
  %v1036 = vpop.f32.mrf.mxu0
  %v1037 = vpop.f32.mrf.mxu0
  %v1038 = vadd.f32 0.0, %v1037
  %v1039 = vpop.f32.mrf.mxu0
  %1040 = vmatprep.mubr.bf16.mxu0 %v928
  %1041 = vmatmul.mubr.bf16.gmra.mxu0 %v927
  %v1042 = vpop.f32.mrf.mxu0
  %v1043 = vadd.f32 0.0, %v1042
  %v1044 = vpop.f32.mrf.mxu0
  %v1045 = vpop.f32.mrf.mxu0
  %v1046 = vadd.f32 0.0, %v1045
  %v1047 = vpop.f32.mrf.mxu0
  %1048 = vmatprep.mubr.bf16.mxu0 %v931
  %1049 = vmatmul.mubr.bf16.gmra.mxu0 %v930
  %v1050 = vpop.f32.mrf.mxu0
  %v1051 = vadd.f32 0.0, %v1050
  %v1052 = vpop.f32.mrf.mxu0
  %v1053 = vpop.f32.mrf.mxu0
  %v1054 = vpop.f32.mrf.mxu0
  %1055 = vdwg.mxu0
  %1056 = vmatprep.subr.bf16.mxu0 0
  %1057 = vmatpush1.bf16.msra.mxu0 0
  %1058 = vmatprep.subr.bf16.mxu0 0
  %1059 = vmatpush1.bf16.msra.mxu0 0
  %1060 = vmatprep.subr.bf16.mxu0 0
  %1061 = vmatpush1.bf16.msra.mxu0 0
  %1062 = vmatprep.subr.bf16.mxu0 0
  %1063 = vmatpush1.bf16.msra.mxu0 0
  %1064 = vmatprep.subr.bf16.mxu0 0
  %1065 = vmatpush1.bf16.msra.mxu0 0
  %1066 = vmatprep.subr.bf16.mxu0 0
  %1067 = vmatpush1.bf16.msra.mxu0 0
  %1068 = vmatprep.subr.bf16.mxu0 0
  %1069 = vmatpush1.bf16.msra.mxu0 %v266
  %1070 = vmatprep.subr.bf16.mxu0 0
  %1071 = vmatpush1.bf16.msra.mxu0 %v265
  %1072 = vmatprep.subr.bf16.mxu0 0
  %1073 = vmatpush2.bf16.msra.mxu0 0
  %1074 = vmatprep.subr.bf16.mxu0 0
  %1075 = vmatpush2.bf16.msra.mxu0 0
  %1076 = vmatprep.subr.bf16.mxu0 0
  %1077 = vmatpush2.bf16.msra.mxu0 0
  %1078 = vmatprep.subr.bf16.mxu0 0
  %1079 = vmatpush2.bf16.msra.mxu0 0
  %1080 = vmatprep.subr.bf16.mxu0 0
  %1081 = vmatpush2.bf16.msra.mxu0 0
  %1082 = vmatprep.subr.bf16.mxu0 0
  %1083 = vmatpush2.bf16.msra.mxu0 0
  %1084 = vmatprep.subr.bf16.mxu0 0
  %1085 = vmatpush2.bf16.msra.mxu0 0
  %1086 = vmatprep.subr.bf16.mxu0 0
  %1087 = vmatpush2.bf16.msra.mxu0 0
  %1088 = vmatprep.mubr.bf16.mxu0 0
  %1089 = vmatmul.mubr.bf16.gmra.mxu0 %v948
  %v1090 = vpop.f32.mrf.mxu0
  %v1091 = vadd.f32 %v1003, %v1090
  %v1092 = vpop.f32.mrf.mxu0
  %v1093 = vpop.f32.mrf.mxu0
  %v1094 = vadd.f32 %v1006, %v1093
  %v1095 = vpop.f32.mrf.mxu0
  %1096 = vmatprep.mubr.bf16.mxu0 0
  %1097 = vmatmul.mubr.bf16.gmra.mxu0 %v951
  %v1098 = vpop.f32.mrf.mxu0
  %v1099 = vadd.f32 %v1011, %v1098
  %v1100 = vpop.f32.mrf.mxu0
  %v1101 = vpop.f32.mrf.mxu0
  %v1102 = vadd.f32 %v1014, %v1101
  %v1103 = vpop.f32.mrf.mxu0
  %1104 = vmatprep.mubr.bf16.mxu0 0
  %1105 = vmatmul.mubr.bf16.gmra.mxu0 %v954
  %v1106 = vpop.f32.mrf.mxu0
  %v1107 = vadd.f32 %v1019, %v1106
  %v1108 = vpop.f32.mrf.mxu0
  %v1109 = vpop.f32.mrf.mxu0
  %v1110 = vadd.f32 %v1022, %v1109
  %v1111 = vpop.f32.mrf.mxu0
  %1112 = vmatprep.mubr.bf16.mxu0 0
  %1113 = vmatmul.mubr.bf16.gmra.mxu0 %v957
  %v1114 = vpop.f32.mrf.mxu0
  %v1115 = vadd.f32 %v1027, %v1114
  %v1116 = vpop.f32.mrf.mxu0
  %v1117 = vpop.f32.mrf.mxu0
  %v1118 = vadd.f32 %v1030, %v1117
  %v1119 = vpop.f32.mrf.mxu0
  %1120 = vmatprep.mubr.bf16.mxu0 0
  %1121 = vmatmul.mubr.bf16.gmra.mxu0 %v960
  %v1122 = vpop.f32.mrf.mxu0
  %v1123 = vadd.f32 %v1035, %v1122
  %v1124 = vpop.f32.mrf.mxu0
  %v1125 = vpop.f32.mrf.mxu0
  %v1126 = vadd.f32 %v1038, %v1125
  %v1127 = vpop.f32.mrf.mxu0
  %1128 = vmatprep.mubr.bf16.mxu0 0
  %1129 = vmatmul.mubr.bf16.gmra.mxu0 %v963
  %v1130 = vpop.f32.mrf.mxu0
  %v1131 = vadd.f32 %v1043, %v1130
  %v1132 = vpop.f32.mrf.mxu0
  %v1133 = vpop.f32.mrf.mxu0
  %v1134 = vadd.f32 %v1046, %v1133
  %v1135 = vpop.f32.mrf.mxu0
  %1136 = vmatprep.mubr.bf16.mxu0 0
  %1137 = vmatmul.mubr.bf16.gmra.mxu0 %v966
  %v1138 = vpop.f32.mrf.mxu0
  %v1139 = vadd.f32 %v1051, %v1138
  %v1140 = vpop.f32.mrf.mxu0
  %v1141 = vpop.f32.mrf.mxu0
  %v1142 = vpop.f32.mrf.mxu0
  %1143 = vdwg.mxu0
  %s1144 = scalar_lea.vmem %s0, 468
  %v1145 = vld [vmem:[%s1144] sm:$0xff]
  %v1146 = vld [vmem:[%s1144 + $0x8] sm:$0xf]
  %v1147 = vld [vmem:[%s1144 + $0xc] sm:$0xff]
  %v1148 = vld [vmem:[%s1144 + $0x14] sm:$0xf]
  %v1149 = vld [vmem:[%s1144 + $0x18] sm:$0xff]
  %v1150 = vld [vmem:[%s1144 + $0x20] sm:$0xf]
  %v1151 = vld [vmem:[%s1144 + $0x24] sm:$0xff]
  %v1152 = vld [vmem:[%s1144 + $0x2c] sm:$0xf]
  %v1153 = vld [vmem:[%s1144 + $0x30] sm:$0xff]
  %v1154 = vld [vmem:[%s1144 + $0x38] sm:$0xf]
  %v1155 = vld [vmem:[%s1144 + $0x3c] sm:$0xff]
  %v1156 = vld [vmem:[%s1144 + $0x44] sm:$0xf]
  %v1157 = vld [vmem:[%s1144 + $0x48] sm:$0xff]
  %v1158 = vld [vmem:[%s1144 + $0x50] sm:$0xf]
  %v1159 = vld [vmem:[%s1144 + $0x54] sm:$0xff]
  %v1160 = vld [vmem:[%s1144 + $0x5c] sm:$0xf]
  %v1161 = vld [vmem:[%s1144 + $0x60] sm:$0xff]
  %v1162 = vld [vmem:[%s1144 + $0x68] sm:$0xf]
  %v1163 = vld [vmem:[%s1144 + $0x6c] sm:$0xff]
  %v1164 = vld [vmem:[%s1144 + $0x74] sm:$0xf]
  %v1165 = vld [vmem:[%s1144 + $0x78] sm:$0xff]
  %v1166 = vld [vmem:[%s1144 + $0x80] sm:$0xf]
  %v1167 = vld [vmem:[%s1144 + $0x84] sm:$0xff]
  %v1168 = vld [vmem:[%s1144 + $0x8c] sm:$0xf]
  %v1169 = vld [vmem:[%s1144 + $0x90] sm:$0x11]
  %v1170 = vld [vmem:[%s1144 + $0x98] sm:$0x1]
  %v1197 = vunpack.c.l.b16 %v1145
  %v1198 = vunpack.c.h.b16 %v1145
  %v1199 = vunpack.c.l.b16 %v1146
  %v1200 = vunpack.c.l.b16 %v1147
  %v1201 = vunpack.c.h.b16 %v1147
  %v1202 = vunpack.c.l.b16 %v1148
  %v1203 = vunpack.c.l.b16 %v1149
  %v1204 = vunpack.c.h.b16 %v1149
  %v1205 = vunpack.c.l.b16 %v1150
  %v1206 = vunpack.c.l.b16 %v1151
  %v1207 = vunpack.c.h.b16 %v1151
  %v1208 = vunpack.c.l.b16 %v1152
  %v1209 = vunpack.c.l.b16 %v1153
  %v1210 = vunpack.c.h.b16 %v1153
  %v1211 = vunpack.c.l.b16 %v1154
  %v1212 = vunpack.c.l.b16 %v1155
  %v1213 = vunpack.c.h.b16 %v1155
  %v1214 = vunpack.c.l.b16 %v1156
  %v1215 = vunpack.c.l.b16 %v1157
  %v1216 = vunpack.c.h.b16 %v1157
  %v1217 = vunpack.c.l.b16 %v1158
  %v1218 = vunpack.c.l.b16 %v1159
  %v1219 = vunpack.c.h.b16 %v1159
  %v1220 = vunpack.c.l.b16 %v1160
  %v1221 = vunpack.c.l.b16 %v1161
  %v1222 = vunpack.c.h.b16 %v1161
  %v1223 = vunpack.c.l.b16 %v1162
  %v1224 = vunpack.c.l.b16 %v1163
  %v1225 = vunpack.c.h.b16 %v1163
  %v1226 = vunpack.c.l.b16 %v1164
  %v1227 = vunpack.c.l.b16 %v1165
  %v1228 = vunpack.c.h.b16 %v1165
  %v1229 = vunpack.c.l.b16 %v1166
  %v1230 = vunpack.c.l.b16 %v1167
  %v1231 = vunpack.c.h.b16 %v1167
  %v1232 = vunpack.c.l.b16 %v1168
  %v1233 = vunpack.c.l.b16 %v1169
  %v1234 = vunpack.c.h.b16 %v1169
  %v1235 = vunpack.c.l.b16 %v1170
  %v1236 = vpack.c.b16 %v1200, %v1197
  %v1237 = vpack.c.b16 %v1201, %v1198
  %v1238 = vpack.c.b16 %v1202, %v1199
  %v1239 = vpack.c.b16 %v1206, %v1203
  %v1240 = vpack.c.b16 %v1207, %v1204
  %v1241 = vpack.c.b16 %v1208, %v1205
  %v1242 = vpack.c.b16 %v1212, %v1209
  %v1243 = vpack.c.b16 %v1213, %v1210
  %v1244 = vpack.c.b16 %v1214, %v1211
  %v1245 = vpack.c.b16 %v1218, %v1215
  %v1246 = vpack.c.b16 %v1219, %v1216
  %v1247 = vpack.c.b16 %v1220, %v1217
  %v1248 = vpack.c.b16 %v1224, %v1221
  %v1249 = vpack.c.b16 %v1225, %v1222
  %v1250 = vpack.c.b16 %v1226, %v1223
  %v1251 = vpack.c.b16 %v1230, %v1227
  %v1252 = vpack.c.b16 %v1231, %v1228
  %v1253 = vpack.c.b16 %v1232, %v1229
  %v1254 = vpack.c.b16 %v1233, %v1233
  %v1255 = vpack.c.b16 %v1234, %v1234
  %v1256 = vpack.c.b16 %v1235, %v1235
  %v1272 = vsel %vm285, %v1238, 0
  %v1275 = vsel %vm285, %v1241, 0
  %v1278 = vsel %vm285, %v1244, 0
  %v1281 = vsel %vm285, %v1247, 0
  %v1284 = vsel %vm285, %v1250, 0
  %v1287 = vsel %vm285, %v1253, 0
  %v1290 = vsel %vm285, %v1256, 0
  %1292 = vmatprep.subr.bf16.mxu0 0
  %1293 = vmatpush1.bf16.msra.mxu0 %v256
  %1294 = vmatprep.subr.bf16.mxu0 0
  %1295 = vmatpush1.bf16.msra.mxu0 %v255
  %1296 = vmatprep.subr.bf16.mxu0 0
  %1297 = vmatpush1.bf16.msra.mxu0 %v254
  %1298 = vmatprep.subr.bf16.mxu0 0
  %1299 = vmatpush1.bf16.msra.mxu0 %v253
  %1300 = vmatprep.subr.bf16.mxu0 0
  %1301 = vmatpush1.bf16.msra.mxu0 %v252
  %1302 = vmatprep.subr.bf16.mxu0 0
  %1303 = vmatpush1.bf16.msra.mxu0 %v251
  %1304 = vmatprep.subr.bf16.mxu0 0
  %1305 = vmatpush1.bf16.msra.mxu0 %v250
  %1306 = vmatprep.subr.bf16.mxu0 0
  %1307 = vmatpush1.bf16.msra.mxu0 %v249
  %1308 = vmatprep.subr.bf16.mxu0 0
  %1309 = vmatpush2.bf16.msra.mxu0 %v264
  %1310 = vmatprep.subr.bf16.mxu0 0
  %1311 = vmatpush2.bf16.msra.mxu0 %v263
  %1312 = vmatprep.subr.bf16.mxu0 0
  %1313 = vmatpush2.bf16.msra.mxu0 %v262
  %1314 = vmatprep.subr.bf16.mxu0 0
  %1315 = vmatpush2.bf16.msra.mxu0 %v261
  %1316 = vmatprep.subr.bf16.mxu0 0
  %1317 = vmatpush2.bf16.msra.mxu0 %v260
  %1318 = vmatprep.subr.bf16.mxu0 0
  %1319 = vmatpush2.bf16.msra.mxu0 %v259
  %1320 = vmatprep.subr.bf16.mxu0 0
  %1321 = vmatpush2.bf16.msra.mxu0 %v258
  %1322 = vmatprep.subr.bf16.mxu0 0
  %1323 = vmatpush2.bf16.msra.mxu0 %v257
  %1324 = vmatprep.mubr.bf16.mxu0 %v1237
  %1325 = vmatmul.mubr.bf16.gmra.mxu0 %v1236
  %v1326 = vpop.f32.mrf.mxu0
  %v1327 = vadd.f32 0.0, %v1326
  %v1328 = vpop.f32.mrf.mxu0
  %v1329 = vpop.f32.mrf.mxu0
  %v1330 = vadd.f32 0.0, %v1329
  %v1331 = vpop.f32.mrf.mxu0
  %1332 = vmatprep.mubr.bf16.mxu0 %v1240
  %1333 = vmatmul.mubr.bf16.gmra.mxu0 %v1239
  %v1334 = vpop.f32.mrf.mxu0
  %v1335 = vadd.f32 0.0, %v1334
  %v1336 = vpop.f32.mrf.mxu0
  %v1337 = vpop.f32.mrf.mxu0
  %v1338 = vadd.f32 0.0, %v1337
  %v1339 = vpop.f32.mrf.mxu0
  %1340 = vmatprep.mubr.bf16.mxu0 %v1243
  %1341 = vmatmul.mubr.bf16.gmra.mxu0 %v1242
  %v1342 = vpop.f32.mrf.mxu0
  %v1343 = vadd.f32 0.0, %v1342
  %v1344 = vpop.f32.mrf.mxu0
  %v1345 = vpop.f32.mrf.mxu0
  %v1346 = vadd.f32 0.0, %v1345
  %v1347 = vpop.f32.mrf.mxu0
  %1348 = vmatprep.mubr.bf16.mxu0 %v1246
  %1349 = vmatmul.mubr.bf16.gmra.mxu0 %v1245
  %v1350 = vpop.f32.mrf.mxu0
  %v1351 = vadd.f32 0.0, %v1350
  %v1352 = vpop.f32.mrf.mxu0
  %v1353 = vpop.f32.mrf.mxu0
  %v1354 = vadd.f32 0.0, %v1353
  %v1355 = vpop.f32.mrf.mxu0
  %1356 = vmatprep.mubr.bf16.mxu0 %v1249
  %1357 = vmatmul.mubr.bf16.gmra.mxu0 %v1248
  %v1358 = vpop.f32.mrf.mxu0
  %v1359 = vadd.f32 0.0, %v1358
  %v1360 = vpop.f32.mrf.mxu0
  %v1361 = vpop.f32.mrf.mxu0
  %v1362 = vadd.f32 0.0, %v1361
  %v1363 = vpop.f32.mrf.mxu0
  %1364 = vmatprep.mubr.bf16.mxu0 %v1252
  %1365 = vmatmul.mubr.bf16.gmra.mxu0 %v1251
  %v1366 = vpop.f32.mrf.mxu0
  %v1367 = vadd.f32 0.0, %v1366
  %v1368 = vpop.f32.mrf.mxu0
  %v1369 = vpop.f32.mrf.mxu0
  %v1370 = vadd.f32 0.0, %v1369
  %v1371 = vpop.f32.mrf.mxu0
  %1372 = vmatprep.mubr.bf16.mxu0 %v1255
  %1373 = vmatmul.mubr.bf16.gmra.mxu0 %v1254
  %v1374 = vpop.f32.mrf.mxu0
  %v1375 = vadd.f32 0.0, %v1374
  %v1376 = vpop.f32.mrf.mxu0
  %v1377 = vpop.f32.mrf.mxu0
  %v1378 = vpop.f32.mrf.mxu0
  %1379 = vdwg.mxu0
  %1380 = vmatprep.subr.bf16.mxu0 0
  %1381 = vmatpush1.bf16.msra.mxu0 0
  %1382 = vmatprep.subr.bf16.mxu0 0
  %1383 = vmatpush1.bf16.msra.mxu0 0
  %1384 = vmatprep.subr.bf16.mxu0 0
  %1385 = vmatpush1.bf16.msra.mxu0 0
  %1386 = vmatprep.subr.bf16.mxu0 0
  %1387 = vmatpush1.bf16.msra.mxu0 0
  %1388 = vmatprep.subr.bf16.mxu0 0
  %1389 = vmatpush1.bf16.msra.mxu0 0
  %1390 = vmatprep.subr.bf16.mxu0 0
  %1391 = vmatpush1.bf16.msra.mxu0 0
  %1392 = vmatprep.subr.bf16.mxu0 0
  %1393 = vmatpush1.bf16.msra.mxu0 %v266
  %1394 = vmatprep.subr.bf16.mxu0 0
  %1395 = vmatpush1.bf16.msra.mxu0 %v265
  %1396 = vmatprep.subr.bf16.mxu0 0
  %1397 = vmatpush2.bf16.msra.mxu0 0
  %1398 = vmatprep.subr.bf16.mxu0 0
  %1399 = vmatpush2.bf16.msra.mxu0 0
  %1400 = vmatprep.subr.bf16.mxu0 0
  %1401 = vmatpush2.bf16.msra.mxu0 0
  %1402 = vmatprep.subr.bf16.mxu0 0
  %1403 = vmatpush2.bf16.msra.mxu0 0
  %1404 = vmatprep.subr.bf16.mxu0 0
  %1405 = vmatpush2.bf16.msra.mxu0 0
  %1406 = vmatprep.subr.bf16.mxu0 0
  %1407 = vmatpush2.bf16.msra.mxu0 0
  %1408 = vmatprep.subr.bf16.mxu0 0
  %1409 = vmatpush2.bf16.msra.mxu0 0
  %1410 = vmatprep.subr.bf16.mxu0 0
  %1411 = vmatpush2.bf16.msra.mxu0 0
  %1412 = vmatprep.mubr.bf16.mxu0 0
  %1413 = vmatmul.mubr.bf16.gmra.mxu0 %v1272
  %v1414 = vpop.f32.mrf.mxu0
  %v1415 = vadd.f32 %v1327, %v1414
  %v1416 = vpop.f32.mrf.mxu0
  %v1417 = vpop.f32.mrf.mxu0
  %v1418 = vadd.f32 %v1330, %v1417
  %v1419 = vpop.f32.mrf.mxu0
  %1420 = vmatprep.mubr.bf16.mxu0 0
  %1421 = vmatmul.mubr.bf16.gmra.mxu0 %v1275
  %v1422 = vpop.f32.mrf.mxu0
  %v1423 = vadd.f32 %v1335, %v1422
  %v1424 = vpop.f32.mrf.mxu0
  %v1425 = vpop.f32.mrf.mxu0
  %v1426 = vadd.f32 %v1338, %v1425
  %v1427 = vpop.f32.mrf.mxu0
  %1428 = vmatprep.mubr.bf16.mxu0 0
  %1429 = vmatmul.mubr.bf16.gmra.mxu0 %v1278
  %v1430 = vpop.f32.mrf.mxu0
  %v1431 = vadd.f32 %v1343, %v1430
  %v1432 = vpop.f32.mrf.mxu0
  %v1433 = vpop.f32.mrf.mxu0
  %v1434 = vadd.f32 %v1346, %v1433
  %v1435 = vpop.f32.mrf.mxu0
  %1436 = vmatprep.mubr.bf16.mxu0 0
  %1437 = vmatmul.mubr.bf16.gmra.mxu0 %v1281
  %v1438 = vpop.f32.mrf.mxu0
  %v1439 = vadd.f32 %v1351, %v1438
  %v1440 = vpop.f32.mrf.mxu0
  %v1441 = vpop.f32.mrf.mxu0
  %v1442 = vadd.f32 %v1354, %v1441
  %v1443 = vpop.f32.mrf.mxu0
  %1444 = vmatprep.mubr.bf16.mxu0 0
  %1445 = vmatmul.mubr.bf16.gmra.mxu0 %v1284
  %v1446 = vpop.f32.mrf.mxu0
  %v1447 = vadd.f32 %v1359, %v1446
  %v1448 = vpop.f32.mrf.mxu0
  %v1449 = vpop.f32.mrf.mxu0
  %v1450 = vadd.f32 %v1362, %v1449
  %v1451 = vpop.f32.mrf.mxu0
  %1452 = vmatprep.mubr.bf16.mxu0 0
  %1453 = vmatmul.mubr.bf16.gmra.mxu0 %v1287
  %v1454 = vpop.f32.mrf.mxu0
  %v1455 = vadd.f32 %v1367, %v1454
  %v1456 = vpop.f32.mrf.mxu0
  %v1457 = vpop.f32.mrf.mxu0
  %v1458 = vadd.f32 %v1370, %v1457
  %v1459 = vpop.f32.mrf.mxu0
  %1460 = vmatprep.mubr.bf16.mxu0 0
  %1461 = vmatmul.mubr.bf16.gmra.mxu0 %v1290
  %v1462 = vpop.f32.mrf.mxu0
  %v1463 = vadd.f32 %v1375, %v1462
  %v1464 = vpop.f32.mrf.mxu0
  %v1465 = vpop.f32.mrf.mxu0
  %v1466 = vpop.f32.mrf.mxu0
  %1467 = vdwg.mxu0
  %v1468 = vmax.f32 %v1091, %v1415
  %v1469 = vmax.f32 %v1094, %v1418
  %v1470 = vmax.f32 %v1099, %v1423
  %v1471 = vmax.f32 %v1102, %v1426
  %v1472 = vmax.f32 %v1107, %v1431
  %v1473 = vmax.f32 %v1110, %v1434
  %v1474 = vmax.f32 %v1115, %v1439
  %v1475 = vmax.f32 %v1118, %v1442
  %v1476 = vmax.f32 %v1123, %v1447
  %v1477 = vmax.f32 %v1126, %v1450
  %v1478 = vmax.f32 %v1131, %v1455
  %v1479 = vmax.f32 %v1134, %v1458
  %v1480 = vmax.f32 %v1139, %v1463
  %v1481 = vmax.f32 %v807, %v1468
  %v1482 = vmax.f32 %v808, %v1469
  %v1483 = vmax.f32 %v809, %v1470
  %v1484 = vmax.f32 %v810, %v1471
  %v1485 = vmax.f32 %v811, %v1472
  %v1486 = vmax.f32 %v812, %v1473
  %v1487 = vmax.f32 %v813, %v1474
  %v1488 = vmax.f32 %v814, %v1475
  %v1489 = vmax.f32 %v815, %v1476
  %v1490 = vmax.f32 %v816, %v1477
  %v1491 = vmax.f32 %v817, %v1478
  %v1492 = vmax.f32 %v818, %v1479
  %v1493 = vmax.f32 %v819, %v1480
  %v1494 = vld [vmem:[%s2] sm:$0x1]
  %v1496 = vlaneseq
  %v1497 = vshrl.u32 %v1496, 7
  %v1498 = vsub.s32 0, %v1497
  %v1499 = vrot.slane %v1494, %v1498
  %v1501 = vadd.f32 %v1481, %v1499
  %v1502 = vadd.f32 %v1482, %v1499
  %v1503 = vadd.f32 %v1483, %v1499
  %v1504 = vadd.f32 %v1484, %v1499
  %v1505 = vadd.f32 %v1485, %v1499
  %v1506 = vadd.f32 %v1486, %v1499
  %v1507 = vadd.f32 %v1487, %v1499
  %v1508 = vadd.f32 %v1488, %v1499
  %v1509 = vadd.f32 %v1489, %v1499
  %v1510 = vadd.f32 %v1490, %v1499
  %v1511 = vadd.f32 %v1491, %v1499
  %v1512 = vadd.f32 %v1492, %v1499
  %v1513 = vadd.f32 %v1493, %v1499
  %v1514 = vmax.f32 %v1501, 0.0
  %v1515 = vmax.f32 %v1502, 0.0
  %v1516 = vmax.f32 %v1503, 0.0
  %v1517 = vmax.f32 %v1504, 0.0
  %v1518 = vmax.f32 %v1505, 0.0
  %v1519 = vmax.f32 %v1506, 0.0
  %v1520 = vmax.f32 %v1507, 0.0
  %v1521 = vmax.f32 %v1508, 0.0
  %v1522 = vmax.f32 %v1509, 0.0
  %v1523 = vmax.f32 %v1510, 0.0
  %v1524 = vmax.f32 %v1511, 0.0
  %v1525 = vmax.f32 %v1512, 0.0
  %v1526 = vmax.f32 %v1513, 0.0
  %v1527 = vpack.c.bf16 %v1515, %v1514
  %v1528 = vpack.c.bf16 %v1517, %v1516
  %v1529 = vpack.c.bf16 %v1519, %v1518
  %v1530 = vpack.c.bf16 %v1521, %v1520
  %v1531 = vpack.c.bf16 %v1523, %v1522
  %v1532 = vpack.c.bf16 %v1525, %v1524
  %v1533 = vpack.c.bf16 %v1526, %v1526
  %v1541 = vunpack.c.l.b16 %v1527
  %v1542 = vunpack.c.h.b16 %v1527
  %v1543 = vunpack.c.l.b16 %v1528
  %v1544 = vunpack.c.h.b16 %v1528
  %v1545 = vunpack.c.l.b16 %v1529
  %v1546 = vunpack.c.h.b16 %v1529
  %v1547 = vunpack.c.l.b16 %v1530
  %v1548 = vunpack.c.h.b16 %v1530
  %v1549 = vunpack.c.l.b16 %v1531
  %v1550 = vunpack.c.h.b16 %v1531
  %v1551 = vunpack.c.l.b16 %v1532
  %v1552 = vunpack.c.h.b16 %v1532
  %v1553 = vunpack.c.l.b16 %v1533
  %v1554 = vpack.c.b16 %v1541, %v1541
  %v1555 = vpack.c.b16 %v1542, %v1542
  %v1556 = vpack.c.b16 %v1543, %v1543
  %v1557 = vpack.c.b16 %v1544, %v1544
  %v1558 = vpack.c.b16 %v1545, %v1545
  %v1559 = vpack.c.b16 %v1546, %v1546
  %v1560 = vpack.c.b16 %v1547, %v1547
  %v1561 = vpack.c.b16 %v1548, %v1548
  %v1562 = vpack.c.b16 %v1549, %v1549
  %v1563 = vpack.c.b16 %v1550, %v1550
  %v1564 = vpack.c.b16 %v1551, %v1551
  %v1565 = vpack.c.b16 %v1552, %v1552
  %v1566 = vpack.c.b16 %v1553, %v1553
  %vm1580 = vcmask 519168
  %1581 = vst.msk [vmem:[%s3] sm:$0xf] %vm1580, %v1554
  %1582 = vst.msk [vmem:[%s3 + $0x4] sm:$0xf] %vm1580, %v1555
  %1583 = vst.msk [vmem:[%s3 + $0x8] sm:$0xf] %vm1580, %v1556
  %1584 = vst.msk [vmem:[%s3 + $0xc] sm:$0xf] %vm1580, %v1557
  %1585 = vst.msk [vmem:[%s3 + $0x10] sm:$0xf] %vm1580, %v1558
  %1586 = vst.msk [vmem:[%s3 + $0x14] sm:$0xf] %vm1580, %v1559
  %1587 = vst.msk [vmem:[%s3 + $0x18] sm:$0xf] %vm1580, %v1560
  %1588 = vst.msk [vmem:[%s3 + $0x1c] sm:$0xf] %vm1580, %v1561
  %1589 = vst.msk [vmem:[%s3 + $0x20] sm:$0xf] %vm1580, %v1562
  %1590 = vst.msk [vmem:[%s3 + $0x24] sm:$0xf] %vm1580, %v1563
  %1591 = vst.msk [vmem:[%s3 + $0x28] sm:$0xf] %vm1580, %v1564
  %1592 = vst.msk [vmem:[%s3 + $0x2c] sm:$0xf] %vm1580, %v1565
  %vm1593 = vcmask 516096
  %1594 = vst.msk [vmem:[%s3 + $0x30] sm:$0x1] %vm1593, %v1566
  // Predicated region
  $region14: #{mnist_cnn_forward.4} parent=0 // pred_check
    _
  $region15: #{mnist_cnn_forward.4} parent=0 // pred_check_branch
    %1596 = sbr.rel (0) target = $region17
  $region16: #{mnist_cnn_forward.4} parent=0 // pred_region
    _
  $region17: #{mnist_cnn_forward.4} parent=0 // pred_fallthru
    _
  // Predicated region
  $region18: #{mnist_cnn_forward.4} parent=0 // pred_check
    _
  $region19: #{mnist_cnn_forward.4} parent=0 // pred_check_branch
    %1598 = sbr.rel (0) target = $region21
  $region20: #{mnist_cnn_forward.4} parent=0 // pred_region
    _
  $region21: #{mnist_cnn_forward.4} parent=0 // pred_fallthru
    _

// kernel: mnist_cnn_forward.5
$region0: #{mnist_cnn_forward.5}
  #allocation0 [shape = 'u32[]', space=smem, size = 0x4, offset = 0x4, fixed_abs, tag = 'smem constant byte address 0x4 - core index']
  #allocation1 [shape = 'u32[144,128]{1,0:T(1,128)}', space=vmem, size = 0x12000, scoped, tag = 'internal scratch']
  %s0 = inlined_call_operand.vmem [shape: bf16[16,3136], index: 0, kind: input, shape index: {}]
  %s1 = inlined_call_operand.vmem [shape: bf16[3136,256], index: 1, kind: input, shape index: {}]
  %s2 = inlined_call_operand.vmem [shape: f32[1,256], index: 2, kind: input, shape index: {}]
  %s3 = inlined_call_operand.vmem [shape: bf16[256,128], index: 3, kind: input, shape index: {}]
  %s4 = inlined_call_operand.vmem [shape: f32[16,256], index: 4, kind: output, shape index: {0}]
  %s5 = inlined_call_operand.vmem [shape: f32[2,16,128], index: 5, kind: output, shape index: {1}]
  %6 = xla_tuple %s4, %s5
  %s7 = sld [smem:[#allocation0]]
  $region132: #{mnist_cnn_forward.5} parent=0
    _
  %s9 = ssub.s32 1, %s7
  %s10 = scalar_select 0, %s9, %s7
  $region1: #{mnist_cnn_forward.5} parent=0
    #allocation2 [shape = 'u8[1605632]{0}', space=vmem, size = 0x188000, scoped, tag = 'input window, operand 1']
    #allocation3 [shape = 'u8[16384]{0}', space=vmem, size = 0x4000, scoped, tag = 'output window, operand 0']
    loop: start=0, step=1, limit=4
    $region2: #{mnist_cnn_forward.5} parent=1 // loop_pre_header
      _
    $region3: #{mnist_cnn_forward.5} parent=1 // loop_header
      %s12 = sphi 0, %s16
      %p13 = scmp.ge.s32.totalorder %s12, 4
      %s20 = sphi 0, %s20
      %s22 = sphi 0, %s20
      %s23 = sphi 0, %s22
      %s37 = sphi 0, %s23
      %s43 = sphi 0, %s45
      %s46 = sphi 0, %s43
      %s47 = sphi 0, %s46
      %s63 = sphi 0, %s47
      %s69 = sphi 0, %s71
      %s72 = sphi 0, %s69
      %s73 = sphi 0, %s72
      %s89 = sphi 0, %s73
      %s95 = sphi 0, %s97
      %s98 = sphi 0, %s95
      %s99 = sphi 0, %s98
      %s115 = sphi 0, %s99
      %s121 = sphi 0, %s123
      %s124 = sphi 0, %s121
      %s125 = sphi 0, %s124
      %s141 = sphi 0, %s125
      %s147 = sphi 0, %s149
      %s150 = sphi 0, %s147
      %s151 = sphi 0, %s150
      %s167 = sphi 0, %s151
    $region4: #{mnist_cnn_forward.5} parent=1 // loop_header_branch
      %15 = sbr.rel (%p13) target = $region8
    $region5: #{mnist_cnn_forward.5} parent=1 // loop_body
      %s17 = ssub.s32 %s12, 1
      %s18 = ssub.s32 %s12, 2
      %s19 = sadd.s32 %s12, 1
      %s21 = sadd.s32 %s20, 1
      %p24 = scmp.eq.s32.totalorder %s12, 1
      %p25 = scmp.ne.s32.totalorder %s20, %s22
      %p26 = scmp.eq.s32.totalorder %s12, 0
      %p27 = por %p25, %p26
      %p28 = scmp.ne.s32.totalorder %s20, %s22
      %p29 = scmp.eq.s32.totalorder %s17, 1
      %p30 = por %p28, %p29
      %p31 = scmp.ne.s32.totalorder %s22, %s23
      %p32 = scmp.eq.s32.totalorder %s17, 0
      %p33 = por %p31, %p32
      %p34 = scmp.ne.s32.totalorder %s22, %s23
      %p35 = scmp.eq.s32.totalorder %s18, 1
      %p36 = por %p34, %p35
      %p38 = scmp.ne.s32.totalorder %s23, %s37
      %p39 = scmp.eq.s32.totalorder %s18, 0
      %p40 = por %p38, %p39
      %s41 = ssub.s32 %s12, %s19
      %p42 = scmp.eq.s32.totalorder %s41, 0
      %s44 = sadd.s32 %s43, 1
      %s45 = scalar_select %p42, %s43, %s44
      %p48 = pneg %p42
      %p49 = scmp.eq.s32.totalorder %s12, 1
      %p50 = por %p48, %p49
      %p51 = scmp.ne.s32.totalorder %s43, %s46
      %p52 = scmp.eq.s32.totalorder %s12, 0
      %p53 = por %p51, %p52
      %p54 = scmp.ne.s32.totalorder %s43, %s46
      %p55 = scmp.eq.s32.totalorder %s17, 1
      %p56 = por %p54, %p55
      %p57 = scmp.ne.s32.totalorder %s46, %s47
      %p58 = scmp.eq.s32.totalorder %s17, 0
      %p59 = por %p57, %p58
      %p60 = scmp.ne.s32.totalorder %s46, %s47
      %p61 = scmp.eq.s32.totalorder %s18, 1
      %p62 = por %p60, %p61
      %p64 = scmp.ne.s32.totalorder %s47, %s63
      %p65 = scmp.eq.s32.totalorder %s18, 0
      %p66 = por %p64, %p65
      %s67 = ssub.s32 %s12, %s19
      %p68 = scmp.eq.s32.totalorder %s67, 0
      %s70 = sadd.s32 %s69, 1
      %s71 = scalar_select %p68, %s69, %s70
      %p74 = pneg %p68
      %p75 = scmp.eq.s32.totalorder %s12, 1
      %p76 = por %p74, %p75
      %p77 = scmp.ne.s32.totalorder %s69, %s72
      %p78 = scmp.eq.s32.totalorder %s12, 0
      %p79 = por %p77, %p78
      %p80 = scmp.ne.s32.totalorder %s69, %s72
      %p81 = scmp.eq.s32.totalorder %s17, 1
      %p82 = por %p80, %p81
      %p83 = scmp.ne.s32.totalorder %s72, %s73
      %p84 = scmp.eq.s32.totalorder %s17, 0
      %p85 = por %p83, %p84
      %p86 = scmp.ne.s32.totalorder %s72, %s73
      %p87 = scmp.eq.s32.totalorder %s18, 1
      %p88 = por %p86, %p87
      %p90 = scmp.ne.s32.totalorder %s73, %s89
      %p91 = scmp.eq.s32.totalorder %s18, 0
      %p92 = por %p90, %p91
      %s93 = ssub.s32 %s12, %s19
      %p94 = scmp.eq.s32.totalorder %s93, 0
      %s96 = sadd.s32 %s95, 1
      %s97 = scalar_select %p94, %s95, %s96
      %p100 = pneg %p94
      %p101 = scmp.eq.s32.totalorder %s12, 1
      %p102 = por %p100, %p101
      %p103 = scmp.ne.s32.totalorder %s95, %s98
      %p104 = scmp.eq.s32.totalorder %s12, 0
      %p105 = por %p103, %p104
      %p106 = scmp.ne.s32.totalorder %s95, %s98
      %p107 = scmp.eq.s32.totalorder %s17, 1
      %p108 = por %p106, %p107
      %p109 = scmp.ne.s32.totalorder %s98, %s99
      %p110 = scmp.eq.s32.totalorder %s17, 0
      %p111 = por %p109, %p110
      %p112 = scmp.ne.s32.totalorder %s98, %s99
      %p113 = scmp.eq.s32.totalorder %s18, 1
      %p114 = por %p112, %p113
      %p116 = scmp.ne.s32.totalorder %s99, %s115
      %p117 = scmp.eq.s32.totalorder %s18, 0
      %p118 = por %p116, %p117
      %s119 = ssub.s32 %s12, %s19
      %p120 = scmp.eq.s32.totalorder %s119, 0
      %s122 = sadd.s32 %s121, 1
      %s123 = scalar_select %p120, %s121, %s122
      %p126 = pneg %p120
      %p127 = scmp.eq.s32.totalorder %s12, 1
      %p128 = por %p126, %p127
      %p129 = scmp.ne.s32.totalorder %s121, %s124
      %p130 = scmp.eq.s32.totalorder %s12, 0
      %p131 = por %p129, %p130
      %p132 = scmp.ne.s32.totalorder %s121, %s124
      %p133 = scmp.eq.s32.totalorder %s17, 1
      %p134 = por %p132, %p133
      %p135 = scmp.ne.s32.totalorder %s124, %s125
      %p136 = scmp.eq.s32.totalorder %s17, 0
      %p137 = por %p135, %p136
      %p138 = scmp.ne.s32.totalorder %s124, %s125
      %p139 = scmp.eq.s32.totalorder %s18, 1
      %p140 = por %p138, %p139
      %p142 = scmp.ne.s32.totalorder %s125, %s141
      %p143 = scmp.eq.s32.totalorder %s18, 0
      %p144 = por %p142, %p143
      %s145 = ssub.s32 %s12, %s19
      %p146 = scmp.eq.s32.totalorder %s145, 0
      %s148 = sadd.s32 %s147, 1
      %s149 = scalar_select %p146, %s147, %s148
      %p152 = pneg %p146
      %p153 = scmp.eq.s32.totalorder %s12, 1
      %p154 = por %p152, %p153
      %p155 = scmp.ne.s32.totalorder %s147, %s150
      %p156 = scmp.eq.s32.totalorder %s12, 0
      %p157 = por %p155, %p156
      %p158 = scmp.ne.s32.totalorder %s147, %s150
      %p159 = scmp.eq.s32.totalorder %s17, 1
      %p160 = por %p158, %p159
      %p161 = scmp.ne.s32.totalorder %s150, %s151
      %p162 = scmp.eq.s32.totalorder %s17, 0
      %p163 = por %p161, %p162
      %p164 = scmp.ne.s32.totalorder %s150, %s151
      %p165 = scmp.eq.s32.totalorder %s18, 1
      %p166 = por %p164, %p165
      %p168 = scmp.ne.s32.totalorder %s151, %s167
      %p169 = scmp.eq.s32.totalorder %s18, 0
      %p170 = por %p168, %p169
      %p171 = scmp.le.s32.totalorder 1, %s12
      %p172 = scmp.lt.s32.totalorder %s12, 3
      %p173 = pnand %p171, %p172
      %p174 = pneg %p173
      // Predicated region
      $region9: #{mnist_cnn_forward.5} parent=5 // pred_check
        _
      $region10: #{mnist_cnn_forward.5} parent=5 // pred_check_branch
        %176 = sbr.rel (%p173) target = $region12
      $region11: #{mnist_cnn_forward.5} parent=5 // pred_region
        %s177 = ssub.s32 %s12, 1
        // Predicated region
        $region13: #{mnist_cnn_forward.5} parent=11 // pred_check
          %p178 = pneg %p33
        $region14: #{mnist_cnn_forward.5} parent=11 // pred_check_branch
          %180 = sbr.rel (%p178) target = $region16
        $region15: #{mnist_cnn_forward.5} parent=11 // pred_region
          _
        $region16: #{mnist_cnn_forward.5} parent=11 // pred_fallthru
          _
      $region12: #{mnist_cnn_forward.5} parent=5 // pred_fallthru
        _
      %p181 = scmp.lt.s32.totalorder %s12, 2
      // Predicated region
      $region17: #{mnist_cnn_forward.5} parent=5 // pred_check
        %p182 = pneg %p181
      $region18: #{mnist_cnn_forward.5} parent=5 // pred_check_branch
        %184 = sbr.rel (%p182) target = $region20
      $region19: #{mnist_cnn_forward.5} parent=5 // pred_region
        // Predicated region
        $region21: #{mnist_cnn_forward.5} parent=19 // pred_check
          %p185 = pneg %p53
        $region22: #{mnist_cnn_forward.5} parent=19 // pred_check_branch
          %187 = sbr.rel (%p185) target = $region24
        $region23: #{mnist_cnn_forward.5} parent=19 // pred_region
          %s188 = sand.u32 %s43, 1
          %s189 = sand.u32 %s43, 1
          %s190 = smul.addr %s189, 1568
          %s191 = scalar_lea.vmem [#allocation2], %s190
          %s192 = smul.addr %s12, 4
          %s193 = scalar_lea.vmem %s1, %s192
          // Predicated region
          $region25: #{mnist_cnn_forward.5} parent=23 // pred_check
            _
          $region26: #{mnist_cnn_forward.5} parent=23 // pred_check_branch
            %195 = sbr.rel (0) target = $region28
          $region27: #{mnist_cnn_forward.5} parent=23 // pred_region
            // Predicated region
            $region29: #{mnist_cnn_forward.5} parent=27 // pred_check
              _
            $region30: #{mnist_cnn_forward.5} parent=27 // pred_check_branch
              %197 = sbr.rel target = $region32
            $region31: #{mnist_cnn_forward.5} parent=27 // pred_region
              // Predicated region
              $region44: #{mnist_cnn_forward.5} parent=31 // pred_check
                _
              $region45: #{mnist_cnn_forward.5} parent=31 // pred_check_branch
                %995 = sbr.rel (0) target = $region47
              $region46: #{mnist_cnn_forward.5} parent=31 // pred_region
                loop: start=0, step=1, limit=1
                $region48: #{mnist_cnn_forward.5} parent=46 // loop_pre_header
                  _
                $region49: #{mnist_cnn_forward.5} parent=46 // loop_header
                  %s997 = sphi 0, %s1001
                  %p998 = scmp.ge.s32.totalorder %s997, 1
                  %s1002 = sphi %s193, %s193
                  %s1003 = sphi %s191, %s191
                $region50: #{mnist_cnn_forward.5} parent=46 // loop_header_branch
                  %1000 = sbr.rel (%p998) target = $region54
                $region51: #{mnist_cnn_forward.5} parent=46 // loop_body
                  _
                $region52: #{mnist_cnn_forward.5} parent=46 // loop_footer
                  %s1001 = sadd.s32 1, %s997
                $region53: #{mnist_cnn_forward.5} parent=46 // loop_footer_branch
                  %996 = sbr.rel target = $region49
                $region54: #{mnist_cnn_forward.5} parent=46 // loop_exit
                  _
                %s1005 = ssub.s32 16, 1
                loop: start=0, step=1, limit=1
                $region55: #{mnist_cnn_forward.5} parent=46 // loop_pre_header
                  _
                $region56: #{mnist_cnn_forward.5} parent=46 // loop_header
                  %s1007 = sphi 0, %s1011
                  %p1008 = scmp.ge.s32.totalorder %s1007, 1
                  %s1012 = sphi %s193, %s193
                  %s1013 = sphi %s191, %s191
                $region57: #{mnist_cnn_forward.5} parent=46 // loop_header_branch
                  %1010 = sbr.rel (%p1008) target = $region61
                $region58: #{mnist_cnn_forward.5} parent=46 // loop_body
                  %v1014 = vld [vmem:[%s1012] sm:%s1005]
                  %1015 = vst [vmem:[%s1013] sm:%s1005] %v1014
                  %v1016 = vld [vmem:[%s1012 + $0x8] sm:%s1005]
                  %1017 = vst [vmem:[%s1013 + $0x4] sm:%s1005] %v1016
                  %v1018 = vld [vmem:[%s1012 + $0x10] sm:%s1005]
                  %1019 = vst [vmem:[%s1013 + $0x8] sm:%s1005] %v1018
                  %v1020 = vld [vmem:[%s1012 + $0x18] sm:%s1005]
                  %1021 = vst [vmem:[%s1013 + $0xc] sm:%s1005] %v1020
                  %v1022 = vld [vmem:[%s1012 + $0x20] sm:%s1005]
                  %1023 = vst [vmem:[%s1013 + $0x10] sm:%s1005] %v1022
                  %v1024 = vld [vmem:[%s1012 + $0x28] sm:%s1005]
                  %1025 = vst [vmem:[%s1013 + $0x14] sm:%s1005] %v1024
                  %v1026 = vld [vmem:[%s1012 + $0x30] sm:%s1005]
                  %1027 = vst [vmem:[%s1013 + $0x18] sm:%s1005] %v1026
                  %v1028 = vld [vmem:[%s1012 + $0x38] sm:%s1005]
                  %1029 = vst [vmem:[%s1013 + $0x1c] sm:%s1005] %v1028
                  %v1030 = vld [vmem:[%s1012 + $0x40] sm:%s1005]
                  %1031 = vst [vmem:[%s1013 + $0x20] sm:%s1005] %v1030
                  %v1032 = vld [vmem:[%s1012 + $0x48] sm:%s1005]
                  %1033 = vst [vmem:[%s1013 + $0x24] sm:%s1005] %v1032
                  %v1034 = vld [vmem:[%s1012 + $0x50] sm:%s1005]
                  %1035 = vst [vmem:[%s1013 + $0x28] sm:%s1005] %v1034
                  %v1036 = vld [vmem:[%s1012 + $0x58] sm:%s1005]
                  %1037 = vst [vmem:[%s1013 + $0x2c] sm:%s1005] %v1036
                  %v1038 = vld [vmem:[%s1012 + $0x60] sm:%s1005]
                  %1039 = vst [vmem:[%s1013 + $0x30] sm:%s1005] %v1038
                  %v1040 = vld [vmem:[%s1012 + $0x68] sm:%s1005]
                  %1041 = vst [vmem:[%s1013 + $0x34] sm:%s1005] %v1040
                  %v1042 = vld [vmem:[%s1012 + $0x70] sm:%s1005]
                  %1043 = vst [vmem:[%s1013 + $0x38] sm:%s1005] %v1042
                  %v1044 = vld [vmem:[%s1012 + $0x78] sm:%s1005]
                  %1045 = vst [vmem:[%s1013 + $0x3c] sm:%s1005] %v1044
                  %v1046 = vld [vmem:[%s1012 + $0x80] sm:%s1005]
                  %1047 = vst [vmem:[%s1013 + $0x40] sm:%s1005] %v1046
                  %v1048 = vld [vmem:[%s1012 + $0x88] sm:%s1005]
                  %1049 = vst [vmem:[%s1013 + $0x44] sm:%s1005] %v1048
                  %v1050 = vld [vmem:[%s1012 + $0x90] sm:%s1005]
                  %1051 = vst [vmem:[%s1013 + $0x48] sm:%s1005] %v1050
                  %v1052 = vld [vmem:[%s1012 + $0x98] sm:%s1005]
                  %1053 = vst [vmem:[%s1013 + $0x4c] sm:%s1005] %v1052
                  %v1054 = vld [vmem:[%s1012 + $0xa0] sm:%s1005]
                  %1055 = vst [vmem:[%s1013 + $0x50] sm:%s1005] %v1054
                  %v1056 = vld [vmem:[%s1012 + $0xa8] sm:%s1005]
                  %1057 = vst [vmem:[%s1013 + $0x54] sm:%s1005] %v1056
                  %v1058 = vld [vmem:[%s1012 + $0xb0] sm:%s1005]
                  %1059 = vst [vmem:[%s1013 + $0x58] sm:%s1005] %v1058
                  %v1060 = vld [vmem:[%s1012 + $0xb8] sm:%s1005]
                  %1061 = vst [vmem:[%s1013 + $0x5c] sm:%s1005] %v1060
                  %v1062 = vld [vmem:[%s1012 + $0xc0] sm:%s1005]
                  %1063 = vst [vmem:[%s1013 + $0x60] sm:%s1005] %v1062
                  %v1064 = vld [vmem:[%s1012 + $0xc8] sm:%s1005]
                  %1065 = vst [vmem:[%s1013 + $0x64] sm:%s1005] %v1064
                  %v1066 = vld [vmem:[%s1012 + $0xd0] sm:%s1005]
                  %1067 = vst [vmem:[%s1013 + $0x68] sm:%s1005] %v1066
                  %v1068 = vld [vmem:[%s1012 + $0xd8] sm:%s1005]
                  %1069 = vst [vmem:[%s1013 + $0x6c] sm:%s1005] %v1068
                  %v1070 = vld [vmem:[%s1012 + $0xe0] sm:%s1005]
                  %1071 = vst [vmem:[%s1013 + $0x70] sm:%s1005] %v1070
                  %v1072 = vld [vmem:[%s1012 + $0xe8] sm:%s1005]
                  %1073 = vst [vmem:[%s1013 + $0x74] sm:%s1005] %v1072
                  %v1074 = vld [vmem:[%s1012 + $0xf0] sm:%s1005]
                  %1075 = vst [vmem:[%s1013 + $0x78] sm:%s1005] %v1074
                  %v1076 = vld [vmem:[%s1012 + $0xf8] sm:%s1005]
                  %1077 = vst [vmem:[%s1013 + $0x7c] sm:%s1005] %v1076
                  %v1078 = vld [vmem:[%s1012 + $0x100] sm:%s1005]
                  %1079 = vst [vmem:[%s1013 + $0x80] sm:%s1005] %v1078
                  %v1080 = vld [vmem:[%s1012 + $0x108] sm:%s1005]
                  %1081 = vst [vmem:[%s1013 + $0x84] sm:%s1005] %v1080
                  %v1082 = vld [vmem:[%s1012 + $0x110] sm:%s1005]
                  %1083 = vst [vmem:[%s1013 + $0x88] sm:%s1005] %v1082
                  %v1084 = vld [vmem:[%s1012 + $0x118] sm:%s1005]
                  %1085 = vst [vmem:[%s1013 + $0x8c] sm:%s1005] %v1084
                  %v1086 = vld [vmem:[%s1012 + $0x120] sm:%s1005]
                  %1087 = vst [vmem:[%s1013 + $0x90] sm:%s1005] %v1086
                  %v1088 = vld [vmem:[%s1012 + $0x128] sm:%s1005]
                  %1089 = vst [vmem:[%s1013 + $0x94] sm:%s1005] %v1088
                  %v1090 = vld [vmem:[%s1012 + $0x130] sm:%s1005]
                  %1091 = vst [vmem:[%s1013 + $0x98] sm:%s1005] %v1090
                  %v1092 = vld [vmem:[%s1012 + $0x138] sm:%s1005]
                  %1093 = vst [vmem:[%s1013 + $0x9c] sm:%s1005] %v1092
                  %v1094 = vld [vmem:[%s1012 + $0x140] sm:%s1005]
                  %1095 = vst [vmem:[%s1013 + $0xa0] sm:%s1005] %v1094
                  %v1096 = vld [vmem:[%s1012 + $0x148] sm:%s1005]
                  %1097 = vst [vmem:[%s1013 + $0xa4] sm:%s1005] %v1096
                  %v1098 = vld [vmem:[%s1012 + $0x150] sm:%s1005]
                  %1099 = vst [vmem:[%s1013 + $0xa8] sm:%s1005] %v1098
                  %v1100 = vld [vmem:[%s1012 + $0x158] sm:%s1005]
                  %1101 = vst [vmem:[%s1013 + $0xac] sm:%s1005] %v1100
                  %v1102 = vld [vmem:[%s1012 + $0x160] sm:%s1005]
                  %1103 = vst [vmem:[%s1013 + $0xb0] sm:%s1005] %v1102
                  %v1104 = vld [vmem:[%s1012 + $0x168] sm:%s1005]
                  %1105 = vst [vmem:[%s1013 + $0xb4] sm:%s1005] %v1104
                  %v1106 = vld [vmem:[%s1012 + $0x170] sm:%s1005]
                  %1107 = vst [vmem:[%s1013 + $0xb8] sm:%s1005] %v1106
                  %v1108 = vld [vmem:[%s1012 + $0x178] sm:%s1005]
                  %1109 = vst [vmem:[%s1013 + $0xbc] sm:%s1005] %v1108
                  %v1110 = vld [vmem:[%s1012 + $0x180] sm:%s1005]
                  %1111 = vst [vmem:[%s1013 + $0xc0] sm:%s1005] %v1110
                  %v1112 = vld [vmem:[%s1012 + $0x188] sm:%s1005]
                  %1113 = vst [vmem:[%s1013 + $0xc4] sm:%s1005] %v1112
                  %v1114 = vld [vmem:[%s1012 + $0x190] sm:%s1005]
                  %1115 = vst [vmem:[%s1013 + $0xc8] sm:%s1005] %v1114
                  %v1116 = vld [vmem:[%s1012 + $0x198] sm:%s1005]
                  %1117 = vst [vmem:[%s1013 + $0xcc] sm:%s1005] %v1116
                  %v1118 = vld [vmem:[%s1012 + $0x1a0] sm:%s1005]
                  %1119 = vst [vmem:[%s1013 + $0xd0] sm:%s1005] %v1118
                  %v1120 = vld [vmem:[%s1012 + $0x1a8] sm:%s1005]
                  %1121 = vst [vmem:[%s1013 + $0xd4] sm:%s1005] %v1120
                  %v1122 = vld [vmem:[%s1012 + $0x1b0] sm:%s1005]
                  %1123 = vst [vmem:[%s1013 + $0xd8] sm:%s1005] %v1122
                  %v1124 = vld [vmem:[%s1012 + $0x1b8] sm:%s1005]
                  %1125 = vst [vmem:[%s1013 + $0xdc] sm:%s1005] %v1124
                  %v1126 = vld [vmem:[%s1012 + $0x1c0] sm:%s1005]
                  %1127 = vst [vmem:[%s1013 + $0xe0] sm:%s1005] %v1126
                  %v1128 = vld [vmem:[%s1012 + $0x1c8] sm:%s1005]
                  %1129 = vst [vmem:[%s1013 + $0xe4] sm:%s1005] %v1128
                  %v1130 = vld [vmem:[%s1012 + $0x1d0] sm:%s1005]
                  %1131 = vst [vmem:[%s1013 + $0xe8] sm:%s1005] %v1130
                  %v1132 = vld [vmem:[%s1012 + $0x1d8] sm:%s1005]
                  %1133 = vst [vmem:[%s1013 + $0xec] sm:%s1005] %v1132
                  %v1134 = vld [vmem:[%s1012 + $0x1e0] sm:%s1005]
                  %1135 = vst [vmem:[%s1013 + $0xf0] sm:%s1005] %v1134
                  %v1136 = vld [vmem:[%s1012 + $0x1e8] sm:%s1005]
                  %1137 = vst [vmem:[%s1013 + $0xf4] sm:%s1005] %v1136
                  %v1138 = vld [vmem:[%s1012 + $0x1f0] sm:%s1005]
                  %1139 = vst [vmem:[%s1013 + $0xf8] sm:%s1005] %v1138
                  %v1140 = vld [vmem:[%s1012 + $0x1f8] sm:%s1005]
                  %1141 = vst [vmem:[%s1013 + $0xfc] sm:%s1005] %v1140
                  %v1142 = vld [vmem:[%s1012 + $0x200] sm:%s1005]
                  %1143 = vst [vmem:[%s1013 + $0x100] sm:%s1005] %v1142
                  %v1144 = vld [vmem:[%s1012 + $0x208] sm:%s1005]
                  %1145 = vst [vmem:[%s1013 + $0x104] sm:%s1005] %v1144
                  %v1146 = vld [vmem:[%s1012 + $0x210] sm:%s1005]
                  %1147 = vst [vmem:[%s1013 + $0x108] sm:%s1005] %v1146
                  %v1148 = vld [vmem:[%s1012 + $0x218] sm:%s1005]
                  %1149 = vst [vmem:[%s1013 + $0x10c] sm:%s1005] %v1148
                  %v1150 = vld [vmem:[%s1012 + $0x220] sm:%s1005]
                  %1151 = vst [vmem:[%s1013 + $0x110] sm:%s1005] %v1150
                  %v1152 = vld [vmem:[%s1012 + $0x228] sm:%s1005]
                  %1153 = vst [vmem:[%s1013 + $0x114] sm:%s1005] %v1152
                  %v1154 = vld [vmem:[%s1012 + $0x230] sm:%s1005]
                  %1155 = vst [vmem:[%s1013 + $0x118] sm:%s1005] %v1154
                  %v1156 = vld [vmem:[%s1012 + $0x238] sm:%s1005]
                  %1157 = vst [vmem:[%s1013 + $0x11c] sm:%s1005] %v1156
                  %v1158 = vld [vmem:[%s1012 + $0x240] sm:%s1005]
                  %1159 = vst [vmem:[%s1013 + $0x120] sm:%s1005] %v1158
                  %v1160 = vld [vmem:[%s1012 + $0x248] sm:%s1005]
                  %1161 = vst [vmem:[%s1013 + $0x124] sm:%s1005] %v1160
                  %v1162 = vld [vmem:[%s1012 + $0x250] sm:%s1005]
                  %1163 = vst [vmem:[%s1013 + $0x128] sm:%s1005] %v1162
                  %v1164 = vld [vmem:[%s1012 + $0x258] sm:%s1005]
                  %1165 = vst [vmem:[%s1013 + $0x12c] sm:%s1005] %v1164
                  %v1166 = vld [vmem:[%s1012 + $0x260] sm:%s1005]
                  %1167 = vst [vmem:[%s1013 + $0x130] sm:%s1005] %v1166
                  %v1168 = vld [vmem:[%s1012 + $0x268] sm:%s1005]
                  %1169 = vst [vmem:[%s1013 + $0x134] sm:%s1005] %v1168
                  %v1170 = vld [vmem:[%s1012 + $0x270] sm:%s1005]
                  %1171 = vst [vmem:[%s1013 + $0x138] sm:%s1005] %v1170
                  %v1172 = vld [vmem:[%s1012 + $0x278] sm:%s1005]
                  %1173 = vst [vmem:[%s1013 + $0x13c] sm:%s1005] %v1172
                  %v1174 = vld [vmem:[%s1012 + $0x280] sm:%s1005]
                  %1175 = vst [vmem:[%s1013 + $0x140] sm:%s1005] %v1174
                  %v1176 = vld [vmem:[%s1012 + $0x288] sm:%s1005]
                  %1177 = vst [vmem:[%s1013 + $0x144] sm:%s1005] %v1176
                  %v1178 = vld [vmem:[%s1012 + $0x290] sm:%s1005]
                  %1179 = vst [vmem:[%s1013 + $0x148] sm:%s1005] %v1178
                  %v1180 = vld [vmem:[%s1012 + $0x298] sm:%s1005]
                  %1181 = vst [vmem:[%s1013 + $0x14c] sm:%s1005] %v1180
                  %v1182 = vld [vmem:[%s1012 + $0x2a0] sm:%s1005]
                  %1183 = vst [vmem:[%s1013 + $0x150] sm:%s1005] %v1182
                  %v1184 = vld [vmem:[%s1012 + $0x2a8] sm:%s1005]
                  %1185 = vst [vmem:[%s1013 + $0x154] sm:%s1005] %v1184
                  %v1186 = vld [vmem:[%s1012 + $0x2b0] sm:%s1005]
                  %1187 = vst [vmem:[%s1013 + $0x158] sm:%s1005] %v1186
                  %v1188 = vld [vmem:[%s1012 + $0x2b8] sm:%s1005]
                  %1189 = vst [vmem:[%s1013 + $0x15c] sm:%s1005] %v1188
                  %v1190 = vld [vmem:[%s1012 + $0x2c0] sm:%s1005]
                  %1191 = vst [vmem:[%s1013 + $0x160] sm:%s1005] %v1190
                  %v1192 = vld [vmem:[%s1012 + $0x2c8] sm:%s1005]
                  %1193 = vst [vmem:[%s1013 + $0x164] sm:%s1005] %v1192
                  %v1194 = vld [vmem:[%s1012 + $0x2d0] sm:%s1005]
                  %1195 = vst [vmem:[%s1013 + $0x168] sm:%s1005] %v1194
                  %v1196 = vld [vmem:[%s1012 + $0x2d8] sm:%s1005]
                  %1197 = vst [vmem:[%s1013 + $0x16c] sm:%s1005] %v1196
                  %v1198 = vld [vmem:[%s1012 + $0x2e0] sm:%s1005]
                  %1199 = vst [vmem:[%s1013 + $0x170] sm:%s1005] %v1198
                  %v1200 = vld [vmem:[%s1012 + $0x2e8] sm:%s1005]
                  %1201 = vst [vmem:[%s1013 + $0x174] sm:%s1005] %v1200
                  %v1202 = vld [vmem:[%s1012 + $0x2f0] sm:%s1005]
                  %1203 = vst [vmem:[%s1013 + $0x178] sm:%s1005] %v1202
                  %v1204 = vld [vmem:[%s1012 + $0x2f8] sm:%s1005]
                  %1205 = vst [vmem:[%s1013 + $0x17c] sm:%s1005] %v1204
                  %v1206 = vld [vmem:[%s1012 + $0x300] sm:%s1005]
                  %1207 = vst [vmem:[%s1013 + $0x180] sm:%s1005] %v1206
                  %v1208 = vld [vmem:[%s1012 + $0x308] sm:%s1005]
                  %1209 = vst [vmem:[%s1013 + $0x184] sm:%s1005] %v1208
                  %v1210 = vld [vmem:[%s1012 + $0x310] sm:%s1005]
                  %1211 = vst [vmem:[%s1013 + $0x188] sm:%s1005] %v1210
                  %v1212 = vld [vmem:[%s1012 + $0x318] sm:%s1005]
                  %1213 = vst [vmem:[%s1013 + $0x18c] sm:%s1005] %v1212
                  %v1214 = vld [vmem:[%s1012 + $0x320] sm:%s1005]
                  %1215 = vst [vmem:[%s1013 + $0x190] sm:%s1005] %v1214
                  %v1216 = vld [vmem:[%s1012 + $0x328] sm:%s1005]
                  %1217 = vst [vmem:[%s1013 + $0x194] sm:%s1005] %v1216
                  %v1218 = vld [vmem:[%s1012 + $0x330] sm:%s1005]
                  %1219 = vst [vmem:[%s1013 + $0x198] sm:%s1005] %v1218
                  %v1220 = vld [vmem:[%s1012 + $0x338] sm:%s1005]
                  %1221 = vst [vmem:[%s1013 + $0x19c] sm:%s1005] %v1220
                  %v1222 = vld [vmem:[%s1012 + $0x340] sm:%s1005]
                  %1223 = vst [vmem:[%s1013 + $0x1a0] sm:%s1005] %v1222
                  %v1224 = vld [vmem:[%s1012 + $0x348] sm:%s1005]
                  %1225 = vst [vmem:[%s1013 + $0x1a4] sm:%s1005] %v1224
                  %v1226 = vld [vmem:[%s1012 + $0x350] sm:%s1005]
                  %1227 = vst [vmem:[%s1013 + $0x1a8] sm:%s1005] %v1226
                  %v1228 = vld [vmem:[%s1012 + $0x358] sm:%s1005]
                  %1229 = vst [vmem:[%s1013 + $0x1ac] sm:%s1005] %v1228
                  %v1230 = vld [vmem:[%s1012 + $0x360] sm:%s1005]
                  %1231 = vst [vmem:[%s1013 + $0x1b0] sm:%s1005] %v1230
                  %v1232 = vld [vmem:[%s1012 + $0x368] sm:%s1005]
                  %1233 = vst [vmem:[%s1013 + $0x1b4] sm:%s1005] %v1232
                  %v1234 = vld [vmem:[%s1012 + $0x370] sm:%s1005]
                  %1235 = vst [vmem:[%s1013 + $0x1b8] sm:%s1005] %v1234
                  %v1236 = vld [vmem:[%s1012 + $0x378] sm:%s1005]
                  %1237 = vst [vmem:[%s1013 + $0x1bc] sm:%s1005] %v1236
                  %v1238 = vld [vmem:[%s1012 + $0x380] sm:%s1005]
                  %1239 = vst [vmem:[%s1013 + $0x1c0] sm:%s1005] %v1238
                  %v1240 = vld [vmem:[%s1012 + $0x388] sm:%s1005]
                  %1241 = vst [vmem:[%s1013 + $0x1c4] sm:%s1005] %v1240
                  %v1242 = vld [vmem:[%s1012 + $0x390] sm:%s1005]
                  %1243 = vst [vmem:[%s1013 + $0x1c8] sm:%s1005] %v1242
                  %v1244 = vld [vmem:[%s1012 + $0x398] sm:%s1005]
                  %1245 = vst [vmem:[%s1013 + $0x1cc] sm:%s1005] %v1244
                  %v1246 = vld [vmem:[%s1012 + $0x3a0] sm:%s1005]
                  %1247 = vst [vmem:[%s1013 + $0x1d0] sm:%s1005] %v1246
                  %v1248 = vld [vmem:[%s1012 + $0x3a8] sm:%s1005]
                  %1249 = vst [vmem:[%s1013 + $0x1d4] sm:%s1005] %v1248
                  %v1250 = vld [vmem:[%s1012 + $0x3b0] sm:%s1005]
                  %1251 = vst [vmem:[%s1013 + $0x1d8] sm:%s1005] %v1250
                  %v1252 = vld [vmem:[%s1012 + $0x3b8] sm:%s1005]
                  %1253 = vst [vmem:[%s1013 + $0x1dc] sm:%s1005] %v1252
                  %v1254 = vld [vmem:[%s1012 + $0x3c0] sm:%s1005]
                  %1255 = vst [vmem:[%s1013 + $0x1e0] sm:%s1005] %v1254
                  %v1256 = vld [vmem:[%s1012 + $0x3c8] sm:%s1005]
                  %1257 = vst [vmem:[%s1013 + $0x1e4] sm:%s1005] %v1256
                  %v1258 = vld [vmem:[%s1012 + $0x3d0] sm:%s1005]
                  %1259 = vst [vmem:[%s1013 + $0x1e8] sm:%s1005] %v1258
                  %v1260 = vld [vmem:[%s1012 + $0x3d8] sm:%s1005]
                  %1261 = vst [vmem:[%s1013 + $0x1ec] sm:%s1005] %v1260
                  %v1262 = vld [vmem:[%s1012 + $0x3e0] sm:%s1005]
                  %1263 = vst [vmem:[%s1013 + $0x1f0] sm:%s1005] %v1262
                  %v1264 = vld [vmem:[%s1012 + $0x3e8] sm:%s1005]
                  %1265 = vst [vmem:[%s1013 + $0x1f4] sm:%s1005] %v1264
                  %v1266 = vld [vmem:[%s1012 + $0x3f0] sm:%s1005]
                  %1267 = vst [vmem:[%s1013 + $0x1f8] sm:%s1005] %v1266
                  %v1268 = vld [vmem:[%s1012 + $0x3f8] sm:%s1005]
                  %1269 = vst [vmem:[%s1013 + $0x1fc] sm:%s1005] %v1268
                  %v1270 = vld [vmem:[%s1012 + $0x400] sm:%s1005]
                  %1271 = vst [vmem:[%s1013 + $0x200] sm:%s1005] %v1270
                  %v1272 = vld [vmem:[%s1012 + $0x408] sm:%s1005]
                  %1273 = vst [vmem:[%s1013 + $0x204] sm:%s1005] %v1272
                  %v1274 = vld [vmem:[%s1012 + $0x410] sm:%s1005]
                  %1275 = vst [vmem:[%s1013 + $0x208] sm:%s1005] %v1274
                  %v1276 = vld [vmem:[%s1012 + $0x418] sm:%s1005]
                  %1277 = vst [vmem:[%s1013 + $0x20c] sm:%s1005] %v1276
                  %v1278 = vld [vmem:[%s1012 + $0x420] sm:%s1005]
                  %1279 = vst [vmem:[%s1013 + $0x210] sm:%s1005] %v1278
                  %v1280 = vld [vmem:[%s1012 + $0x428] sm:%s1005]
                  %1281 = vst [vmem:[%s1013 + $0x214] sm:%s1005] %v1280
                  %v1282 = vld [vmem:[%s1012 + $0x430] sm:%s1005]
                  %1283 = vst [vmem:[%s1013 + $0x218] sm:%s1005] %v1282
                  %v1284 = vld [vmem:[%s1012 + $0x438] sm:%s1005]
                  %1285 = vst [vmem:[%s1013 + $0x21c] sm:%s1005] %v1284
                  %v1286 = vld [vmem:[%s1012 + $0x440] sm:%s1005]
                  %1287 = vst [vmem:[%s1013 + $0x220] sm:%s1005] %v1286
                  %v1288 = vld [vmem:[%s1012 + $0x448] sm:%s1005]
                  %1289 = vst [vmem:[%s1013 + $0x224] sm:%s1005] %v1288
                  %v1290 = vld [vmem:[%s1012 + $0x450] sm:%s1005]
                  %1291 = vst [vmem:[%s1013 + $0x228] sm:%s1005] %v1290
                  %v1292 = vld [vmem:[%s1012 + $0x458] sm:%s1005]
                  %1293 = vst [vmem:[%s1013 + $0x22c] sm:%s1005] %v1292
                  %v1294 = vld [vmem:[%s1012 + $0x460] sm:%s1005]
                  %1295 = vst [vmem:[%s1013 + $0x230] sm:%s1005] %v1294
                  %v1296 = vld [vmem:[%s1012 + $0x468] sm:%s1005]
                  %1297 = vst [vmem:[%s1013 + $0x234] sm:%s1005] %v1296
                  %v1298 = vld [vmem:[%s1012 + $0x470] sm:%s1005]
                  %1299 = vst [vmem:[%s1013 + $0x238] sm:%s1005] %v1298
                  %v1300 = vld [vmem:[%s1012 + $0x478] sm:%s1005]
                  %1301 = vst [vmem:[%s1013 + $0x23c] sm:%s1005] %v1300
                  %v1302 = vld [vmem:[%s1012 + $0x480] sm:%s1005]
                  %1303 = vst [vmem:[%s1013 + $0x240] sm:%s1005] %v1302
                  %v1304 = vld [vmem:[%s1012 + $0x488] sm:%s1005]
                  %1305 = vst [vmem:[%s1013 + $0x244] sm:%s1005] %v1304
                  %v1306 = vld [vmem:[%s1012 + $0x490] sm:%s1005]
                  %1307 = vst [vmem:[%s1013 + $0x248] sm:%s1005] %v1306
                  %v1308 = vld [vmem:[%s1012 + $0x498] sm:%s1005]
                  %1309 = vst [vmem:[%s1013 + $0x24c] sm:%s1005] %v1308
                  %v1310 = vld [vmem:[%s1012 + $0x4a0] sm:%s1005]
                  %1311 = vst [vmem:[%s1013 + $0x250] sm:%s1005] %v1310
                  %v1312 = vld [vmem:[%s1012 + $0x4a8] sm:%s1005]
                  %1313 = vst [vmem:[%s1013 + $0x254] sm:%s1005] %v1312
                  %v1314 = vld [vmem:[%s1012 + $0x4b0] sm:%s1005]
                  %1315 = vst [vmem:[%s1013 + $0x258] sm:%s1005] %v1314
                  %v1316 = vld [vmem:[%s1012 + $0x4b8] sm:%s1005]
                  %1317 = vst [vmem:[%s1013 + $0x25c] sm:%s1005] %v1316
                  %v1318 = vld [vmem:[%s1012 + $0x4c0] sm:%s1005]
                  %1319 = vst [vmem:[%s1013 + $0x260] sm:%s1005] %v1318
                  %v1320 = vld [vmem:[%s1012 + $0x4c8] sm:%s1005]
                  %1321 = vst [vmem:[%s1013 + $0x264] sm:%s1005] %v1320
                  %v1322 = vld [vmem:[%s1012 + $0x4d0] sm:%s1005]
                  %1323 = vst [vmem:[%s1013 + $0x268] sm:%s1005] %v1322
                  %v1324 = vld [vmem:[%s1012 + $0x4d8] sm:%s1005]
                  %1325 = vst [vmem:[%s1013 + $0x26c] sm:%s1005] %v1324
                  %v1326 = vld [vmem:[%s1012 + $0x4e0] sm:%s1005]
                  %1327 = vst [vmem:[%s1013 + $0x270] sm:%s1005] %v1326
                  %v1328 = vld [vmem:[%s1012 + $0x4e8] sm:%s1005]
                  %1329 = vst [vmem:[%s1013 + $0x274] sm:%s1005] %v1328
                  %v1330 = vld [vmem:[%s1012 + $0x4f0] sm:%s1005]
                  %1331 = vst [vmem:[%s1013 + $0x278] sm:%s1005] %v1330
                  %v1332 = vld [vmem:[%s1012 + $0x4f8] sm:%s1005]
                  %1333 = vst [vmem:[%s1013 + $0x27c] sm:%s1005] %v1332
                  %v1334 = vld [vmem:[%s1012 + $0x500] sm:%s1005]
                  %1335 = vst [vmem:[%s1013 + $0x280] sm:%s1005] %v1334
                  %v1336 = vld [vmem:[%s1012 + $0x508] sm:%s1005]
                  %1337 = vst [vmem:[%s1013 + $0x284] sm:%s1005] %v1336
                  %v1338 = vld [vmem:[%s1012 + $0x510] sm:%s1005]
                  %1339 = vst [vmem:[%s1013 + $0x288] sm:%s1005] %v1338
                  %v1340 = vld [vmem:[%s1012 + $0x518] sm:%s1005]
                  %1341 = vst [vmem:[%s1013 + $0x28c] sm:%s1005] %v1340
                  %v1342 = vld [vmem:[%s1012 + $0x520] sm:%s1005]
                  %1343 = vst [vmem:[%s1013 + $0x290] sm:%s1005] %v1342
                  %v1344 = vld [vmem:[%s1012 + $0x528] sm:%s1005]
                  %1345 = vst [vmem:[%s1013 + $0x294] sm:%s1005] %v1344
                  %v1346 = vld [vmem:[%s1012 + $0x530] sm:%s1005]
                  %1347 = vst [vmem:[%s1013 + $0x298] sm:%s1005] %v1346
                  %v1348 = vld [vmem:[%s1012 + $0x538] sm:%s1005]
                  %1349 = vst [vmem:[%s1013 + $0x29c] sm:%s1005] %v1348
                  %v1350 = vld [vmem:[%s1012 + $0x540] sm:%s1005]
                  %1351 = vst [vmem:[%s1013 + $0x2a0] sm:%s1005] %v1350
                  %v1352 = vld [vmem:[%s1012 + $0x548] sm:%s1005]
                  %1353 = vst [vmem:[%s1013 + $0x2a4] sm:%s1005] %v1352
                  %v1354 = vld [vmem:[%s1012 + $0x550] sm:%s1005]
                  %1355 = vst [vmem:[%s1013 + $0x2a8] sm:%s1005] %v1354
                  %v1356 = vld [vmem:[%s1012 + $0x558] sm:%s1005]
                  %1357 = vst [vmem:[%s1013 + $0x2ac] sm:%s1005] %v1356
                  %v1358 = vld [vmem:[%s1012 + $0x560] sm:%s1005]
                  %1359 = vst [vmem:[%s1013 + $0x2b0] sm:%s1005] %v1358
                  %v1360 = vld [vmem:[%s1012 + $0x568] sm:%s1005]
                  %1361 = vst [vmem:[%s1013 + $0x2b4] sm:%s1005] %v1360
                  %v1362 = vld [vmem:[%s1012 + $0x570] sm:%s1005]
                  %1363 = vst [vmem:[%s1013 + $0x2b8] sm:%s1005] %v1362
                  %v1364 = vld [vmem:[%s1012 + $0x578] sm:%s1005]
                  %1365 = vst [vmem:[%s1013 + $0x2bc] sm:%s1005] %v1364
                  %v1366 = vld [vmem:[%s1012 + $0x580] sm:%s1005]
                  %1367 = vst [vmem:[%s1013 + $0x2c0] sm:%s1005] %v1366
                  %v1368 = vld [vmem:[%s1012 + $0x588] sm:%s1005]
                  %1369 = vst [vmem:[%s1013 + $0x2c4] sm:%s1005] %v1368
                  %v1370 = vld [vmem:[%s1012 + $0x590] sm:%s1005]
                  %1371 = vst [vmem:[%s1013 + $0x2c8] sm:%s1005] %v1370
                  %v1372 = vld [vmem:[%s1012 + $0x598] sm:%s1005]
                  %1373 = vst [vmem:[%s1013 + $0x2cc] sm:%s1005] %v1372
                  %v1374 = vld [vmem:[%s1012 + $0x5a0] sm:%s1005]
                  %1375 = vst [vmem:[%s1013 + $0x2d0] sm:%s1005] %v1374
                  %v1376 = vld [vmem:[%s1012 + $0x5a8] sm:%s1005]
                  %1377 = vst [vmem:[%s1013 + $0x2d4] sm:%s1005] %v1376
                  %v1378 = vld [vmem:[%s1012 + $0x5b0] sm:%s1005]
                  %1379 = vst [vmem:[%s1013 + $0x2d8] sm:%s1005] %v1378
                  %v1380 = vld [vmem:[%s1012 + $0x5b8] sm:%s1005]
                  %1381 = vst [vmem:[%s1013 + $0x2dc] sm:%s1005] %v1380
                  %v1382 = vld [vmem:[%s1012 + $0x5c0] sm:%s1005]
                  %1383 = vst [vmem:[%s1013 + $0x2e0] sm:%s1005] %v1382
                  %v1384 = vld [vmem:[%s1012 + $0x5c8] sm:%s1005]
                  %1385 = vst [vmem:[%s1013 + $0x2e4] sm:%s1005] %v1384
                  %v1386 = vld [vmem:[%s1012 + $0x5d0] sm:%s1005]
                  %1387 = vst [vmem:[%s1013 + $0x2e8] sm:%s1005] %v1386
                  %v1388 = vld [vmem:[%s1012 + $0x5d8] sm:%s1005]
                  %1389 = vst [vmem:[%s1013 + $0x2ec] sm:%s1005] %v1388
                  %v1390 = vld [vmem:[%s1012 + $0x5e0] sm:%s1005]
                  %1391 = vst [vmem:[%s1013 + $0x2f0] sm:%s1005] %v1390
                  %v1392 = vld [vmem:[%s1012 + $0x5e8] sm:%s1005]
                  %1393 = vst [vmem:[%s1013 + $0x2f4] sm:%s1005] %v1392
                  %v1394 = vld [vmem:[%s1012 + $0x5f0] sm:%s1005]
                  %1395 = vst [vmem:[%s1013 + $0x2f8] sm:%s1005] %v1394
                  %v1396 = vld [vmem:[%s1012 + $0x5f8] sm:%s1005]
                  %1397 = vst [vmem:[%s1013 + $0x2fc] sm:%s1005] %v1396
                  %v1398 = vld [vmem:[%s1012 + $0x600] sm:%s1005]
                  %1399 = vst [vmem:[%s1013 + $0x300] sm:%s1005] %v1398
                  %v1400 = vld [vmem:[%s1012 + $0x608] sm:%s1005]
                  %1401 = vst [vmem:[%s1013 + $0x304] sm:%s1005] %v1400
                  %v1402 = vld [vmem:[%s1012 + $0x610] sm:%s1005]
                  %1403 = vst [vmem:[%s1013 + $0x308] sm:%s1005] %v1402
                  %v1404 = vld [vmem:[%s1012 + $0x618] sm:%s1005]
                  %1405 = vst [vmem:[%s1013 + $0x30c] sm:%s1005] %v1404
                  %v1406 = vld [vmem:[%s1012 + $0x620] sm:%s1005]
                  %1407 = vst [vmem:[%s1013 + $0x310] sm:%s1005] %v1406
                  %v1408 = vld [vmem:[%s1012 + $0x628] sm:%s1005]
                  %1409 = vst [vmem:[%s1013 + $0x314] sm:%s1005] %v1408
                  %v1410 = vld [vmem:[%s1012 + $0x630] sm:%s1005]
                  %1411 = vst [vmem:[%s1013 + $0x318] sm:%s1005] %v1410
                  %v1412 = vld [vmem:[%s1012 + $0x638] sm:%s1005]
                  %1413 = vst [vmem:[%s1013 + $0x31c] sm:%s1005] %v1412
                  %v1414 = vld [vmem:[%s1012 + $0x640] sm:%s1005]
                  %1415 = vst [vmem:[%s1013 + $0x320] sm:%s1005] %v1414
                  %v1416 = vld [vmem:[%s1012 + $0x648] sm:%s1005]
                  %1417 = vst [vmem:[%s1013 + $0x324] sm:%s1005] %v1416
                  %v1418 = vld [vmem:[%s1012 + $0x650] sm:%s1005]
                  %1419 = vst [vmem:[%s1013 + $0x328] sm:%s1005] %v1418
                  %v1420 = vld [vmem:[%s1012 + $0x658] sm:%s1005]
                  %1421 = vst [vmem:[%s1013 + $0x32c] sm:%s1005] %v1420
                  %v1422 = vld [vmem:[%s1012 + $0x660] sm:%s1005]
                  %1423 = vst [vmem:[%s1013 + $0x330] sm:%s1005] %v1422
                  %v1424 = vld [vmem:[%s1012 + $0x668] sm:%s1005]
                  %1425 = vst [vmem:[%s1013 + $0x334] sm:%s1005] %v1424
                  %v1426 = vld [vmem:[%s1012 + $0x670] sm:%s1005]
                  %1427 = vst [vmem:[%s1013 + $0x338] sm:%s1005] %v1426
                  %v1428 = vld [vmem:[%s1012 + $0x678] sm:%s1005]
                  %1429 = vst [vmem:[%s1013 + $0x33c] sm:%s1005] %v1428
                  %v1430 = vld [vmem:[%s1012 + $0x680] sm:%s1005]
                  %1431 = vst [vmem:[%s1013 + $0x340] sm:%s1005] %v1430
                  %v1432 = vld [vmem:[%s1012 + $0x688] sm:%s1005]
                  %1433 = vst [vmem:[%s1013 + $0x344] sm:%s1005] %v1432
                  %v1434 = vld [vmem:[%s1012 + $0x690] sm:%s1005]
                  %1435 = vst [vmem:[%s1013 + $0x348] sm:%s1005] %v1434
                  %v1436 = vld [vmem:[%s1012 + $0x698] sm:%s1005]
                  %1437 = vst [vmem:[%s1013 + $0x34c] sm:%s1005] %v1436
                  %v1438 = vld [vmem:[%s1012 + $0x6a0] sm:%s1005]
                  %1439 = vst [vmem:[%s1013 + $0x350] sm:%s1005] %v1438
                  %v1440 = vld [vmem:[%s1012 + $0x6a8] sm:%s1005]
                  %1441 = vst [vmem:[%s1013 + $0x354] sm:%s1005] %v1440
                  %v1442 = vld [vmem:[%s1012 + $0x6b0] sm:%s1005]
                  %1443 = vst [vmem:[%s1013 + $0x358] sm:%s1005] %v1442
                  %v1444 = vld [vmem:[%s1012 + $0x6b8] sm:%s1005]
                  %1445 = vst [vmem:[%s1013 + $0x35c] sm:%s1005] %v1444
                  %v1446 = vld [vmem:[%s1012 + $0x6c0] sm:%s1005]
                  %1447 = vst [vmem:[%s1013 + $0x360] sm:%s1005] %v1446
                  %v1448 = vld [vmem:[%s1012 + $0x6c8] sm:%s1005]
                  %1449 = vst [vmem:[%s1013 + $0x364] sm:%s1005] %v1448
                  %v1450 = vld [vmem:[%s1012 + $0x6d0] sm:%s1005]
                  %1451 = vst [vmem:[%s1013 + $0x368] sm:%s1005] %v1450
                  %v1452 = vld [vmem:[%s1012 + $0x6d8] sm:%s1005]
                  %1453 = vst [vmem:[%s1013 + $0x36c] sm:%s1005] %v1452
                  %v1454 = vld [vmem:[%s1012 + $0x6e0] sm:%s1005]
                  %1455 = vst [vmem:[%s1013 + $0x370] sm:%s1005] %v1454
                  %v1456 = vld [vmem:[%s1012 + $0x6e8] sm:%s1005]
                  %1457 = vst [vmem:[%s1013 + $0x374] sm:%s1005] %v1456
                  %v1458 = vld [vmem:[%s1012 + $0x6f0] sm:%s1005]
                  %1459 = vst [vmem:[%s1013 + $0x378] sm:%s1005] %v1458
                  %v1460 = vld [vmem:[%s1012 + $0x6f8] sm:%s1005]
                  %1461 = vst [vmem:[%s1013 + $0x37c] sm:%s1005] %v1460
                  %v1462 = vld [vmem:[%s1012 + $0x700] sm:%s1005]
                  %1463 = vst [vmem:[%s1013 + $0x380] sm:%s1005] %v1462
                  %v1464 = vld [vmem:[%s1012 + $0x708] sm:%s1005]
                  %1465 = vst [vmem:[%s1013 + $0x384] sm:%s1005] %v1464
                  %v1466 = vld [vmem:[%s1012 + $0x710] sm:%s1005]
                  %1467 = vst [vmem:[%s1013 + $0x388] sm:%s1005] %v1466
                  %v1468 = vld [vmem:[%s1012 + $0x718] sm:%s1005]
                  %1469 = vst [vmem:[%s1013 + $0x38c] sm:%s1005] %v1468
                  %v1470 = vld [vmem:[%s1012 + $0x720] sm:%s1005]
                  %1471 = vst [vmem:[%s1013 + $0x390] sm:%s1005] %v1470
                  %v1472 = vld [vmem:[%s1012 + $0x728] sm:%s1005]
                  %1473 = vst [vmem:[%s1013 + $0x394] sm:%s1005] %v1472
                  %v1474 = vld [vmem:[%s1012 + $0x730] sm:%s1005]
                  %1475 = vst [vmem:[%s1013 + $0x398] sm:%s1005] %v1474
                  %v1476 = vld [vmem:[%s1012 + $0x738] sm:%s1005]
                  %1477 = vst [vmem:[%s1013 + $0x39c] sm:%s1005] %v1476
                  %v1478 = vld [vmem:[%s1012 + $0x740] sm:%s1005]
                  %1479 = vst [vmem:[%s1013 + $0x3a0] sm:%s1005] %v1478
                  %v1480 = vld [vmem:[%s1012 + $0x748] sm:%s1005]
                  %1481 = vst [vmem:[%s1013 + $0x3a4] sm:%s1005] %v1480
                  %v1482 = vld [vmem:[%s1012 + $0x750] sm:%s1005]
                  %1483 = vst [vmem:[%s1013 + $0x3a8] sm:%s1005] %v1482
                  %v1484 = vld [vmem:[%s1012 + $0x758] sm:%s1005]
                  %1485 = vst [vmem:[%s1013 + $0x3ac] sm:%s1005] %v1484
                  %v1486 = vld [vmem:[%s1012 + $0x760] sm:%s1005]
                  %1487 = vst [vmem:[%s1013 + $0x3b0] sm:%s1005] %v1486
                  %v1488 = vld [vmem:[%s1012 + $0x768] sm:%s1005]
                  %1489 = vst [vmem:[%s1013 + $0x3b4] sm:%s1005] %v1488
                  %v1490 = vld [vmem:[%s1012 + $0x770] sm:%s1005]
                  %1491 = vst [vmem:[%s1013 + $0x3b8] sm:%s1005] %v1490
                  %v1492 = vld [vmem:[%s1012 + $0x778] sm:%s1005]
                  %1493 = vst [vmem:[%s1013 + $0x3bc] sm:%s1005] %v1492
                  %v1494 = vld [vmem:[%s1012 + $0x780] sm:%s1005]
                  %1495 = vst [vmem:[%s1013 + $0x3c0] sm:%s1005] %v1494
                  %v1496 = vld [vmem:[%s1012 + $0x788] sm:%s1005]
                  %1497 = vst [vmem:[%s1013 + $0x3c4] sm:%s1005] %v1496
                  %v1498 = vld [vmem:[%s1012 + $0x790] sm:%s1005]
                  %1499 = vst [vmem:[%s1013 + $0x3c8] sm:%s1005] %v1498
                  %v1500 = vld [vmem:[%s1012 + $0x798] sm:%s1005]
                  %1501 = vst [vmem:[%s1013 + $0x3cc] sm:%s1005] %v1500
                  %v1502 = vld [vmem:[%s1012 + $0x7a0] sm:%s1005]
                  %1503 = vst [vmem:[%s1013 + $0x3d0] sm:%s1005] %v1502
                  %v1504 = vld [vmem:[%s1012 + $0x7a8] sm:%s1005]
                  %1505 = vst [vmem:[%s1013 + $0x3d4] sm:%s1005] %v1504
                  %v1506 = vld [vmem:[%s1012 + $0x7b0] sm:%s1005]
                  %1507 = vst [vmem:[%s1013 + $0x3d8] sm:%s1005] %v1506
                  %v1508 = vld [vmem:[%s1012 + $0x7b8] sm:%s1005]
                  %1509 = vst [vmem:[%s1013 + $0x3dc] sm:%s1005] %v1508
                  %v1510 = vld [vmem:[%s1012 + $0x7c0] sm:%s1005]
                  %1511 = vst [vmem:[%s1013 + $0x3e0] sm:%s1005] %v1510
                  %v1512 = vld [vmem:[%s1012 + $0x7c8] sm:%s1005]
                  %1513 = vst [vmem:[%s1013 + $0x3e4] sm:%s1005] %v1512
                  %v1514 = vld [vmem:[%s1012 + $0x7d0] sm:%s1005]
                  %1515 = vst [vmem:[%s1013 + $0x3e8] sm:%s1005] %v1514
                  %v1516 = vld [vmem:[%s1012 + $0x7d8] sm:%s1005]
                  %1517 = vst [vmem:[%s1013 + $0x3ec] sm:%s1005] %v1516
                  %v1518 = vld [vmem:[%s1012 + $0x7e0] sm:%s1005]
                  %1519 = vst [vmem:[%s1013 + $0x3f0] sm:%s1005] %v1518
                  %v1520 = vld [vmem:[%s1012 + $0x7e8] sm:%s1005]
                  %1521 = vst [vmem:[%s1013 + $0x3f4] sm:%s1005] %v1520
                  %v1522 = vld [vmem:[%s1012 + $0x7f0] sm:%s1005]
                  %1523 = vst [vmem:[%s1013 + $0x3f8] sm:%s1005] %v1522
                  %v1524 = vld [vmem:[%s1012 + $0x7f8] sm:%s1005]
                  %1525 = vst [vmem:[%s1013 + $0x3fc] sm:%s1005] %v1524
                  %v1526 = vld [vmem:[%s1012 + $0x800] sm:%s1005]
                  %1527 = vst [vmem:[%s1013 + $0x400] sm:%s1005] %v1526
                  %v1528 = vld [vmem:[%s1012 + $0x808] sm:%s1005]
                  %1529 = vst [vmem:[%s1013 + $0x404] sm:%s1005] %v1528
                  %v1530 = vld [vmem:[%s1012 + $0x810] sm:%s1005]
                  %1531 = vst [vmem:[%s1013 + $0x408] sm:%s1005] %v1530
                  %v1532 = vld [vmem:[%s1012 + $0x818] sm:%s1005]
                  %1533 = vst [vmem:[%s1013 + $0x40c] sm:%s1005] %v1532
                  %v1534 = vld [vmem:[%s1012 + $0x820] sm:%s1005]
                  %1535 = vst [vmem:[%s1013 + $0x410] sm:%s1005] %v1534
                  %v1536 = vld [vmem:[%s1012 + $0x828] sm:%s1005]
                  %1537 = vst [vmem:[%s1013 + $0x414] sm:%s1005] %v1536
                  %v1538 = vld [vmem:[%s1012 + $0x830] sm:%s1005]
                  %1539 = vst [vmem:[%s1013 + $0x418] sm:%s1005] %v1538
                  %v1540 = vld [vmem:[%s1012 + $0x838] sm:%s1005]
                  %1541 = vst [vmem:[%s1013 + $0x41c] sm:%s1005] %v1540
                  %v1542 = vld [vmem:[%s1012 + $0x840] sm:%s1005]
                  %1543 = vst [vmem:[%s1013 + $0x420] sm:%s1005] %v1542
                  %v1544 = vld [vmem:[%s1012 + $0x848] sm:%s1005]
                  %1545 = vst [vmem:[%s1013 + $0x424] sm:%s1005] %v1544
                  %v1546 = vld [vmem:[%s1012 + $0x850] sm:%s1005]
                  %1547 = vst [vmem:[%s1013 + $0x428] sm:%s1005] %v1546
                  %v1548 = vld [vmem:[%s1012 + $0x858] sm:%s1005]
                  %1549 = vst [vmem:[%s1013 + $0x42c] sm:%s1005] %v1548
                  %v1550 = vld [vmem:[%s1012 + $0x860] sm:%s1005]
                  %1551 = vst [vmem:[%s1013 + $0x430] sm:%s1005] %v1550
                  %v1552 = vld [vmem:[%s1012 + $0x868] sm:%s1005]
                  %1553 = vst [vmem:[%s1013 + $0x434] sm:%s1005] %v1552
                  %v1554 = vld [vmem:[%s1012 + $0x870] sm:%s1005]
                  %1555 = vst [vmem:[%s1013 + $0x438] sm:%s1005] %v1554
                  %v1556 = vld [vmem:[%s1012 + $0x878] sm:%s1005]
                  %1557 = vst [vmem:[%s1013 + $0x43c] sm:%s1005] %v1556
                  %v1558 = vld [vmem:[%s1012 + $0x880] sm:%s1005]
                  %1559 = vst [vmem:[%s1013 + $0x440] sm:%s1005] %v1558
                  %v1560 = vld [vmem:[%s1012 + $0x888] sm:%s1005]
                  %1561 = vst [vmem:[%s1013 + $0x444] sm:%s1005] %v1560
                  %v1562 = vld [vmem:[%s1012 + $0x890] sm:%s1005]
                  %1563 = vst [vmem:[%s1013 + $0x448] sm:%s1005] %v1562
                  %v1564 = vld [vmem:[%s1012 + $0x898] sm:%s1005]
                  %1565 = vst [vmem:[%s1013 + $0x44c] sm:%s1005] %v1564
                  %v1566 = vld [vmem:[%s1012 + $0x8a0] sm:%s1005]
                  %1567 = vst [vmem:[%s1013 + $0x450] sm:%s1005] %v1566
                  %v1568 = vld [vmem:[%s1012 + $0x8a8] sm:%s1005]
                  %1569 = vst [vmem:[%s1013 + $0x454] sm:%s1005] %v1568
                  %v1570 = vld [vmem:[%s1012 + $0x8b0] sm:%s1005]
                  %1571 = vst [vmem:[%s1013 + $0x458] sm:%s1005] %v1570
                  %v1572 = vld [vmem:[%s1012 + $0x8b8] sm:%s1005]
                  %1573 = vst [vmem:[%s1013 + $0x45c] sm:%s1005] %v1572
                  %v1574 = vld [vmem:[%s1012 + $0x8c0] sm:%s1005]
                  %1575 = vst [vmem:[%s1013 + $0x460] sm:%s1005] %v1574
                  %v1576 = vld [vmem:[%s1012 + $0x8c8] sm:%s1005]
                  %1577 = vst [vmem:[%s1013 + $0x464] sm:%s1005] %v1576
                  %v1578 = vld [vmem:[%s1012 + $0x8d0] sm:%s1005]
                  %1579 = vst [vmem:[%s1013 + $0x468] sm:%s1005] %v1578
                  %v1580 = vld [vmem:[%s1012 + $0x8d8] sm:%s1005]
                  %1581 = vst [vmem:[%s1013 + $0x46c] sm:%s1005] %v1580
                  %v1582 = vld [vmem:[%s1012 + $0x8e0] sm:%s1005]
                  %1583 = vst [vmem:[%s1013 + $0x470] sm:%s1005] %v1582
                  %v1584 = vld [vmem:[%s1012 + $0x8e8] sm:%s1005]
                  %1585 = vst [vmem:[%s1013 + $0x474] sm:%s1005] %v1584
                  %v1586 = vld [vmem:[%s1012 + $0x8f0] sm:%s1005]
                  %1587 = vst [vmem:[%s1013 + $0x478] sm:%s1005] %v1586
                  %v1588 = vld [vmem:[%s1012 + $0x8f8] sm:%s1005]
                  %1589 = vst [vmem:[%s1013 + $0x47c] sm:%s1005] %v1588
                  %v1590 = vld [vmem:[%s1012 + $0x900] sm:%s1005]
                  %1591 = vst [vmem:[%s1013 + $0x480] sm:%s1005] %v1590
                  %v1592 = vld [vmem:[%s1012 + $0x908] sm:%s1005]
                  %1593 = vst [vmem:[%s1013 + $0x484] sm:%s1005] %v1592
                  %v1594 = vld [vmem:[%s1012 + $0x910] sm:%s1005]
                  %1595 = vst [vmem:[%s1013 + $0x488] sm:%s1005] %v1594
                  %v1596 = vld [vmem:[%s1012 + $0x918] sm:%s1005]
                  %1597 = vst [vmem:[%s1013 + $0x48c] sm:%s1005] %v1596
                  %v1598 = vld [vmem:[%s1012 + $0x920] sm:%s1005]
                  %1599 = vst [vmem:[%s1013 + $0x490] sm:%s1005] %v1598
                  %v1600 = vld [vmem:[%s1012 + $0x928] sm:%s1005]
                  %1601 = vst [vmem:[%s1013 + $0x494] sm:%s1005] %v1600
                  %v1602 = vld [vmem:[%s1012 + $0x930] sm:%s1005]
                  %1603 = vst [vmem:[%s1013 + $0x498] sm:%s1005] %v1602
                  %v1604 = vld [vmem:[%s1012 + $0x938] sm:%s1005]
                  %1605 = vst [vmem:[%s1013 + $0x49c] sm:%s1005] %v1604
                  %v1606 = vld [vmem:[%s1012 + $0x940] sm:%s1005]
                  %1607 = vst [vmem:[%s1013 + $0x4a0] sm:%s1005] %v1606
                  %v1608 = vld [vmem:[%s1012 + $0x948] sm:%s1005]
                  %1609 = vst [vmem:[%s1013 + $0x4a4] sm:%s1005] %v1608
                  %v1610 = vld [vmem:[%s1012 + $0x950] sm:%s1005]
                  %1611 = vst [vmem:[%s1013 + $0x4a8] sm:%s1005] %v1610
                  %v1612 = vld [vmem:[%s1012 + $0x958] sm:%s1005]
                  %1613 = vst [vmem:[%s1013 + $0x4ac] sm:%s1005] %v1612
                  %v1614 = vld [vmem:[%s1012 + $0x960] sm:%s1005]
                  %1615 = vst [vmem:[%s1013 + $0x4b0] sm:%s1005] %v1614
                  %v1616 = vld [vmem:[%s1012 + $0x968] sm:%s1005]
                  %1617 = vst [vmem:[%s1013 + $0x4b4] sm:%s1005] %v1616
                  %v1618 = vld [vmem:[%s1012 + $0x970] sm:%s1005]
                  %1619 = vst [vmem:[%s1013 + $0x4b8] sm:%s1005] %v1618
                  %v1620 = vld [vmem:[%s1012 + $0x978] sm:%s1005]
                  %1621 = vst [vmem:[%s1013 + $0x4bc] sm:%s1005] %v1620
                  %v1622 = vld [vmem:[%s1012 + $0x980] sm:%s1005]
                  %1623 = vst [vmem:[%s1013 + $0x4c0] sm:%s1005] %v1622
                  %v1624 = vld [vmem:[%s1012 + $0x988] sm:%s1005]
                  %1625 = vst [vmem:[%s1013 + $0x4c4] sm:%s1005] %v1624
                  %v1626 = vld [vmem:[%s1012 + $0x990] sm:%s1005]
                  %1627 = vst [vmem:[%s1013 + $0x4c8] sm:%s1005] %v1626
                  %v1628 = vld [vmem:[%s1012 + $0x998] sm:%s1005]
                  %1629 = vst [vmem:[%s1013 + $0x4cc] sm:%s1005] %v1628
                  %v1630 = vld [vmem:[%s1012 + $0x9a0] sm:%s1005]
                  %1631 = vst [vmem:[%s1013 + $0x4d0] sm:%s1005] %v1630
                  %v1632 = vld [vmem:[%s1012 + $0x9a8] sm:%s1005]
                  %1633 = vst [vmem:[%s1013 + $0x4d4] sm:%s1005] %v1632
                  %v1634 = vld [vmem:[%s1012 + $0x9b0] sm:%s1005]
                  %1635 = vst [vmem:[%s1013 + $0x4d8] sm:%s1005] %v1634
                  %v1636 = vld [vmem:[%s1012 + $0x9b8] sm:%s1005]
                  %1637 = vst [vmem:[%s1013 + $0x4dc] sm:%s1005] %v1636
                  %v1638 = vld [vmem:[%s1012 + $0x9c0] sm:%s1005]
                  %1639 = vst [vmem:[%s1013 + $0x4e0] sm:%s1005] %v1638
                  %v1640 = vld [vmem:[%s1012 + $0x9c8] sm:%s1005]
                  %1641 = vst [vmem:[%s1013 + $0x4e4] sm:%s1005] %v1640
                  %v1642 = vld [vmem:[%s1012 + $0x9d0] sm:%s1005]
                  %1643 = vst [vmem:[%s1013 + $0x4e8] sm:%s1005] %v1642
                  %v1644 = vld [vmem:[%s1012 + $0x9d8] sm:%s1005]
                  %1645 = vst [vmem:[%s1013 + $0x4ec] sm:%s1005] %v1644
                  %v1646 = vld [vmem:[%s1012 + $0x9e0] sm:%s1005]
                  %1647 = vst [vmem:[%s1013 + $0x4f0] sm:%s1005] %v1646
                  %v1648 = vld [vmem:[%s1012 + $0x9e8] sm:%s1005]
                  %1649 = vst [vmem:[%s1013 + $0x4f4] sm:%s1005] %v1648
                  %v1650 = vld [vmem:[%s1012 + $0x9f0] sm:%s1005]
                  %1651 = vst [vmem:[%s1013 + $0x4f8] sm:%s1005] %v1650
                  %v1652 = vld [vmem:[%s1012 + $0x9f8] sm:%s1005]
                  %1653 = vst [vmem:[%s1013 + $0x4fc] sm:%s1005] %v1652
                  %v1654 = vld [vmem:[%s1012 + $0xa00] sm:%s1005]
                  %1655 = vst [vmem:[%s1013 + $0x500] sm:%s1005] %v1654
                  %v1656 = vld [vmem:[%s1012 + $0xa08] sm:%s1005]
                  %1657 = vst [vmem:[%s1013 + $0x504] sm:%s1005] %v1656
                  %v1658 = vld [vmem:[%s1012 + $0xa10] sm:%s1005]
                  %1659 = vst [vmem:[%s1013 + $0x508] sm:%s1005] %v1658
                  %v1660 = vld [vmem:[%s1012 + $0xa18] sm:%s1005]
                  %1661 = vst [vmem:[%s1013 + $0x50c] sm:%s1005] %v1660
                  %v1662 = vld [vmem:[%s1012 + $0xa20] sm:%s1005]
                  %1663 = vst [vmem:[%s1013 + $0x510] sm:%s1005] %v1662
                  %v1664 = vld [vmem:[%s1012 + $0xa28] sm:%s1005]
                  %1665 = vst [vmem:[%s1013 + $0x514] sm:%s1005] %v1664
                  %v1666 = vld [vmem:[%s1012 + $0xa30] sm:%s1005]
                  %1667 = vst [vmem:[%s1013 + $0x518] sm:%s1005] %v1666
                  %v1668 = vld [vmem:[%s1012 + $0xa38] sm:%s1005]
                  %1669 = vst [vmem:[%s1013 + $0x51c] sm:%s1005] %v1668
                  %v1670 = vld [vmem:[%s1012 + $0xa40] sm:%s1005]
                  %1671 = vst [vmem:[%s1013 + $0x520] sm:%s1005] %v1670
                  %v1672 = vld [vmem:[%s1012 + $0xa48] sm:%s1005]
                  %1673 = vst [vmem:[%s1013 + $0x524] sm:%s1005] %v1672
                  %v1674 = vld [vmem:[%s1012 + $0xa50] sm:%s1005]
                  %1675 = vst [vmem:[%s1013 + $0x528] sm:%s1005] %v1674
                  %v1676 = vld [vmem:[%s1012 + $0xa58] sm:%s1005]
                  %1677 = vst [vmem:[%s1013 + $0x52c] sm:%s1005] %v1676
                  %v1678 = vld [vmem:[%s1012 + $0xa60] sm:%s1005]
                  %1679 = vst [vmem:[%s1013 + $0x530] sm:%s1005] %v1678
                  %v1680 = vld [vmem:[%s1012 + $0xa68] sm:%s1005]
                  %1681 = vst [vmem:[%s1013 + $0x534] sm:%s1005] %v1680
                  %v1682 = vld [vmem:[%s1012 + $0xa70] sm:%s1005]
                  %1683 = vst [vmem:[%s1013 + $0x538] sm:%s1005] %v1682
                  %v1684 = vld [vmem:[%s1012 + $0xa78] sm:%s1005]
                  %1685 = vst [vmem:[%s1013 + $0x53c] sm:%s1005] %v1684
                  %v1686 = vld [vmem:[%s1012 + $0xa80] sm:%s1005]
                  %1687 = vst [vmem:[%s1013 + $0x540] sm:%s1005] %v1686
                  %v1688 = vld [vmem:[%s1012 + $0xa88] sm:%s1005]
                  %1689 = vst [vmem:[%s1013 + $0x544] sm:%s1005] %v1688
                  %v1690 = vld [vmem:[%s1012 + $0xa90] sm:%s1005]
                  %1691 = vst [vmem:[%s1013 + $0x548] sm:%s1005] %v1690
                  %v1692 = vld [vmem:[%s1012 + $0xa98] sm:%s1005]
                  %1693 = vst [vmem:[%s1013 + $0x54c] sm:%s1005] %v1692
                  %v1694 = vld [vmem:[%s1012 + $0xaa0] sm:%s1005]
                  %1695 = vst [vmem:[%s1013 + $0x550] sm:%s1005] %v1694
                  %v1696 = vld [vmem:[%s1012 + $0xaa8] sm:%s1005]
                  %1697 = vst [vmem:[%s1013 + $0x554] sm:%s1005] %v1696
                  %v1698 = vld [vmem:[%s1012 + $0xab0] sm:%s1005]
                  %1699 = vst [vmem:[%s1013 + $0x558] sm:%s1005] %v1698
                  %v1700 = vld [vmem:[%s1012 + $0xab8] sm:%s1005]
                  %1701 = vst [vmem:[%s1013 + $0x55c] sm:%s1005] %v1700
                  %v1702 = vld [vmem:[%s1012 + $0xac0] sm:%s1005]
                  %1703 = vst [vmem:[%s1013 + $0x560] sm:%s1005] %v1702
                  %v1704 = vld [vmem:[%s1012 + $0xac8] sm:%s1005]
                  %1705 = vst [vmem:[%s1013 + $0x564] sm:%s1005] %v1704
                  %v1706 = vld [vmem:[%s1012 + $0xad0] sm:%s1005]
                  %1707 = vst [vmem:[%s1013 + $0x568] sm:%s1005] %v1706
                  %v1708 = vld [vmem:[%s1012 + $0xad8] sm:%s1005]
                  %1709 = vst [vmem:[%s1013 + $0x56c] sm:%s1005] %v1708
                  %v1710 = vld [vmem:[%s1012 + $0xae0] sm:%s1005]
                  %1711 = vst [vmem:[%s1013 + $0x570] sm:%s1005] %v1710
                  %v1712 = vld [vmem:[%s1012 + $0xae8] sm:%s1005]
                  %1713 = vst [vmem:[%s1013 + $0x574] sm:%s1005] %v1712
                  %v1714 = vld [vmem:[%s1012 + $0xaf0] sm:%s1005]
                  %1715 = vst [vmem:[%s1013 + $0x578] sm:%s1005] %v1714
                  %v1716 = vld [vmem:[%s1012 + $0xaf8] sm:%s1005]
                  %1717 = vst [vmem:[%s1013 + $0x57c] sm:%s1005] %v1716
                  %v1718 = vld [vmem:[%s1012 + $0xb00] sm:%s1005]
                  %1719 = vst [vmem:[%s1013 + $0x580] sm:%s1005] %v1718
                  %v1720 = vld [vmem:[%s1012 + $0xb08] sm:%s1005]
                  %1721 = vst [vmem:[%s1013 + $0x584] sm:%s1005] %v1720
                  %v1722 = vld [vmem:[%s1012 + $0xb10] sm:%s1005]
                  %1723 = vst [vmem:[%s1013 + $0x588] sm:%s1005] %v1722
                  %v1724 = vld [vmem:[%s1012 + $0xb18] sm:%s1005]
                  %1725 = vst [vmem:[%s1013 + $0x58c] sm:%s1005] %v1724
                  %v1726 = vld [vmem:[%s1012 + $0xb20] sm:%s1005]
                  %1727 = vst [vmem:[%s1013 + $0x590] sm:%s1005] %v1726
                  %v1728 = vld [vmem:[%s1012 + $0xb28] sm:%s1005]
                  %1729 = vst [vmem:[%s1013 + $0x594] sm:%s1005] %v1728
                  %v1730 = vld [vmem:[%s1012 + $0xb30] sm:%s1005]
                  %1731 = vst [vmem:[%s1013 + $0x598] sm:%s1005] %v1730
                  %v1732 = vld [vmem:[%s1012 + $0xb38] sm:%s1005]
                  %1733 = vst [vmem:[%s1013 + $0x59c] sm:%s1005] %v1732
                  %v1734 = vld [vmem:[%s1012 + $0xb40] sm:%s1005]
                  %1735 = vst [vmem:[%s1013 + $0x5a0] sm:%s1005] %v1734
                  %v1736 = vld [vmem:[%s1012 + $0xb48] sm:%s1005]
                  %1737 = vst [vmem:[%s1013 + $0x5a4] sm:%s1005] %v1736
                  %v1738 = vld [vmem:[%s1012 + $0xb50] sm:%s1005]
                  %1739 = vst [vmem:[%s1013 + $0x5a8] sm:%s1005] %v1738
                  %v1740 = vld [vmem:[%s1012 + $0xb58] sm:%s1005]
                  %1741 = vst [vmem:[%s1013 + $0x5ac] sm:%s1005] %v1740
                  %v1742 = vld [vmem:[%s1012 + $0xb60] sm:%s1005]
                  %1743 = vst [vmem:[%s1013 + $0x5b0] sm:%s1005] %v1742
                  %v1744 = vld [vmem:[%s1012 + $0xb68] sm:%s1005]
                  %1745 = vst [vmem:[%s1013 + $0x5b4] sm:%s1005] %v1744
                  %v1746 = vld [vmem:[%s1012 + $0xb70] sm:%s1005]
                  %1747 = vst [vmem:[%s1013 + $0x5b8] sm:%s1005] %v1746
                  %v1748 = vld [vmem:[%s1012 + $0xb78] sm:%s1005]
                  %1749 = vst [vmem:[%s1013 + $0x5bc] sm:%s1005] %v1748
                  %v1750 = vld [vmem:[%s1012 + $0xb80] sm:%s1005]
                  %1751 = vst [vmem:[%s1013 + $0x5c0] sm:%s1005] %v1750
                  %v1752 = vld [vmem:[%s1012 + $0xb88] sm:%s1005]
                  %1753 = vst [vmem:[%s1013 + $0x5c4] sm:%s1005] %v1752
                  %v1754 = vld [vmem:[%s1012 + $0xb90] sm:%s1005]
                  %1755 = vst [vmem:[%s1013 + $0x5c8] sm:%s1005] %v1754
                  %v1756 = vld [vmem:[%s1012 + $0xb98] sm:%s1005]
                  %1757 = vst [vmem:[%s1013 + $0x5cc] sm:%s1005] %v1756
                  %v1758 = vld [vmem:[%s1012 + $0xba0] sm:%s1005]
                  %1759 = vst [vmem:[%s1013 + $0x5d0] sm:%s1005] %v1758
                  %v1760 = vld [vmem:[%s1012 + $0xba8] sm:%s1005]
                  %1761 = vst [vmem:[%s1013 + $0x5d4] sm:%s1005] %v1760
                  %v1762 = vld [vmem:[%s1012 + $0xbb0] sm:%s1005]
                  %1763 = vst [vmem:[%s1013 + $0x5d8] sm:%s1005] %v1762
                  %v1764 = vld [vmem:[%s1012 + $0xbb8] sm:%s1005]
                  %1765 = vst [vmem:[%s1013 + $0x5dc] sm:%s1005] %v1764
                  %v1766 = vld [vmem:[%s1012 + $0xbc0] sm:%s1005]
                  %1767 = vst [vmem:[%s1013 + $0x5e0] sm:%s1005] %v1766
                  %v1768 = vld [vmem:[%s1012 + $0xbc8] sm:%s1005]
                  %1769 = vst [vmem:[%s1013 + $0x5e4] sm:%s1005] %v1768
                  %v1770 = vld [vmem:[%s1012 + $0xbd0] sm:%s1005]
                  %1771 = vst [vmem:[%s1013 + $0x5e8] sm:%s1005] %v1770
                  %v1772 = vld [vmem:[%s1012 + $0xbd8] sm:%s1005]
                  %1773 = vst [vmem:[%s1013 + $0x5ec] sm:%s1005] %v1772
                  %v1774 = vld [vmem:[%s1012 + $0xbe0] sm:%s1005]
                  %1775 = vst [vmem:[%s1013 + $0x5f0] sm:%s1005] %v1774
                  %v1776 = vld [vmem:[%s1012 + $0xbe8] sm:%s1005]
                  %1777 = vst [vmem:[%s1013 + $0x5f4] sm:%s1005] %v1776
                  %v1778 = vld [vmem:[%s1012 + $0xbf0] sm:%s1005]
                  %1779 = vst [vmem:[%s1013 + $0x5f8] sm:%s1005] %v1778
                  %v1780 = vld [vmem:[%s1012 + $0xbf8] sm:%s1005]
                  %1781 = vst [vmem:[%s1013 + $0x5fc] sm:%s1005] %v1780
                  %v1782 = vld [vmem:[%s1012 + $0xc00] sm:%s1005]
                  %1783 = vst [vmem:[%s1013 + $0x600] sm:%s1005] %v1782
                  %v1784 = vld [vmem:[%s1012 + $0xc08] sm:%s1005]
                  %1785 = vst [vmem:[%s1013 + $0x604] sm:%s1005] %v1784
                  %v1786 = vld [vmem:[%s1012 + $0xc10] sm:%s1005]
                  %1787 = vst [vmem:[%s1013 + $0x608] sm:%s1005] %v1786
                  %v1788 = vld [vmem:[%s1012 + $0xc18] sm:%s1005]
                  %1789 = vst [vmem:[%s1013 + $0x60c] sm:%s1005] %v1788
                  %v1790 = vld [vmem:[%s1012 + $0xc20] sm:%s1005]
                  %1791 = vst [vmem:[%s1013 + $0x610] sm:%s1005] %v1790
                  %v1792 = vld [vmem:[%s1012 + $0xc28] sm:%s1005]
                  %1793 = vst [vmem:[%s1013 + $0x614] sm:%s1005] %v1792
                  %v1794 = vld [vmem:[%s1012 + $0xc30] sm:%s1005]
                  %1795 = vst [vmem:[%s1013 + $0x618] sm:%s1005] %v1794
                  %v1796 = vld [vmem:[%s1012 + $0xc38] sm:%s1005]
                  %1797 = vst [vmem:[%s1013 + $0x61c] sm:%s1005] %v1796
                $region59: #{mnist_cnn_forward.5} parent=46 // loop_footer
                  %s1011 = sadd.s32 1, %s1007
                $region60: #{mnist_cnn_forward.5} parent=46 // loop_footer_branch
                  %1006 = sbr.rel target = $region56
                $region61: #{mnist_cnn_forward.5} parent=46 // loop_exit
                  _
              $region47: #{mnist_cnn_forward.5} parent=31 // pred_fallthru
                _
            $region32: #{mnist_cnn_forward.5} parent=27 // pred_fallthru
              _
            // Predicated region
            $region33: #{mnist_cnn_forward.5} parent=27 // pred_check
              _
            $region34: #{mnist_cnn_forward.5} parent=27 // pred_check_branch
              %199 = sbr.rel (0) target = $region36
            $region35: #{mnist_cnn_forward.5} parent=27 // pred_region
              %s201 = ssub.s32 16, 1
              loop: start=0, step=1, limit=1
              $region37: #{mnist_cnn_forward.5} parent=35 // loop_pre_header
                _
              $region38: #{mnist_cnn_forward.5} parent=35 // loop_header
                %s203 = sphi 0, %s207
                %p204 = scmp.ge.s32.totalorder %s203, 1
                %s208 = sphi %s193, %s193
                %s209 = sphi %s191, %s191
              $region39: #{mnist_cnn_forward.5} parent=35 // loop_header_branch
                %206 = sbr.rel (%p204) target = $region43
              $region40: #{mnist_cnn_forward.5} parent=35 // loop_body
                %v210 = vld [vmem:[%s208] sm:%s201]
                %211 = vst [vmem:[%s209] sm:%s201] %v210
                %v212 = vld [vmem:[%s208 + $0x8] sm:%s201]
                %213 = vst [vmem:[%s209 + $0x4] sm:%s201] %v212
                %v214 = vld [vmem:[%s208 + $0x10] sm:%s201]
                %215 = vst [vmem:[%s209 + $0x8] sm:%s201] %v214
                %v216 = vld [vmem:[%s208 + $0x18] sm:%s201]
                %217 = vst [vmem:[%s209 + $0xc] sm:%s201] %v216
                %v218 = vld [vmem:[%s208 + $0x20] sm:%s201]
                %219 = vst [vmem:[%s209 + $0x10] sm:%s201] %v218
                %v220 = vld [vmem:[%s208 + $0x28] sm:%s201]
                %221 = vst [vmem:[%s209 + $0x14] sm:%s201] %v220
                %v222 = vld [vmem:[%s208 + $0x30] sm:%s201]
                %223 = vst [vmem:[%s209 + $0x18] sm:%s201] %v222
                %v224 = vld [vmem:[%s208 + $0x38] sm:%s201]
                %225 = vst [vmem:[%s209 + $0x1c] sm:%s201] %v224
                %v226 = vld [vmem:[%s208 + $0x40] sm:%s201]
                %227 = vst [vmem:[%s209 + $0x20] sm:%s201] %v226
                %v228 = vld [vmem:[%s208 + $0x48] sm:%s201]
                %229 = vst [vmem:[%s209 + $0x24] sm:%s201] %v228
                %v230 = vld [vmem:[%s208 + $0x50] sm:%s201]
                %231 = vst [vmem:[%s209 + $0x28] sm:%s201] %v230
                %v232 = vld [vmem:[%s208 + $0x58] sm:%s201]
                %233 = vst [vmem:[%s209 + $0x2c] sm:%s201] %v232
                %v234 = vld [vmem:[%s208 + $0x60] sm:%s201]
                %235 = vst [vmem:[%s209 + $0x30] sm:%s201] %v234
                %v236 = vld [vmem:[%s208 + $0x68] sm:%s201]
                %237 = vst [vmem:[%s209 + $0x34] sm:%s201] %v236
                %v238 = vld [vmem:[%s208 + $0x70] sm:%s201]
                %239 = vst [vmem:[%s209 + $0x38] sm:%s201] %v238
                %v240 = vld [vmem:[%s208 + $0x78] sm:%s201]
                %241 = vst [vmem:[%s209 + $0x3c] sm:%s201] %v240
                %v242 = vld [vmem:[%s208 + $0x80] sm:%s201]
                %243 = vst [vmem:[%s209 + $0x40] sm:%s201] %v242
                %v244 = vld [vmem:[%s208 + $0x88] sm:%s201]
                %245 = vst [vmem:[%s209 + $0x44] sm:%s201] %v244
                %v246 = vld [vmem:[%s208 + $0x90] sm:%s201]
                %247 = vst [vmem:[%s209 + $0x48] sm:%s201] %v246
                %v248 = vld [vmem:[%s208 + $0x98] sm:%s201]
                %249 = vst [vmem:[%s209 + $0x4c] sm:%s201] %v248
                %v250 = vld [vmem:[%s208 + $0xa0] sm:%s201]
                %251 = vst [vmem:[%s209 + $0x50] sm:%s201] %v250
                %v252 = vld [vmem:[%s208 + $0xa8] sm:%s201]
                %253 = vst [vmem:[%s209 + $0x54] sm:%s201] %v252
                %v254 = vld [vmem:[%s208 + $0xb0] sm:%s201]
                %255 = vst [vmem:[%s209 + $0x58] sm:%s201] %v254
                %v256 = vld [vmem:[%s208 + $0xb8] sm:%s201]
                %257 = vst [vmem:[%s209 + $0x5c] sm:%s201] %v256
                %v258 = vld [vmem:[%s208 + $0xc0] sm:%s201]
                %259 = vst [vmem:[%s209 + $0x60] sm:%s201] %v258
                %v260 = vld [vmem:[%s208 + $0xc8] sm:%s201]
                %261 = vst [vmem:[%s209 + $0x64] sm:%s201] %v260
                %v262 = vld [vmem:[%s208 + $0xd0] sm:%s201]
                %263 = vst [vmem:[%s209 + $0x68] sm:%s201] %v262
                %v264 = vld [vmem:[%s208 + $0xd8] sm:%s201]
                %265 = vst [vmem:[%s209 + $0x6c] sm:%s201] %v264
                %v266 = vld [vmem:[%s208 + $0xe0] sm:%s201]
                %267 = vst [vmem:[%s209 + $0x70] sm:%s201] %v266
                %v268 = vld [vmem:[%s208 + $0xe8] sm:%s201]
                %269 = vst [vmem:[%s209 + $0x74] sm:%s201] %v268
                %v270 = vld [vmem:[%s208 + $0xf0] sm:%s201]
                %271 = vst [vmem:[%s209 + $0x78] sm:%s201] %v270
                %v272 = vld [vmem:[%s208 + $0xf8] sm:%s201]
                %273 = vst [vmem:[%s209 + $0x7c] sm:%s201] %v272
                %v274 = vld [vmem:[%s208 + $0x100] sm:%s201]
                %275 = vst [vmem:[%s209 + $0x80] sm:%s201] %v274
                %v276 = vld [vmem:[%s208 + $0x108] sm:%s201]
                %277 = vst [vmem:[%s209 + $0x84] sm:%s201] %v276
                %v278 = vld [vmem:[%s208 + $0x110] sm:%s201]
                %279 = vst [vmem:[%s209 + $0x88] sm:%s201] %v278
                %v280 = vld [vmem:[%s208 + $0x118] sm:%s201]
                %281 = vst [vmem:[%s209 + $0x8c] sm:%s201] %v280
                %v282 = vld [vmem:[%s208 + $0x120] sm:%s201]
                %283 = vst [vmem:[%s209 + $0x90] sm:%s201] %v282
                %v284 = vld [vmem:[%s208 + $0x128] sm:%s201]
                %285 = vst [vmem:[%s209 + $0x94] sm:%s201] %v284
                %v286 = vld [vmem:[%s208 + $0x130] sm:%s201]
                %287 = vst [vmem:[%s209 + $0x98] sm:%s201] %v286
                %v288 = vld [vmem:[%s208 + $0x138] sm:%s201]
                %289 = vst [vmem:[%s209 + $0x9c] sm:%s201] %v288
                %v290 = vld [vmem:[%s208 + $0x140] sm:%s201]
                %291 = vst [vmem:[%s209 + $0xa0] sm:%s201] %v290
                %v292 = vld [vmem:[%s208 + $0x148] sm:%s201]
                %293 = vst [vmem:[%s209 + $0xa4] sm:%s201] %v292
                %v294 = vld [vmem:[%s208 + $0x150] sm:%s201]
                %295 = vst [vmem:[%s209 + $0xa8] sm:%s201] %v294
                %v296 = vld [vmem:[%s208 + $0x158] sm:%s201]
                %297 = vst [vmem:[%s209 + $0xac] sm:%s201] %v296
                %v298 = vld [vmem:[%s208 + $0x160] sm:%s201]
                %299 = vst [vmem:[%s209 + $0xb0] sm:%s201] %v298
                %v300 = vld [vmem:[%s208 + $0x168] sm:%s201]
                %301 = vst [vmem:[%s209 + $0xb4] sm:%s201] %v300
                %v302 = vld [vmem:[%s208 + $0x170] sm:%s201]
                %303 = vst [vmem:[%s209 + $0xb8] sm:%s201] %v302
                %v304 = vld [vmem:[%s208 + $0x178] sm:%s201]
                %305 = vst [vmem:[%s209 + $0xbc] sm:%s201] %v304
                %v306 = vld [vmem:[%s208 + $0x180] sm:%s201]
                %307 = vst [vmem:[%s209 + $0xc0] sm:%s201] %v306
                %v308 = vld [vmem:[%s208 + $0x188] sm:%s201]
                %309 = vst [vmem:[%s209 + $0xc4] sm:%s201] %v308
                %v310 = vld [vmem:[%s208 + $0x190] sm:%s201]
                %311 = vst [vmem:[%s209 + $0xc8] sm:%s201] %v310
                %v312 = vld [vmem:[%s208 + $0x198] sm:%s201]
                %313 = vst [vmem:[%s209 + $0xcc] sm:%s201] %v312
                %v314 = vld [vmem:[%s208 + $0x1a0] sm:%s201]
                %315 = vst [vmem:[%s209 + $0xd0] sm:%s201] %v314
                %v316 = vld [vmem:[%s208 + $0x1a8] sm:%s201]
                %317 = vst [vmem:[%s209 + $0xd4] sm:%s201] %v316
                %v318 = vld [vmem:[%s208 + $0x1b0] sm:%s201]
                %319 = vst [vmem:[%s209 + $0xd8] sm:%s201] %v318
                %v320 = vld [vmem:[%s208 + $0x1b8] sm:%s201]
                %321 = vst [vmem:[%s209 + $0xdc] sm:%s201] %v320
                %v322 = vld [vmem:[%s208 + $0x1c0] sm:%s201]
                %323 = vst [vmem:[%s209 + $0xe0] sm:%s201] %v322
                %v324 = vld [vmem:[%s208 + $0x1c8] sm:%s201]
                %325 = vst [vmem:[%s209 + $0xe4] sm:%s201] %v324
                %v326 = vld [vmem:[%s208 + $0x1d0] sm:%s201]
                %327 = vst [vmem:[%s209 + $0xe8] sm:%s201] %v326
                %v328 = vld [vmem:[%s208 + $0x1d8] sm:%s201]
                %329 = vst [vmem:[%s209 + $0xec] sm:%s201] %v328
                %v330 = vld [vmem:[%s208 + $0x1e0] sm:%s201]
                %331 = vst [vmem:[%s209 + $0xf0] sm:%s201] %v330
                %v332 = vld [vmem:[%s208 + $0x1e8] sm:%s201]
                %333 = vst [vmem:[%s209 + $0xf4] sm:%s201] %v332
                %v334 = vld [vmem:[%s208 + $0x1f0] sm:%s201]
                %335 = vst [vmem:[%s209 + $0xf8] sm:%s201] %v334
                %v336 = vld [vmem:[%s208 + $0x1f8] sm:%s201]
                %337 = vst [vmem:[%s209 + $0xfc] sm:%s201] %v336
                %v338 = vld [vmem:[%s208 + $0x200] sm:%s201]
                %339 = vst [vmem:[%s209 + $0x100] sm:%s201] %v338
                %v340 = vld [vmem:[%s208 + $0x208] sm:%s201]
                %341 = vst [vmem:[%s209 + $0x104] sm:%s201] %v340
                %v342 = vld [vmem:[%s208 + $0x210] sm:%s201]
                %343 = vst [vmem:[%s209 + $0x108] sm:%s201] %v342
                %v344 = vld [vmem:[%s208 + $0x218] sm:%s201]
                %345 = vst [vmem:[%s209 + $0x10c] sm:%s201] %v344
                %v346 = vld [vmem:[%s208 + $0x220] sm:%s201]
                %347 = vst [vmem:[%s209 + $0x110] sm:%s201] %v346
                %v348 = vld [vmem:[%s208 + $0x228] sm:%s201]
                %349 = vst [vmem:[%s209 + $0x114] sm:%s201] %v348
                %v350 = vld [vmem:[%s208 + $0x230] sm:%s201]
                %351 = vst [vmem:[%s209 + $0x118] sm:%s201] %v350
                %v352 = vld [vmem:[%s208 + $0x238] sm:%s201]
                %353 = vst [vmem:[%s209 + $0x11c] sm:%s201] %v352
                %v354 = vld [vmem:[%s208 + $0x240] sm:%s201]
                %355 = vst [vmem:[%s209 + $0x120] sm:%s201] %v354
                %v356 = vld [vmem:[%s208 + $0x248] sm:%s201]
                %357 = vst [vmem:[%s209 + $0x124] sm:%s201] %v356
                %v358 = vld [vmem:[%s208 + $0x250] sm:%s201]
                %359 = vst [vmem:[%s209 + $0x128] sm:%s201] %v358
                %v360 = vld [vmem:[%s208 + $0x258] sm:%s201]
                %361 = vst [vmem:[%s209 + $0x12c] sm:%s201] %v360
                %v362 = vld [vmem:[%s208 + $0x260] sm:%s201]
                %363 = vst [vmem:[%s209 + $0x130] sm:%s201] %v362
                %v364 = vld [vmem:[%s208 + $0x268] sm:%s201]
                %365 = vst [vmem:[%s209 + $0x134] sm:%s201] %v364
                %v366 = vld [vmem:[%s208 + $0x270] sm:%s201]
                %367 = vst [vmem:[%s209 + $0x138] sm:%s201] %v366
                %v368 = vld [vmem:[%s208 + $0x278] sm:%s201]
                %369 = vst [vmem:[%s209 + $0x13c] sm:%s201] %v368
                %v370 = vld [vmem:[%s208 + $0x280] sm:%s201]
                %371 = vst [vmem:[%s209 + $0x140] sm:%s201] %v370
                %v372 = vld [vmem:[%s208 + $0x288] sm:%s201]
                %373 = vst [vmem:[%s209 + $0x144] sm:%s201] %v372
                %v374 = vld [vmem:[%s208 + $0x290] sm:%s201]
                %375 = vst [vmem:[%s209 + $0x148] sm:%s201] %v374
                %v376 = vld [vmem:[%s208 + $0x298] sm:%s201]
                %377 = vst [vmem:[%s209 + $0x14c] sm:%s201] %v376
                %v378 = vld [vmem:[%s208 + $0x2a0] sm:%s201]
                %379 = vst [vmem:[%s209 + $0x150] sm:%s201] %v378
                %v380 = vld [vmem:[%s208 + $0x2a8] sm:%s201]
                %381 = vst [vmem:[%s209 + $0x154] sm:%s201] %v380
                %v382 = vld [vmem:[%s208 + $0x2b0] sm:%s201]
                %383 = vst [vmem:[%s209 + $0x158] sm:%s201] %v382
                %v384 = vld [vmem:[%s208 + $0x2b8] sm:%s201]
                %385 = vst [vmem:[%s209 + $0x15c] sm:%s201] %v384
                %v386 = vld [vmem:[%s208 + $0x2c0] sm:%s201]
                %387 = vst [vmem:[%s209 + $0x160] sm:%s201] %v386
                %v388 = vld [vmem:[%s208 + $0x2c8] sm:%s201]
                %389 = vst [vmem:[%s209 + $0x164] sm:%s201] %v388
                %v390 = vld [vmem:[%s208 + $0x2d0] sm:%s201]
                %391 = vst [vmem:[%s209 + $0x168] sm:%s201] %v390
                %v392 = vld [vmem:[%s208 + $0x2d8] sm:%s201]
                %393 = vst [vmem:[%s209 + $0x16c] sm:%s201] %v392
                %v394 = vld [vmem:[%s208 + $0x2e0] sm:%s201]
                %395 = vst [vmem:[%s209 + $0x170] sm:%s201] %v394
                %v396 = vld [vmem:[%s208 + $0x2e8] sm:%s201]
                %397 = vst [vmem:[%s209 + $0x174] sm:%s201] %v396
                %v398 = vld [vmem:[%s208 + $0x2f0] sm:%s201]
                %399 = vst [vmem:[%s209 + $0x178] sm:%s201] %v398
                %v400 = vld [vmem:[%s208 + $0x2f8] sm:%s201]
                %401 = vst [vmem:[%s209 + $0x17c] sm:%s201] %v400
                %v402 = vld [vmem:[%s208 + $0x300] sm:%s201]
                %403 = vst [vmem:[%s209 + $0x180] sm:%s201] %v402
                %v404 = vld [vmem:[%s208 + $0x308] sm:%s201]
                %405 = vst [vmem:[%s209 + $0x184] sm:%s201] %v404
                %v406 = vld [vmem:[%s208 + $0x310] sm:%s201]
                %407 = vst [vmem:[%s209 + $0x188] sm:%s201] %v406
                %v408 = vld [vmem:[%s208 + $0x318] sm:%s201]
                %409 = vst [vmem:[%s209 + $0x18c] sm:%s201] %v408
                %v410 = vld [vmem:[%s208 + $0x320] sm:%s201]
                %411 = vst [vmem:[%s209 + $0x190] sm:%s201] %v410
                %v412 = vld [vmem:[%s208 + $0x328] sm:%s201]
                %413 = vst [vmem:[%s209 + $0x194] sm:%s201] %v412
                %v414 = vld [vmem:[%s208 + $0x330] sm:%s201]
                %415 = vst [vmem:[%s209 + $0x198] sm:%s201] %v414
                %v416 = vld [vmem:[%s208 + $0x338] sm:%s201]
                %417 = vst [vmem:[%s209 + $0x19c] sm:%s201] %v416
                %v418 = vld [vmem:[%s208 + $0x340] sm:%s201]
                %419 = vst [vmem:[%s209 + $0x1a0] sm:%s201] %v418
                %v420 = vld [vmem:[%s208 + $0x348] sm:%s201]
                %421 = vst [vmem:[%s209 + $0x1a4] sm:%s201] %v420
                %v422 = vld [vmem:[%s208 + $0x350] sm:%s201]
                %423 = vst [vmem:[%s209 + $0x1a8] sm:%s201] %v422
                %v424 = vld [vmem:[%s208 + $0x358] sm:%s201]
                %425 = vst [vmem:[%s209 + $0x1ac] sm:%s201] %v424
                %v426 = vld [vmem:[%s208 + $0x360] sm:%s201]
                %427 = vst [vmem:[%s209 + $0x1b0] sm:%s201] %v426
                %v428 = vld [vmem:[%s208 + $0x368] sm:%s201]
                %429 = vst [vmem:[%s209 + $0x1b4] sm:%s201] %v428
                %v430 = vld [vmem:[%s208 + $0x370] sm:%s201]
                %431 = vst [vmem:[%s209 + $0x1b8] sm:%s201] %v430
                %v432 = vld [vmem:[%s208 + $0x378] sm:%s201]
                %433 = vst [vmem:[%s209 + $0x1bc] sm:%s201] %v432
                %v434 = vld [vmem:[%s208 + $0x380] sm:%s201]
                %435 = vst [vmem:[%s209 + $0x1c0] sm:%s201] %v434
                %v436 = vld [vmem:[%s208 + $0x388] sm:%s201]
                %437 = vst [vmem:[%s209 + $0x1c4] sm:%s201] %v436
                %v438 = vld [vmem:[%s208 + $0x390] sm:%s201]
                %439 = vst [vmem:[%s209 + $0x1c8] sm:%s201] %v438
                %v440 = vld [vmem:[%s208 + $0x398] sm:%s201]
                %441 = vst [vmem:[%s209 + $0x1cc] sm:%s201] %v440
                %v442 = vld [vmem:[%s208 + $0x3a0] sm:%s201]
                %443 = vst [vmem:[%s209 + $0x1d0] sm:%s201] %v442
                %v444 = vld [vmem:[%s208 + $0x3a8] sm:%s201]
                %445 = vst [vmem:[%s209 + $0x1d4] sm:%s201] %v444
                %v446 = vld [vmem:[%s208 + $0x3b0] sm:%s201]
                %447 = vst [vmem:[%s209 + $0x1d8] sm:%s201] %v446
                %v448 = vld [vmem:[%s208 + $0x3b8] sm:%s201]
                %449 = vst [vmem:[%s209 + $0x1dc] sm:%s201] %v448
                %v450 = vld [vmem:[%s208 + $0x3c0] sm:%s201]
                %451 = vst [vmem:[%s209 + $0x1e0] sm:%s201] %v450
                %v452 = vld [vmem:[%s208 + $0x3c8] sm:%s201]
                %453 = vst [vmem:[%s209 + $0x1e4] sm:%s201] %v452
                %v454 = vld [vmem:[%s208 + $0x3d0] sm:%s201]
                %455 = vst [vmem:[%s209 + $0x1e8] sm:%s201] %v454
                %v456 = vld [vmem:[%s208 + $0x3d8] sm:%s201]
                %457 = vst [vmem:[%s209 + $0x1ec] sm:%s201] %v456
                %v458 = vld [vmem:[%s208 + $0x3e0] sm:%s201]
                %459 = vst [vmem:[%s209 + $0x1f0] sm:%s201] %v458
                %v460 = vld [vmem:[%s208 + $0x3e8] sm:%s201]
                %461 = vst [vmem:[%s209 + $0x1f4] sm:%s201] %v460
                %v462 = vld [vmem:[%s208 + $0x3f0] sm:%s201]
                %463 = vst [vmem:[%s209 + $0x1f8] sm:%s201] %v462
                %v464 = vld [vmem:[%s208 + $0x3f8] sm:%s201]
                %465 = vst [vmem:[%s209 + $0x1fc] sm:%s201] %v464
                %v466 = vld [vmem:[%s208 + $0x400] sm:%s201]
                %467 = vst [vmem:[%s209 + $0x200] sm:%s201] %v466
                %v468 = vld [vmem:[%s208 + $0x408] sm:%s201]
                %469 = vst [vmem:[%s209 + $0x204] sm:%s201] %v468
                %v470 = vld [vmem:[%s208 + $0x410] sm:%s201]
                %471 = vst [vmem:[%s209 + $0x208] sm:%s201] %v470
                %v472 = vld [vmem:[%s208 + $0x418] sm:%s201]
                %473 = vst [vmem:[%s209 + $0x20c] sm:%s201] %v472
                %v474 = vld [vmem:[%s208 + $0x420] sm:%s201]
                %475 = vst [vmem:[%s209 + $0x210] sm:%s201] %v474
                %v476 = vld [vmem:[%s208 + $0x428] sm:%s201]
                %477 = vst [vmem:[%s209 + $0x214] sm:%s201] %v476
                %v478 = vld [vmem:[%s208 + $0x430] sm:%s201]
                %479 = vst [vmem:[%s209 + $0x218] sm:%s201] %v478
                %v480 = vld [vmem:[%s208 + $0x438] sm:%s201]
                %481 = vst [vmem:[%s209 + $0x21c] sm:%s201] %v480
                %v482 = vld [vmem:[%s208 + $0x440] sm:%s201]
                %483 = vst [vmem:[%s209 + $0x220] sm:%s201] %v482
                %v484 = vld [vmem:[%s208 + $0x448] sm:%s201]
                %485 = vst [vmem:[%s209 + $0x224] sm:%s201] %v484
                %v486 = vld [vmem:[%s208 + $0x450] sm:%s201]
                %487 = vst [vmem:[%s209 + $0x228] sm:%s201] %v486
                %v488 = vld [vmem:[%s208 + $0x458] sm:%s201]
                %489 = vst [vmem:[%s209 + $0x22c] sm:%s201] %v488
                %v490 = vld [vmem:[%s208 + $0x460] sm:%s201]
                %491 = vst [vmem:[%s209 + $0x230] sm:%s201] %v490
                %v492 = vld [vmem:[%s208 + $0x468] sm:%s201]
                %493 = vst [vmem:[%s209 + $0x234] sm:%s201] %v492
                %v494 = vld [vmem:[%s208 + $0x470] sm:%s201]
                %495 = vst [vmem:[%s209 + $0x238] sm:%s201] %v494
                %v496 = vld [vmem:[%s208 + $0x478] sm:%s201]
                %497 = vst [vmem:[%s209 + $0x23c] sm:%s201] %v496
                %v498 = vld [vmem:[%s208 + $0x480] sm:%s201]
                %499 = vst [vmem:[%s209 + $0x240] sm:%s201] %v498
                %v500 = vld [vmem:[%s208 + $0x488] sm:%s201]
                %501 = vst [vmem:[%s209 + $0x244] sm:%s201] %v500
                %v502 = vld [vmem:[%s208 + $0x490] sm:%s201]
                %503 = vst [vmem:[%s209 + $0x248] sm:%s201] %v502
                %v504 = vld [vmem:[%s208 + $0x498] sm:%s201]
                %505 = vst [vmem:[%s209 + $0x24c] sm:%s201] %v504
                %v506 = vld [vmem:[%s208 + $0x4a0] sm:%s201]
                %507 = vst [vmem:[%s209 + $0x250] sm:%s201] %v506
                %v508 = vld [vmem:[%s208 + $0x4a8] sm:%s201]
                %509 = vst [vmem:[%s209 + $0x254] sm:%s201] %v508
                %v510 = vld [vmem:[%s208 + $0x4b0] sm:%s201]
                %511 = vst [vmem:[%s209 + $0x258] sm:%s201] %v510
                %v512 = vld [vmem:[%s208 + $0x4b8] sm:%s201]
                %513 = vst [vmem:[%s209 + $0x25c] sm:%s201] %v512
                %v514 = vld [vmem:[%s208 + $0x4c0] sm:%s201]
                %515 = vst [vmem:[%s209 + $0x260] sm:%s201] %v514
                %v516 = vld [vmem:[%s208 + $0x4c8] sm:%s201]
                %517 = vst [vmem:[%s209 + $0x264] sm:%s201] %v516
                %v518 = vld [vmem:[%s208 + $0x4d0] sm:%s201]
                %519 = vst [vmem:[%s209 + $0x268] sm:%s201] %v518
                %v520 = vld [vmem:[%s208 + $0x4d8] sm:%s201]
                %521 = vst [vmem:[%s209 + $0x26c] sm:%s201] %v520
                %v522 = vld [vmem:[%s208 + $0x4e0] sm:%s201]
                %523 = vst [vmem:[%s209 + $0x270] sm:%s201] %v522
                %v524 = vld [vmem:[%s208 + $0x4e8] sm:%s201]
                %525 = vst [vmem:[%s209 + $0x274] sm:%s201] %v524
                %v526 = vld [vmem:[%s208 + $0x4f0] sm:%s201]
                %527 = vst [vmem:[%s209 + $0x278] sm:%s201] %v526
                %v528 = vld [vmem:[%s208 + $0x4f8] sm:%s201]
                %529 = vst [vmem:[%s209 + $0x27c] sm:%s201] %v528
                %v530 = vld [vmem:[%s208 + $0x500] sm:%s201]
                %531 = vst [vmem:[%s209 + $0x280] sm:%s201] %v530
                %v532 = vld [vmem:[%s208 + $0x508] sm:%s201]
                %533 = vst [vmem:[%s209 + $0x284] sm:%s201] %v532
                %v534 = vld [vmem:[%s208 + $0x510] sm:%s201]
                %535 = vst [vmem:[%s209 + $0x288] sm:%s201] %v534
                %v536 = vld [vmem:[%s208 + $0x518] sm:%s201]
                %537 = vst [vmem:[%s209 + $0x28c] sm:%s201] %v536
                %v538 = vld [vmem:[%s208 + $0x520] sm:%s201]
                %539 = vst [vmem:[%s209 + $0x290] sm:%s201] %v538
                %v540 = vld [vmem:[%s208 + $0x528] sm:%s201]
                %541 = vst [vmem:[%s209 + $0x294] sm:%s201] %v540
                %v542 = vld [vmem:[%s208 + $0x530] sm:%s201]
                %543 = vst [vmem:[%s209 + $0x298] sm:%s201] %v542
                %v544 = vld [vmem:[%s208 + $0x538] sm:%s201]
                %545 = vst [vmem:[%s209 + $0x29c] sm:%s201] %v544
                %v546 = vld [vmem:[%s208 + $0x540] sm:%s201]
                %547 = vst [vmem:[%s209 + $0x2a0] sm:%s201] %v546
                %v548 = vld [vmem:[%s208 + $0x548] sm:%s201]
                %549 = vst [vmem:[%s209 + $0x2a4] sm:%s201] %v548
                %v550 = vld [vmem:[%s208 + $0x550] sm:%s201]
                %551 = vst [vmem:[%s209 + $0x2a8] sm:%s201] %v550
                %v552 = vld [vmem:[%s208 + $0x558] sm:%s201]
                %553 = vst [vmem:[%s209 + $0x2ac] sm:%s201] %v552
                %v554 = vld [vmem:[%s208 + $0x560] sm:%s201]
                %555 = vst [vmem:[%s209 + $0x2b0] sm:%s201] %v554
                %v556 = vld [vmem:[%s208 + $0x568] sm:%s201]
                %557 = vst [vmem:[%s209 + $0x2b4] sm:%s201] %v556
                %v558 = vld [vmem:[%s208 + $0x570] sm:%s201]
                %559 = vst [vmem:[%s209 + $0x2b8] sm:%s201] %v558
                %v560 = vld [vmem:[%s208 + $0x578] sm:%s201]
                %561 = vst [vmem:[%s209 + $0x2bc] sm:%s201] %v560
                %v562 = vld [vmem:[%s208 + $0x580] sm:%s201]
                %563 = vst [vmem:[%s209 + $0x2c0] sm:%s201] %v562
                %v564 = vld [vmem:[%s208 + $0x588] sm:%s201]
                %565 = vst [vmem:[%s209 + $0x2c4] sm:%s201] %v564
                %v566 = vld [vmem:[%s208 + $0x590] sm:%s201]
                %567 = vst [vmem:[%s209 + $0x2c8] sm:%s201] %v566
                %v568 = vld [vmem:[%s208 + $0x598] sm:%s201]
                %569 = vst [vmem:[%s209 + $0x2cc] sm:%s201] %v568
                %v570 = vld [vmem:[%s208 + $0x5a0] sm:%s201]
                %571 = vst [vmem:[%s209 + $0x2d0] sm:%s201] %v570
                %v572 = vld [vmem:[%s208 + $0x5a8] sm:%s201]
                %573 = vst [vmem:[%s209 + $0x2d4] sm:%s201] %v572
                %v574 = vld [vmem:[%s208 + $0x5b0] sm:%s201]
                %575 = vst [vmem:[%s209 + $0x2d8] sm:%s201] %v574
                %v576 = vld [vmem:[%s208 + $0x5b8] sm:%s201]
                %577 = vst [vmem:[%s209 + $0x2dc] sm:%s201] %v576
                %v578 = vld [vmem:[%s208 + $0x5c0] sm:%s201]
                %579 = vst [vmem:[%s209 + $0x2e0] sm:%s201] %v578
                %v580 = vld [vmem:[%s208 + $0x5c8] sm:%s201]
                %581 = vst [vmem:[%s209 + $0x2e4] sm:%s201] %v580
                %v582 = vld [vmem:[%s208 + $0x5d0] sm:%s201]
                %583 = vst [vmem:[%s209 + $0x2e8] sm:%s201] %v582
                %v584 = vld [vmem:[%s208 + $0x5d8] sm:%s201]
                %585 = vst [vmem:[%s209 + $0x2ec] sm:%s201] %v584
                %v586 = vld [vmem:[%s208 + $0x5e0] sm:%s201]
                %587 = vst [vmem:[%s209 + $0x2f0] sm:%s201] %v586
                %v588 = vld [vmem:[%s208 + $0x5e8] sm:%s201]
                %589 = vst [vmem:[%s209 + $0x2f4] sm:%s201] %v588
                %v590 = vld [vmem:[%s208 + $0x5f0] sm:%s201]
                %591 = vst [vmem:[%s209 + $0x2f8] sm:%s201] %v590
                %v592 = vld [vmem:[%s208 + $0x5f8] sm:%s201]
                %593 = vst [vmem:[%s209 + $0x2fc] sm:%s201] %v592
                %v594 = vld [vmem:[%s208 + $0x600] sm:%s201]
                %595 = vst [vmem:[%s209 + $0x300] sm:%s201] %v594
                %v596 = vld [vmem:[%s208 + $0x608] sm:%s201]
                %597 = vst [vmem:[%s209 + $0x304] sm:%s201] %v596
                %v598 = vld [vmem:[%s208 + $0x610] sm:%s201]
                %599 = vst [vmem:[%s209 + $0x308] sm:%s201] %v598
                %v600 = vld [vmem:[%s208 + $0x618] sm:%s201]
                %601 = vst [vmem:[%s209 + $0x30c] sm:%s201] %v600
                %v602 = vld [vmem:[%s208 + $0x620] sm:%s201]
                %603 = vst [vmem:[%s209 + $0x310] sm:%s201] %v602
                %v604 = vld [vmem:[%s208 + $0x628] sm:%s201]
                %605 = vst [vmem:[%s209 + $0x314] sm:%s201] %v604
                %v606 = vld [vmem:[%s208 + $0x630] sm:%s201]
                %607 = vst [vmem:[%s209 + $0x318] sm:%s201] %v606
                %v608 = vld [vmem:[%s208 + $0x638] sm:%s201]
                %609 = vst [vmem:[%s209 + $0x31c] sm:%s201] %v608
                %v610 = vld [vmem:[%s208 + $0x640] sm:%s201]
                %611 = vst [vmem:[%s209 + $0x320] sm:%s201] %v610
                %v612 = vld [vmem:[%s208 + $0x648] sm:%s201]
                %613 = vst [vmem:[%s209 + $0x324] sm:%s201] %v612
                %v614 = vld [vmem:[%s208 + $0x650] sm:%s201]
                %615 = vst [vmem:[%s209 + $0x328] sm:%s201] %v614
                %v616 = vld [vmem:[%s208 + $0x658] sm:%s201]
                %617 = vst [vmem:[%s209 + $0x32c] sm:%s201] %v616
                %v618 = vld [vmem:[%s208 + $0x660] sm:%s201]
                %619 = vst [vmem:[%s209 + $0x330] sm:%s201] %v618
                %v620 = vld [vmem:[%s208 + $0x668] sm:%s201]
                %621 = vst [vmem:[%s209 + $0x334] sm:%s201] %v620
                %v622 = vld [vmem:[%s208 + $0x670] sm:%s201]
                %623 = vst [vmem:[%s209 + $0x338] sm:%s201] %v622
                %v624 = vld [vmem:[%s208 + $0x678] sm:%s201]
                %625 = vst [vmem:[%s209 + $0x33c] sm:%s201] %v624
                %v626 = vld [vmem:[%s208 + $0x680] sm:%s201]
                %627 = vst [vmem:[%s209 + $0x340] sm:%s201] %v626
                %v628 = vld [vmem:[%s208 + $0x688] sm:%s201]
                %629 = vst [vmem:[%s209 + $0x344] sm:%s201] %v628
                %v630 = vld [vmem:[%s208 + $0x690] sm:%s201]
                %631 = vst [vmem:[%s209 + $0x348] sm:%s201] %v630
                %v632 = vld [vmem:[%s208 + $0x698] sm:%s201]
                %633 = vst [vmem:[%s209 + $0x34c] sm:%s201] %v632
                %v634 = vld [vmem:[%s208 + $0x6a0] sm:%s201]
                %635 = vst [vmem:[%s209 + $0x350] sm:%s201] %v634
                %v636 = vld [vmem:[%s208 + $0x6a8] sm:%s201]
                %637 = vst [vmem:[%s209 + $0x354] sm:%s201] %v636
                %v638 = vld [vmem:[%s208 + $0x6b0] sm:%s201]
                %639 = vst [vmem:[%s209 + $0x358] sm:%s201] %v638
                %v640 = vld [vmem:[%s208 + $0x6b8] sm:%s201]
                %641 = vst [vmem:[%s209 + $0x35c] sm:%s201] %v640
                %v642 = vld [vmem:[%s208 + $0x6c0] sm:%s201]
                %643 = vst [vmem:[%s209 + $0x360] sm:%s201] %v642
                %v644 = vld [vmem:[%s208 + $0x6c8] sm:%s201]
                %645 = vst [vmem:[%s209 + $0x364] sm:%s201] %v644
                %v646 = vld [vmem:[%s208 + $0x6d0] sm:%s201]
                %647 = vst [vmem:[%s209 + $0x368] sm:%s201] %v646
                %v648 = vld [vmem:[%s208 + $0x6d8] sm:%s201]
                %649 = vst [vmem:[%s209 + $0x36c] sm:%s201] %v648
                %v650 = vld [vmem:[%s208 + $0x6e0] sm:%s201]
                %651 = vst [vmem:[%s209 + $0x370] sm:%s201] %v650
                %v652 = vld [vmem:[%s208 + $0x6e8] sm:%s201]
                %653 = vst [vmem:[%s209 + $0x374] sm:%s201] %v652
                %v654 = vld [vmem:[%s208 + $0x6f0] sm:%s201]
                %655 = vst [vmem:[%s209 + $0x378] sm:%s201] %v654
                %v656 = vld [vmem:[%s208 + $0x6f8] sm:%s201]
                %657 = vst [vmem:[%s209 + $0x37c] sm:%s201] %v656
                %v658 = vld [vmem:[%s208 + $0x700] sm:%s201]
                %659 = vst [vmem:[%s209 + $0x380] sm:%s201] %v658
                %v660 = vld [vmem:[%s208 + $0x708] sm:%s201]
                %661 = vst [vmem:[%s209 + $0x384] sm:%s201] %v660
                %v662 = vld [vmem:[%s208 + $0x710] sm:%s201]
                %663 = vst [vmem:[%s209 + $0x388] sm:%s201] %v662
                %v664 = vld [vmem:[%s208 + $0x718] sm:%s201]
                %665 = vst [vmem:[%s209 + $0x38c] sm:%s201] %v664
                %v666 = vld [vmem:[%s208 + $0x720] sm:%s201]
                %667 = vst [vmem:[%s209 + $0x390] sm:%s201] %v666
                %v668 = vld [vmem:[%s208 + $0x728] sm:%s201]
                %669 = vst [vmem:[%s209 + $0x394] sm:%s201] %v668
                %v670 = vld [vmem:[%s208 + $0x730] sm:%s201]
                %671 = vst [vmem:[%s209 + $0x398] sm:%s201] %v670
                %v672 = vld [vmem:[%s208 + $0x738] sm:%s201]
                %673 = vst [vmem:[%s209 + $0x39c] sm:%s201] %v672
                %v674 = vld [vmem:[%s208 + $0x740] sm:%s201]
                %675 = vst [vmem:[%s209 + $0x3a0] sm:%s201] %v674
                %v676 = vld [vmem:[%s208 + $0x748] sm:%s201]
                %677 = vst [vmem:[%s209 + $0x3a4] sm:%s201] %v676
                %v678 = vld [vmem:[%s208 + $0x750] sm:%s201]
                %679 = vst [vmem:[%s209 + $0x3a8] sm:%s201] %v678
                %v680 = vld [vmem:[%s208 + $0x758] sm:%s201]
                %681 = vst [vmem:[%s209 + $0x3ac] sm:%s201] %v680
                %v682 = vld [vmem:[%s208 + $0x760] sm:%s201]
                %683 = vst [vmem:[%s209 + $0x3b0] sm:%s201] %v682
                %v684 = vld [vmem:[%s208 + $0x768] sm:%s201]
                %685 = vst [vmem:[%s209 + $0x3b4] sm:%s201] %v684
                %v686 = vld [vmem:[%s208 + $0x770] sm:%s201]
                %687 = vst [vmem:[%s209 + $0x3b8] sm:%s201] %v686
                %v688 = vld [vmem:[%s208 + $0x778] sm:%s201]
                %689 = vst [vmem:[%s209 + $0x3bc] sm:%s201] %v688
                %v690 = vld [vmem:[%s208 + $0x780] sm:%s201]
                %691 = vst [vmem:[%s209 + $0x3c0] sm:%s201] %v690
                %v692 = vld [vmem:[%s208 + $0x788] sm:%s201]
                %693 = vst [vmem:[%s209 + $0x3c4] sm:%s201] %v692
                %v694 = vld [vmem:[%s208 + $0x790] sm:%s201]
                %695 = vst [vmem:[%s209 + $0x3c8] sm:%s201] %v694
                %v696 = vld [vmem:[%s208 + $0x798] sm:%s201]
                %697 = vst [vmem:[%s209 + $0x3cc] sm:%s201] %v696
                %v698 = vld [vmem:[%s208 + $0x7a0] sm:%s201]
                %699 = vst [vmem:[%s209 + $0x3d0] sm:%s201] %v698
                %v700 = vld [vmem:[%s208 + $0x7a8] sm:%s201]
                %701 = vst [vmem:[%s209 + $0x3d4] sm:%s201] %v700
                %v702 = vld [vmem:[%s208 + $0x7b0] sm:%s201]
                %703 = vst [vmem:[%s209 + $0x3d8] sm:%s201] %v702
                %v704 = vld [vmem:[%s208 + $0x7b8] sm:%s201]
                %705 = vst [vmem:[%s209 + $0x3dc] sm:%s201] %v704
                %v706 = vld [vmem:[%s208 + $0x7c0] sm:%s201]
                %707 = vst [vmem:[%s209 + $0x3e0] sm:%s201] %v706
                %v708 = vld [vmem:[%s208 + $0x7c8] sm:%s201]
                %709 = vst [vmem:[%s209 + $0x3e4] sm:%s201] %v708
                %v710 = vld [vmem:[%s208 + $0x7d0] sm:%s201]
                %711 = vst [vmem:[%s209 + $0x3e8] sm:%s201] %v710
                %v712 = vld [vmem:[%s208 + $0x7d8] sm:%s201]
                %713 = vst [vmem:[%s209 + $0x3ec] sm:%s201] %v712
                %v714 = vld [vmem:[%s208 + $0x7e0] sm:%s201]
                %715 = vst [vmem:[%s209 + $0x3f0] sm:%s201] %v714
                %v716 = vld [vmem:[%s208 + $0x7e8] sm:%s201]
                %717 = vst [vmem:[%s209 + $0x3f4] sm:%s201] %v716
                %v718 = vld [vmem:[%s208 + $0x7f0] sm:%s201]
                %719 = vst [vmem:[%s209 + $0x3f8] sm:%s201] %v718
                %v720 = vld [vmem:[%s208 + $0x7f8] sm:%s201]
                %721 = vst [vmem:[%s209 + $0x3fc] sm:%s201] %v720
                %v722 = vld [vmem:[%s208 + $0x800] sm:%s201]
                %723 = vst [vmem:[%s209 + $0x400] sm:%s201] %v722
                %v724 = vld [vmem:[%s208 + $0x808] sm:%s201]
                %725 = vst [vmem:[%s209 + $0x404] sm:%s201] %v724
                %v726 = vld [vmem:[%s208 + $0x810] sm:%s201]
                %727 = vst [vmem:[%s209 + $0x408] sm:%s201] %v726
                %v728 = vld [vmem:[%s208 + $0x818] sm:%s201]
                %729 = vst [vmem:[%s209 + $0x40c] sm:%s201] %v728
                %v730 = vld [vmem:[%s208 + $0x820] sm:%s201]
                %731 = vst [vmem:[%s209 + $0x410] sm:%s201] %v730
                %v732 = vld [vmem:[%s208 + $0x828] sm:%s201]
                %733 = vst [vmem:[%s209 + $0x414] sm:%s201] %v732
                %v734 = vld [vmem:[%s208 + $0x830] sm:%s201]
                %735 = vst [vmem:[%s209 + $0x418] sm:%s201] %v734
                %v736 = vld [vmem:[%s208 + $0x838] sm:%s201]
                %737 = vst [vmem:[%s209 + $0x41c] sm:%s201] %v736
                %v738 = vld [vmem:[%s208 + $0x840] sm:%s201]
                %739 = vst [vmem:[%s209 + $0x420] sm:%s201] %v738
                %v740 = vld [vmem:[%s208 + $0x848] sm:%s201]
                %741 = vst [vmem:[%s209 + $0x424] sm:%s201] %v740
                %v742 = vld [vmem:[%s208 + $0x850] sm:%s201]
                %743 = vst [vmem:[%s209 + $0x428] sm:%s201] %v742
                %v744 = vld [vmem:[%s208 + $0x858] sm:%s201]
                %745 = vst [vmem:[%s209 + $0x42c] sm:%s201] %v744
                %v746 = vld [vmem:[%s208 + $0x860] sm:%s201]
                %747 = vst [vmem:[%s209 + $0x430] sm:%s201] %v746
                %v748 = vld [vmem:[%s208 + $0x868] sm:%s201]
                %749 = vst [vmem:[%s209 + $0x434] sm:%s201] %v748
                %v750 = vld [vmem:[%s208 + $0x870] sm:%s201]
                %751 = vst [vmem:[%s209 + $0x438] sm:%s201] %v750
                %v752 = vld [vmem:[%s208 + $0x878] sm:%s201]
                %753 = vst [vmem:[%s209 + $0x43c] sm:%s201] %v752
                %v754 = vld [vmem:[%s208 + $0x880] sm:%s201]
                %755 = vst [vmem:[%s209 + $0x440] sm:%s201] %v754
                %v756 = vld [vmem:[%s208 + $0x888] sm:%s201]
                %757 = vst [vmem:[%s209 + $0x444] sm:%s201] %v756
                %v758 = vld [vmem:[%s208 + $0x890] sm:%s201]
                %759 = vst [vmem:[%s209 + $0x448] sm:%s201] %v758
                %v760 = vld [vmem:[%s208 + $0x898] sm:%s201]
                %761 = vst [vmem:[%s209 + $0x44c] sm:%s201] %v760
                %v762 = vld [vmem:[%s208 + $0x8a0] sm:%s201]
                %763 = vst [vmem:[%s209 + $0x450] sm:%s201] %v762
                %v764 = vld [vmem:[%s208 + $0x8a8] sm:%s201]
                %765 = vst [vmem:[%s209 + $0x454] sm:%s201] %v764
                %v766 = vld [vmem:[%s208 + $0x8b0] sm:%s201]
                %767 = vst [vmem:[%s209 + $0x458] sm:%s201] %v766
                %v768 = vld [vmem:[%s208 + $0x8b8] sm:%s201]
                %769 = vst [vmem:[%s209 + $0x45c] sm:%s201] %v768
                %v770 = vld [vmem:[%s208 + $0x8c0] sm:%s201]
                %771 = vst [vmem:[%s209 + $0x460] sm:%s201] %v770
                %v772 = vld [vmem:[%s208 + $0x8c8] sm:%s201]
                %773 = vst [vmem:[%s209 + $0x464] sm:%s201] %v772
                %v774 = vld [vmem:[%s208 + $0x8d0] sm:%s201]
                %775 = vst [vmem:[%s209 + $0x468] sm:%s201] %v774
                %v776 = vld [vmem:[%s208 + $0x8d8] sm:%s201]
                %777 = vst [vmem:[%s209 + $0x46c] sm:%s201] %v776
                %v778 = vld [vmem:[%s208 + $0x8e0] sm:%s201]
                %779 = vst [vmem:[%s209 + $0x470] sm:%s201] %v778
                %v780 = vld [vmem:[%s208 + $0x8e8] sm:%s201]
                %781 = vst [vmem:[%s209 + $0x474] sm:%s201] %v780
                %v782 = vld [vmem:[%s208 + $0x8f0] sm:%s201]
                %783 = vst [vmem:[%s209 + $0x478] sm:%s201] %v782
                %v784 = vld [vmem:[%s208 + $0x8f8] sm:%s201]
                %785 = vst [vmem:[%s209 + $0x47c] sm:%s201] %v784
                %v786 = vld [vmem:[%s208 + $0x900] sm:%s201]
                %787 = vst [vmem:[%s209 + $0x480] sm:%s201] %v786
                %v788 = vld [vmem:[%s208 + $0x908] sm:%s201]
                %789 = vst [vmem:[%s209 + $0x484] sm:%s201] %v788
                %v790 = vld [vmem:[%s208 + $0x910] sm:%s201]
                %791 = vst [vmem:[%s209 + $0x488] sm:%s201] %v790
                %v792 = vld [vmem:[%s208 + $0x918] sm:%s201]
                %793 = vst [vmem:[%s209 + $0x48c] sm:%s201] %v792
                %v794 = vld [vmem:[%s208 + $0x920] sm:%s201]
                %795 = vst [vmem:[%s209 + $0x490] sm:%s201] %v794
                %v796 = vld [vmem:[%s208 + $0x928] sm:%s201]
                %797 = vst [vmem:[%s209 + $0x494] sm:%s201] %v796
                %v798 = vld [vmem:[%s208 + $0x930] sm:%s201]
                %799 = vst [vmem:[%s209 + $0x498] sm:%s201] %v798
                %v800 = vld [vmem:[%s208 + $0x938] sm:%s201]
                %801 = vst [vmem:[%s209 + $0x49c] sm:%s201] %v800
                %v802 = vld [vmem:[%s208 + $0x940] sm:%s201]
                %803 = vst [vmem:[%s209 + $0x4a0] sm:%s201] %v802
                %v804 = vld [vmem:[%s208 + $0x948] sm:%s201]
                %805 = vst [vmem:[%s209 + $0x4a4] sm:%s201] %v804
                %v806 = vld [vmem:[%s208 + $0x950] sm:%s201]
                %807 = vst [vmem:[%s209 + $0x4a8] sm:%s201] %v806
                %v808 = vld [vmem:[%s208 + $0x958] sm:%s201]
                %809 = vst [vmem:[%s209 + $0x4ac] sm:%s201] %v808
                %v810 = vld [vmem:[%s208 + $0x960] sm:%s201]
                %811 = vst [vmem:[%s209 + $0x4b0] sm:%s201] %v810
                %v812 = vld [vmem:[%s208 + $0x968] sm:%s201]
                %813 = vst [vmem:[%s209 + $0x4b4] sm:%s201] %v812
                %v814 = vld [vmem:[%s208 + $0x970] sm:%s201]
                %815 = vst [vmem:[%s209 + $0x4b8] sm:%s201] %v814
                %v816 = vld [vmem:[%s208 + $0x978] sm:%s201]
                %817 = vst [vmem:[%s209 + $0x4bc] sm:%s201] %v816
                %v818 = vld [vmem:[%s208 + $0x980] sm:%s201]
                %819 = vst [vmem:[%s209 + $0x4c0] sm:%s201] %v818
                %v820 = vld [vmem:[%s208 + $0x988] sm:%s201]
                %821 = vst [vmem:[%s209 + $0x4c4] sm:%s201] %v820
                %v822 = vld [vmem:[%s208 + $0x990] sm:%s201]
                %823 = vst [vmem:[%s209 + $0x4c8] sm:%s201] %v822
                %v824 = vld [vmem:[%s208 + $0x998] sm:%s201]
                %825 = vst [vmem:[%s209 + $0x4cc] sm:%s201] %v824
                %v826 = vld [vmem:[%s208 + $0x9a0] sm:%s201]
                %827 = vst [vmem:[%s209 + $0x4d0] sm:%s201] %v826
                %v828 = vld [vmem:[%s208 + $0x9a8] sm:%s201]
                %829 = vst [vmem:[%s209 + $0x4d4] sm:%s201] %v828
                %v830 = vld [vmem:[%s208 + $0x9b0] sm:%s201]
                %831 = vst [vmem:[%s209 + $0x4d8] sm:%s201] %v830
                %v832 = vld [vmem:[%s208 + $0x9b8] sm:%s201]
                %833 = vst [vmem:[%s209 + $0x4dc] sm:%s201] %v832
                %v834 = vld [vmem:[%s208 + $0x9c0] sm:%s201]
                %835 = vst [vmem:[%s209 + $0x4e0] sm:%s201] %v834
                %v836 = vld [vmem:[%s208 + $0x9c8] sm:%s201]
                %837 = vst [vmem:[%s209 + $0x4e4] sm:%s201] %v836
                %v838 = vld [vmem:[%s208 + $0x9d0] sm:%s201]
                %839 = vst [vmem:[%s209 + $0x4e8] sm:%s201] %v838
                %v840 = vld [vmem:[%s208 + $0x9d8] sm:%s201]
                %841 = vst [vmem:[%s209 + $0x4ec] sm:%s201] %v840
                %v842 = vld [vmem:[%s208 + $0x9e0] sm:%s201]
                %843 = vst [vmem:[%s209 + $0x4f0] sm:%s201] %v842
                %v844 = vld [vmem:[%s208 + $0x9e8] sm:%s201]
                %845 = vst [vmem:[%s209 + $0x4f4] sm:%s201] %v844
                %v846 = vld [vmem:[%s208 + $0x9f0] sm:%s201]
                %847 = vst [vmem:[%s209 + $0x4f8] sm:%s201] %v846
                %v848 = vld [vmem:[%s208 + $0x9f8] sm:%s201]
                %849 = vst [vmem:[%s209 + $0x4fc] sm:%s201] %v848
                %v850 = vld [vmem:[%s208 + $0xa00] sm:%s201]
                %851 = vst [vmem:[%s209 + $0x500] sm:%s201] %v850
                %v852 = vld [vmem:[%s208 + $0xa08] sm:%s201]
                %853 = vst [vmem:[%s209 + $0x504] sm:%s201] %v852
                %v854 = vld [vmem:[%s208 + $0xa10] sm:%s201]
                %855 = vst [vmem:[%s209 + $0x508] sm:%s201] %v854
                %v856 = vld [vmem:[%s208 + $0xa18] sm:%s201]
                %857 = vst [vmem:[%s209 + $0x50c] sm:%s201] %v856
                %v858 = vld [vmem:[%s208 + $0xa20] sm:%s201]
                %859 = vst [vmem:[%s209 + $0x510] sm:%s201] %v858
                %v860 = vld [vmem:[%s208 + $0xa28] sm:%s201]
                %861 = vst [vmem:[%s209 + $0x514] sm:%s201] %v860
                %v862 = vld [vmem:[%s208 + $0xa30] sm:%s201]
                %863 = vst [vmem:[%s209 + $0x518] sm:%s201] %v862
                %v864 = vld [vmem:[%s208 + $0xa38] sm:%s201]
                %865 = vst [vmem:[%s209 + $0x51c] sm:%s201] %v864
                %v866 = vld [vmem:[%s208 + $0xa40] sm:%s201]
                %867 = vst [vmem:[%s209 + $0x520] sm:%s201] %v866
                %v868 = vld [vmem:[%s208 + $0xa48] sm:%s201]
                %869 = vst [vmem:[%s209 + $0x524] sm:%s201] %v868
                %v870 = vld [vmem:[%s208 + $0xa50] sm:%s201]
                %871 = vst [vmem:[%s209 + $0x528] sm:%s201] %v870
                %v872 = vld [vmem:[%s208 + $0xa58] sm:%s201]
                %873 = vst [vmem:[%s209 + $0x52c] sm:%s201] %v872
                %v874 = vld [vmem:[%s208 + $0xa60] sm:%s201]
                %875 = vst [vmem:[%s209 + $0x530] sm:%s201] %v874
                %v876 = vld [vmem:[%s208 + $0xa68] sm:%s201]
                %877 = vst [vmem:[%s209 + $0x534] sm:%s201] %v876
                %v878 = vld [vmem:[%s208 + $0xa70] sm:%s201]
                %879 = vst [vmem:[%s209 + $0x538] sm:%s201] %v878
                %v880 = vld [vmem:[%s208 + $0xa78] sm:%s201]
                %881 = vst [vmem:[%s209 + $0x53c] sm:%s201] %v880
                %v882 = vld [vmem:[%s208 + $0xa80] sm:%s201]
                %883 = vst [vmem:[%s209 + $0x540] sm:%s201] %v882
                %v884 = vld [vmem:[%s208 + $0xa88] sm:%s201]
                %885 = vst [vmem:[%s209 + $0x544] sm:%s201] %v884
                %v886 = vld [vmem:[%s208 + $0xa90] sm:%s201]
                %887 = vst [vmem:[%s209 + $0x548] sm:%s201] %v886
                %v888 = vld [vmem:[%s208 + $0xa98] sm:%s201]
                %889 = vst [vmem:[%s209 + $0x54c] sm:%s201] %v888
                %v890 = vld [vmem:[%s208 + $0xaa0] sm:%s201]
                %891 = vst [vmem:[%s209 + $0x550] sm:%s201] %v890
                %v892 = vld [vmem:[%s208 + $0xaa8] sm:%s201]
                %893 = vst [vmem:[%s209 + $0x554] sm:%s201] %v892
                %v894 = vld [vmem:[%s208 + $0xab0] sm:%s201]
                %895 = vst [vmem:[%s209 + $0x558] sm:%s201] %v894
                %v896 = vld [vmem:[%s208 + $0xab8] sm:%s201]
                %897 = vst [vmem:[%s209 + $0x55c] sm:%s201] %v896
                %v898 = vld [vmem:[%s208 + $0xac0] sm:%s201]
                %899 = vst [vmem:[%s209 + $0x560] sm:%s201] %v898
                %v900 = vld [vmem:[%s208 + $0xac8] sm:%s201]
                %901 = vst [vmem:[%s209 + $0x564] sm:%s201] %v900
                %v902 = vld [vmem:[%s208 + $0xad0] sm:%s201]
                %903 = vst [vmem:[%s209 + $0x568] sm:%s201] %v902
                %v904 = vld [vmem:[%s208 + $0xad8] sm:%s201]
                %905 = vst [vmem:[%s209 + $0x56c] sm:%s201] %v904
                %v906 = vld [vmem:[%s208 + $0xae0] sm:%s201]
                %907 = vst [vmem:[%s209 + $0x570] sm:%s201] %v906
                %v908 = vld [vmem:[%s208 + $0xae8] sm:%s201]
                %909 = vst [vmem:[%s209 + $0x574] sm:%s201] %v908
                %v910 = vld [vmem:[%s208 + $0xaf0] sm:%s201]
                %911 = vst [vmem:[%s209 + $0x578] sm:%s201] %v910
                %v912 = vld [vmem:[%s208 + $0xaf8] sm:%s201]
                %913 = vst [vmem:[%s209 + $0x57c] sm:%s201] %v912
                %v914 = vld [vmem:[%s208 + $0xb00] sm:%s201]
                %915 = vst [vmem:[%s209 + $0x580] sm:%s201] %v914
                %v916 = vld [vmem:[%s208 + $0xb08] sm:%s201]
                %917 = vst [vmem:[%s209 + $0x584] sm:%s201] %v916
                %v918 = vld [vmem:[%s208 + $0xb10] sm:%s201]
                %919 = vst [vmem:[%s209 + $0x588] sm:%s201] %v918
                %v920 = vld [vmem:[%s208 + $0xb18] sm:%s201]
                %921 = vst [vmem:[%s209 + $0x58c] sm:%s201] %v920
                %v922 = vld [vmem:[%s208 + $0xb20] sm:%s201]
                %923 = vst [vmem:[%s209 + $0x590] sm:%s201] %v922
                %v924 = vld [vmem:[%s208 + $0xb28] sm:%s201]
                %925 = vst [vmem:[%s209 + $0x594] sm:%s201] %v924
                %v926 = vld [vmem:[%s208 + $0xb30] sm:%s201]
                %927 = vst [vmem:[%s209 + $0x598] sm:%s201] %v926
                %v928 = vld [vmem:[%s208 + $0xb38] sm:%s201]
                %929 = vst [vmem:[%s209 + $0x59c] sm:%s201] %v928
                %v930 = vld [vmem:[%s208 + $0xb40] sm:%s201]
                %931 = vst [vmem:[%s209 + $0x5a0] sm:%s201] %v930
                %v932 = vld [vmem:[%s208 + $0xb48] sm:%s201]
                %933 = vst [vmem:[%s209 + $0x5a4] sm:%s201] %v932
                %v934 = vld [vmem:[%s208 + $0xb50] sm:%s201]
                %935 = vst [vmem:[%s209 + $0x5a8] sm:%s201] %v934
                %v936 = vld [vmem:[%s208 + $0xb58] sm:%s201]
                %937 = vst [vmem:[%s209 + $0x5ac] sm:%s201] %v936
                %v938 = vld [vmem:[%s208 + $0xb60] sm:%s201]
                %939 = vst [vmem:[%s209 + $0x5b0] sm:%s201] %v938
                %v940 = vld [vmem:[%s208 + $0xb68] sm:%s201]
                %941 = vst [vmem:[%s209 + $0x5b4] sm:%s201] %v940
                %v942 = vld [vmem:[%s208 + $0xb70] sm:%s201]
                %943 = vst [vmem:[%s209 + $0x5b8] sm:%s201] %v942
                %v944 = vld [vmem:[%s208 + $0xb78] sm:%s201]
                %945 = vst [vmem:[%s209 + $0x5bc] sm:%s201] %v944
                %v946 = vld [vmem:[%s208 + $0xb80] sm:%s201]
                %947 = vst [vmem:[%s209 + $0x5c0] sm:%s201] %v946
                %v948 = vld [vmem:[%s208 + $0xb88] sm:%s201]
                %949 = vst [vmem:[%s209 + $0x5c4] sm:%s201] %v948
                %v950 = vld [vmem:[%s208 + $0xb90] sm:%s201]
                %951 = vst [vmem:[%s209 + $0x5c8] sm:%s201] %v950
                %v952 = vld [vmem:[%s208 + $0xb98] sm:%s201]
                %953 = vst [vmem:[%s209 + $0x5cc] sm:%s201] %v952
                %v954 = vld [vmem:[%s208 + $0xba0] sm:%s201]
                %955 = vst [vmem:[%s209 + $0x5d0] sm:%s201] %v954
                %v956 = vld [vmem:[%s208 + $0xba8] sm:%s201]
                %957 = vst [vmem:[%s209 + $0x5d4] sm:%s201] %v956
                %v958 = vld [vmem:[%s208 + $0xbb0] sm:%s201]
                %959 = vst [vmem:[%s209 + $0x5d8] sm:%s201] %v958
                %v960 = vld [vmem:[%s208 + $0xbb8] sm:%s201]
                %961 = vst [vmem:[%s209 + $0x5dc] sm:%s201] %v960
                %v962 = vld [vmem:[%s208 + $0xbc0] sm:%s201]
                %963 = vst [vmem:[%s209 + $0x5e0] sm:%s201] %v962
                %v964 = vld [vmem:[%s208 + $0xbc8] sm:%s201]
                %965 = vst [vmem:[%s209 + $0x5e4] sm:%s201] %v964
                %v966 = vld [vmem:[%s208 + $0xbd0] sm:%s201]
                %967 = vst [vmem:[%s209 + $0x5e8] sm:%s201] %v966
                %v968 = vld [vmem:[%s208 + $0xbd8] sm:%s201]
                %969 = vst [vmem:[%s209 + $0x5ec] sm:%s201] %v968
                %v970 = vld [vmem:[%s208 + $0xbe0] sm:%s201]
                %971 = vst [vmem:[%s209 + $0x5f0] sm:%s201] %v970
                %v972 = vld [vmem:[%s208 + $0xbe8] sm:%s201]
                %973 = vst [vmem:[%s209 + $0x5f4] sm:%s201] %v972
                %v974 = vld [vmem:[%s208 + $0xbf0] sm:%s201]
                %975 = vst [vmem:[%s209 + $0x5f8] sm:%s201] %v974
                %v976 = vld [vmem:[%s208 + $0xbf8] sm:%s201]
                %977 = vst [vmem:[%s209 + $0x5fc] sm:%s201] %v976
                %v978 = vld [vmem:[%s208 + $0xc00] sm:%s201]
                %979 = vst [vmem:[%s209 + $0x600] sm:%s201] %v978
                %v980 = vld [vmem:[%s208 + $0xc08] sm:%s201]
                %981 = vst [vmem:[%s209 + $0x604] sm:%s201] %v980
                %v982 = vld [vmem:[%s208 + $0xc10] sm:%s201]
                %983 = vst [vmem:[%s209 + $0x608] sm:%s201] %v982
                %v984 = vld [vmem:[%s208 + $0xc18] sm:%s201]
                %985 = vst [vmem:[%s209 + $0x60c] sm:%s201] %v984
                %v986 = vld [vmem:[%s208 + $0xc20] sm:%s201]
                %987 = vst [vmem:[%s209 + $0x610] sm:%s201] %v986
                %v988 = vld [vmem:[%s208 + $0xc28] sm:%s201]
                %989 = vst [vmem:[%s209 + $0x614] sm:%s201] %v988
                %v990 = vld [vmem:[%s208 + $0xc30] sm:%s201]
                %991 = vst [vmem:[%s209 + $0x618] sm:%s201] %v990
                %v992 = vld [vmem:[%s208 + $0xc38] sm:%s201]
                %993 = vst [vmem:[%s209 + $0x61c] sm:%s201] %v992
              $region41: #{mnist_cnn_forward.5} parent=35 // loop_footer
                %s207 = sadd.s32 1, %s203
              $region42: #{mnist_cnn_forward.5} parent=35 // loop_footer_branch
                %202 = sbr.rel target = $region38
              $region43: #{mnist_cnn_forward.5} parent=35 // loop_exit
                _
            $region36: #{mnist_cnn_forward.5} parent=27 // pred_fallthru
              _
          $region28: #{mnist_cnn_forward.5} parent=23 // pred_fallthru
            _
          %1798 = vnop
        $region24: #{mnist_cnn_forward.5} parent=19 // pred_fallthru
          _
        // Predicated region
        $region62: #{mnist_cnn_forward.5} parent=19 // pred_check
          %p1799 = pneg %p79
        $region63: #{mnist_cnn_forward.5} parent=19 // pred_check_branch
          %1801 = sbr.rel (%p1799) target = $region65
        $region64: #{mnist_cnn_forward.5} parent=19 // pred_region
          %p1802 = scmp.lt.s32.totalorder %s12, 1
          %s1803 = scalar_select %p1802, %s12, 1
          %s1804 = scalar_lea.vmem %s2, %s1803
        $region65: #{mnist_cnn_forward.5} parent=19 // pred_fallthru
          _
        // Predicated region
        $region66: #{mnist_cnn_forward.5} parent=19 // pred_check
          %p1805 = pneg %p105
        $region67: #{mnist_cnn_forward.5} parent=19 // pred_check_branch
          %1807 = sbr.rel (%p1805) target = $region69
        $region68: #{mnist_cnn_forward.5} parent=19 // pred_region
          %s1808 = smul.u32 16, %s12
          %p1809 = scmp.lt.s32.totalorder %s1808, 31
          %s1810 = scalar_select %p1809, %s1808, 31
          %s1811 = smul.addr %s1810, 4
          %s1812 = scalar_lea.vmem %s3, %s1811
          %s1813 = smul.u32 16, %s12
        $region69: #{mnist_cnn_forward.5} parent=19 // pred_fallthru
          _
      $region20: #{mnist_cnn_forward.5} parent=5 // pred_fallthru
        _
      %p1814 = scmp.le.s32.totalorder 1, %s12
      %p1815 = scmp.lt.s32.totalorder %s12, 3
      %p1816 = pnand %p1814, %p1815
      %p1817 = pneg %p1816
      // Predicated region
      $region70: #{mnist_cnn_forward.5} parent=5 // pred_check
        _
      $region71: #{mnist_cnn_forward.5} parent=5 // pred_check_branch
        %1819 = sbr.rel (%p1816) target = $region73
      $region72: #{mnist_cnn_forward.5} parent=5 // pred_region
        %s1820 = ssub.s32 %s12, 1
        %s1821 = sand.u32 %s46, 1
        %s1822 = sand.u32 %s46, 1
        %s1823 = smul.addr %s1822, 1568
        %s1824 = scalar_lea.vmem [#allocation2], %s1823
        // Predicated region
        $region74: #{mnist_cnn_forward.5} parent=72 // pred_check
          %p1825 = pneg %p59
        $region75: #{mnist_cnn_forward.5} parent=72 // pred_check_branch
          %1827 = sbr.rel (%p1825) target = $region77
        $region76: #{mnist_cnn_forward.5} parent=72 // pred_region
          _
        $region77: #{mnist_cnn_forward.5} parent=72 // pred_fallthru
          _
        %p1828 = pneg %p33
        %p1829 = pneg %p30
        %s1830 = sand.u32 %s46, 1
        %s1831 = sand.u32 %s46, 1
        %s1832 = smul.addr %s1831, 1568
        %s1833 = scalar_lea.vmem [#allocation2], %s1832
        %p1834 = pneg %p59
        %p1835 = pneg %p56
        %p1836 = scmp.lt.s32.totalorder %s17, 1
        %s1837 = scalar_select %p1836, %s17, 1
        %s1838 = scalar_lea.vmem %s2, %s1837
        %p1839 = pneg %p85
        %p1840 = pneg %p82
        %s1841 = smul.u32 16, %s17
        %p1842 = scmp.lt.s32.totalorder %s1841, 31
        %s1843 = scalar_select %p1842, %s1841, 31
        %s1844 = smul.addr %s1843, 4
        %s1845 = scalar_lea.vmem %s3, %s1844
        %p1846 = pneg %p111
        %p1847 = pneg %p108
        %p1848 = pneg %p137
        %p1849 = pneg %p134
        %s1850 = sand.u32 %s124, 1
        %s1851 = sand.u32 %s124, 1
        %s1852 = smul.addr %s1851, 16
        %s1853 = scalar_lea.vmem [#allocation3], %s1852
        %p1854 = pneg %p163
        %p1855 = pneg %p160
        %p1856 = scmp.lt.s32.totalorder %s17, 1
        %s1857 = scalar_select %p1856, %s17, 1
        %s1858 = smul.addr %s1857, 2
        %s1859 = smul.addr %s1858, 8
        %s1860 = scalar_lea.vmem %s5, %s1859
        %p1861 = scmp.lt.s32.totalorder %s17, 1
        %s1862 = scalar_select %p1861, %s17, 1
        %s1863 = scalar_lea.vmem %s2, %s1862
        %s1864 = smul.u32 16, %s17
        %p1865 = scmp.lt.s32.totalorder %s1864, 31
        %s1866 = scalar_select %p1865, %s1864, 31
        %s1867 = smul.addr %s1866, 4
        %s1868 = scalar_lea.vmem %s3, %s1867
        %s1869 = smul.u32 16, %s17
        %p1870 = scmp.lt.s32.totalorder %s17, 1
        %s1871 = scalar_select %p1870, %s17, 1
        %s1872 = smul.addr %s1871, 2
        %s1873 = smul.addr %s1872, 8
        %s1874 = scalar_lea.vmem %s5, %s1873
        %v1876 = vld [vmem:[%s0] sm:$0xff]
        %v1877 = vld [vmem:[%s0 + $0x8] sm:$0xff]
        %v1878 = vld [vmem:[%s0 + $0x10] sm:$0xff]
        %v1879 = vld [vmem:[%s0 + $0x18] sm:$0xff]
        %v1880 = vld [vmem:[%s0 + $0x20] sm:$0xff]
        %v1881 = vld [vmem:[%s0 + $0x28] sm:$0xff]
        %v1882 = vld [vmem:[%s0 + $0x30] sm:$0xff]
        %v1883 = vld [vmem:[%s0 + $0x38] sm:$0xff]
        %v1884 = vld [vmem:[%s0 + $0x40] sm:$0xff]
        %v1885 = vld [vmem:[%s0 + $0x48] sm:$0xff]
        %v1886 = vld [vmem:[%s0 + $0x50] sm:$0xff]
        %v1887 = vld [vmem:[%s0 + $0x58] sm:$0xff]
        %v1888 = vld [vmem:[%s0 + $0x60] sm:$0xf]
        %v1889 = vld [vmem:[%s0 + $0x64] sm:$0xff]
        %v1890 = vld [vmem:[%s0 + $0x6c] sm:$0xff]
        %v1891 = vld [vmem:[%s0 + $0x74] sm:$0xff]
        %v1892 = vld [vmem:[%s0 + $0x7c] sm:$0xff]
        %v1893 = vld [vmem:[%s0 + $0x84] sm:$0xff]
        %v1894 = vld [vmem:[%s0 + $0x8c] sm:$0xff]
        %v1895 = vld [vmem:[%s0 + $0x94] sm:$0xff]
        %v1896 = vld [vmem:[%s0 + $0x9c] sm:$0xff]
        %v1897 = vld [vmem:[%s0 + $0xa4] sm:$0xff]
        %v1898 = vld [vmem:[%s0 + $0xac] sm:$0xff]
        %v1899 = vld [vmem:[%s0 + $0xb4] sm:$0xff]
        %v1900 = vld [vmem:[%s0 + $0xbc] sm:$0xff]
        %v1901 = vld [vmem:[%s0 + $0xc4] sm:$0xf]
        %v1902 = vld [vmem:[%s1824] sm:$0xf]
        %v1903 = vld [vmem:[%s1824 + $0x4] sm:$0xf]
        %v1904 = vld [vmem:[%s1824 + $0x8] sm:$0xf]
        %v1905 = vld [vmem:[%s1824 + $0xc] sm:$0xf]
        %v1906 = vld [vmem:[%s1824 + $0x10] sm:$0xf]
        %v1907 = vld [vmem:[%s1824 + $0x14] sm:$0xf]
        %v1908 = vld [vmem:[%s1824 + $0x18] sm:$0xf]
        %v1909 = vld [vmem:[%s1824 + $0x1c] sm:$0xf]
        %v1910 = vld [vmem:[%s1824 + $0x20] sm:$0xf]
        %v1911 = vld [vmem:[%s1824 + $0x24] sm:$0xf]
        %v1912 = vld [vmem:[%s1824 + $0x28] sm:$0xf]
        %v1913 = vld [vmem:[%s1824 + $0x2c] sm:$0xf]
        %v1914 = vld [vmem:[%s1824 + $0x30] sm:$0xf]
        %v1915 = vld [vmem:[%s1824 + $0x34] sm:$0xf]
        %v1916 = vld [vmem:[%s1824 + $0x38] sm:$0xf]
        %v1917 = vld [vmem:[%s1824 + $0x3c] sm:$0xf]
        %v1918 = vld [vmem:[%s1824 + $0x40] sm:$0xf]
        %v1919 = vld [vmem:[%s1824 + $0x44] sm:$0xf]
        %v1920 = vld [vmem:[%s1824 + $0x48] sm:$0xf]
        %v1921 = vld [vmem:[%s1824 + $0x4c] sm:$0xf]
        %v1922 = vld [vmem:[%s1824 + $0x50] sm:$0xf]
        %v1923 = vld [vmem:[%s1824 + $0x54] sm:$0xf]
        %v1924 = vld [vmem:[%s1824 + $0x58] sm:$0xf]
        %v1925 = vld [vmem:[%s1824 + $0x5c] sm:$0xf]
        %v1926 = vld [vmem:[%s1824 + $0x60] sm:$0xf]
        %v1927 = vld [vmem:[%s1824 + $0x64] sm:$0xf]
        %v1928 = vld [vmem:[%s1824 + $0x68] sm:$0xf]
        %v1929 = vld [vmem:[%s1824 + $0x6c] sm:$0xf]
        %v1930 = vld [vmem:[%s1824 + $0x70] sm:$0xf]
        %v1931 = vld [vmem:[%s1824 + $0x74] sm:$0xf]
        %v1932 = vld [vmem:[%s1824 + $0x78] sm:$0xf]
        %v1933 = vld [vmem:[%s1824 + $0x7c] sm:$0xf]
        %v1934 = vld [vmem:[%s1824 + $0x80] sm:$0xf]
        %v1935 = vld [vmem:[%s1824 + $0x84] sm:$0xf]
        %v1936 = vld [vmem:[%s1824 + $0x88] sm:$0xf]
        %v1937 = vld [vmem:[%s1824 + $0x8c] sm:$0xf]
        %v1938 = vld [vmem:[%s1824 + $0x90] sm:$0xf]
        %v1939 = vld [vmem:[%s1824 + $0x94] sm:$0xf]
        %v1940 = vld [vmem:[%s1824 + $0x98] sm:$0xf]
        %v1941 = vld [vmem:[%s1824 + $0x9c] sm:$0xf]
        %v1942 = vld [vmem:[%s1824 + $0xa0] sm:$0xf]
        %v1943 = vld [vmem:[%s1824 + $0xa4] sm:$0xf]
        %v1944 = vld [vmem:[%s1824 + $0xa8] sm:$0xf]
        %v1945 = vld [vmem:[%s1824 + $0xac] sm:$0xf]
        %v1946 = vld [vmem:[%s1824 + $0xb0] sm:$0xf]
        %v1947 = vld [vmem:[%s1824 + $0xb4] sm:$0xf]
        %v1948 = vld [vmem:[%s1824 + $0xb8] sm:$0xf]
        %v1949 = vld [vmem:[%s1824 + $0xbc] sm:$0xf]
        %v1950 = vld [vmem:[%s1824 + $0xc0] sm:$0xf]
        %v1951 = vld [vmem:[%s1824 + $0xc4] sm:$0xf]
        %v1952 = vld [vmem:[%s1824 + $0xc8] sm:$0xf]
        %v1953 = vld [vmem:[%s1824 + $0xcc] sm:$0xf]
        %v1954 = vld [vmem:[%s1824 + $0xd0] sm:$0xf]
        %v1955 = vld [vmem:[%s1824 + $0xd4] sm:$0xf]
        %v1956 = vld [vmem:[%s1824 + $0xd8] sm:$0xf]
        %v1957 = vld [vmem:[%s1824 + $0xdc] sm:$0xf]
        %v1958 = vld [vmem:[%s1824 + $0xe0] sm:$0xf]
        %v1959 = vld [vmem:[%s1824 + $0xe4] sm:$0xf]
        %v1960 = vld [vmem:[%s1824 + $0xe8] sm:$0xf]
        %v1961 = vld [vmem:[%s1824 + $0xec] sm:$0xf]
        %v1962 = vld [vmem:[%s1824 + $0xf0] sm:$0xf]
        %v1963 = vld [vmem:[%s1824 + $0xf4] sm:$0xf]
        %v1964 = vld [vmem:[%s1824 + $0xf8] sm:$0xf]
        %v1965 = vld [vmem:[%s1824 + $0xfc] sm:$0xf]
        %v1966 = vld [vmem:[%s1824 + $0x100] sm:$0xf]
        %v1967 = vld [vmem:[%s1824 + $0x104] sm:$0xf]
        %v1968 = vld [vmem:[%s1824 + $0x108] sm:$0xf]
        %v1969 = vld [vmem:[%s1824 + $0x10c] sm:$0xf]
        %v1970 = vld [vmem:[%s1824 + $0x110] sm:$0xf]
        %v1971 = vld [vmem:[%s1824 + $0x114] sm:$0xf]
        %v1972 = vld [vmem:[%s1824 + $0x118] sm:$0xf]
        %v1973 = vld [vmem:[%s1824 + $0x11c] sm:$0xf]
        %v1974 = vld [vmem:[%s1824 + $0x120] sm:$0xf]
        %v1975 = vld [vmem:[%s1824 + $0x124] sm:$0xf]
        %v1976 = vld [vmem:[%s1824 + $0x128] sm:$0xf]
        %v1977 = vld [vmem:[%s1824 + $0x12c] sm:$0xf]
        %v1978 = vld [vmem:[%s1824 + $0x130] sm:$0xf]
        %v1979 = vld [vmem:[%s1824 + $0x134] sm:$0xf]
        %v1980 = vld [vmem:[%s1824 + $0x138] sm:$0xf]
        %v1981 = vld [vmem:[%s1824 + $0x13c] sm:$0xf]
        %v1982 = vld [vmem:[%s1824 + $0x140] sm:$0xf]
        %v1983 = vld [vmem:[%s1824 + $0x144] sm:$0xf]
        %v1984 = vld [vmem:[%s1824 + $0x148] sm:$0xf]
        %v1985 = vld [vmem:[%s1824 + $0x14c] sm:$0xf]
        %v1986 = vld [vmem:[%s1824 + $0x150] sm:$0xf]
        %v1987 = vld [vmem:[%s1824 + $0x154] sm:$0xf]
        %v1988 = vld [vmem:[%s1824 + $0x158] sm:$0xf]
        %v1989 = vld [vmem:[%s1824 + $0x15c] sm:$0xf]
        %v1990 = vld [vmem:[%s1824 + $0x160] sm:$0xf]
        %v1991 = vld [vmem:[%s1824 + $0x164] sm:$0xf]
        %v1992 = vld [vmem:[%s1824 + $0x168] sm:$0xf]
        %v1993 = vld [vmem:[%s1824 + $0x16c] sm:$0xf]
        %v1994 = vld [vmem:[%s1824 + $0x170] sm:$0xf]
        %v1995 = vld [vmem:[%s1824 + $0x174] sm:$0xf]
        %v1996 = vld [vmem:[%s1824 + $0x178] sm:$0xf]
        %v1997 = vld [vmem:[%s1824 + $0x17c] sm:$0xf]
        %v1998 = vld [vmem:[%s1824 + $0x180] sm:$0xf]
        %v1999 = vld [vmem:[%s1824 + $0x184] sm:$0xf]
        %v2000 = vld [vmem:[%s1824 + $0x188] sm:$0xf]
        %v2001 = vld [vmem:[%s1824 + $0x18c] sm:$0xf]
        %v2002 = vld [vmem:[%s1824 + $0x190] sm:$0xf]
        %v2003 = vld [vmem:[%s1824 + $0x194] sm:$0xf]
        %v2004 = vld [vmem:[%s1824 + $0x198] sm:$0xf]
        %v2005 = vld [vmem:[%s1824 + $0x19c] sm:$0xf]
        %v2006 = vld [vmem:[%s1824 + $0x1a0] sm:$0xf]
        %v2007 = vld [vmem:[%s1824 + $0x1a4] sm:$0xf]
        %v2008 = vld [vmem:[%s1824 + $0x1a8] sm:$0xf]
        %v2009 = vld [vmem:[%s1824 + $0x1ac] sm:$0xf]
        %v2010 = vld [vmem:[%s1824 + $0x1b0] sm:$0xf]
        %v2011 = vld [vmem:[%s1824 + $0x1b4] sm:$0xf]
        %v2012 = vld [vmem:[%s1824 + $0x1b8] sm:$0xf]
        %v2013 = vld [vmem:[%s1824 + $0x1bc] sm:$0xf]
        %v2014 = vld [vmem:[%s1824 + $0x1c0] sm:$0xf]
        %v2015 = vld [vmem:[%s1824 + $0x1c4] sm:$0xf]
        %v2016 = vld [vmem:[%s1824 + $0x1c8] sm:$0xf]
        %v2017 = vld [vmem:[%s1824 + $0x1cc] sm:$0xf]
        %v2018 = vld [vmem:[%s1824 + $0x1d0] sm:$0xf]
        %v2019 = vld [vmem:[%s1824 + $0x1d4] sm:$0xf]
        %v2020 = vld [vmem:[%s1824 + $0x1d8] sm:$0xf]
        %v2021 = vld [vmem:[%s1824 + $0x1dc] sm:$0xf]
        %v2022 = vld [vmem:[%s1824 + $0x1e0] sm:$0xf]
        %v2023 = vld [vmem:[%s1824 + $0x1e4] sm:$0xf]
        %v2024 = vld [vmem:[%s1824 + $0x1e8] sm:$0xf]
        %v2025 = vld [vmem:[%s1824 + $0x1ec] sm:$0xf]
        %v2026 = vld [vmem:[%s1824 + $0x1f0] sm:$0xf]
        %v2027 = vld [vmem:[%s1824 + $0x1f4] sm:$0xf]
        %v2028 = vld [vmem:[%s1824 + $0x1f8] sm:$0xf]
        %v2029 = vld [vmem:[%s1824 + $0x1fc] sm:$0xf]
        %v2030 = vld [vmem:[%s1824 + $0x200] sm:$0xf]
        %v2031 = vld [vmem:[%s1824 + $0x204] sm:$0xf]
        %v2032 = vld [vmem:[%s1824 + $0x208] sm:$0xf]
        %v2033 = vld [vmem:[%s1824 + $0x20c] sm:$0xf]
        %v2034 = vld [vmem:[%s1824 + $0x210] sm:$0xf]
        %v2035 = vld [vmem:[%s1824 + $0x214] sm:$0xf]
        %v2036 = vld [vmem:[%s1824 + $0x218] sm:$0xf]
        %v2037 = vld [vmem:[%s1824 + $0x21c] sm:$0xf]
        %v2038 = vld [vmem:[%s1824 + $0x220] sm:$0xf]
        %v2039 = vld [vmem:[%s1824 + $0x224] sm:$0xf]
        %v2040 = vld [vmem:[%s1824 + $0x228] sm:$0xf]
        %v2041 = vld [vmem:[%s1824 + $0x22c] sm:$0xf]
        %v2042 = vld [vmem:[%s1824 + $0x230] sm:$0xf]
        %v2043 = vld [vmem:[%s1824 + $0x234] sm:$0xf]
        %v2044 = vld [vmem:[%s1824 + $0x238] sm:$0xf]
        %v2045 = vld [vmem:[%s1824 + $0x23c] sm:$0xf]
        %v2046 = vld [vmem:[%s1824 + $0x240] sm:$0xf]
        %v2047 = vld [vmem:[%s1824 + $0x244] sm:$0xf]
        %v2048 = vld [vmem:[%s1824 + $0x248] sm:$0xf]
        %v2049 = vld [vmem:[%s1824 + $0x24c] sm:$0xf]
        %v2050 = vld [vmem:[%s1824 + $0x250] sm:$0xf]
        %v2051 = vld [vmem:[%s1824 + $0x254] sm:$0xf]
        %v2052 = vld [vmem:[%s1824 + $0x258] sm:$0xf]
        %v2053 = vld [vmem:[%s1824 + $0x25c] sm:$0xf]
        %v2054 = vld [vmem:[%s1824 + $0x260] sm:$0xf]
        %v2055 = vld [vmem:[%s1824 + $0x264] sm:$0xf]
        %v2056 = vld [vmem:[%s1824 + $0x268] sm:$0xf]
        %v2057 = vld [vmem:[%s1824 + $0x26c] sm:$0xf]
        %v2058 = vld [vmem:[%s1824 + $0x270] sm:$0xf]
        %v2059 = vld [vmem:[%s1824 + $0x274] sm:$0xf]
        %v2060 = vld [vmem:[%s1824 + $0x278] sm:$0xf]
        %v2061 = vld [vmem:[%s1824 + $0x27c] sm:$0xf]
        %v2062 = vld [vmem:[%s1824 + $0x280] sm:$0xf]
        %v2063 = vld [vmem:[%s1824 + $0x284] sm:$0xf]
        %v2064 = vld [vmem:[%s1824 + $0x288] sm:$0xf]
        %v2065 = vld [vmem:[%s1824 + $0x28c] sm:$0xf]
        %v2066 = vld [vmem:[%s1824 + $0x290] sm:$0xf]
        %v2067 = vld [vmem:[%s1824 + $0x294] sm:$0xf]
        %v2068 = vld [vmem:[%s1824 + $0x298] sm:$0xf]
        %v2069 = vld [vmem:[%s1824 + $0x29c] sm:$0xf]
        %v2070 = vld [vmem:[%s1824 + $0x2a0] sm:$0xf]
        %v2071 = vld [vmem:[%s1824 + $0x2a4] sm:$0xf]
        %v2072 = vld [vmem:[%s1824 + $0x2a8] sm:$0xf]
        %v2073 = vld [vmem:[%s1824 + $0x2ac] sm:$0xf]
        %v2074 = vld [vmem:[%s1824 + $0x2b0] sm:$0xf]
        %v2075 = vld [vmem:[%s1824 + $0x2b4] sm:$0xf]
        %v2076 = vld [vmem:[%s1824 + $0x2b8] sm:$0xf]
        %v2077 = vld [vmem:[%s1824 + $0x2bc] sm:$0xf]
        %v2078 = vld [vmem:[%s1824 + $0x2c0] sm:$0xf]
        %v2079 = vld [vmem:[%s1824 + $0x2c4] sm:$0xf]
        %v2080 = vld [vmem:[%s1824 + $0x2c8] sm:$0xf]
        %v2081 = vld [vmem:[%s1824 + $0x2cc] sm:$0xf]
        %v2082 = vld [vmem:[%s1824 + $0x2d0] sm:$0xf]
        %v2083 = vld [vmem:[%s1824 + $0x2d4] sm:$0xf]
        %v2084 = vld [vmem:[%s1824 + $0x2d8] sm:$0xf]
        %v2085 = vld [vmem:[%s1824 + $0x2dc] sm:$0xf]
        %v2086 = vld [vmem:[%s1824 + $0x2e0] sm:$0xf]
        %v2087 = vld [vmem:[%s1824 + $0x2e4] sm:$0xf]
        %v2088 = vld [vmem:[%s1824 + $0x2e8] sm:$0xf]
        %v2089 = vld [vmem:[%s1824 + $0x2ec] sm:$0xf]
        %v2090 = vld [vmem:[%s1824 + $0x2f0] sm:$0xf]
        %v2091 = vld [vmem:[%s1824 + $0x2f4] sm:$0xf]
        %v2092 = vld [vmem:[%s1824 + $0x2f8] sm:$0xf]
        %v2093 = vld [vmem:[%s1824 + $0x2fc] sm:$0xf]
        %v2094 = vld [vmem:[%s1824 + $0x300] sm:$0xf]
        %v2095 = vld [vmem:[%s1824 + $0x304] sm:$0xf]
        %v2096 = vld [vmem:[%s1824 + $0x308] sm:$0xf]
        %v2097 = vld [vmem:[%s1824 + $0x30c] sm:$0xf]
        %v2098 = vld [vmem:[%s1824 + $0x310] sm:$0xf]
        %v2099 = vld [vmem:[%s1824 + $0x314] sm:$0xf]
        %v2100 = vld [vmem:[%s1824 + $0x318] sm:$0xf]
        %v2101 = vld [vmem:[%s1824 + $0x31c] sm:$0xf]
        %v2102 = vld [vmem:[%s1824 + $0x320] sm:$0xf]
        %v2103 = vld [vmem:[%s1824 + $0x324] sm:$0xf]
        %v2104 = vld [vmem:[%s1824 + $0x328] sm:$0xf]
        %v2105 = vld [vmem:[%s1824 + $0x32c] sm:$0xf]
        %v2106 = vld [vmem:[%s1824 + $0x330] sm:$0xf]
        %v2107 = vld [vmem:[%s1824 + $0x334] sm:$0xf]
        %v2108 = vld [vmem:[%s1824 + $0x338] sm:$0xf]
        %v2109 = vld [vmem:[%s1824 + $0x33c] sm:$0xf]
        %v2110 = vld [vmem:[%s1824 + $0x340] sm:$0xf]
        %v2111 = vld [vmem:[%s1824 + $0x344] sm:$0xf]
        %v2112 = vld [vmem:[%s1824 + $0x348] sm:$0xf]
        %v2113 = vld [vmem:[%s1824 + $0x34c] sm:$0xf]
        %v2114 = vld [vmem:[%s1824 + $0x350] sm:$0xf]
        %v2115 = vld [vmem:[%s1824 + $0x354] sm:$0xf]
        %v2116 = vld [vmem:[%s1824 + $0x358] sm:$0xf]
        %v2117 = vld [vmem:[%s1824 + $0x35c] sm:$0xf]
        %v2118 = vld [vmem:[%s1824 + $0x360] sm:$0xf]
        %v2119 = vld [vmem:[%s1824 + $0x364] sm:$0xf]
        %v2120 = vld [vmem:[%s1824 + $0x368] sm:$0xf]
        %v2121 = vld [vmem:[%s1824 + $0x36c] sm:$0xf]
        %v2122 = vld [vmem:[%s1824 + $0x370] sm:$0xf]
        %v2123 = vld [vmem:[%s1824 + $0x374] sm:$0xf]
        %v2124 = vld [vmem:[%s1824 + $0x378] sm:$0xf]
        %v2125 = vld [vmem:[%s1824 + $0x37c] sm:$0xf]
        %v2126 = vld [vmem:[%s1824 + $0x380] sm:$0xf]
        %v2127 = vld [vmem:[%s1824 + $0x384] sm:$0xf]
        %v2128 = vld [vmem:[%s1824 + $0x388] sm:$0xf]
        %v2129 = vld [vmem:[%s1824 + $0x38c] sm:$0xf]
        %v2130 = vld [vmem:[%s1824 + $0x390] sm:$0xf]
        %v2131 = vld [vmem:[%s1824 + $0x394] sm:$0xf]
        %v2132 = vld [vmem:[%s1824 + $0x398] sm:$0xf]
        %v2133 = vld [vmem:[%s1824 + $0x39c] sm:$0xf]
        %v2134 = vld [vmem:[%s1824 + $0x3a0] sm:$0xf]
        %v2135 = vld [vmem:[%s1824 + $0x3a4] sm:$0xf]
        %v2136 = vld [vmem:[%s1824 + $0x3a8] sm:$0xf]
        %v2137 = vld [vmem:[%s1824 + $0x3ac] sm:$0xf]
        %v2138 = vld [vmem:[%s1824 + $0x3b0] sm:$0xf]
        %v2139 = vld [vmem:[%s1824 + $0x3b4] sm:$0xf]
        %v2140 = vld [vmem:[%s1824 + $0x3b8] sm:$0xf]
        %v2141 = vld [vmem:[%s1824 + $0x3bc] sm:$0xf]
        %v2142 = vld [vmem:[%s1824 + $0x3c0] sm:$0xf]
        %v2143 = vld [vmem:[%s1824 + $0x3c4] sm:$0xf]
        %v2144 = vld [vmem:[%s1824 + $0x3c8] sm:$0xf]
        %v2145 = vld [vmem:[%s1824 + $0x3cc] sm:$0xf]
        %v2146 = vld [vmem:[%s1824 + $0x3d0] sm:$0xf]
        %v2147 = vld [vmem:[%s1824 + $0x3d4] sm:$0xf]
        %v2148 = vld [vmem:[%s1824 + $0x3d8] sm:$0xf]
        %v2149 = vld [vmem:[%s1824 + $0x3dc] sm:$0xf]
        %v2150 = vld [vmem:[%s1824 + $0x3e0] sm:$0xf]
        %v2151 = vld [vmem:[%s1824 + $0x3e4] sm:$0xf]
        %v2152 = vld [vmem:[%s1824 + $0x3e8] sm:$0xf]
        %v2153 = vld [vmem:[%s1824 + $0x3ec] sm:$0xf]
        %v2154 = vld [vmem:[%s1824 + $0x3f0] sm:$0xf]
        %v2155 = vld [vmem:[%s1824 + $0x3f4] sm:$0xf]
        %v2156 = vld [vmem:[%s1824 + $0x3f8] sm:$0xf]
        %v2157 = vld [vmem:[%s1824 + $0x3fc] sm:$0xf]
        %v2158 = vld [vmem:[%s1824 + $0x400] sm:$0xf]
        %v2159 = vld [vmem:[%s1824 + $0x404] sm:$0xf]
        %v2160 = vld [vmem:[%s1824 + $0x408] sm:$0xf]
        %v2161 = vld [vmem:[%s1824 + $0x40c] sm:$0xf]
        %v2162 = vld [vmem:[%s1824 + $0x410] sm:$0xf]
        %v2163 = vld [vmem:[%s1824 + $0x414] sm:$0xf]
        %v2164 = vld [vmem:[%s1824 + $0x418] sm:$0xf]
        %v2165 = vld [vmem:[%s1824 + $0x41c] sm:$0xf]
        %v2166 = vld [vmem:[%s1824 + $0x420] sm:$0xf]
        %v2167 = vld [vmem:[%s1824 + $0x424] sm:$0xf]
        %v2168 = vld [vmem:[%s1824 + $0x428] sm:$0xf]
        %v2169 = vld [vmem:[%s1824 + $0x42c] sm:$0xf]
        %v2170 = vld [vmem:[%s1824 + $0x430] sm:$0xf]
        %v2171 = vld [vmem:[%s1824 + $0x434] sm:$0xf]
        %v2172 = vld [vmem:[%s1824 + $0x438] sm:$0xf]
        %v2173 = vld [vmem:[%s1824 + $0x43c] sm:$0xf]
        %v2174 = vld [vmem:[%s1824 + $0x440] sm:$0xf]
        %v2175 = vld [vmem:[%s1824 + $0x444] sm:$0xf]
        %v2176 = vld [vmem:[%s1824 + $0x448] sm:$0xf]
        %v2177 = vld [vmem:[%s1824 + $0x44c] sm:$0xf]
        %v2178 = vld [vmem:[%s1824 + $0x450] sm:$0xf]
        %v2179 = vld [vmem:[%s1824 + $0x454] sm:$0xf]
        %v2180 = vld [vmem:[%s1824 + $0x458] sm:$0xf]
        %v2181 = vld [vmem:[%s1824 + $0x45c] sm:$0xf]
        %v2182 = vld [vmem:[%s1824 + $0x460] sm:$0xf]
        %v2183 = vld [vmem:[%s1824 + $0x464] sm:$0xf]
        %v2184 = vld [vmem:[%s1824 + $0x468] sm:$0xf]
        %v2185 = vld [vmem:[%s1824 + $0x46c] sm:$0xf]
        %v2186 = vld [vmem:[%s1824 + $0x470] sm:$0xf]
        %v2187 = vld [vmem:[%s1824 + $0x474] sm:$0xf]
        %v2188 = vld [vmem:[%s1824 + $0x478] sm:$0xf]
        %v2189 = vld [vmem:[%s1824 + $0x47c] sm:$0xf]
        %v2190 = vld [vmem:[%s1824 + $0x480] sm:$0xf]
        %v2191 = vld [vmem:[%s1824 + $0x484] sm:$0xf]
        %v2192 = vld [vmem:[%s1824 + $0x488] sm:$0xf]
        %v2193 = vld [vmem:[%s1824 + $0x48c] sm:$0xf]
        %v2194 = vld [vmem:[%s1824 + $0x490] sm:$0xf]
        %v2195 = vld [vmem:[%s1824 + $0x494] sm:$0xf]
        %v2196 = vld [vmem:[%s1824 + $0x498] sm:$0xf]
        %v2197 = vld [vmem:[%s1824 + $0x49c] sm:$0xf]
        %v2198 = vld [vmem:[%s1824 + $0x4a0] sm:$0xf]
        %v2199 = vld [vmem:[%s1824 + $0x4a4] sm:$0xf]
        %v2200 = vld [vmem:[%s1824 + $0x4a8] sm:$0xf]
        %v2201 = vld [vmem:[%s1824 + $0x4ac] sm:$0xf]
        %v2202 = vld [vmem:[%s1824 + $0x4b0] sm:$0xf]
        %v2203 = vld [vmem:[%s1824 + $0x4b4] sm:$0xf]
        %v2204 = vld [vmem:[%s1824 + $0x4b8] sm:$0xf]
        %v2205 = vld [vmem:[%s1824 + $0x4bc] sm:$0xf]
        %v2206 = vld [vmem:[%s1824 + $0x4c0] sm:$0xf]
        %v2207 = vld [vmem:[%s1824 + $0x4c4] sm:$0xf]
        %v2208 = vld [vmem:[%s1824 + $0x4c8] sm:$0xf]
        %v2209 = vld [vmem:[%s1824 + $0x4cc] sm:$0xf]
        %v2210 = vld [vmem:[%s1824 + $0x4d0] sm:$0xf]
        %v2211 = vld [vmem:[%s1824 + $0x4d4] sm:$0xf]
        %v2212 = vld [vmem:[%s1824 + $0x4d8] sm:$0xf]
        %v2213 = vld [vmem:[%s1824 + $0x4dc] sm:$0xf]
        %v2214 = vld [vmem:[%s1824 + $0x4e0] sm:$0xf]
        %v2215 = vld [vmem:[%s1824 + $0x4e4] sm:$0xf]
        %v2216 = vld [vmem:[%s1824 + $0x4e8] sm:$0xf]
        %v2217 = vld [vmem:[%s1824 + $0x4ec] sm:$0xf]
        %v2218 = vld [vmem:[%s1824 + $0x4f0] sm:$0xf]
        %v2219 = vld [vmem:[%s1824 + $0x4f4] sm:$0xf]
        %v2220 = vld [vmem:[%s1824 + $0x4f8] sm:$0xf]
        %v2221 = vld [vmem:[%s1824 + $0x4fc] sm:$0xf]
        %v2222 = vld [vmem:[%s1824 + $0x500] sm:$0xf]
        %v2223 = vld [vmem:[%s1824 + $0x504] sm:$0xf]
        %v2224 = vld [vmem:[%s1824 + $0x508] sm:$0xf]
        %v2225 = vld [vmem:[%s1824 + $0x50c] sm:$0xf]
        %v2226 = vld [vmem:[%s1824 + $0x510] sm:$0xf]
        %v2227 = vld [vmem:[%s1824 + $0x514] sm:$0xf]
        %v2228 = vld [vmem:[%s1824 + $0x518] sm:$0xf]
        %v2229 = vld [vmem:[%s1824 + $0x51c] sm:$0xf]
        %v2230 = vld [vmem:[%s1824 + $0x520] sm:$0xf]
        %v2231 = vld [vmem:[%s1824 + $0x524] sm:$0xf]
        %v2232 = vld [vmem:[%s1824 + $0x528] sm:$0xf]
        %v2233 = vld [vmem:[%s1824 + $0x52c] sm:$0xf]
        %v2234 = vld [vmem:[%s1824 + $0x530] sm:$0xf]
        %v2235 = vld [vmem:[%s1824 + $0x534] sm:$0xf]
        %v2236 = vld [vmem:[%s1824 + $0x538] sm:$0xf]
        %v2237 = vld [vmem:[%s1824 + $0x53c] sm:$0xf]
        %v2238 = vld [vmem:[%s1824 + $0x540] sm:$0xf]
        %v2239 = vld [vmem:[%s1824 + $0x544] sm:$0xf]
        %v2240 = vld [vmem:[%s1824 + $0x548] sm:$0xf]
        %v2241 = vld [vmem:[%s1824 + $0x54c] sm:$0xf]
        %v2242 = vld [vmem:[%s1824 + $0x550] sm:$0xf]
        %v2243 = vld [vmem:[%s1824 + $0x554] sm:$0xf]
        %v2244 = vld [vmem:[%s1824 + $0x558] sm:$0xf]
        %v2245 = vld [vmem:[%s1824 + $0x55c] sm:$0xf]
        %v2246 = vld [vmem:[%s1824 + $0x560] sm:$0xf]
        %v2247 = vld [vmem:[%s1824 + $0x564] sm:$0xf]
        %v2248 = vld [vmem:[%s1824 + $0x568] sm:$0xf]
        %v2249 = vld [vmem:[%s1824 + $0x56c] sm:$0xf]
        %v2250 = vld [vmem:[%s1824 + $0x570] sm:$0xf]
        %v2251 = vld [vmem:[%s1824 + $0x574] sm:$0xf]
        %v2252 = vld [vmem:[%s1824 + $0x578] sm:$0xf]
        %v2253 = vld [vmem:[%s1824 + $0x57c] sm:$0xf]
        %v2254 = vld [vmem:[%s1824 + $0x580] sm:$0xf]
        %v2255 = vld [vmem:[%s1824 + $0x584] sm:$0xf]
        %v2256 = vld [vmem:[%s1824 + $0x588] sm:$0xf]
        %v2257 = vld [vmem:[%s1824 + $0x58c] sm:$0xf]
        %v2258 = vld [vmem:[%s1824 + $0x590] sm:$0xf]
        %v2259 = vld [vmem:[%s1824 + $0x594] sm:$0xf]
        %v2260 = vld [vmem:[%s1824 + $0x598] sm:$0xf]
        %v2261 = vld [vmem:[%s1824 + $0x59c] sm:$0xf]
        %v2262 = vld [vmem:[%s1824 + $0x5a0] sm:$0xf]
        %v2263 = vld [vmem:[%s1824 + $0x5a4] sm:$0xf]
        %v2264 = vld [vmem:[%s1824 + $0x5a8] sm:$0xf]
        %v2265 = vld [vmem:[%s1824 + $0x5ac] sm:$0xf]
        %v2266 = vld [vmem:[%s1824 + $0x5b0] sm:$0xf]
        %v2267 = vld [vmem:[%s1824 + $0x5b4] sm:$0xf]
        %v2268 = vld [vmem:[%s1824 + $0x5b8] sm:$0xf]
        %v2269 = vld [vmem:[%s1824 + $0x5bc] sm:$0xf]
        %v2270 = vld [vmem:[%s1824 + $0x5c0] sm:$0xf]
        %v2271 = vld [vmem:[%s1824 + $0x5c4] sm:$0xf]
        %v2272 = vld [vmem:[%s1824 + $0x5c8] sm:$0xf]
        %v2273 = vld [vmem:[%s1824 + $0x5cc] sm:$0xf]
        %v2274 = vld [vmem:[%s1824 + $0x5d0] sm:$0xf]
        %v2275 = vld [vmem:[%s1824 + $0x5d4] sm:$0xf]
        %v2276 = vld [vmem:[%s1824 + $0x5d8] sm:$0xf]
        %v2277 = vld [vmem:[%s1824 + $0x5dc] sm:$0xf]
        %v2278 = vld [vmem:[%s1824 + $0x5e0] sm:$0xf]
        %v2279 = vld [vmem:[%s1824 + $0x5e4] sm:$0xf]
        %v2280 = vld [vmem:[%s1824 + $0x5e8] sm:$0xf]
        %v2281 = vld [vmem:[%s1824 + $0x5ec] sm:$0xf]
        %v2282 = vld [vmem:[%s1824 + $0x5f0] sm:$0xf]
        %v2283 = vld [vmem:[%s1824 + $0x5f4] sm:$0xf]
        %v2284 = vld [vmem:[%s1824 + $0x5f8] sm:$0xf]
        %v2285 = vld [vmem:[%s1824 + $0x5fc] sm:$0xf]
        %v2286 = vld [vmem:[%s1824 + $0x600] sm:$0xf]
        %v2287 = vld [vmem:[%s1824 + $0x604] sm:$0xf]
        %v2288 = vld [vmem:[%s1824 + $0x608] sm:$0xf]
        %v2289 = vld [vmem:[%s1824 + $0x60c] sm:$0xf]
        %v2290 = vld [vmem:[%s1824 + $0x610] sm:$0xf]
        %v2291 = vld [vmem:[%s1824 + $0x614] sm:$0xf]
        %v2292 = vld [vmem:[%s1824 + $0x618] sm:$0xf]
        %v2293 = vld [vmem:[%s1824 + $0x61c] sm:$0xf]
        %v2294 = vld [vmem:[%s1863] sm:$0x1]
        %v2296 = vlaneseq
        %v2297 = vshrl.u32 %v2296, 7
        %v2298 = vsub.s32 0, %v2297
        %v2299 = vrot.slane %v2294, %v2298
        %v2327 = vunpack.c.l.b16 %v1876
        %v2328 = vunpack.c.h.b16 %v1876
        %v2329 = vunpack.c.l.b16 %v1877
        %v2330 = vunpack.c.h.b16 %v1877
        %v2331 = vunpack.c.l.b16 %v1878
        %v2332 = vunpack.c.h.b16 %v1878
        %v2333 = vunpack.c.l.b16 %v1879
        %v2334 = vunpack.c.h.b16 %v1879
        %v2335 = vunpack.c.l.b16 %v1880
        %v2336 = vunpack.c.h.b16 %v1880
        %v2337 = vunpack.c.l.b16 %v1881
        %v2338 = vunpack.c.h.b16 %v1881
        %v2339 = vunpack.c.l.b16 %v1882
        %v2340 = vunpack.c.h.b16 %v1882
        %v2341 = vunpack.c.l.b16 %v1883
        %v2342 = vunpack.c.h.b16 %v1883
        %v2343 = vunpack.c.l.b16 %v1884
        %v2344 = vunpack.c.h.b16 %v1884
        %v2345 = vunpack.c.l.b16 %v1885
        %v2346 = vunpack.c.h.b16 %v1885
        %v2347 = vunpack.c.l.b16 %v1886
        %v2348 = vunpack.c.h.b16 %v1886
        %v2349 = vunpack.c.l.b16 %v1887
        %v2350 = vunpack.c.h.b16 %v1887
        %v2351 = vunpack.c.l.b16 %v1888
        %v2352 = vunpack.c.l.b16 %v1889
        %v2353 = vunpack.c.h.b16 %v1889
        %v2354 = vunpack.c.l.b16 %v1890
        %v2355 = vunpack.c.h.b16 %v1890
        %v2356 = vunpack.c.l.b16 %v1891
        %v2357 = vunpack.c.h.b16 %v1891
        %v2358 = vunpack.c.l.b16 %v1892
        %v2359 = vunpack.c.h.b16 %v1892
        %v2360 = vunpack.c.l.b16 %v1893
        %v2361 = vunpack.c.h.b16 %v1893
        %v2362 = vunpack.c.l.b16 %v1894
        %v2363 = vunpack.c.h.b16 %v1894
        %v2364 = vunpack.c.l.b16 %v1895
        %v2365 = vunpack.c.h.b16 %v1895
        %v2366 = vunpack.c.l.b16 %v1896
        %v2367 = vunpack.c.h.b16 %v1896
        %v2368 = vunpack.c.l.b16 %v1897
        %v2369 = vunpack.c.h.b16 %v1897
        %v2370 = vunpack.c.l.b16 %v1898
        %v2371 = vunpack.c.h.b16 %v1898
        %v2372 = vunpack.c.l.b16 %v1899
        %v2373 = vunpack.c.h.b16 %v1899
        %v2374 = vunpack.c.l.b16 %v1900
        %v2375 = vunpack.c.h.b16 %v1900
        %v2376 = vunpack.c.l.b16 %v1901
        %v2377 = vpack.c.b16 %v2352, %v2327
        %v2378 = vpack.c.b16 %v2353, %v2328
        %v2379 = vpack.c.b16 %v2354, %v2329
        %v2380 = vpack.c.b16 %v2355, %v2330
        %v2381 = vpack.c.b16 %v2356, %v2331
        %v2382 = vpack.c.b16 %v2357, %v2332
        %v2383 = vpack.c.b16 %v2358, %v2333
        %v2384 = vpack.c.b16 %v2359, %v2334
        %v2385 = vpack.c.b16 %v2360, %v2335
        %v2386 = vpack.c.b16 %v2361, %v2336
        %v2387 = vpack.c.b16 %v2362, %v2337
        %v2388 = vpack.c.b16 %v2363, %v2338
        %v2389 = vpack.c.b16 %v2364, %v2339
        %v2390 = vpack.c.b16 %v2365, %v2340
        %v2391 = vpack.c.b16 %v2366, %v2341
        %v2392 = vpack.c.b16 %v2367, %v2342
        %v2393 = vpack.c.b16 %v2368, %v2343
        %v2394 = vpack.c.b16 %v2369, %v2344
        %v2395 = vpack.c.b16 %v2370, %v2345
        %v2396 = vpack.c.b16 %v2371, %v2346
        %v2397 = vpack.c.b16 %v2372, %v2347
        %v2398 = vpack.c.b16 %v2373, %v2348
        %v2399 = vpack.c.b16 %v2374, %v2349
        %v2400 = vpack.c.b16 %v2375, %v2350
        %v2401 = vpack.c.b16 %v2376, %v2351
        %v2818 = vunpack.c.l.b16 %v1902
        %v2819 = vunpack.c.l.b16 %v1903
        %v2820 = vunpack.c.l.b16 %v1904
        %v2821 = vunpack.c.l.b16 %v1905
        %v2822 = vunpack.c.l.b16 %v1906
        %v2823 = vunpack.c.l.b16 %v1907
        %v2824 = vunpack.c.l.b16 %v1908
        %v2825 = vunpack.c.l.b16 %v1909
        %v2826 = vunpack.c.l.b16 %v1910
        %v2827 = vunpack.c.l.b16 %v1911
        %v2828 = vunpack.c.l.b16 %v1912
        %v2829 = vunpack.c.l.b16 %v1913
        %v2830 = vunpack.c.l.b16 %v1914
        %v2831 = vunpack.c.l.b16 %v1915
        %v2832 = vunpack.c.l.b16 %v1916
        %v2833 = vunpack.c.l.b16 %v1917
        %v2834 = vunpack.c.l.b16 %v1918
        %v2835 = vunpack.c.l.b16 %v1919
        %v2836 = vunpack.c.l.b16 %v1920
        %v2837 = vunpack.c.l.b16 %v1921
        %v2838 = vunpack.c.l.b16 %v1922
        %v2839 = vunpack.c.l.b16 %v1923
        %v2840 = vunpack.c.l.b16 %v1924
        %v2841 = vunpack.c.l.b16 %v1925
        %v2842 = vunpack.c.l.b16 %v1926
        %v2843 = vunpack.c.l.b16 %v1927
        %v2844 = vunpack.c.l.b16 %v1928
        %v2845 = vunpack.c.l.b16 %v1929
        %v2846 = vunpack.c.l.b16 %v1930
        %v2847 = vunpack.c.l.b16 %v1931
        %v2848 = vunpack.c.l.b16 %v1932
        %v2849 = vunpack.c.l.b16 %v1933
        %v2850 = vunpack.c.l.b16 %v1934
        %v2851 = vunpack.c.l.b16 %v1935
        %v2852 = vunpack.c.l.b16 %v1936
        %v2853 = vunpack.c.l.b16 %v1937
        %v2854 = vunpack.c.l.b16 %v1938
        %v2855 = vunpack.c.l.b16 %v1939
        %v2856 = vunpack.c.l.b16 %v1940
        %v2857 = vunpack.c.l.b16 %v1941
        %v2858 = vunpack.c.l.b16 %v1942
        %v2859 = vunpack.c.l.b16 %v1943
        %v2860 = vunpack.c.l.b16 %v1944
        %v2861 = vunpack.c.l.b16 %v1945
        %v2862 = vunpack.c.l.b16 %v1946
        %v2863 = vunpack.c.l.b16 %v1947
        %v2864 = vunpack.c.l.b16 %v1948
        %v2865 = vunpack.c.l.b16 %v1949
        %v2866 = vunpack.c.l.b16 %v1950
        %v2867 = vunpack.c.l.b16 %v1951
        %v2868 = vunpack.c.l.b16 %v1952
        %v2869 = vunpack.c.l.b16 %v1953
        %v2870 = vunpack.c.l.b16 %v1954
        %v2871 = vunpack.c.l.b16 %v1955
        %v2872 = vunpack.c.l.b16 %v1956
        %v2873 = vunpack.c.l.b16 %v1957
        %v2874 = vunpack.c.l.b16 %v1958
        %v2875 = vunpack.c.l.b16 %v1959
        %v2876 = vunpack.c.l.b16 %v1960
        %v2877 = vunpack.c.l.b16 %v1961
        %v2878 = vunpack.c.l.b16 %v1962
        %v2879 = vunpack.c.l.b16 %v1963
        %v2880 = vunpack.c.l.b16 %v1964
        %v2881 = vunpack.c.l.b16 %v1965
        %v2882 = vunpack.c.l.b16 %v1966
        %v2883 = vunpack.c.l.b16 %v1967
        %v2884 = vunpack.c.l.b16 %v1968
        %v2885 = vunpack.c.l.b16 %v1969
        %v2886 = vunpack.c.l.b16 %v1970
        %v2887 = vunpack.c.l.b16 %v1971
        %v2888 = vunpack.c.l.b16 %v1972
        %v2889 = vunpack.c.l.b16 %v1973
        %v2890 = vunpack.c.l.b16 %v1974
        %v2891 = vunpack.c.l.b16 %v1975
        %v2892 = vunpack.c.l.b16 %v1976
        %v2893 = vunpack.c.l.b16 %v1977
        %v2894 = vunpack.c.l.b16 %v1978
        %v2895 = vunpack.c.l.b16 %v1979
        %v2896 = vunpack.c.l.b16 %v1980
        %v2897 = vunpack.c.l.b16 %v1981
        %v2898 = vunpack.c.l.b16 %v1982
        %v2899 = vunpack.c.l.b16 %v1983
        %v2900 = vunpack.c.l.b16 %v1984
        %v2901 = vunpack.c.l.b16 %v1985
        %v2902 = vunpack.c.l.b16 %v1986
        %v2903 = vunpack.c.l.b16 %v1987
        %v2904 = vunpack.c.l.b16 %v1988
        %v2905 = vunpack.c.l.b16 %v1989
        %v2906 = vunpack.c.l.b16 %v1990
        %v2907 = vunpack.c.l.b16 %v1991
        %v2908 = vunpack.c.l.b16 %v1992
        %v2909 = vunpack.c.l.b16 %v1993
        %v2910 = vunpack.c.l.b16 %v1994
        %v2911 = vunpack.c.l.b16 %v1995
        %v2912 = vunpack.c.l.b16 %v1996
        %v2913 = vunpack.c.l.b16 %v1997
        %v2914 = vunpack.c.l.b16 %v1998
        %v2915 = vunpack.c.l.b16 %v1999
        %v2916 = vunpack.c.l.b16 %v2000
        %v2917 = vunpack.c.l.b16 %v2001
        %v2918 = vunpack.c.l.b16 %v2002
        %v2919 = vunpack.c.l.b16 %v2003
        %v2920 = vunpack.c.l.b16 %v2004
        %v2921 = vunpack.c.l.b16 %v2005
        %v2922 = vunpack.c.l.b16 %v2006
        %v2923 = vunpack.c.l.b16 %v2007
        %v2924 = vunpack.c.l.b16 %v2008
        %v2925 = vunpack.c.l.b16 %v2009
        %v2926 = vunpack.c.l.b16 %v2010
        %v2927 = vunpack.c.l.b16 %v2011
        %v2928 = vunpack.c.l.b16 %v2012
        %v2929 = vunpack.c.l.b16 %v2013
        %v2930 = vunpack.c.l.b16 %v2014
        %v2931 = vunpack.c.l.b16 %v2015
        %v2932 = vunpack.c.l.b16 %v2016
        %v2933 = vunpack.c.l.b16 %v2017
        %v2934 = vunpack.c.l.b16 %v2018
        %v2935 = vunpack.c.l.b16 %v2019
        %v2936 = vunpack.c.l.b16 %v2020
        %v2937 = vunpack.c.l.b16 %v2021
        %v2938 = vunpack.c.l.b16 %v2022
        %v2939 = vunpack.c.l.b16 %v2023
        %v2940 = vunpack.c.l.b16 %v2024
        %v2941 = vunpack.c.l.b16 %v2025
        %v2942 = vunpack.c.l.b16 %v2026
        %v2943 = vunpack.c.l.b16 %v2027
        %v2944 = vunpack.c.l.b16 %v2028
        %v2945 = vunpack.c.l.b16 %v2029
        %v2946 = vunpack.c.l.b16 %v2030
        %v2947 = vunpack.c.l.b16 %v2031
        %v2948 = vunpack.c.l.b16 %v2032
        %v2949 = vunpack.c.l.b16 %v2033
        %v2950 = vunpack.c.l.b16 %v2034
        %v2951 = vunpack.c.l.b16 %v2035
        %v2952 = vunpack.c.l.b16 %v2036
        %v2953 = vunpack.c.l.b16 %v2037
        %v2954 = vunpack.c.l.b16 %v2038
        %v2955 = vunpack.c.l.b16 %v2039
        %v2956 = vunpack.c.l.b16 %v2040
        %v2957 = vunpack.c.l.b16 %v2041
        %v2958 = vunpack.c.l.b16 %v2042
        %v2959 = vunpack.c.l.b16 %v2043
        %v2960 = vunpack.c.l.b16 %v2044
        %v2961 = vunpack.c.l.b16 %v2045
        %v2962 = vunpack.c.l.b16 %v2046
        %v2963 = vunpack.c.l.b16 %v2047
        %v2964 = vunpack.c.l.b16 %v2048
        %v2965 = vunpack.c.l.b16 %v2049
        %v2966 = vunpack.c.l.b16 %v2050
        %v2967 = vunpack.c.l.b16 %v2051
        %v2968 = vunpack.c.l.b16 %v2052
        %v2969 = vunpack.c.l.b16 %v2053
        %v2970 = vunpack.c.l.b16 %v2054
        %v2971 = vunpack.c.l.b16 %v2055
        %v2972 = vunpack.c.l.b16 %v2056
        %v2973 = vunpack.c.l.b16 %v2057
        %v2974 = vunpack.c.l.b16 %v2058
        %v2975 = vunpack.c.l.b16 %v2059
        %v2976 = vunpack.c.l.b16 %v2060
        %v2977 = vunpack.c.l.b16 %v2061
        %v2978 = vunpack.c.l.b16 %v2062
        %v2979 = vunpack.c.l.b16 %v2063
        %v2980 = vunpack.c.l.b16 %v2064
        %v2981 = vunpack.c.l.b16 %v2065
        %v2982 = vunpack.c.l.b16 %v2066
        %v2983 = vunpack.c.l.b16 %v2067
        %v2984 = vunpack.c.l.b16 %v2068
        %v2985 = vunpack.c.l.b16 %v2069
        %v2986 = vunpack.c.l.b16 %v2070
        %v2987 = vunpack.c.l.b16 %v2071
        %v2988 = vunpack.c.l.b16 %v2072
        %v2989 = vunpack.c.l.b16 %v2073
        %v2990 = vunpack.c.l.b16 %v2074
        %v2991 = vunpack.c.l.b16 %v2075
        %v2992 = vunpack.c.l.b16 %v2076
        %v2993 = vunpack.c.l.b16 %v2077
        %v2994 = vunpack.c.l.b16 %v2078
        %v2995 = vunpack.c.l.b16 %v2079
        %v2996 = vunpack.c.l.b16 %v2080
        %v2997 = vunpack.c.l.b16 %v2081
        %v2998 = vunpack.c.l.b16 %v2082
        %v2999 = vunpack.c.l.b16 %v2083
        %v3000 = vunpack.c.l.b16 %v2084
        %v3001 = vunpack.c.l.b16 %v2085
        %v3002 = vunpack.c.l.b16 %v2086
        %v3003 = vunpack.c.l.b16 %v2087
        %v3004 = vunpack.c.l.b16 %v2088
        %v3005 = vunpack.c.l.b16 %v2089
        %v3006 = vunpack.c.l.b16 %v2090
        %v3007 = vunpack.c.l.b16 %v2091
        %v3008 = vunpack.c.l.b16 %v2092
        %v3009 = vunpack.c.l.b16 %v2093
        %v3010 = vunpack.c.l.b16 %v2094
        %v3011 = vunpack.c.l.b16 %v2095
        %v3012 = vunpack.c.l.b16 %v2096
        %v3013 = vunpack.c.l.b16 %v2097
        %v3014 = vunpack.c.l.b16 %v2098
        %v3015 = vunpack.c.l.b16 %v2099
        %v3016 = vunpack.c.l.b16 %v2100
        %v3017 = vunpack.c.l.b16 %v2101
        %v3018 = vunpack.c.l.b16 %v2102
        %v3019 = vunpack.c.l.b16 %v2103
        %v3020 = vunpack.c.l.b16 %v2104
        %v3021 = vunpack.c.l.b16 %v2105
        %v3022 = vunpack.c.l.b16 %v2106
        %v3023 = vunpack.c.l.b16 %v2107
        %v3024 = vunpack.c.l.b16 %v2108
        %v3025 = vunpack.c.l.b16 %v2109
        %v3026 = vunpack.c.l.b16 %v2110
        %v3027 = vunpack.c.l.b16 %v2111
        %v3028 = vunpack.c.l.b16 %v2112
        %v3029 = vunpack.c.l.b16 %v2113
        %v3030 = vunpack.c.l.b16 %v2114
        %v3031 = vunpack.c.l.b16 %v2115
        %v3032 = vunpack.c.l.b16 %v2116
        %v3033 = vunpack.c.l.b16 %v2117
        %v3034 = vunpack.c.l.b16 %v2118
        %v3035 = vunpack.c.l.b16 %v2119
        %v3036 = vunpack.c.l.b16 %v2120
        %v3037 = vunpack.c.l.b16 %v2121
        %v3038 = vunpack.c.l.b16 %v2122
        %v3039 = vunpack.c.l.b16 %v2123
        %v3040 = vunpack.c.l.b16 %v2124
        %v3041 = vunpack.c.l.b16 %v2125
        %v3042 = vunpack.c.l.b16 %v2126
        %v3043 = vunpack.c.l.b16 %v2127
        %v3044 = vunpack.c.l.b16 %v2128
        %v3045 = vunpack.c.l.b16 %v2129
        %v3046 = vunpack.c.l.b16 %v2130
        %v3047 = vunpack.c.l.b16 %v2131
        %v3048 = vunpack.c.l.b16 %v2132
        %v3049 = vunpack.c.l.b16 %v2133
        %v3050 = vunpack.c.l.b16 %v2134
        %v3051 = vunpack.c.l.b16 %v2135
        %v3052 = vunpack.c.l.b16 %v2136
        %v3053 = vunpack.c.l.b16 %v2137
        %v3054 = vunpack.c.l.b16 %v2138
        %v3055 = vunpack.c.l.b16 %v2139
        %v3056 = vunpack.c.l.b16 %v2140
        %v3057 = vunpack.c.l.b16 %v2141
        %v3058 = vunpack.c.l.b16 %v2142
        %v3059 = vunpack.c.l.b16 %v2143
        %v3060 = vunpack.c.l.b16 %v2144
        %v3061 = vunpack.c.l.b16 %v2145
        %v3062 = vunpack.c.l.b16 %v2146
        %v3063 = vunpack.c.l.b16 %v2147
        %v3064 = vunpack.c.l.b16 %v2148
        %v3065 = vunpack.c.l.b16 %v2149
        %v3066 = vunpack.c.l.b16 %v2150
        %v3067 = vunpack.c.l.b16 %v2151
        %v3068 = vunpack.c.l.b16 %v2152
        %v3069 = vunpack.c.l.b16 %v2153
        %v3070 = vunpack.c.l.b16 %v2154
        %v3071 = vunpack.c.l.b16 %v2155
        %v3072 = vunpack.c.l.b16 %v2156
        %v3073 = vunpack.c.l.b16 %v2157
        %v3074 = vunpack.c.l.b16 %v2158
        %v3075 = vunpack.c.l.b16 %v2159
        %v3076 = vunpack.c.l.b16 %v2160
        %v3077 = vunpack.c.l.b16 %v2161
        %v3078 = vunpack.c.l.b16 %v2162
        %v3079 = vunpack.c.l.b16 %v2163
        %v3080 = vunpack.c.l.b16 %v2164
        %v3081 = vunpack.c.l.b16 %v2165
        %v3082 = vunpack.c.l.b16 %v2166
        %v3083 = vunpack.c.l.b16 %v2167
        %v3084 = vunpack.c.l.b16 %v2168
        %v3085 = vunpack.c.l.b16 %v2169
        %v3086 = vunpack.c.l.b16 %v2170
        %v3087 = vunpack.c.l.b16 %v2171
        %v3088 = vunpack.c.l.b16 %v2172
        %v3089 = vunpack.c.l.b16 %v2173
        %v3090 = vunpack.c.l.b16 %v2174
        %v3091 = vunpack.c.l.b16 %v2175
        %v3092 = vunpack.c.l.b16 %v2176
        %v3093 = vunpack.c.l.b16 %v2177
        %v3094 = vunpack.c.l.b16 %v2178
        %v3095 = vunpack.c.l.b16 %v2179
        %v3096 = vunpack.c.l.b16 %v2180
        %v3097 = vunpack.c.l.b16 %v2181
        %v3098 = vunpack.c.l.b16 %v2182
        %v3099 = vunpack.c.l.b16 %v2183
        %v3100 = vunpack.c.l.b16 %v2184
        %v3101 = vunpack.c.l.b16 %v2185
        %v3102 = vunpack.c.l.b16 %v2186
        %v3103 = vunpack.c.l.b16 %v2187
        %v3104 = vunpack.c.l.b16 %v2188
        %v3105 = vunpack.c.l.b16 %v2189
        %v3106 = vunpack.c.l.b16 %v2190
        %v3107 = vunpack.c.l.b16 %v2191
        %v3108 = vunpack.c.l.b16 %v2192
        %v3109 = vunpack.c.l.b16 %v2193
        %v3110 = vunpack.c.l.b16 %v2194
        %v3111 = vunpack.c.l.b16 %v2195
        %v3112 = vunpack.c.l.b16 %v2196
        %v3113 = vunpack.c.l.b16 %v2197
        %v3114 = vunpack.c.l.b16 %v2198
        %v3115 = vunpack.c.l.b16 %v2199
        %v3116 = vunpack.c.l.b16 %v2200
        %v3117 = vunpack.c.l.b16 %v2201
        %v3118 = vunpack.c.l.b16 %v2202
        %v3119 = vunpack.c.l.b16 %v2203
        %v3120 = vunpack.c.l.b16 %v2204
        %v3121 = vunpack.c.l.b16 %v2205
        %v3122 = vunpack.c.l.b16 %v2206
        %v3123 = vunpack.c.l.b16 %v2207
        %v3124 = vunpack.c.l.b16 %v2208
        %v3125 = vunpack.c.l.b16 %v2209
        %v3126 = vunpack.c.l.b16 %v2210
        %v3127 = vunpack.c.l.b16 %v2211
        %v3128 = vunpack.c.l.b16 %v2212
        %v3129 = vunpack.c.l.b16 %v2213
        %v3130 = vunpack.c.l.b16 %v2214
        %v3131 = vunpack.c.l.b16 %v2215
        %v3132 = vunpack.c.l.b16 %v2216
        %v3133 = vunpack.c.l.b16 %v2217
        %v3134 = vunpack.c.l.b16 %v2218
        %v3135 = vunpack.c.l.b16 %v2219
        %v3136 = vunpack.c.l.b16 %v2220
        %v3137 = vunpack.c.l.b16 %v2221
        %v3138 = vunpack.c.l.b16 %v2222
        %v3139 = vunpack.c.l.b16 %v2223
        %v3140 = vunpack.c.l.b16 %v2224
        %v3141 = vunpack.c.l.b16 %v2225
        %v3142 = vunpack.c.l.b16 %v2226
        %v3143 = vunpack.c.l.b16 %v2227
        %v3144 = vunpack.c.l.b16 %v2228
        %v3145 = vunpack.c.l.b16 %v2229
        %v3146 = vunpack.c.l.b16 %v2230
        %v3147 = vunpack.c.l.b16 %v2231
        %v3148 = vunpack.c.l.b16 %v2232
        %v3149 = vunpack.c.l.b16 %v2233
        %v3150 = vunpack.c.l.b16 %v2234
        %v3151 = vunpack.c.l.b16 %v2235
        %v3152 = vunpack.c.l.b16 %v2236
        %v3153 = vunpack.c.l.b16 %v2237
        %v3154 = vunpack.c.l.b16 %v2238
        %v3155 = vunpack.c.l.b16 %v2239
        %v3156 = vunpack.c.l.b16 %v2240
        %v3157 = vunpack.c.l.b16 %v2241
        %v3158 = vunpack.c.l.b16 %v2242
        %v3159 = vunpack.c.l.b16 %v2243
        %v3160 = vunpack.c.l.b16 %v2244
        %v3161 = vunpack.c.l.b16 %v2245
        %v3162 = vunpack.c.l.b16 %v2246
        %v3163 = vunpack.c.l.b16 %v2247
        %v3164 = vunpack.c.l.b16 %v2248
        %v3165 = vunpack.c.l.b16 %v2249
        %v3166 = vunpack.c.l.b16 %v2250
        %v3167 = vunpack.c.l.b16 %v2251
        %v3168 = vunpack.c.l.b16 %v2252
        %v3169 = vunpack.c.l.b16 %v2253
        %v3170 = vunpack.c.l.b16 %v2254
        %v3171 = vunpack.c.l.b16 %v2255
        %v3172 = vunpack.c.l.b16 %v2256
        %v3173 = vunpack.c.l.b16 %v2257
        %v3174 = vunpack.c.l.b16 %v2258
        %v3175 = vunpack.c.l.b16 %v2259
        %v3176 = vunpack.c.l.b16 %v2260
        %v3177 = vunpack.c.l.b16 %v2261
        %v3178 = vunpack.c.l.b16 %v2262
        %v3179 = vunpack.c.l.b16 %v2263
        %v3180 = vunpack.c.l.b16 %v2264
        %v3181 = vunpack.c.l.b16 %v2265
        %v3182 = vunpack.c.l.b16 %v2266
        %v3183 = vunpack.c.l.b16 %v2267
        %v3184 = vunpack.c.l.b16 %v2268
        %v3185 = vunpack.c.l.b16 %v2269
        %v3186 = vunpack.c.l.b16 %v2270
        %v3187 = vunpack.c.l.b16 %v2271
        %v3188 = vunpack.c.l.b16 %v2272
        %v3189 = vunpack.c.l.b16 %v2273
        %v3190 = vunpack.c.l.b16 %v2274
        %v3191 = vunpack.c.l.b16 %v2275
        %v3192 = vunpack.c.l.b16 %v2276
        %v3193 = vunpack.c.l.b16 %v2277
        %v3194 = vunpack.c.l.b16 %v2278
        %v3195 = vunpack.c.l.b16 %v2279
        %v3196 = vunpack.c.l.b16 %v2280
        %v3197 = vunpack.c.l.b16 %v2281
        %v3198 = vunpack.c.l.b16 %v2282
        %v3199 = vunpack.c.l.b16 %v2283
        %v3200 = vunpack.c.l.b16 %v2284
        %v3201 = vunpack.c.l.b16 %v2285
        %v3202 = vunpack.c.l.b16 %v2286
        %v3203 = vunpack.c.l.b16 %v2287
        %v3204 = vunpack.c.l.b16 %v2288
        %v3205 = vunpack.c.l.b16 %v2289
        %v3206 = vunpack.c.l.b16 %v2290
        %v3207 = vunpack.c.l.b16 %v2291
        %v3208 = vunpack.c.l.b16 %v2292
        %v3209 = vunpack.c.l.b16 %v2293
        %v3210 = vpack.c.b16 %v2819, %v2818
        %v3211 = vpack.c.b16 %v2821, %v2820
        %v3212 = vpack.c.b16 %v2823, %v2822
        %v3213 = vpack.c.b16 %v2825, %v2824
        %v3214 = vpack.c.b16 %v2827, %v2826
        %v3215 = vpack.c.b16 %v2829, %v2828
        %v3216 = vpack.c.b16 %v2831, %v2830
        %v3217 = vpack.c.b16 %v2833, %v2832
        %v3218 = vpack.c.b16 %v2835, %v2834
        %v3219 = vpack.c.b16 %v2837, %v2836
        %v3220 = vpack.c.b16 %v2839, %v2838
        %v3221 = vpack.c.b16 %v2841, %v2840
        %v3222 = vpack.c.b16 %v2843, %v2842
        %v3223 = vpack.c.b16 %v2845, %v2844
        %v3224 = vpack.c.b16 %v2847, %v2846
        %v3225 = vpack.c.b16 %v2849, %v2848
        %v3226 = vpack.c.b16 %v2851, %v2850
        %v3227 = vpack.c.b16 %v2853, %v2852
        %v3228 = vpack.c.b16 %v2855, %v2854
        %v3229 = vpack.c.b16 %v2857, %v2856
        %v3230 = vpack.c.b16 %v2859, %v2858
        %v3231 = vpack.c.b16 %v2861, %v2860
        %v3232 = vpack.c.b16 %v2863, %v2862
        %v3233 = vpack.c.b16 %v2865, %v2864
        %v3234 = vpack.c.b16 %v2867, %v2866
        %v3235 = vpack.c.b16 %v2869, %v2868
        %v3236 = vpack.c.b16 %v2871, %v2870
        %v3237 = vpack.c.b16 %v2873, %v2872
        %v3238 = vpack.c.b16 %v2875, %v2874
        %v3239 = vpack.c.b16 %v2877, %v2876
        %v3240 = vpack.c.b16 %v2879, %v2878
        %v3241 = vpack.c.b16 %v2881, %v2880
        %v3242 = vpack.c.b16 %v2883, %v2882
        %v3243 = vpack.c.b16 %v2885, %v2884
        %v3244 = vpack.c.b16 %v2887, %v2886
        %v3245 = vpack.c.b16 %v2889, %v2888
        %v3246 = vpack.c.b16 %v2891, %v2890
        %v3247 = vpack.c.b16 %v2893, %v2892
        %v3248 = vpack.c.b16 %v2895, %v2894
        %v3249 = vpack.c.b16 %v2897, %v2896
        %v3250 = vpack.c.b16 %v2899, %v2898
        %v3251 = vpack.c.b16 %v2901, %v2900
        %v3252 = vpack.c.b16 %v2903, %v2902
        %v3253 = vpack.c.b16 %v2905, %v2904
        %v3254 = vpack.c.b16 %v2907, %v2906
        %v3255 = vpack.c.b16 %v2909, %v2908
        %v3256 = vpack.c.b16 %v2911, %v2910
        %v3257 = vpack.c.b16 %v2913, %v2912
        %v3258 = vpack.c.b16 %v2915, %v2914
        %v3259 = vpack.c.b16 %v2917, %v2916
        %v3260 = vpack.c.b16 %v2919, %v2918
        %v3261 = vpack.c.b16 %v2921, %v2920
        %v3262 = vpack.c.b16 %v2923, %v2922
        %v3263 = vpack.c.b16 %v2925, %v2924
        %v3264 = vpack.c.b16 %v2927, %v2926
        %v3265 = vpack.c.b16 %v2929, %v2928
        %v3266 = vpack.c.b16 %v2931, %v2930
        %v3267 = vpack.c.b16 %v2933, %v2932
        %v3268 = vpack.c.b16 %v2935, %v2934
        %v3269 = vpack.c.b16 %v2937, %v2936
        %v3270 = vpack.c.b16 %v2939, %v2938
        %v3271 = vpack.c.b16 %v2941, %v2940
        %v3272 = vpack.c.b16 %v2943, %v2942
        %v3273 = vpack.c.b16 %v2945, %v2944
        %v3274 = vpack.c.b16 %v2947, %v2946
        %v3275 = vpack.c.b16 %v2949, %v2948
        %v3276 = vpack.c.b16 %v2951, %v2950
        %v3277 = vpack.c.b16 %v2953, %v2952
        %v3278 = vpack.c.b16 %v2955, %v2954
        %v3279 = vpack.c.b16 %v2957, %v2956
        %v3280 = vpack.c.b16 %v2959, %v2958
        %v3281 = vpack.c.b16 %v2961, %v2960
        %v3282 = vpack.c.b16 %v2963, %v2962
        %v3283 = vpack.c.b16 %v2965, %v2964
        %v3284 = vpack.c.b16 %v2967, %v2966
        %v3285 = vpack.c.b16 %v2969, %v2968
        %v3286 = vpack.c.b16 %v2971, %v2970
        %v3287 = vpack.c.b16 %v2973, %v2972
        %v3288 = vpack.c.b16 %v2975, %v2974
        %v3289 = vpack.c.b16 %v2977, %v2976
        %v3290 = vpack.c.b16 %v2979, %v2978
        %v3291 = vpack.c.b16 %v2981, %v2980
        %v3292 = vpack.c.b16 %v2983, %v2982
        %v3293 = vpack.c.b16 %v2985, %v2984
        %v3294 = vpack.c.b16 %v2987, %v2986
        %v3295 = vpack.c.b16 %v2989, %v2988
        %v3296 = vpack.c.b16 %v2991, %v2990
        %v3297 = vpack.c.b16 %v2993, %v2992
        %v3298 = vpack.c.b16 %v2995, %v2994
        %v3299 = vpack.c.b16 %v2997, %v2996
        %v3300 = vpack.c.b16 %v2999, %v2998
        %v3301 = vpack.c.b16 %v3001, %v3000
        %v3302 = vpack.c.b16 %v3003, %v3002
        %v3303 = vpack.c.b16 %v3005, %v3004
        %v3304 = vpack.c.b16 %v3007, %v3006
        %v3305 = vpack.c.b16 %v3009, %v3008
        %v3306 = vpack.c.b16 %v3011, %v3010
        %v3307 = vpack.c.b16 %v3013, %v3012
        %v3308 = vpack.c.b16 %v3015, %v3014
        %v3309 = vpack.c.b16 %v3017, %v3016
        %v3310 = vpack.c.b16 %v3019, %v3018
        %v3311 = vpack.c.b16 %v3021, %v3020
        %v3312 = vpack.c.b16 %v3023, %v3022
        %v3313 = vpack.c.b16 %v3025, %v3024
        %v3314 = vpack.c.b16 %v3027, %v3026
        %v3315 = vpack.c.b16 %v3029, %v3028
        %v3316 = vpack.c.b16 %v3031, %v3030
        %v3317 = vpack.c.b16 %v3033, %v3032
        %v3318 = vpack.c.b16 %v3035, %v3034
        %v3319 = vpack.c.b16 %v3037, %v3036
        %v3320 = vpack.c.b16 %v3039, %v3038
        %v3321 = vpack.c.b16 %v3041, %v3040
        %v3322 = vpack.c.b16 %v3043, %v3042
        %v3323 = vpack.c.b16 %v3045, %v3044
        %v3324 = vpack.c.b16 %v3047, %v3046
        %v3325 = vpack.c.b16 %v3049, %v3048
        %v3326 = vpack.c.b16 %v3051, %v3050
        %v3327 = vpack.c.b16 %v3053, %v3052
        %v3328 = vpack.c.b16 %v3055, %v3054
        %v3329 = vpack.c.b16 %v3057, %v3056
        %v3330 = vpack.c.b16 %v3059, %v3058
        %v3331 = vpack.c.b16 %v3061, %v3060
        %v3332 = vpack.c.b16 %v3063, %v3062
        %v3333 = vpack.c.b16 %v3065, %v3064
        %v3334 = vpack.c.b16 %v3067, %v3066
        %v3335 = vpack.c.b16 %v3069, %v3068
        %v3336 = vpack.c.b16 %v3071, %v3070
        %v3337 = vpack.c.b16 %v3073, %v3072
        %v3338 = vpack.c.b16 %v3075, %v3074
        %v3339 = vpack.c.b16 %v3077, %v3076
        %v3340 = vpack.c.b16 %v3079, %v3078
        %v3341 = vpack.c.b16 %v3081, %v3080
        %v3342 = vpack.c.b16 %v3083, %v3082
        %v3343 = vpack.c.b16 %v3085, %v3084
        %v3344 = vpack.c.b16 %v3087, %v3086
        %v3345 = vpack.c.b16 %v3089, %v3088
        %v3346 = vpack.c.b16 %v3091, %v3090
        %v3347 = vpack.c.b16 %v3093, %v3092
        %v3348 = vpack.c.b16 %v3095, %v3094
        %v3349 = vpack.c.b16 %v3097, %v3096
        %v3350 = vpack.c.b16 %v3099, %v3098
        %v3351 = vpack.c.b16 %v3101, %v3100
        %v3352 = vpack.c.b16 %v3103, %v3102
        %v3353 = vpack.c.b16 %v3105, %v3104
        %v3354 = vpack.c.b16 %v3107, %v3106
        %v3355 = vpack.c.b16 %v3109, %v3108
        %v3356 = vpack.c.b16 %v3111, %v3110
        %v3357 = vpack.c.b16 %v3113, %v3112
        %v3358 = vpack.c.b16 %v3115, %v3114
        %v3359 = vpack.c.b16 %v3117, %v3116
        %v3360 = vpack.c.b16 %v3119, %v3118
        %v3361 = vpack.c.b16 %v3121, %v3120
        %v3362 = vpack.c.b16 %v3123, %v3122
        %v3363 = vpack.c.b16 %v3125, %v3124
        %v3364 = vpack.c.b16 %v3127, %v3126
        %v3365 = vpack.c.b16 %v3129, %v3128
        %v3366 = vpack.c.b16 %v3131, %v3130
        %v3367 = vpack.c.b16 %v3133, %v3132
        %v3368 = vpack.c.b16 %v3135, %v3134
        %v3369 = vpack.c.b16 %v3137, %v3136
        %v3370 = vpack.c.b16 %v3139, %v3138
        %v3371 = vpack.c.b16 %v3141, %v3140
        %v3372 = vpack.c.b16 %v3143, %v3142
        %v3373 = vpack.c.b16 %v3145, %v3144
        %v3374 = vpack.c.b16 %v3147, %v3146
        %v3375 = vpack.c.b16 %v3149, %v3148
        %v3376 = vpack.c.b16 %v3151, %v3150
        %v3377 = vpack.c.b16 %v3153, %v3152
        %v3378 = vpack.c.b16 %v3155, %v3154
        %v3379 = vpack.c.b16 %v3157, %v3156
        %v3380 = vpack.c.b16 %v3159, %v3158
        %v3381 = vpack.c.b16 %v3161, %v3160
        %v3382 = vpack.c.b16 %v3163, %v3162
        %v3383 = vpack.c.b16 %v3165, %v3164
        %v3384 = vpack.c.b16 %v3167, %v3166
        %v3385 = vpack.c.b16 %v3169, %v3168
        %v3386 = vpack.c.b16 %v3171, %v3170
        %v3387 = vpack.c.b16 %v3173, %v3172
        %v3388 = vpack.c.b16 %v3175, %v3174
        %v3389 = vpack.c.b16 %v3177, %v3176
        %v3390 = vpack.c.b16 %v3179, %v3178
        %v3391 = vpack.c.b16 %v3181, %v3180
        %v3392 = vpack.c.b16 %v3183, %v3182
        %v3393 = vpack.c.b16 %v3185, %v3184
        %v3394 = vpack.c.b16 %v3187, %v3186
        %v3395 = vpack.c.b16 %v3189, %v3188
        %v3396 = vpack.c.b16 %v3191, %v3190
        %v3397 = vpack.c.b16 %v3193, %v3192
        %v3398 = vpack.c.b16 %v3195, %v3194
        %v3399 = vpack.c.b16 %v3197, %v3196
        %v3400 = vpack.c.b16 %v3199, %v3198
        %v3401 = vpack.c.b16 %v3201, %v3200
        %v3402 = vpack.c.b16 %v3203, %v3202
        %v3403 = vpack.c.b16 %v3205, %v3204
        %v3404 = vpack.c.b16 %v3207, %v3206
        %v3405 = vpack.c.b16 %v3209, %v3208
        %vm3602 = vcmask 523264
        %v3604 = vsel %vm3602, %v2401, 0
        %3606 = vmatprep.subr.bf16.mxu0 0
        %3607 = vmatpush1.bf16.msra.mxu0 %v3217
        %3608 = vmatprep.subr.bf16.mxu0 0
        %3609 = vmatpush1.bf16.msra.mxu0 %v3216
        %3610 = vmatprep.subr.bf16.mxu0 0
        %3611 = vmatpush1.bf16.msra.mxu0 %v3215
        %3612 = vmatprep.subr.bf16.mxu0 0
        %3613 = vmatpush1.bf16.msra.mxu0 %v3214
        %3614 = vmatprep.subr.bf16.mxu0 0
        %3615 = vmatpush1.bf16.msra.mxu0 %v3213
        %3616 = vmatprep.subr.bf16.mxu0 0
        %3617 = vmatpush1.bf16.msra.mxu0 %v3212
        %3618 = vmatprep.subr.bf16.mxu0 0
        %3619 = vmatpush1.bf16.msra.mxu0 %v3211
        %3620 = vmatprep.subr.bf16.mxu0 0
        %3621 = vmatpush1.bf16.msra.mxu0 %v3210
        %3622 = vmatprep.subr.bf16.mxu0 0
        %3623 = vmatpush2.bf16.msra.mxu0 %v3225
        %3624 = vmatprep.subr.bf16.mxu0 0
        %3625 = vmatpush2.bf16.msra.mxu0 %v3224
        %3626 = vmatprep.subr.bf16.mxu0 0
        %3627 = vmatpush2.bf16.msra.mxu0 %v3223
        %3628 = vmatprep.subr.bf16.mxu0 0
        %3629 = vmatpush2.bf16.msra.mxu0 %v3222
        %3630 = vmatprep.subr.bf16.mxu0 0
        %3631 = vmatpush2.bf16.msra.mxu0 %v3221
        %3632 = vmatprep.subr.bf16.mxu0 0
        %3633 = vmatpush2.bf16.msra.mxu0 %v3220
        %3634 = vmatprep.subr.bf16.mxu0 0
        %3635 = vmatpush2.bf16.msra.mxu0 %v3219
        %3636 = vmatprep.subr.bf16.mxu0 0
        %3637 = vmatpush2.bf16.msra.mxu0 %v3218
        %3638 = vmatprep.mubr.bf16.mxu0 %v2378
        %3639 = vmatmul.mubr.bf16.gmra.mxu0 %v2377
        %v3640 = vpop.f32.mrf.mxu0
        %v3641 = vadd.f32 %v2299, %v3640
        %v3642 = vpop.f32.mrf.mxu0
        %v3643 = vpop.f32.mrf.mxu0
        %v3644 = vadd.f32 %v2299, %v3643
        %v3645 = vpop.f32.mrf.mxu0
        %3646 = vdwg.mxu0
        %3647 = vmatprep.subr.bf16.mxu0 0
        %3648 = vmatpush1.bf16.msra.mxu0 %v3233
        %3649 = vmatprep.subr.bf16.mxu0 0
        %3650 = vmatpush1.bf16.msra.mxu0 %v3232
        %3651 = vmatprep.subr.bf16.mxu0 0
        %3652 = vmatpush1.bf16.msra.mxu0 %v3231
        %3653 = vmatprep.subr.bf16.mxu0 0
        %3654 = vmatpush1.bf16.msra.mxu0 %v3230
        %3655 = vmatprep.subr.bf16.mxu0 0
        %3656 = vmatpush1.bf16.msra.mxu0 %v3229
        %3657 = vmatprep.subr.bf16.mxu0 0
        %3658 = vmatpush1.bf16.msra.mxu0 %v3228
        %3659 = vmatprep.subr.bf16.mxu0 0
        %3660 = vmatpush1.bf16.msra.mxu0 %v3227
        %3661 = vmatprep.subr.bf16.mxu0 0
        %3662 = vmatpush1.bf16.msra.mxu0 %v3226
        %3663 = vmatprep.subr.bf16.mxu0 0
        %3664 = vmatpush2.bf16.msra.mxu0 %v3241
        %3665 = vmatprep.subr.bf16.mxu0 0
        %3666 = vmatpush2.bf16.msra.mxu0 %v3240
        %3667 = vmatprep.subr.bf16.mxu0 0
        %3668 = vmatpush2.bf16.msra.mxu0 %v3239
        %3669 = vmatprep.subr.bf16.mxu0 0
        %3670 = vmatpush2.bf16.msra.mxu0 %v3238
        %3671 = vmatprep.subr.bf16.mxu0 0
        %3672 = vmatpush2.bf16.msra.mxu0 %v3237
        %3673 = vmatprep.subr.bf16.mxu0 0
        %3674 = vmatpush2.bf16.msra.mxu0 %v3236
        %3675 = vmatprep.subr.bf16.mxu0 0
        %3676 = vmatpush2.bf16.msra.mxu0 %v3235
        %3677 = vmatprep.subr.bf16.mxu0 0
        %3678 = vmatpush2.bf16.msra.mxu0 %v3234
        %3679 = vmatprep.mubr.bf16.mxu0 %v2380
        %3680 = vmatmul.mubr.bf16.gmra.mxu0 %v2379
        %v3681 = vpop.f32.mrf.mxu0
        %v3682 = vadd.f32 %v3641, %v3681
        %v3683 = vpop.f32.mrf.mxu0
        %v3684 = vpop.f32.mrf.mxu0
        %v3685 = vadd.f32 %v3644, %v3684
        %v3686 = vpop.f32.mrf.mxu0
        %3687 = vdwg.mxu0
        %3688 = vmatprep.subr.bf16.mxu0 0
        %3689 = vmatpush1.bf16.msra.mxu0 %v3249
        %3690 = vmatprep.subr.bf16.mxu0 0
        %3691 = vmatpush1.bf16.msra.mxu0 %v3248
        %3692 = vmatprep.subr.bf16.mxu0 0
        %3693 = vmatpush1.bf16.msra.mxu0 %v3247
        %3694 = vmatprep.subr.bf16.mxu0 0
        %3695 = vmatpush1.bf16.msra.mxu0 %v3246
        %3696 = vmatprep.subr.bf16.mxu0 0
        %3697 = vmatpush1.bf16.msra.mxu0 %v3245
        %3698 = vmatprep.subr.bf16.mxu0 0
        %3699 = vmatpush1.bf16.msra.mxu0 %v3244
        %3700 = vmatprep.subr.bf16.mxu0 0
        %3701 = vmatpush1.bf16.msra.mxu0 %v3243
        %3702 = vmatprep.subr.bf16.mxu0 0
        %3703 = vmatpush1.bf16.msra.mxu0 %v3242
        %3704 = vmatprep.subr.bf16.mxu0 0
        %3705 = vmatpush2.bf16.msra.mxu0 %v3257
        %3706 = vmatprep.subr.bf16.mxu0 0
        %3707 = vmatpush2.bf16.msra.mxu0 %v3256
        %3708 = vmatprep.subr.bf16.mxu0 0
        %3709 = vmatpush2.bf16.msra.mxu0 %v3255
        %3710 = vmatprep.subr.bf16.mxu0 0
        %3711 = vmatpush2.bf16.msra.mxu0 %v3254
        %3712 = vmatprep.subr.bf16.mxu0 0
        %3713 = vmatpush2.bf16.msra.mxu0 %v3253
        %3714 = vmatprep.subr.bf16.mxu0 0
        %3715 = vmatpush2.bf16.msra.mxu0 %v3252
        %3716 = vmatprep.subr.bf16.mxu0 0
        %3717 = vmatpush2.bf16.msra.mxu0 %v3251
        %3718 = vmatprep.subr.bf16.mxu0 0
        %3719 = vmatpush2.bf16.msra.mxu0 %v3250
        %3720 = vmatprep.mubr.bf16.mxu0 %v2382
        %3721 = vmatmul.mubr.bf16.gmra.mxu0 %v2381
        %v3722 = vpop.f32.mrf.mxu0
        %v3723 = vadd.f32 %v3682, %v3722
        %v3724 = vpop.f32.mrf.mxu0
        %v3725 = vpop.f32.mrf.mxu0
        %v3726 = vadd.f32 %v3685, %v3725
        %v3727 = vpop.f32.mrf.mxu0
        %3728 = vdwg.mxu0
        %3729 = vmatprep.subr.bf16.mxu0 0
        %3730 = vmatpush1.bf16.msra.mxu0 %v3265
        %3731 = vmatprep.subr.bf16.mxu0 0
        %3732 = vmatpush1.bf16.msra.mxu0 %v3264
        %3733 = vmatprep.subr.bf16.mxu0 0
        %3734 = vmatpush1.bf16.msra.mxu0 %v3263
        %3735 = vmatprep.subr.bf16.mxu0 0
        %3736 = vmatpush1.bf16.msra.mxu0 %v3262
        %3737 = vmatprep.subr.bf16.mxu0 0
        %3738 = vmatpush1.bf16.msra.mxu0 %v3261
        %3739 = vmatprep.subr.bf16.mxu0 0
        %3740 = vmatpush1.bf16.msra.mxu0 %v3260
        %3741 = vmatprep.subr.bf16.mxu0 0
        %3742 = vmatpush1.bf16.msra.mxu0 %v3259
        %3743 = vmatprep.subr.bf16.mxu0 0
        %3744 = vmatpush1.bf16.msra.mxu0 %v3258
        %3745 = vmatprep.subr.bf16.mxu0 0
        %3746 = vmatpush2.bf16.msra.mxu0 %v3273
        %3747 = vmatprep.subr.bf16.mxu0 0
        %3748 = vmatpush2.bf16.msra.mxu0 %v3272
        %3749 = vmatprep.subr.bf16.mxu0 0
        %3750 = vmatpush2.bf16.msra.mxu0 %v3271
        %3751 = vmatprep.subr.bf16.mxu0 0
        %3752 = vmatpush2.bf16.msra.mxu0 %v3270
        %3753 = vmatprep.subr.bf16.mxu0 0
        %3754 = vmatpush2.bf16.msra.mxu0 %v3269
        %3755 = vmatprep.subr.bf16.mxu0 0
        %3756 = vmatpush2.bf16.msra.mxu0 %v3268
        %3757 = vmatprep.subr.bf16.mxu0 0
        %3758 = vmatpush2.bf16.msra.mxu0 %v3267
        %3759 = vmatprep.subr.bf16.mxu0 0
        %3760 = vmatpush2.bf16.msra.mxu0 %v3266
        %3761 = vmatprep.mubr.bf16.mxu0 %v2384
        %3762 = vmatmul.mubr.bf16.gmra.mxu0 %v2383
        %v3763 = vpop.f32.mrf.mxu0
        %v3764 = vadd.f32 %v3723, %v3763
        %v3765 = vpop.f32.mrf.mxu0
        %v3766 = vpop.f32.mrf.mxu0
        %v3767 = vadd.f32 %v3726, %v3766
        %v3768 = vpop.f32.mrf.mxu0
        %3769 = vdwg.mxu0
        %3770 = vmatprep.subr.bf16.mxu0 0
        %3771 = vmatpush1.bf16.msra.mxu0 %v3281
        %3772 = vmatprep.subr.bf16.mxu0 0
        %3773 = vmatpush1.bf16.msra.mxu0 %v3280
        %3774 = vmatprep.subr.bf16.mxu0 0
        %3775 = vmatpush1.bf16.msra.mxu0 %v3279
        %3776 = vmatprep.subr.bf16.mxu0 0
        %3777 = vmatpush1.bf16.msra.mxu0 %v3278
        %3778 = vmatprep.subr.bf16.mxu0 0
        %3779 = vmatpush1.bf16.msra.mxu0 %v3277
        %3780 = vmatprep.subr.bf16.mxu0 0
        %3781 = vmatpush1.bf16.msra.mxu0 %v3276
        %3782 = vmatprep.subr.bf16.mxu0 0
        %3783 = vmatpush1.bf16.msra.mxu0 %v3275
        %3784 = vmatprep.subr.bf16.mxu0 0
        %3785 = vmatpush1.bf16.msra.mxu0 %v3274
        %3786 = vmatprep.subr.bf16.mxu0 0
        %3787 = vmatpush2.bf16.msra.mxu0 %v3289
        %3788 = vmatprep.subr.bf16.mxu0 0
        %3789 = vmatpush2.bf16.msra.mxu0 %v3288
        %3790 = vmatprep.subr.bf16.mxu0 0
        %3791 = vmatpush2.bf16.msra.mxu0 %v3287
        %3792 = vmatprep.subr.bf16.mxu0 0
        %3793 = vmatpush2.bf16.msra.mxu0 %v3286
        %3794 = vmatprep.subr.bf16.mxu0 0
        %3795 = vmatpush2.bf16.msra.mxu0 %v3285
        %3796 = vmatprep.subr.bf16.mxu0 0
        %3797 = vmatpush2.bf16.msra.mxu0 %v3284
        %3798 = vmatprep.subr.bf16.mxu0 0
        %3799 = vmatpush2.bf16.msra.mxu0 %v3283
        %3800 = vmatprep.subr.bf16.mxu0 0
        %3801 = vmatpush2.bf16.msra.mxu0 %v3282
        %3802 = vmatprep.mubr.bf16.mxu0 %v2386
        %3803 = vmatmul.mubr.bf16.gmra.mxu0 %v2385
        %v3804 = vpop.f32.mrf.mxu0
        %v3805 = vadd.f32 %v3764, %v3804
        %v3806 = vpop.f32.mrf.mxu0
        %v3807 = vpop.f32.mrf.mxu0
        %v3808 = vadd.f32 %v3767, %v3807
        %v3809 = vpop.f32.mrf.mxu0
        %3810 = vdwg.mxu0
        %3811 = vmatprep.subr.bf16.mxu0 0
        %3812 = vmatpush1.bf16.msra.mxu0 %v3297
        %3813 = vmatprep.subr.bf16.mxu0 0
        %3814 = vmatpush1.bf16.msra.mxu0 %v3296
        %3815 = vmatprep.subr.bf16.mxu0 0
        %3816 = vmatpush1.bf16.msra.mxu0 %v3295
        %3817 = vmatprep.subr.bf16.mxu0 0
        %3818 = vmatpush1.bf16.msra.mxu0 %v3294
        %3819 = vmatprep.subr.bf16.mxu0 0
        %3820 = vmatpush1.bf16.msra.mxu0 %v3293
        %3821 = vmatprep.subr.bf16.mxu0 0
        %3822 = vmatpush1.bf16.msra.mxu0 %v3292
        %3823 = vmatprep.subr.bf16.mxu0 0
        %3824 = vmatpush1.bf16.msra.mxu0 %v3291
        %3825 = vmatprep.subr.bf16.mxu0 0
        %3826 = vmatpush1.bf16.msra.mxu0 %v3290
        %3827 = vmatprep.subr.bf16.mxu0 0
        %3828 = vmatpush2.bf16.msra.mxu0 %v3305
        %3829 = vmatprep.subr.bf16.mxu0 0
        %3830 = vmatpush2.bf16.msra.mxu0 %v3304
        %3831 = vmatprep.subr.bf16.mxu0 0
        %3832 = vmatpush2.bf16.msra.mxu0 %v3303
        %3833 = vmatprep.subr.bf16.mxu0 0
        %3834 = vmatpush2.bf16.msra.mxu0 %v3302
        %3835 = vmatprep.subr.bf16.mxu0 0
        %3836 = vmatpush2.bf16.msra.mxu0 %v3301
        %3837 = vmatprep.subr.bf16.mxu0 0
        %3838 = vmatpush2.bf16.msra.mxu0 %v3300
        %3839 = vmatprep.subr.bf16.mxu0 0
        %3840 = vmatpush2.bf16.msra.mxu0 %v3299
        %3841 = vmatprep.subr.bf16.mxu0 0
        %3842 = vmatpush2.bf16.msra.mxu0 %v3298
        %3843 = vmatprep.mubr.bf16.mxu0 %v2388
        %3844 = vmatmul.mubr.bf16.gmra.mxu0 %v2387
        %v3845 = vpop.f32.mrf.mxu0
        %v3846 = vadd.f32 %v3805, %v3845
        %v3847 = vpop.f32.mrf.mxu0
        %v3848 = vpop.f32.mrf.mxu0
        %v3849 = vadd.f32 %v3808, %v3848
        %v3850 = vpop.f32.mrf.mxu0
        %3851 = vdwg.mxu0
        %3852 = vmatprep.subr.bf16.mxu0 0
        %3853 = vmatpush1.bf16.msra.mxu0 %v3313
        %3854 = vmatprep.subr.bf16.mxu0 0
        %3855 = vmatpush1.bf16.msra.mxu0 %v3312
        %3856 = vmatprep.subr.bf16.mxu0 0
        %3857 = vmatpush1.bf16.msra.mxu0 %v3311
        %3858 = vmatprep.subr.bf16.mxu0 0
        %3859 = vmatpush1.bf16.msra.mxu0 %v3310
        %3860 = vmatprep.subr.bf16.mxu0 0
        %3861 = vmatpush1.bf16.msra.mxu0 %v3309
        %3862 = vmatprep.subr.bf16.mxu0 0
        %3863 = vmatpush1.bf16.msra.mxu0 %v3308
        %3864 = vmatprep.subr.bf16.mxu0 0
        %3865 = vmatpush1.bf16.msra.mxu0 %v3307
        %3866 = vmatprep.subr.bf16.mxu0 0
        %3867 = vmatpush1.bf16.msra.mxu0 %v3306
        %3868 = vmatprep.subr.bf16.mxu0 0
        %3869 = vmatpush2.bf16.msra.mxu0 %v3321
        %3870 = vmatprep.subr.bf16.mxu0 0
        %3871 = vmatpush2.bf16.msra.mxu0 %v3320
        %3872 = vmatprep.subr.bf16.mxu0 0
        %3873 = vmatpush2.bf16.msra.mxu0 %v3319
        %3874 = vmatprep.subr.bf16.mxu0 0
        %3875 = vmatpush2.bf16.msra.mxu0 %v3318
        %3876 = vmatprep.subr.bf16.mxu0 0
        %3877 = vmatpush2.bf16.msra.mxu0 %v3317
        %3878 = vmatprep.subr.bf16.mxu0 0
        %3879 = vmatpush2.bf16.msra.mxu0 %v3316
        %3880 = vmatprep.subr.bf16.mxu0 0
        %3881 = vmatpush2.bf16.msra.mxu0 %v3315
        %3882 = vmatprep.subr.bf16.mxu0 0
        %3883 = vmatpush2.bf16.msra.mxu0 %v3314
        %3884 = vmatprep.mubr.bf16.mxu0 %v2390
        %3885 = vmatmul.mubr.bf16.gmra.mxu0 %v2389
        %v3886 = vpop.f32.mrf.mxu0
        %v3887 = vadd.f32 %v3846, %v3886
        %v3888 = vpop.f32.mrf.mxu0
        %v3889 = vpop.f32.mrf.mxu0
        %v3890 = vadd.f32 %v3849, %v3889
        %v3891 = vpop.f32.mrf.mxu0
        %3892 = vdwg.mxu0
        %3893 = vmatprep.subr.bf16.mxu0 0
        %3894 = vmatpush1.bf16.msra.mxu0 %v3329
        %3895 = vmatprep.subr.bf16.mxu0 0
        %3896 = vmatpush1.bf16.msra.mxu0 %v3328
        %3897 = vmatprep.subr.bf16.mxu0 0
        %3898 = vmatpush1.bf16.msra.mxu0 %v3327
        %3899 = vmatprep.subr.bf16.mxu0 0
        %3900 = vmatpush1.bf16.msra.mxu0 %v3326
        %3901 = vmatprep.subr.bf16.mxu0 0
        %3902 = vmatpush1.bf16.msra.mxu0 %v3325
        %3903 = vmatprep.subr.bf16.mxu0 0
        %3904 = vmatpush1.bf16.msra.mxu0 %v3324
        %3905 = vmatprep.subr.bf16.mxu0 0
        %3906 = vmatpush1.bf16.msra.mxu0 %v3323
        %3907 = vmatprep.subr.bf16.mxu0 0
        %3908 = vmatpush1.bf16.msra.mxu0 %v3322
        %3909 = vmatprep.subr.bf16.mxu0 0
        %3910 = vmatpush2.bf16.msra.mxu0 %v3337
        %3911 = vmatprep.subr.bf16.mxu0 0
        %3912 = vmatpush2.bf16.msra.mxu0 %v3336
        %3913 = vmatprep.subr.bf16.mxu0 0
        %3914 = vmatpush2.bf16.msra.mxu0 %v3335
        %3915 = vmatprep.subr.bf16.mxu0 0
        %3916 = vmatpush2.bf16.msra.mxu0 %v3334
        %3917 = vmatprep.subr.bf16.mxu0 0
        %3918 = vmatpush2.bf16.msra.mxu0 %v3333
        %3919 = vmatprep.subr.bf16.mxu0 0
        %3920 = vmatpush2.bf16.msra.mxu0 %v3332
        %3921 = vmatprep.subr.bf16.mxu0 0
        %3922 = vmatpush2.bf16.msra.mxu0 %v3331
        %3923 = vmatprep.subr.bf16.mxu0 0
        %3924 = vmatpush2.bf16.msra.mxu0 %v3330
        %3925 = vmatprep.mubr.bf16.mxu0 %v2392
        %3926 = vmatmul.mubr.bf16.gmra.mxu0 %v2391
        %v3927 = vpop.f32.mrf.mxu0
        %v3928 = vadd.f32 %v3887, %v3927
        %v3929 = vpop.f32.mrf.mxu0
        %v3930 = vpop.f32.mrf.mxu0
        %v3931 = vadd.f32 %v3890, %v3930
        %v3932 = vpop.f32.mrf.mxu0
        %3933 = vdwg.mxu0
        %3934 = vmatprep.subr.bf16.mxu0 0
        %3935 = vmatpush1.bf16.msra.mxu0 %v3345
        %3936 = vmatprep.subr.bf16.mxu0 0
        %3937 = vmatpush1.bf16.msra.mxu0 %v3344
        %3938 = vmatprep.subr.bf16.mxu0 0
        %3939 = vmatpush1.bf16.msra.mxu0 %v3343
        %3940 = vmatprep.subr.bf16.mxu0 0
        %3941 = vmatpush1.bf16.msra.mxu0 %v3342
        %3942 = vmatprep.subr.bf16.mxu0 0
        %3943 = vmatpush1.bf16.msra.mxu0 %v3341
        %3944 = vmatprep.subr.bf16.mxu0 0
        %3945 = vmatpush1.bf16.msra.mxu0 %v3340
        %3946 = vmatprep.subr.bf16.mxu0 0
        %3947 = vmatpush1.bf16.msra.mxu0 %v3339
        %3948 = vmatprep.subr.bf16.mxu0 0
        %3949 = vmatpush1.bf16.msra.mxu0 %v3338
        %3950 = vmatprep.subr.bf16.mxu0 0
        %3951 = vmatpush2.bf16.msra.mxu0 %v3353
        %3952 = vmatprep.subr.bf16.mxu0 0
        %3953 = vmatpush2.bf16.msra.mxu0 %v3352
        %3954 = vmatprep.subr.bf16.mxu0 0
        %3955 = vmatpush2.bf16.msra.mxu0 %v3351
        %3956 = vmatprep.subr.bf16.mxu0 0
        %3957 = vmatpush2.bf16.msra.mxu0 %v3350
        %3958 = vmatprep.subr.bf16.mxu0 0
        %3959 = vmatpush2.bf16.msra.mxu0 %v3349
        %3960 = vmatprep.subr.bf16.mxu0 0
        %3961 = vmatpush2.bf16.msra.mxu0 %v3348
        %3962 = vmatprep.subr.bf16.mxu0 0
        %3963 = vmatpush2.bf16.msra.mxu0 %v3347
        %3964 = vmatprep.subr.bf16.mxu0 0
        %3965 = vmatpush2.bf16.msra.mxu0 %v3346
        %3966 = vmatprep.mubr.bf16.mxu0 %v2394
        %3967 = vmatmul.mubr.bf16.gmra.mxu0 %v2393
        %v3968 = vpop.f32.mrf.mxu0
        %v3969 = vadd.f32 %v3928, %v3968
        %v3970 = vpop.f32.mrf.mxu0
        %v3971 = vpop.f32.mrf.mxu0
        %v3972 = vadd.f32 %v3931, %v3971
        %v3973 = vpop.f32.mrf.mxu0
        %3974 = vdwg.mxu0
        %3975 = vmatprep.subr.bf16.mxu0 0
        %3976 = vmatpush1.bf16.msra.mxu0 %v3361
        %3977 = vmatprep.subr.bf16.mxu0 0
        %3978 = vmatpush1.bf16.msra.mxu0 %v3360
        %3979 = vmatprep.subr.bf16.mxu0 0
        %3980 = vmatpush1.bf16.msra.mxu0 %v3359
        %3981 = vmatprep.subr.bf16.mxu0 0
        %3982 = vmatpush1.bf16.msra.mxu0 %v3358
        %3983 = vmatprep.subr.bf16.mxu0 0
        %3984 = vmatpush1.bf16.msra.mxu0 %v3357
        %3985 = vmatprep.subr.bf16.mxu0 0
        %3986 = vmatpush1.bf16.msra.mxu0 %v3356
        %3987 = vmatprep.subr.bf16.mxu0 0
        %3988 = vmatpush1.bf16.msra.mxu0 %v3355
        %3989 = vmatprep.subr.bf16.mxu0 0
        %3990 = vmatpush1.bf16.msra.mxu0 %v3354
        %3991 = vmatprep.subr.bf16.mxu0 0
        %3992 = vmatpush2.bf16.msra.mxu0 %v3369
        %3993 = vmatprep.subr.bf16.mxu0 0
        %3994 = vmatpush2.bf16.msra.mxu0 %v3368
        %3995 = vmatprep.subr.bf16.mxu0 0
        %3996 = vmatpush2.bf16.msra.mxu0 %v3367
        %3997 = vmatprep.subr.bf16.mxu0 0
        %3998 = vmatpush2.bf16.msra.mxu0 %v3366
        %3999 = vmatprep.subr.bf16.mxu0 0
        %4000 = vmatpush2.bf16.msra.mxu0 %v3365
        %4001 = vmatprep.subr.bf16.mxu0 0
        %4002 = vmatpush2.bf16.msra.mxu0 %v3364
        %4003 = vmatprep.subr.bf16.mxu0 0
        %4004 = vmatpush2.bf16.msra.mxu0 %v3363
        %4005 = vmatprep.subr.bf16.mxu0 0
        %4006 = vmatpush2.bf16.msra.mxu0 %v3362
        %4007 = vmatprep.mubr.bf16.mxu0 %v2396
        %4008 = vmatmul.mubr.bf16.gmra.mxu0 %v2395
        %v4009 = vpop.f32.mrf.mxu0
        %v4010 = vadd.f32 %v3969, %v4009
        %v4011 = vpop.f32.mrf.mxu0
        %v4012 = vpop.f32.mrf.mxu0
        %v4013 = vadd.f32 %v3972, %v4012
        %v4014 = vpop.f32.mrf.mxu0
        %4015 = vdwg.mxu0
        %4016 = vmatprep.subr.bf16.mxu0 0
        %4017 = vmatpush1.bf16.msra.mxu0 %v3377
        %4018 = vmatprep.subr.bf16.mxu0 0
        %4019 = vmatpush1.bf16.msra.mxu0 %v3376
        %4020 = vmatprep.subr.bf16.mxu0 0
        %4021 = vmatpush1.bf16.msra.mxu0 %v3375
        %4022 = vmatprep.subr.bf16.mxu0 0
        %4023 = vmatpush1.bf16.msra.mxu0 %v3374
        %4024 = vmatprep.subr.bf16.mxu0 0
        %4025 = vmatpush1.bf16.msra.mxu0 %v3373
        %4026 = vmatprep.subr.bf16.mxu0 0
        %4027 = vmatpush1.bf16.msra.mxu0 %v3372
        %4028 = vmatprep.subr.bf16.mxu0 0
        %4029 = vmatpush1.bf16.msra.mxu0 %v3371
        %4030 = vmatprep.subr.bf16.mxu0 0
        %4031 = vmatpush1.bf16.msra.mxu0 %v3370
        %4032 = vmatprep.subr.bf16.mxu0 0
        %4033 = vmatpush2.bf16.msra.mxu0 %v3385
        %4034 = vmatprep.subr.bf16.mxu0 0
        %4035 = vmatpush2.bf16.msra.mxu0 %v3384
        %4036 = vmatprep.subr.bf16.mxu0 0
        %4037 = vmatpush2.bf16.msra.mxu0 %v3383
        %4038 = vmatprep.subr.bf16.mxu0 0
        %4039 = vmatpush2.bf16.msra.mxu0 %v3382
        %4040 = vmatprep.subr.bf16.mxu0 0
        %4041 = vmatpush2.bf16.msra.mxu0 %v3381
        %4042 = vmatprep.subr.bf16.mxu0 0
        %4043 = vmatpush2.bf16.msra.mxu0 %v3380
        %4044 = vmatprep.subr.bf16.mxu0 0
        %4045 = vmatpush2.bf16.msra.mxu0 %v3379
        %4046 = vmatprep.subr.bf16.mxu0 0
        %4047 = vmatpush2.bf16.msra.mxu0 %v3378
        %4048 = vmatprep.mubr.bf16.mxu0 %v2398
        %4049 = vmatmul.mubr.bf16.gmra.mxu0 %v2397
        %v4050 = vpop.f32.mrf.mxu0
        %v4051 = vadd.f32 %v4010, %v4050
        %v4052 = vpop.f32.mrf.mxu0
        %v4053 = vpop.f32.mrf.mxu0
        %v4054 = vadd.f32 %v4013, %v4053
        %v4055 = vpop.f32.mrf.mxu0
        %4056 = vdwg.mxu0
        %4057 = vmatprep.subr.bf16.mxu0 0
        %4058 = vmatpush1.bf16.msra.mxu0 %v3393
        %4059 = vmatprep.subr.bf16.mxu0 0
        %4060 = vmatpush1.bf16.msra.mxu0 %v3392
        %4061 = vmatprep.subr.bf16.mxu0 0
        %4062 = vmatpush1.bf16.msra.mxu0 %v3391
        %4063 = vmatprep.subr.bf16.mxu0 0
        %4064 = vmatpush1.bf16.msra.mxu0 %v3390
        %4065 = vmatprep.subr.bf16.mxu0 0
        %4066 = vmatpush1.bf16.msra.mxu0 %v3389
        %4067 = vmatprep.subr.bf16.mxu0 0
        %4068 = vmatpush1.bf16.msra.mxu0 %v3388
        %4069 = vmatprep.subr.bf16.mxu0 0
        %4070 = vmatpush1.bf16.msra.mxu0 %v3387
        %4071 = vmatprep.subr.bf16.mxu0 0
        %4072 = vmatpush1.bf16.msra.mxu0 %v3386
        %4073 = vmatprep.subr.bf16.mxu0 0
        %4074 = vmatpush2.bf16.msra.mxu0 %v3401
        %4075 = vmatprep.subr.bf16.mxu0 0
        %4076 = vmatpush2.bf16.msra.mxu0 %v3400
        %4077 = vmatprep.subr.bf16.mxu0 0
        %4078 = vmatpush2.bf16.msra.mxu0 %v3399
        %4079 = vmatprep.subr.bf16.mxu0 0
        %4080 = vmatpush2.bf16.msra.mxu0 %v3398
        %4081 = vmatprep.subr.bf16.mxu0 0
        %4082 = vmatpush2.bf16.msra.mxu0 %v3397
        %4083 = vmatprep.subr.bf16.mxu0 0
        %4084 = vmatpush2.bf16.msra.mxu0 %v3396
        %4085 = vmatprep.subr.bf16.mxu0 0
        %4086 = vmatpush2.bf16.msra.mxu0 %v3395
        %4087 = vmatprep.subr.bf16.mxu0 0
        %4088 = vmatpush2.bf16.msra.mxu0 %v3394
        %4089 = vmatprep.mubr.bf16.mxu0 %v2400
        %4090 = vmatmul.mubr.bf16.gmra.mxu0 %v2399
        %v4091 = vpop.f32.mrf.mxu0
        %v4092 = vadd.f32 %v4051, %v4091
        %v4093 = vpop.f32.mrf.mxu0
        %v4094 = vpop.f32.mrf.mxu0
        %v4095 = vadd.f32 %v4054, %v4094
        %v4096 = vpop.f32.mrf.mxu0
        %4097 = vdwg.mxu0
        %4098 = vmatprep.subr.bf16.mxu0 0
        %4099 = vmatpush1.bf16.msra.mxu0 0
        %4100 = vmatprep.subr.bf16.mxu0 0
        %4101 = vmatpush1.bf16.msra.mxu0 0
        %4102 = vmatprep.subr.bf16.mxu0 0
        %4103 = vmatpush1.bf16.msra.mxu0 0
        %4104 = vmatprep.subr.bf16.mxu0 0
        %4105 = vmatpush1.bf16.msra.mxu0 0
        %4106 = vmatprep.subr.bf16.mxu0 0
        %4107 = vmatpush1.bf16.msra.mxu0 %v3405
        %4108 = vmatprep.subr.bf16.mxu0 0
        %4109 = vmatpush1.bf16.msra.mxu0 %v3404
        %4110 = vmatprep.subr.bf16.mxu0 0
        %4111 = vmatpush1.bf16.msra.mxu0 %v3403
        %4112 = vmatprep.subr.bf16.mxu0 0
        %4113 = vmatpush1.bf16.msra.mxu0 %v3402
        %4114 = vmatprep.subr.bf16.mxu0 0
        %4115 = vmatpush2.bf16.msra.mxu0 0
        %4116 = vmatprep.subr.bf16.mxu0 0
        %4117 = vmatpush2.bf16.msra.mxu0 0
        %4118 = vmatprep.subr.bf16.mxu0 0
        %4119 = vmatpush2.bf16.msra.mxu0 0
        %4120 = vmatprep.subr.bf16.mxu0 0
        %4121 = vmatpush2.bf16.msra.mxu0 0
        %4122 = vmatprep.subr.bf16.mxu0 0
        %4123 = vmatpush2.bf16.msra.mxu0 0
        %4124 = vmatprep.subr.bf16.mxu0 0
        %4125 = vmatpush2.bf16.msra.mxu0 0
        %4126 = vmatprep.subr.bf16.mxu0 0
        %4127 = vmatpush2.bf16.msra.mxu0 0
        %4128 = vmatprep.subr.bf16.mxu0 0
        %4129 = vmatpush2.bf16.msra.mxu0 0
        %4130 = vmatprep.mubr.bf16.mxu0 0
        %4131 = vmatmul.mubr.bf16.gmra.mxu0 %v3604
        %v4132 = vpop.f32.mrf.mxu0
        %v4133 = vadd.f32 %v4092, %v4132
        %v4134 = vpop.f32.mrf.mxu0
        %v4135 = vpop.f32.mrf.mxu0
        %v4136 = vadd.f32 %v4095, %v4135
        %v4137 = vpop.f32.mrf.mxu0
        %4138 = vdwg.mxu0
        %4139 = vst [vmem:[%s1853] sm:$0xff] %v4133
        %4140 = vst [vmem:[%s1853 + $0x8] sm:$0xff] %v4136
        %v4141 = vpack.c.bf16 %v4136, %v4133
        %v4142 = vld [vmem:[%s1868] sm:$0xf]
        %v4143 = vld [vmem:[%s1868 + $0x4] sm:$0xf]
        %v4144 = vld [vmem:[%s1868 + $0x8] sm:$0xf]
        %v4145 = vld [vmem:[%s1868 + $0xc] sm:$0xf]
        %v4146 = vld [vmem:[%s1868 + $0x10] sm:$0xf]
        %v4147 = vld [vmem:[%s1868 + $0x14] sm:$0xf]
        %v4148 = vld [vmem:[%s1868 + $0x18] sm:$0xf]
        %v4149 = vld [vmem:[%s1868 + $0x1c] sm:$0xf]
        %v4150 = vld [vmem:[%s1868 + $0x20] sm:$0xf]
        %v4151 = vld [vmem:[%s1868 + $0x24] sm:$0xf]
        %v4152 = vld [vmem:[%s1868 + $0x28] sm:$0xf]
        %v4153 = vld [vmem:[%s1868 + $0x2c] sm:$0xf]
        %v4154 = vld [vmem:[%s1868 + $0x30] sm:$0xf]
        %v4155 = vld [vmem:[%s1868 + $0x34] sm:$0xf]
        %v4156 = vld [vmem:[%s1868 + $0x38] sm:$0xf]
        %v4157 = vld [vmem:[%s1868 + $0x3c] sm:$0xf]
        %v4174 = vunpack.c.l.b16 %v4142
        %v4175 = vunpack.c.l.b16 %v4143
        %v4176 = vunpack.c.l.b16 %v4144
        %v4177 = vunpack.c.l.b16 %v4145
        %v4178 = vunpack.c.l.b16 %v4146
        %v4179 = vunpack.c.l.b16 %v4147
        %v4180 = vunpack.c.l.b16 %v4148
        %v4181 = vunpack.c.l.b16 %v4149
        %v4182 = vunpack.c.l.b16 %v4150
        %v4183 = vunpack.c.l.b16 %v4151
        %v4184 = vunpack.c.l.b16 %v4152
        %v4185 = vunpack.c.l.b16 %v4153
        %v4186 = vunpack.c.l.b16 %v4154
        %v4187 = vunpack.c.l.b16 %v4155
        %v4188 = vunpack.c.l.b16 %v4156
        %v4189 = vunpack.c.l.b16 %v4157
        %v4190 = vpack.c.b16 %v4175, %v4174
        %v4191 = vpack.c.b16 %v4177, %v4176
        %v4192 = vpack.c.b16 %v4179, %v4178
        %v4193 = vpack.c.b16 %v4181, %v4180
        %v4194 = vpack.c.b16 %v4183, %v4182
        %v4195 = vpack.c.b16 %v4185, %v4184
        %v4196 = vpack.c.b16 %v4187, %v4186
        %v4197 = vpack.c.b16 %v4189, %v4188
        %4206 = vmatprep.subr.bf16.mxu0 0
        %4207 = vmatpush1.bf16.msra.mxu0 %v4197
        %4208 = vmatprep.subr.bf16.mxu0 0
        %4209 = vmatpush1.bf16.msra.mxu0 %v4196
        %4210 = vmatprep.subr.bf16.mxu0 0
        %4211 = vmatpush1.bf16.msra.mxu0 %v4195
        %4212 = vmatprep.subr.bf16.mxu0 0
        %4213 = vmatpush1.bf16.msra.mxu0 %v4194
        %4214 = vmatprep.subr.bf16.mxu0 0
        %4215 = vmatpush1.bf16.msra.mxu0 %v4193
        %4216 = vmatprep.subr.bf16.mxu0 0
        %4217 = vmatpush1.bf16.msra.mxu0 %v4192
        %4218 = vmatprep.subr.bf16.mxu0 0
        %4219 = vmatpush1.bf16.msra.mxu0 %v4191
        %4220 = vmatprep.subr.bf16.mxu0 0
        %4221 = vmatpush1.bf16.msra.mxu0 %v4190
        %4222 = vmatprep.subr.bf16.mxu0 0
        %4223 = vmatpush2.bf16.msra.mxu0 0
        %4224 = vmatprep.subr.bf16.mxu0 0
        %4225 = vmatpush2.bf16.msra.mxu0 0
        %4226 = vmatprep.subr.bf16.mxu0 0
        %4227 = vmatpush2.bf16.msra.mxu0 0
        %4228 = vmatprep.subr.bf16.mxu0 0
        %4229 = vmatpush2.bf16.msra.mxu0 0
        %4230 = vmatprep.subr.bf16.mxu0 0
        %4231 = vmatpush2.bf16.msra.mxu0 0
        %4232 = vmatprep.subr.bf16.mxu0 0
        %4233 = vmatpush2.bf16.msra.mxu0 0
        %4234 = vmatprep.subr.bf16.mxu0 0
        %4235 = vmatpush2.bf16.msra.mxu0 0
        %4236 = vmatprep.subr.bf16.mxu0 0
        %4237 = vmatpush2.bf16.msra.mxu0 0
        %4238 = vmatprep.mubr.bf16.mxu0 0
        %4239 = vmatmul.mubr.bf16.gmra.mxu0 %v4141
        %v4240 = vpop.f32.mrf.mxu0
        %v4241 = vadd.f32 0.0, %v4240
        %v4242 = vpop.f32.mrf.mxu0
        %v4243 = vpop.f32.mrf.mxu0
        %v4244 = vadd.f32 0.0, %v4243
        %v4245 = vpop.f32.mrf.mxu0
        %4246 = vdwg.mxu0
        %4247 = vst [vmem:[%s1874] sm:$0xff] %v4241
        %4248 = vst [vmem:[%s1874 + $0x8] sm:$0xff] %v4244
        %s4249 = sand.u32 %s124, 1
        %s4250 = sand.u32 %s124, 1
        %s4251 = smul.addr %s4250, 16
        %s4252 = scalar_lea.vmem [#allocation3], %s4251
        %p4253 = scmp.lt.s32.totalorder %s17, 1
        %s4254 = scalar_select %p4253, %s17, 1
        %s4255 = smul.addr %s4254, 2
        %s4256 = smul.addr %s4255, 8
        %s4257 = scalar_lea.vmem %s5, %s4256
        // Predicated region
        $region78: #{mnist_cnn_forward.5} parent=72 // pred_check
          %p4258 = pneg %p134
        $region79: #{mnist_cnn_forward.5} parent=72 // pred_check_branch
          %4260 = sbr.rel (%p4258) target = $region81
        $region80: #{mnist_cnn_forward.5} parent=72 // pred_region
          %s4261 = smul.addr %s17, 8
          %s4262 = scalar_lea.vmem %s4, %s4261
          // Predicated region
          $region82: #{mnist_cnn_forward.5} parent=80 // pred_check
            _
          $region83: #{mnist_cnn_forward.5} parent=80 // pred_check_branch
            %4264 = sbr.rel (0) target = $region85
          $region84: #{mnist_cnn_forward.5} parent=80 // pred_region
            // Predicated region
            $region86: #{mnist_cnn_forward.5} parent=84 // pred_check
              _
            $region87: #{mnist_cnn_forward.5} parent=84 // pred_check_branch
              %4266 = sbr.rel (0) target = $region89
            $region88: #{mnist_cnn_forward.5} parent=84 // pred_region
              // Predicated region
              $region101: #{mnist_cnn_forward.5} parent=88 // pred_check
                _
              $region102: #{mnist_cnn_forward.5} parent=88 // pred_check_branch
                %4284 = sbr.rel (0) target = $region104
              $region103: #{mnist_cnn_forward.5} parent=88 // pred_region
                loop: start=0, step=1, limit=1
                $region105: #{mnist_cnn_forward.5} parent=103 // loop_pre_header
                  _
                $region106: #{mnist_cnn_forward.5} parent=103 // loop_header
                  %s4286 = sphi 0, %s4290
                  %p4287 = scmp.ge.s32.totalorder %s4286, 1
                  %s4291 = sphi %s4252, %s4252
                  %s4292 = sphi %s4262, %s4262
                $region107: #{mnist_cnn_forward.5} parent=103 // loop_header_branch
                  %4289 = sbr.rel (%p4287) target = $region111
                $region108: #{mnist_cnn_forward.5} parent=103 // loop_body
                  %v4293 = vld [vmem:[%s4291] sm:$0xff]
                  %4294 = vst [vmem:[%s4292] sm:$0xff] %v4293
                  %v4295 = vld [vmem:[%s4291 + $0x8] sm:$0xff]
                  %4296 = vst [vmem:[%s4292 + $0x10] sm:$0xff] %v4295
                $region109: #{mnist_cnn_forward.5} parent=103 // loop_footer
                  %s4290 = sadd.s32 1, %s4286
                $region110: #{mnist_cnn_forward.5} parent=103 // loop_footer_branch
                  %4285 = sbr.rel target = $region106
                $region111: #{mnist_cnn_forward.5} parent=103 // loop_exit
                  _
              $region104: #{mnist_cnn_forward.5} parent=88 // pred_fallthru
                _
              // Predicated region
              $region112: #{mnist_cnn_forward.5} parent=88 // pred_check
                _
              $region113: #{mnist_cnn_forward.5} parent=88 // pred_check_branch
                %4298 = sbr.rel target = $region115
              $region114: #{mnist_cnn_forward.5} parent=88 // pred_region
                _
              $region115: #{mnist_cnn_forward.5} parent=88 // pred_fallthru
                _
            $region89: #{mnist_cnn_forward.5} parent=84 // pred_fallthru
              _
            // Predicated region
            $region90: #{mnist_cnn_forward.5} parent=84 // pred_check
              _
            $region91: #{mnist_cnn_forward.5} parent=84 // pred_check_branch
              %4268 = sbr.rel target = $region93
            $region92: #{mnist_cnn_forward.5} parent=84 // pred_region
              %s4270 = ssub.s32 256, 1
              loop: start=0, step=1, limit=1
              $region94: #{mnist_cnn_forward.5} parent=92 // loop_pre_header
                _
              $region95: #{mnist_cnn_forward.5} parent=92 // loop_header
                %s4272 = sphi 0, %s4276
                %p4273 = scmp.ge.s32.totalorder %s4272, 1
                %s4277 = sphi %s4252, %s4252
                %s4278 = sphi %s4262, %s4262
              $region96: #{mnist_cnn_forward.5} parent=92 // loop_header_branch
                %4275 = sbr.rel (%p4273) target = $region100
              $region97: #{mnist_cnn_forward.5} parent=92 // loop_body
                %v4279 = vld [vmem:[%s4277] sm:%s4270]
                %4280 = vst [vmem:[%s4278] sm:%s4270] %v4279
                %v4281 = vld [vmem:[%s4277 + $0x8] sm:%s4270]
                %4282 = vst [vmem:[%s4278 + $0x10] sm:%s4270] %v4281
              $region98: #{mnist_cnn_forward.5} parent=92 // loop_footer
                %s4276 = sadd.s32 1, %s4272
              $region99: #{mnist_cnn_forward.5} parent=92 // loop_footer_branch
                %4271 = sbr.rel target = $region95
              $region100: #{mnist_cnn_forward.5} parent=92 // loop_exit
                _
            $region93: #{mnist_cnn_forward.5} parent=84 // pred_fallthru
              _
          $region85: #{mnist_cnn_forward.5} parent=80 // pred_fallthru
            _
          %4299 = vnop
        $region81: #{mnist_cnn_forward.5} parent=72 // pred_fallthru
          _
        // Predicated region
        $region116: #{mnist_cnn_forward.5} parent=72 // pred_check
          %p4300 = pneg %p160
        $region117: #{mnist_cnn_forward.5} parent=72 // pred_check_branch
          %4302 = sbr.rel (%p4300) target = $region119
        $region118: #{mnist_cnn_forward.5} parent=72 // pred_region
          _
        $region119: #{mnist_cnn_forward.5} parent=72 // pred_fallthru
          _
      $region73: #{mnist_cnn_forward.5} parent=5 // pred_fallthru
        _
      %p4303 = scmp.le.s32.totalorder 2, %s12
      // Predicated region
      $region120: #{mnist_cnn_forward.5} parent=5 // pred_check
        %p4304 = pneg %p4303
      $region121: #{mnist_cnn_forward.5} parent=5 // pred_check_branch
        %4306 = sbr.rel (%p4304) target = $region123
      $region122: #{mnist_cnn_forward.5} parent=5 // pred_region
        %s4307 = ssub.s32 %s12, 2
        // Predicated region
        $region124: #{mnist_cnn_forward.5} parent=122 // pred_check
          %p4308 = pneg %p140
        $region125: #{mnist_cnn_forward.5} parent=122 // pred_check_branch
          %4310 = sbr.rel (%p4308) target = $region127
        $region126: #{mnist_cnn_forward.5} parent=122 // pred_region
          %s4311 = sand.u32 %s125, 1
          %s4312 = sand.u32 %s125, 1
          %s4313 = smul.addr %s4312, 16
          %s4314 = scalar_lea.vmem [#allocation3], %s4313
        $region127: #{mnist_cnn_forward.5} parent=122 // pred_fallthru
          _
        // Predicated region
        $region128: #{mnist_cnn_forward.5} parent=122 // pred_check
          %p4315 = pneg %p166
        $region129: #{mnist_cnn_forward.5} parent=122 // pred_check_branch
          %4317 = sbr.rel (%p4315) target = $region131
        $region130: #{mnist_cnn_forward.5} parent=122 // pred_region
          %p4318 = scmp.lt.s32.totalorder %s18, 1
          %s4319 = scalar_select %p4318, %s18, 1
          %s4320 = smul.addr %s4319, 2
          %s4321 = smul.addr %s4320, 8
          %s4322 = scalar_lea.vmem %s5, %s4321
        $region131: #{mnist_cnn_forward.5} parent=122 // pred_fallthru
          _
      $region123: #{mnist_cnn_forward.5} parent=5 // pred_fallthru
        _
    $region6: #{mnist_cnn_forward.5} parent=1 // loop_footer
      %s16 = sadd.s32 1, %s12
    $region7: #{mnist_cnn_forward.5} parent=1 // loop_footer_branch
      %11 = sbr.rel target = $region3
    $region8: #{mnist_cnn_forward.5} parent=1 // loop_exit
      _

</llo_original>
